<compile_context>
chip_gen: v7x
topology: tpu7x:2x2x1
jax: 0.10.0
libtpu: 0.0.40
codegen_flags: <defaults>
</compile_context>

<pallas_src>
import functools

import jax
import jax.numpy as jnp
import numpy as np
from jax import lax
from jax.experimental import pallas as pl
from jax.experimental.pallas import tpu as pltpu

MODE = "ELU"                      # 'ELU', 'ReLU' or 'LeakyReLU'
_PREC = lax.Precision.HIGHEST     # host-side weight prep + reference ONLY


# ----------------------------------------------------------------------------
# Shared helpers
# ----------------------------------------------------------------------------
def _activate(y, mode):
    if mode == "ELU":
        # jnp.expm1 would be marginally more accurate near 0; exp(y)-1 is kept
        # because its Mosaic lowering is already proven for this kernel.
        return jnp.where(y > 0, y, jnp.exp(y) - 1.0)      # alpha = 1.0
    elif mode == "ReLU":
        return jnp.maximum(y, 0.0)
    elif mode == "LeakyReLU":
        return jnp.where(y > 0, y, 0.01 * y)
    raise ValueError(mode)


def _chunks(n, chunk=192):
    """Static row-chunking to bound live vreg pressure of conv accumulators."""
    out, s = [], 0
    while s < n:
        out.append((s, min(chunk, n - s)))
        s += chunk
    return out


# ----------------------------------------------------------------------------
# Fused Pallas kernel: blocks 1-4 (+ folded eval-BN) + activation + avgpool +
# FC.  One grid step == `tb` batch elements; everything stays in VMEM.
# ----------------------------------------------------------------------------
def _deepconvnet_kernel(x_ref,
                        w1_ref, b1_ref, w2_ref, b2_ref, w3_ref, b3_ref,
                        w4_ref, b4_ref, fcw_ref, fcb_ref,
                        out_ref,
                        pad2, pad3, pad4, stage, *, mode):
    f32 = jnp.float32
    tb = x_ref.shape[0]            # samples handled by this grid step
    p1 = x_ref.shape[2]            # 375 = width after block-1 pooling
    p2 = p1 // 2                   # 187
    p3 = p2 // 2                   # 93
    p4 = p3 // 2                   # 46
    co1 = w1_ref.shape[1]          # 25
    co2 = w2_ref.shape[2]          # 50
    co3 = w3_ref.shape[2]          # 100

    act = functools.partial(_activate, mode=mode)

    # One zero-fill per grid step (previously per sample).  The conv halo rows
    # and the zero-padded Cin lanes are never written by the per-sample body,
    # so they remain zero for every sample of this step.
    pad2[...] = jnp.zeros(pad2.shape, f32)
    pad3[...] = jnp.zeros(pad3.shape, f32)
    pad4[...] = jnp.zeros(pad4.shape, f32)

    def conv5_act(pin, w_ref, b_ref, r0, rows):
        # rows [r0, r0+rows) of a width-5 "same" conv over the padded buffer,
        # as 5 contiguous-slice MXU matmuls + folded-BN bias + activation.
        acc = jnp.zeros((rows, w_ref.shape[2]), f32)
        for k in range(5):
            acc = acc + jnp.dot(pin[r0 + k:r0 + k + rows, :], w_ref[k],
                                preferred_element_type=f32)
        return act(acc + b_ref[...])

    @pl.loop(0, tb)
    def _per_sample(s):
        # ---- block 1 -------------------------------------------------------
        # Host-composed conv1a∘conv1b(+BN1) as a single im2col matmul (K=16).
        # Input rows are pre-split by W-parity, so AvgPool((1,2)) is just
        # 0.5*(even + odd): no strided access and no stage buffer.
        for c0, cs in _chunks(p1):
            xe = x_ref[s, 0, pl.ds(c0, cs), :]
            xo = x_ref[s, 1, pl.ds(c0, cs), :]
            ye = act(jnp.dot(xe, w1_ref[...], preferred_element_type=f32)
                     + b1_ref[...])
            yo = act(jnp.dot(xo, w1_ref[...], preferred_element_type=f32)
                     + b1_ref[...])
            pad2[2 + c0:2 + c0 + cs, 0:co1] = 0.5 * (ye + yo)

        # ---- block 2 -------------------------------------------------------
        for c0, cs in _chunks(p1):
            stage[c0:c0 + cs, 0:co2] = conv5_act(pad2, w2_ref, b2_ref, c0, cs)
        ev = stage[pl.ds(0, p2, stride=2), pl.ds(0, co2)]
        od = stage[pl.ds(1, p2, stride=2), pl.ds(0, co2)]
        pad3[2:2 + p2, 0:co2] = 0.5 * (ev + od)       # trailing odd col dropped

        # ---- block 3 -------------------------------------------------------
        stage[0:p2, 0:co3] = conv5_act(pad3, w3_ref, b3_ref, 0, p2)
        ev = stage[pl.ds(0, p3, stride=2), pl.ds(0, co3)]
        od = stage[pl.ds(1, p3, stride=2), pl.ds(0, co3)]
        pad4[2:2 + p3, 0:co3] = 0.5 * (ev + od)

        # ---- block 4 + FC --------------------------------------------------
        # Block-4's AvgPool is folded into the FC weights on the host, so the
        # FC contracts the un-pooled (92, 200) activation directly.
        y4 = conv5_act(pad4, w4_ref, b4_ref, 0, p3)              # (93, 200)
        h = y4[0:2 * p4, :]                                      # (92, 200)
        t0 = jnp.sum(jnp.sum(h * fcw_ref[0], axis=1, keepdims=True),
                     axis=0, keepdims=True)                      # (1, 1)
        t1 = jnp.sum(jnp.sum(h * fcw_ref[1], axis=1, keepdims=True),
                     axis=0, keepdims=True)                      # (1, 1)
        out_ref[pl.ds(s, 1), :] = (jnp.concatenate([t0, t1], axis=1)
                                   + fcb_ref[...])               # one store


# ----------------------------------------------------------------------------
# Host-side weight / input preparation (layout glue, conv composition,
# eval-BN folding, pool-into-FC folding)
# ----------------------------------------------------------------------------
def _bn_fold(bnp, eps=1e-5):
    gamma, beta, mean, var = bnp
    scale = gamma * lax.rsqrt(var + eps)
    shift = beta - mean * scale
    return scale, shift


def _pad_cin(w, mult=8):
    pad = (-w.shape[1]) % mult
    if pad:
        w = jnp.pad(w, ((0, 0), (0, pad), (0, 0)))
    return w


def _prepare_weights(p):
    # block 1: Conv2d(1,25,(1,5)) followed directly by Conv2d(25,25,(2,1)) is
    # a linear composition -> one width-5 conv over the 2 H rows; fold eval-BN
    # and flatten (k, h) into a 16-wide im2col weight.
    w1a = p["w1a"][:, 0, 0, :]                         # (i=25, k=5)
    w1b = p["w1b"][:, :, :, 0]                         # (o=25, i=25, h=2)
    w1 = jnp.einsum("oih,ik->kho", w1b, w1a, precision=_PREC)      # (5, 2, 25)
    b1 = p["b1b"] + jnp.einsum("oih,i->o", w1b, p["b1a"], precision=_PREC)
    sc, sh = _bn_fold(p["bn1"])
    w1 = w1 * sc[None, None, :]
    b1 = b1 * sc + sh
    w1im = jnp.zeros((16, w1.shape[-1]), jnp.float32).at[:10].set(
        w1.reshape(10, -1))                            # (16, 25), f = 2k + h

    def fold(wkey, bkey, bnkey):
        scale, shift = _bn_fold(p[bnkey])
        wr = jnp.transpose(p[wkey][:, :, 0, :], (2, 1, 0))   # (5, Cin, Cout)
        wr = wr * scale[None, None, :]
        bf = p[bkey] * scale + shift
        return _pad_cin(wr), bf[None, :]

    w2, b2 = fold("w2", "b2", "bn2")                   # (5, 32, 50)
    w3, b3 = fold("w3", "b3", "bn3")                   # (5, 56, 100)
    w4, b4 = fold("w4", "b4", "bn4")                   # (5, 104, 200)

    # FC: PyTorch flattens (B, C=200, 1, W=46) C-major -> permute to
    # (2, 46, 200), then fold block-4's AvgPool((1,2)) by duplicating + 0.5.
    c_last = p["w4"].shape[0]
    fcwp = jnp.transpose(p["fc_w"].reshape(2, c_last, -1), (0, 2, 1))  # (2,46,200)
    fcw2 = 0.5 * jnp.repeat(fcwp, 2, axis=1)                           # (2,92,200)
    fcb = p["fc_b"][None, :]
    return (w1im, b1[None, :], w2, b2, w3, b3, w4, b4, fcw2, fcb)


def _prepare_input(x_nchw):
    """(B,1,2,W) NCHW -> block-1 im2col split by W-parity: (B, 2, W//2, 16)."""
    B, _, _, W0 = x_nchw.shape
    x = jnp.transpose(x_nchw[:, 0], (0, 2, 1))               # (B, W, 2)
    xp = jnp.pad(x, ((0, 0), (2, 2), (0, 0)))                # (B, W+4, 2)
    cols = jnp.stack([xp[:, k:k + W0, :] for k in range(5)], axis=2)  # (B,W,5,2)
    im = cols.reshape(B, W0, 10)                             # f = 2k + h
    im = jnp.pad(im, ((0, 0), (0, 0), (0, 6)))               # (B, W, 16)
    return jnp.stack([im[:, 0::2, :], im[:, 1::2, :]], axis=1)


def _full_spec(shape):
    n = len(shape)
    return pl.BlockSpec(shape, lambda i: (0,) * n)


def deepconvnet_forward(x_nchw, p, mode=MODE, tb=8):
    """Eval-mode DeepConvNet forward.

    tb = samples per grid step (multiple of 8).  ~8-16 on v7x (64 MiB VMEM),
    up to 32 on v5e/v6e.  The batch is zero-padded up to a multiple of tb.
    """
    assert tb % 8 == 0, "tb must be a multiple of 8 (sublane tile)"
    B = x_nchw.shape[0]
    W0 = x_nchw.shape[3]
    assert x_nchw.shape[1] == 1 and x_nchw.shape[2] == 2 and W0 % 2 == 0

    weights = _prepare_weights(p)
    p1 = W0 // 2
    p2 = p1 // 2
    p3 = p2 // 2
    ci2 = weights[2].shape[1]        # 32
    ci3 = weights[4].shape[1]        # 56
    ci4 = weights[6].shape[1]        # 104
    co3 = weights[4].shape[2]        # 100
    assert weights[8].shape[1] == 2 * (p3 // 2), "input width inconsistent w/ fc"

    xph = _prepare_input(x_nchw)                     # (B, 2, p1, 16)
    bp = ((B + tb - 1) // tb) * tb
    if bp != B:
        xph = jnp.pad(xph, ((0, bp - B), (0, 0), (0, 0), (0, 0)))

    scratch = [
        pltpu.VMEM((p1 + 4, ci2), jnp.float32),      # padded block-2 input
        pltpu.VMEM((p2 + 4, ci3), jnp.float32),      # padded block-3 input
        pltpu.VMEM((p3 + 4, ci4), jnp.float32),      # padded block-4 input
        pltpu.VMEM((p1, co3), jnp.float32),          # pre-pool stage (blk 2-3)
    ]

    in_specs = [pl.BlockSpec((tb, 2, p1, 16), lambda i: (i, 0, 0, 0))]
    in_specs += [_full_spec(w.shape) for w in weights]

    out = pl.pallas_call(
        functools.partial(_deepconvnet_kernel, mode=mode),
        out_shape=jax.ShapeDtypeStruct((bp, 2), jnp.float32),
        grid=(bp // tb,),
        in_specs=in_specs,
        out_specs=pl.BlockSpec((tb, 2), lambda i: (i, 0)),
        scratch_shapes=scratch,
        compiler_params=pltpu.CompilerParams(
            dimension_semantics=("parallel",),
            vmem_limit_bytes=32 * 1024 * 1024),
    )(xph, *weights)
    return out[:B]                                   # (B, 2)


# ----------------------------------------------------------------------------
# Parameters (deterministic, synthetic, PyTorch layouts)
# ----------------------------------------------------------------------------
def _bn_init(key, c):
    k1, k2, k3, k4 = jax.random.split(key, 4)
    gamma = 1.0 + 0.1 * jax.random.normal(k1, (c,), jnp.float32)
    beta = 0.1 * jax.random.normal(k2, (c,), jnp.float32)
    mean = 0.1 * jax.random.normal(k3, (c,), jnp.float32)
    var = 0.5 + jnp.abs(jax.random.normal(k4, (c,), jnp.float32))
    return (gamma, beta, mean, var)


def init_params(key):
    ks = jax.random.split(key, 16)
    nrm = lambda k, s, sc=0.1: sc * jax.random.normal(k, s, jnp.float32)
    p = {}
    p["w1a"], p["b1a"] = nrm(ks[0], (25, 1, 1, 5)), nrm(ks[1], (25,))     # Conv2d(1,25,(1,5))
    p["w1b"], p["b1b"] = nrm(ks[2], (25, 25, 2, 1)), nrm(ks[3], (25,))    # Conv2d(25,25,(2,1))
    p["bn1"] = _bn_init(ks[4], 25)
    p["w2"], p["b2"] = nrm(ks[5], (50, 25, 1, 5)), nrm(ks[6], (50,))      # Conv2d(25,50,(1,5))
    p["bn2"] = _bn_init(ks[7], 50)
    p["w3"], p["b3"] = nrm(ks[8], (100, 50, 1, 5)), nrm(ks[9], (100,))    # Conv2d(50,100,(1,5))
    p["bn3"] = _bn_init(ks[10], 100)
    p["w4"], p["b4"] = nrm(ks[11], (200, 100, 1, 5)), nrm(ks[12], (200,)) # Conv2d(100,200,(1,5))
    p["bn4"] = _bn_init(ks[13], 200)
    p["fc_w"], p["fc_b"] = nrm(ks[14], (2, 9200), 0.02), nrm(ks[15], (2,))  # Linear(9200,2)
    return p


# ----------------------------------------------------------------------------
# Pure-JAX reference (mirrors PyTorch eval-mode forward, full precision)
# ----------------------------------------------------------------------------
def reference_forward(x, p, mode=MODE):
    def conv(x, w, b, pad_w):
        y = lax.conv_general_dilated(
            x, w, window_strides=(1, 1), padding=((0, 0), (pad_w, pad_w)),
            dimension_numbers=("NCHW", "OIHW", "NCHW"), precision=_PREC)
        return y + b[None, :, None, None]

    def bn(x, bnp):
        g, bt, m, v = bnp
        inv = g / jnp.sqrt(v + 1e-5)
        return (x - m[None, :, None, None]) * inv[None, :, None, None] + bt[None, :, None, None]

    def pool(x):
        B, C, H, W = x.shape
        Wo = W // 2
        return x[..., :2 * Wo].reshape(B, C, H, Wo, 2).mean(-1)

    act = lambda y: _activate(y, mode)
    h = conv(x, p["w1a"], p["b1a"], 2)
    h = conv(h, p["w1b"], p["b1b"], 0)
    h = pool(act(bn(h, p["bn1"])))                   # Dropout = identity (eval)
    h = pool(act(bn(conv(h, p["w2"], p["b2"], 2), p["bn2"])))
    h = pool(act(bn(conv(h, p["w3"], p["b3"], 2), p["bn3"])))
    h = pool(act(bn(conv(h, p["w4"], p["b4"], 2), p["bn4"])))
    flat = h.reshape(h.shape[0], -1)
    return jnp.dot(flat, p["fc_w"].T, precision=_PREC) + p["fc_b"][None, :]


if __name__ == "__main__":
    key = jax.random.PRNGKey(0)
    pkey, xkey = jax.random.split(key)
    params = init_params(pkey)

    # nn.Linear(9200, 2) fixes the spatial extent: input is (B, 1, 2, 750).
    # B=16 with tb=8 -> grid of 2 steps (both v7x TensorCores get work).
    B = 16
    x = jax.random.normal(xkey, (B, 1, 2, 750), jnp.float32)

    fwd = jax.jit(functools.partial(deepconvnet_forward, mode=MODE, tb=8))
    out = jax.block_until_ready(fwd(x, params))
    assert out.shape == (B, 2) and out.dtype == jnp.float32

    ref = jax.block_until_ready(
        jax.jit(functools.partial(reference_forward, mode=MODE))(x, params))
    # kernel matmuls use default MXU precision (bf16 passes, f32 accumulate);
    # reference is HIGHEST precision -> slightly relaxed tolerance.
    np.testing.assert_allclose(np.asarray(out), np.asarray(ref),
                               rtol=2e-2, atol=2e-2)

    print("KERNEL_OK")
</pallas_src>

<mosaic_0001>
module attributes {stable_mosaic.version = 11 : i64} {
  func.func @_deepconvnet_kernel(%arg0: i32, %arg1: memref<8x2x375x16xf32, #tpu.memory_space<vmem>>, %arg2: memref<16x25xf32, #tpu.memory_space<vmem>>, %arg3: memref<1x25xf32, #tpu.memory_space<vmem>>, %arg4: memref<5x32x50xf32, #tpu.memory_space<vmem>>, %arg5: memref<1x50xf32, #tpu.memory_space<vmem>>, %arg6: memref<5x56x100xf32, #tpu.memory_space<vmem>>, %arg7: memref<1x100xf32, #tpu.memory_space<vmem>>, %arg8: memref<5x104x200xf32, #tpu.memory_space<vmem>>, %arg9: memref<1x200xf32, #tpu.memory_space<vmem>>, %arg10: memref<2x92x200xf32, #tpu.memory_space<vmem>>, %arg11: memref<1x2xf32, #tpu.memory_space<vmem>>, %arg12: memref<8x2xf32, #tpu.memory_space<vmem>>, %arg13: memref<379x32xf32, #tpu.memory_space<vmem>>, %arg14: memref<191x56xf32, #tpu.memory_space<vmem>>, %arg15: memref<97x104xf32, #tpu.memory_space<vmem>>, %arg16: memref<375x100xf32, #tpu.memory_space<vmem>>) attributes {dimension_semantics = [#tpu.dimension_semantics<parallel>], iteration_bounds = array<i64: 2>, scalar_prefetch = 0 : i64, scratch_operands = 4 : i64, tpu.core_type = #tpu.core_type<tc>, window_params = [{transform_indices = @transform_0, window_bounds = array<i64: 8, 2, 375, 16>}, {pipeline_mode = #tpu.pipeline_mode<synchronous>, transform_indices = @transform_1, window_bounds = array<i64: 16, 25>}, {pipeline_mode = #tpu.pipeline_mode<synchronous>, transform_indices = @transform_2, window_bounds = array<i64: 1, 25>}, {pipeline_mode = #tpu.pipeline_mode<synchronous>, transform_indices = @transform_3, window_bounds = array<i64: 5, 32, 50>}, {pipeline_mode = #tpu.pipeline_mode<synchronous>, transform_indices = @transform_4, window_bounds = array<i64: 1, 50>}, {pipeline_mode = #tpu.pipeline_mode<synchronous>, transform_indices = @transform_5, window_bounds = array<i64: 5, 56, 100>}, {pipeline_mode = #tpu.pipeline_mode<synchronous>, transform_indices = @transform_6, window_bounds = array<i64: 1, 100>}, {pipeline_mode = #tpu.pipeline_mode<synchronous>, transform_indices = @transform_7, window_bounds = array<i64: 5, 104, 200>}, {pipeline_mode = #tpu.pipeline_mode<synchronous>, transform_indices = @transform_8, window_bounds = array<i64: 1, 200>}, {pipeline_mode = #tpu.pipeline_mode<synchronous>, transform_indices = @transform_9, window_bounds = array<i64: 2, 92, 200>}, {pipeline_mode = #tpu.pipeline_mode<synchronous>, transform_indices = @transform_10, window_bounds = array<i64: 1, 2>}, {transform_indices = @transform_11, window_bounds = array<i64: 8, 2>}]} {
    %cst = arith.constant 0.000000e+00 : f32
    %0 = vector.broadcast %cst : f32 to vector<379x32xf32>
    %c0 = arith.constant 0 : index
    %c0_0 = arith.constant 0 : index
    %1 = vector.load %arg13[%c0, %c0_0] : memref<379x32xf32, #tpu.memory_space<vmem>>, vector<379x32xf32>
    tpu.vector_store %arg13[%c0, %c0_0], %0 {strides = array<i32>} : memref<379x32xf32, #tpu.memory_space<vmem>>, vector<379x32xf32>,
    %cst_1 = arith.constant 0.000000e+00 : f32
    %2 = vector.broadcast %cst_1 : f32 to vector<191x56xf32>
    %c0_2 = arith.constant 0 : index
    %c0_3 = arith.constant 0 : index
    %3 = vector.load %arg14[%c0_2, %c0_3] : memref<191x56xf32, #tpu.memory_space<vmem>>, vector<191x56xf32>
    tpu.vector_store %arg14[%c0_2, %c0_3], %2 {strides = array<i32>} : memref<191x56xf32, #tpu.memory_space<vmem>>, vector<191x56xf32>,
    %cst_4 = arith.constant 0.000000e+00 : f32
    %4 = vector.broadcast %cst_4 : f32 to vector<97x104xf32>
    %c0_5 = arith.constant 0 : index
    %c0_6 = arith.constant 0 : index
    %5 = vector.load %arg15[%c0_5, %c0_6] : memref<97x104xf32, #tpu.memory_space<vmem>>, vector<97x104xf32>
    tpu.vector_store %arg15[%c0_5, %c0_6], %4 {strides = array<i32>} : memref<97x104xf32, #tpu.memory_space<vmem>>, vector<97x104xf32>,
    %c0_i32 = arith.constant 0 : i32
    %c8_i32 = arith.constant 8 : i32
    %6 = arith.addi %c0_i32, %c8_i32 : i32
    %c1_i32 = arith.constant 1 : i32
    scf.for %arg17 = %c0_i32 to %6 step %c1_i32  : i32 {
      %c1_i32_8 = arith.constant 1 : i32
      %7 = arith.muli %arg17, %c1_i32_8 : i32
      %c0_i32_9 = arith.constant 0 : i32
      %8 = arith.addi %c0_i32_9, %7 : i32
      %9 = arith.index_cast %8 : i32 to index
      %c0_10 = arith.constant 0 : index
      %c0_11 = arith.constant 0 : index
      %c0_12 = arith.constant 0 : index
      %10 = vector.load %arg1[%9, %c0_10, %c0_11, %c0_12] : memref<8x2x375x16xf32, #tpu.memory_space<vmem>>, vector<1x1x192x16xf32>
      %11 = vector.shape_cast %10 : vector<1x1x192x16xf32> to vector<192x16xf32>
      %12 = arith.index_cast %8 : i32 to index
      %c1 = arith.constant 1 : index
      %c0_13 = arith.constant 0 : index
      %c0_14 = arith.constant 0 : index
      %13 = vector.load %arg1[%12, %c1, %c0_13, %c0_14] : memref<8x2x375x16xf32, #tpu.memory_space<vmem>>, vector<1x1x192x16xf32>
      %14 = vector.shape_cast %13 : vector<1x1x192x16xf32> to vector<192x16xf32>
      %c0_15 = arith.constant 0 : index
      %c0_16 = arith.constant 0 : index
      %15 = vector.load %arg2[%c0_15, %c0_16] : memref<16x25xf32, #tpu.memory_space<vmem>>, vector<16x25xf32>
      %cst_17 = arith.constant dense<0.000000e+00> : vector<192x25xf32>
      %16 = tpu.matmul %11, %15, %cst_17 {dimension_numbers = #tpu.dot_dimension_numbers<[1], [0], [0], [1], [0, 0, 1, 1], [], []>} : vector<192x16xf32>, vector<16x25xf32>, vector<192x25xf32> -> vector<192x25xf32>
      %c0_18 = arith.constant 0 : index
      %c0_19 = arith.constant 0 : index
      %17 = vector.load %arg3[%c0_18, %c0_19] : memref<1x25xf32, #tpu.memory_space<vmem>>, vector<1x25xf32>
      %18 = vector.broadcast %17 : vector<1x25xf32> to vector<192x25xf32>
      %19 = arith.addf %16, %18 : vector<192x25xf32>
      %cst_20 = arith.constant 0.000000e+00 : f32
      %20 = vector.broadcast %cst_20 : f32 to vector<192x25xf32>
      %21 = arith.cmpf ogt, %19, %20 : vector<192x25xf32>
      %22 = math.exp %19 : vector<192x25xf32>
      %cst_21 = arith.constant 1.000000e+00 : f32
      %23 = vector.broadcast %cst_21 : f32 to vector<192x25xf32>
      %24 = arith.subf %22, %23 : vector<192x25xf32>
      %25 = arith.select %21, %19, %24 : vector<192x25xi1>, vector<192x25xf32>
      %c0_22 = arith.constant 0 : index
      %c0_23 = arith.constant 0 : index
      %26 = vector.load %arg2[%c0_22, %c0_23] : memref<16x25xf32, #tpu.memory_space<vmem>>, vector<16x25xf32>
      %cst_24 = arith.constant dense<0.000000e+00> : vector<192x25xf32>
      %27 = tpu.matmul %14, %26, %cst_24 {dimension_numbers = #tpu.dot_dimension_numbers<[1], [0], [0], [1], [0, 0, 1, 1], [], []>} : vector<192x16xf32>, vector<16x25xf32>, vector<192x25xf32> -> vector<192x25xf32>
      %c0_25 = arith.constant 0 : index
      %c0_26 = arith.constant 0 : index
      %28 = vector.load %arg3[%c0_25, %c0_26] : memref<1x25xf32, #tpu.memory_space<vmem>>, vector<1x25xf32>
      %29 = vector.broadcast %28 : vector<1x25xf32> to vector<192x25xf32>
      %30 = arith.addf %27, %29 : vector<192x25xf32>
      %cst_27 = arith.constant 0.000000e+00 : f32
      %31 = vector.broadcast %cst_27 : f32 to vector<192x25xf32>
      %32 = arith.cmpf ogt, %30, %31 : vector<192x25xf32>
      %33 = math.exp %30 : vector<192x25xf32>
      %cst_28 = arith.constant 1.000000e+00 : f32
      %34 = vector.broadcast %cst_28 : f32 to vector<192x25xf32>
      %35 = arith.subf %33, %34 : vector<192x25xf32>
      %36 = arith.select %32, %30, %35 : vector<192x25xi1>, vector<192x25xf32>
      %37 = arith.addf %25, %36 : vector<192x25xf32>
      %cst_29 = arith.constant 5.000000e-01 : f32
      %38 = vector.broadcast %cst_29 : f32 to vector<192x25xf32>
      %39 = arith.mulf %38, %37 : vector<192x25xf32>
      %c2 = arith.constant 2 : index
      %c0_30 = arith.constant 0 : index
      %40 = vector.load %arg13[%c2, %c0_30] : memref<379x32xf32, #tpu.memory_space<vmem>>, vector<192x25xf32>
      tpu.vector_store %arg13[%c2, %c0_30], %39 {strides = array<i32>} : memref<379x32xf32, #tpu.memory_space<vmem>>, vector<192x25xf32>,
      %41 = arith.index_cast %8 : i32 to index
      %c0_31 = arith.constant 0 : index
      %c192 = arith.constant 192 : index
      %c0_32 = arith.constant 0 : index
      %42 = vector.load %arg1[%41, %c0_31, %c192, %c0_32] : memref<8x2x375x16xf32, #tpu.memory_space<vmem>>, vector<1x1x183x16xf32>
      %43 = vector.shape_cast %42 : vector<1x1x183x16xf32> to vector<183x16xf32>
      %44 = arith.index_cast %8 : i32 to index
      %c1_33 = arith.constant 1 : index
      %c192_34 = arith.constant 192 : index
      %c0_35 = arith.constant 0 : index
      %45 = vector.load %arg1[%44, %c1_33, %c192_34, %c0_35] : memref<8x2x375x16xf32, #tpu.memory_space<vmem>>, vector<1x1x183x16xf32>
      %46 = vector.shape_cast %45 : vector<1x1x183x16xf32> to vector<183x16xf32>
      %c0_36 = arith.constant 0 : index
      %c0_37 = arith.constant 0 : index
      %47 = vector.load %arg2[%c0_36, %c0_37] : memref<16x25xf32, #tpu.memory_space<vmem>>, vector<16x25xf32>
      %cst_38 = arith.constant dense<0.000000e+00> : vector<183x25xf32>
      %48 = tpu.matmul %43, %47, %cst_38 {dimension_numbers = #tpu.dot_dimension_numbers<[1], [0], [0], [1], [0, 0, 1, 1], [], []>} : vector<183x16xf32>, vector<16x25xf32>, vector<183x25xf32> -> vector<183x25xf32>
      %c0_39 = arith.constant 0 : index
      %c0_40 = arith.constant 0 : index
      %49 = vector.load %arg3[%c0_39, %c0_40] : memref<1x25xf32, #tpu.memory_space<vmem>>, vector<1x25xf32>
      %50 = vector.broadcast %49 : vector<1x25xf32> to vector<183x25xf32>
      %51 = arith.addf %48, %50 : vector<183x25xf32>
      %cst_41 = arith.constant 0.000000e+00 : f32
      %52 = vector.broadcast %cst_41 : f32 to vector<183x25xf32>
      %53 = arith.cmpf ogt, %51, %52 : vector<183x25xf32>
      %54 = math.exp %51 : vector<183x25xf32>
      %cst_42 = arith.constant 1.000000e+00 : f32
      %55 = vector.broadcast %cst_42 : f32 to vector<183x25xf32>
      %56 = arith.subf %54, %55 : vector<183x25xf32>
      %57 = arith.select %53, %51, %56 : vector<183x25xi1>, vector<183x25xf32>
      %c0_43 = arith.constant 0 : index
      %c0_44 = arith.constant 0 : index
      %58 = vector.load %arg2[%c0_43, %c0_44] : memref<16x25xf32, #tpu.memory_space<vmem>>, vector<16x25xf32>
      %cst_45 = arith.constant dense<0.000000e+00> : vector<183x25xf32>
      %59 = tpu.matmul %46, %58, %cst_45 {dimension_numbers = #tpu.dot_dimension_numbers<[1], [0], [0], [1], [0, 0, 1, 1], [], []>} : vector<183x16xf32>, vector<16x25xf32>, vector<183x25xf32> -> vector<183x25xf32>
      %c0_46 = arith.constant 0 : index
      %c0_47 = arith.constant 0 : index
      %60 = vector.load %arg3[%c0_46, %c0_47] : memref<1x25xf32, #tpu.memory_space<vmem>>, vector<1x25xf32>
      %61 = vector.broadcast %60 : vector<1x25xf32> to vector<183x25xf32>
      %62 = arith.addf %59, %61 : vector<183x25xf32>
      %cst_48 = arith.constant 0.000000e+00 : f32
      %63 = vector.broadcast %cst_48 : f32 to vector<183x25xf32>
      %64 = arith.cmpf ogt, %62, %63 : vector<183x25xf32>
      %65 = math.exp %62 : vector<183x25xf32>
      %cst_49 = arith.constant 1.000000e+00 : f32
      %66 = vector.broadcast %cst_49 : f32 to vector<183x25xf32>
      %67 = arith.subf %65, %66 : vector<183x25xf32>
      %68 = arith.select %64, %62, %67 : vector<183x25xi1>, vector<183x25xf32>
      %69 = arith.addf %57, %68 : vector<183x25xf32>
      %cst_50 = arith.constant 5.000000e-01 : f32
      %70 = vector.broadcast %cst_50 : f32 to vector<183x25xf32>
      %71 = arith.mulf %70, %69 : vector<183x25xf32>
      %c194 = arith.constant 194 : index
      %c0_51 = arith.constant 0 : index
      %72 = vector.load %arg13[%c194, %c0_51] : memref<379x32xf32, #tpu.memory_space<vmem>>, vector<183x25xf32>
      tpu.vector_store %arg13[%c194, %c0_51], %71 {strides = array<i32>} : memref<379x32xf32, #tpu.memory_space<vmem>>, vector<183x25xf32>,
      %cst_52 = arith.constant 0.000000e+00 : f32
      %73 = vector.broadcast %cst_52 : f32 to vector<192x50xf32>
      %c0_53 = arith.constant 0 : index
      %c0_54 = arith.constant 0 : index
      %74 = vector.load %arg13[%c0_53, %c0_54] : memref<379x32xf32, #tpu.memory_space<vmem>>, vector<192x32xf32>
      %c0_55 = arith.constant 0 : index
      %c0_56 = arith.constant 0 : index
      %c0_57 = arith.constant 0 : index
      %75 = vector.load %arg4[%c0_55, %c0_56, %c0_57] : memref<5x32x50xf32, #tpu.memory_space<vmem>>, vector<1x32x50xf32>
      %76 = vector.shape_cast %75 : vector<1x32x50xf32> to vector<32x50xf32>
      %cst_58 = arith.constant dense<0.000000e+00> : vector<192x50xf32>
      %77 = tpu.matmul %74, %76, %cst_58 {dimension_numbers = #tpu.dot_dimension_numbers<[1], [0], [0], [1], [0, 0, 1, 1], [], []>} : vector<192x32xf32>, vector<32x50xf32>, vector<192x50xf32> -> vector<192x50xf32>
      %78 = arith.addf %73, %77 : vector<192x50xf32>
      %c1_59 = arith.constant 1 : index
      %c0_60 = arith.constant 0 : index
      %79 = vector.load %arg13[%c1_59, %c0_60] : memref<379x32xf32, #tpu.memory_space<vmem>>, vector<192x32xf32>
      %c1_61 = arith.constant 1 : index
      %c0_62 = arith.constant 0 : index
      %c0_63 = arith.constant 0 : index
      %80 = vector.load %arg4[%c1_61, %c0_62, %c0_63] : memref<5x32x50xf32, #tpu.memory_space<vmem>>, vector<1x32x50xf32>
      %81 = vector.shape_cast %80 : vector<1x32x50xf32> to vector<32x50xf32>
      %cst_64 = arith.constant dense<0.000000e+00> : vector<192x50xf32>
      %82 = tpu.matmul %79, %81, %cst_64 {dimension_numbers = #tpu.dot_dimension_numbers<[1], [0], [0], [1], [0, 0, 1, 1], [], []>} : vector<192x32xf32>, vector<32x50xf32>, vector<192x50xf32> -> vector<192x50xf32>
      %83 = arith.addf %78, %82 : vector<192x50xf32>
      %c2_65 = arith.constant 2 : index
      %c0_66 = arith.constant 0 : index
      %84 = vector.load %arg13[%c2_65, %c0_66] : memref<379x32xf32, #tpu.memory_space<vmem>>, vector<192x32xf32>
      %c2_67 = arith.constant 2 : index
      %c0_68 = arith.constant 0 : index
      %c0_69 = arith.constant 0 : index
      %85 = vector.load %arg4[%c2_67, %c0_68, %c0_69] : memref<5x32x50xf32, #tpu.memory_space<vmem>>, vector<1x32x50xf32>
      %86 = vector.shape_cast %85 : vector<1x32x50xf32> to vector<32x50xf32>
      %cst_70 = arith.constant dense<0.000000e+00> : vector<192x50xf32>
      %87 = tpu.matmul %84, %86, %cst_70 {dimension_numbers = #tpu.dot_dimension_numbers<[1], [0], [0], [1], [0, 0, 1, 1], [], []>} : vector<192x32xf32>, vector<32x50xf32>, vector<192x50xf32> -> vector<192x50xf32>
      %88 = arith.addf %83, %87 : vector<192x50xf32>
      %c3 = arith.constant 3 : index
      %c0_71 = arith.constant 0 : index
      %89 = vector.load %arg13[%c3, %c0_71] : memref<379x32xf32, #tpu.memory_space<vmem>>, vector<192x32xf32>
      %c3_72 = arith.constant 3 : index
      %c0_73 = arith.constant 0 : index
      %c0_74 = arith.constant 0 : index
      %90 = vector.load %arg4[%c3_72, %c0_73, %c0_74] : memref<5x32x50xf32, #tpu.memory_space<vmem>>, vector<1x32x50xf32>
      %91 = vector.shape_cast %90 : vector<1x32x50xf32> to vector<32x50xf32>
      %cst_75 = arith.constant dense<0.000000e+00> : vector<192x50xf32>
      %92 = tpu.matmul %89, %91, %cst_75 {dimension_numbers = #tpu.dot_dimension_numbers<[1], [0], [0], [1], [0, 0, 1, 1], [], []>} : vector<192x32xf32>, vector<32x50xf32>, vector<192x50xf32> -> vector<192x50xf32>
      %93 = arith.addf %88, %92 : vector<192x50xf32>
      %c4 = arith.constant 4 : index
      %c0_76 = arith.constant 0 : index
      %94 = vector.load %arg13[%c4, %c0_76] : memref<379x32xf32, #tpu.memory_space<vmem>>, vector<192x32xf32>
      %c4_77 = arith.constant 4 : index
      %c0_78 = arith.constant 0 : index
      %c0_79 = arith.constant 0 : index
      %95 = vector.load %arg4[%c4_77, %c0_78, %c0_79] : memref<5x32x50xf32, #tpu.memory_space<vmem>>, vector<1x32x50xf32>
      %96 = vector.shape_cast %95 : vector<1x32x50xf32> to vector<32x50xf32>
      %cst_80 = arith.constant dense<0.000000e+00> : vector<192x50xf32>
      %97 = tpu.matmul %94, %96, %cst_80 {dimension_numbers = #tpu.dot_dimension_numbers<[1], [0], [0], [1], [0, 0, 1, 1], [], []>} : vector<192x32xf32>, vector<32x50xf32>, vector<192x50xf32> -> vector<192x50xf32>
      %98 = arith.addf %93, %97 : vector<192x50xf32>
      %c0_81 = arith.constant 0 : index
      %c0_82 = arith.constant 0 : index
      %99 = vector.load %arg5[%c0_81, %c0_82] : memref<1x50xf32, #tpu.memory_space<vmem>>, vector<1x50xf32>
      %100 = vector.broadcast %99 : vector<1x50xf32> to vector<192x50xf32>
      %101 = arith.addf %98, %100 : vector<192x50xf32>
      %cst_83 = arith.constant 0.000000e+00 : f32
      %102 = vector.broadcast %cst_83 : f32 to vector<192x50xf32>
      %103 = arith.cmpf ogt, %101, %102 : vector<192x50xf32>
      %104 = math.exp %101 : vector<192x50xf32>
      %cst_84 = arith.constant 1.000000e+00 : f32
      %105 = vector.broadcast %cst_84 : f32 to vector<192x50xf32>
      %106 = arith.subf %104, %105 : vector<192x50xf32>
      %107 = arith.select %103, %101, %106 : vector<192x50xi1>, vector<192x50xf32>
      %c0_85 = arith.constant 0 : index
      %c0_86 = arith.constant 0 : index
      %108 = vector.load %arg16[%c0_85, %c0_86] : memref<375x100xf32, #tpu.memory_space<vmem>>, vector<192x50xf32>
      tpu.vector_store %arg16[%c0_85, %c0_86], %107 {strides = array<i32>} : memref<375x100xf32, #tpu.memory_space<vmem>>, vector<192x50xf32>,
      %cst_87 = arith.constant 0.000000e+00 : f32
      %109 = vector.broadcast %cst_87 : f32 to vector<183x50xf32>
      %c192_88 = arith.constant 192 : index
      %c0_89 = arith.constant 0 : index
      %110 = vector.load %arg13[%c192_88, %c0_89] : memref<379x32xf32, #tpu.memory_space<vmem>>, vector<183x32xf32>
      %c0_90 = arith.constant 0 : index
      %c0_91 = arith.constant 0 : index
      %c0_92 = arith.constant 0 : index
      %111 = vector.load %arg4[%c0_90, %c0_91, %c0_92] : memref<5x32x50xf32, #tpu.memory_space<vmem>>, vector<1x32x50xf32>
      %112 = vector.shape_cast %111 : vector<1x32x50xf32> to vector<32x50xf32>
      %cst_93 = arith.constant dense<0.000000e+00> : vector<183x50xf32>
      %113 = tpu.matmul %110, %112, %cst_93 {dimension_numbers = #tpu.dot_dimension_numbers<[1], [0], [0], [1], [0, 0, 1, 1], [], []>} : vector<183x32xf32>, vector<32x50xf32>, vector<183x50xf32> -> vector<183x50xf32>
      %114 = arith.addf %109, %113 : vector<183x50xf32>
      %c193 = arith.constant 193 : index
      %c0_94 = arith.constant 0 : index
      %115 = vector.load %arg13[%c193, %c0_94] : memref<379x32xf32, #tpu.memory_space<vmem>>, vector<183x32xf32>
      %c1_95 = arith.constant 1 : index
      %c0_96 = arith.constant 0 : index
      %c0_97 = arith.constant 0 : index
      %116 = vector.load %arg4[%c1_95, %c0_96, %c0_97] : memref<5x32x50xf32, #tpu.memory_space<vmem>>, vector<1x32x50xf32>
      %117 = vector.shape_cast %116 : vector<1x32x50xf32> to vector<32x50xf32>
      %cst_98 = arith.constant dense<0.000000e+00> : vector<183x50xf32>
      %118 = tpu.matmul %115, %117, %cst_98 {dimension_numbers = #tpu.dot_dimension_numbers<[1], [0], [0], [1], [0, 0, 1, 1], [], []>} : vector<183x32xf32>, vector<32x50xf32>, vector<183x50xf32> -> vector<183x50xf32>
      %119 = arith.addf %114, %118 : vector<183x50xf32>
      %c194_99 = arith.constant 194 : index
      %c0_100 = arith.constant 0 : index
      %120 = vector.load %arg13[%c194_99, %c0_100] : memref<379x32xf32, #tpu.memory_space<vmem>>, vector<183x32xf32>
      %c2_101 = arith.constant 2 : index
      %c0_102 = arith.constant 0 : index
      %c0_103 = arith.constant 0 : index
      %121 = vector.load %arg4[%c2_101, %c0_102, %c0_103] : memref<5x32x50xf32, #tpu.memory_space<vmem>>, vector<1x32x50xf32>
      %122 = vector.shape_cast %121 : vector<1x32x50xf32> to vector<32x50xf32>
      %cst_104 = arith.constant dense<0.000000e+00> : vector<183x50xf32>
      %123 = tpu.matmul %120, %122, %cst_104 {dimension_numbers = #tpu.dot_dimension_numbers<[1], [0], [0], [1], [0, 0, 1, 1], [], []>} : vector<183x32xf32>, vector<32x50xf32>, vector<183x50xf32> -> vector<183x50xf32>
      %124 = arith.addf %119, %123 : vector<183x50xf32>
      %c195 = arith.constant 195 : index
      %c0_105 = arith.constant 0 : index
      %125 = vector.load %arg13[%c195, %c0_105] : memref<379x32xf32, #tpu.memory_space<vmem>>, vector<183x32xf32>
      %c3_106 = arith.constant 3 : index
      %c0_107 = arith.constant 0 : index
      %c0_108 = arith.constant 0 : index
      %126 = vector.load %arg4[%c3_106, %c0_107, %c0_108] : memref<5x32x50xf32, #tpu.memory_space<vmem>>, vector<1x32x50xf32>
      %127 = vector.shape_cast %126 : vector<1x32x50xf32> to vector<32x50xf32>
      %cst_109 = arith.constant dense<0.000000e+00> : vector<183x50xf32>
      %128 = tpu.matmul %125, %127, %cst_109 {dimension_numbers = #tpu.dot_dimension_numbers<[1], [0], [0], [1], [0, 0, 1, 1], [], []>} : vector<183x32xf32>, vector<32x50xf32>, vector<183x50xf32> -> vector<183x50xf32>
      %129 = arith.addf %124, %128 : vector<183x50xf32>
      %c196 = arith.constant 196 : index
      %c0_110 = arith.constant 0 : index
      %130 = vector.load %arg13[%c196, %c0_110] : memref<379x32xf32, #tpu.memory_space<vmem>>, vector<183x32xf32>
      %c4_111 = arith.constant 4 : index
      %c0_112 = arith.constant 0 : index
      %c0_113 = arith.constant 0 : index
      %131 = vector.load %arg4[%c4_111, %c0_112, %c0_113] : memref<5x32x50xf32, #tpu.memory_space<vmem>>, vector<1x32x50xf32>
      %132 = vector.shape_cast %131 : vector<1x32x50xf32> to vector<32x50xf32>
      %cst_114 = arith.constant dense<0.000000e+00> : vector<183x50xf32>
      %133 = tpu.matmul %130, %132, %cst_114 {dimension_numbers = #tpu.dot_dimension_numbers<[1], [0], [0], [1], [0, 0, 1, 1], [], []>} : vector<183x32xf32>, vector<32x50xf32>, vector<183x50xf32> -> vector<183x50xf32>
      %134 = arith.addf %129, %133 : vector<183x50xf32>
      %c0_115 = arith.constant 0 : index
      %c0_116 = arith.constant 0 : index
      %135 = vector.load %arg5[%c0_115, %c0_116] : memref<1x50xf32, #tpu.memory_space<vmem>>, vector<1x50xf32>
      %136 = vector.broadcast %135 : vector<1x50xf32> to vector<183x50xf32>
      %137 = arith.addf %134, %136 : vector<183x50xf32>
      %cst_117 = arith.constant 0.000000e+00 : f32
      %138 = vector.broadcast %cst_117 : f32 to vector<183x50xf32>
      %139 = arith.cmpf ogt, %137, %138 : vector<183x50xf32>
      %140 = math.exp %137 : vector<183x50xf32>
      %cst_118 = arith.constant 1.000000e+00 : f32
      %141 = vector.broadcast %cst_118 : f32 to vector<183x50xf32>
      %142 = arith.subf %140, %141 : vector<183x50xf32>
      %143 = arith.select %139, %137, %142 : vector<183x50xi1>, vector<183x50xf32>
      %c192_119 = arith.constant 192 : index
      %c0_120 = arith.constant 0 : index
      %144 = vector.load %arg16[%c192_119, %c0_120] : memref<375x100xf32, #tpu.memory_space<vmem>>, vector<183x50xf32>
      tpu.vector_store %arg16[%c192_119, %c0_120], %143 {strides = array<i32>} : memref<375x100xf32, #tpu.memory_space<vmem>>, vector<183x50xf32>,
      %c0_121 = arith.constant 0 : index
      %c0_122 = arith.constant 0 : index
      %145 = tpu.strided_load %arg16[%c0_121, %c0_122] {strides = array<i32: 2, 1>} : memref<375x100xf32, #tpu.memory_space<vmem>>, vector<187x50xf32>
      %c1_123 = arith.constant 1 : index
      %c0_124 = arith.constant 0 : index
      %146 = tpu.strided_load %arg16[%c1_123, %c0_124] {strides = array<i32: 2, 1>} : memref<375x100xf32, #tpu.memory_space<vmem>>, vector<187x50xf32>
      %147 = arith.addf %145, %146 : vector<187x50xf32>
      %cst_125 = arith.constant 5.000000e-01 : f32
      %148 = vector.broadcast %cst_125 : f32 to vector<187x50xf32>
      %149 = arith.mulf %148, %147 : vector<187x50xf32>
      %c2_126 = arith.constant 2 : index
      %c0_127 = arith.constant 0 : index
      %150 = vector.load %arg14[%c2_126, %c0_127] : memref<191x56xf32, #tpu.memory_space<vmem>>, vector<187x50xf32>
      tpu.vector_store %arg14[%c2_126, %c0_127], %149 {strides = array<i32>} : memref<191x56xf32, #tpu.memory_space<vmem>>, vector<187x50xf32>,
      %cst_128 = arith.constant 0.000000e+00 : f32
      %151 = vector.broadcast %cst_128 : f32 to vector<187x100xf32>
      %c0_129 = arith.constant 0 : index
      %c0_130 = arith.constant 0 : index
      %152 = vector.load %arg14[%c0_129, %c0_130] : memref<191x56xf32, #tpu.memory_space<vmem>>, vector<187x56xf32>
      %c0_131 = arith.constant 0 : index
      %c0_132 = arith.constant 0 : index
      %c0_133 = arith.constant 0 : index
      %153 = vector.load %arg6[%c0_131, %c0_132, %c0_133] : memref<5x56x100xf32, #tpu.memory_space<vmem>>, vector<1x56x100xf32>
      %154 = vector.shape_cast %153 : vector<1x56x100xf32> to vector<56x100xf32>
      %cst_134 = arith.constant dense<0.000000e+00> : vector<187x100xf32>
      %155 = tpu.matmul %152, %154, %cst_134 {dimension_numbers = #tpu.dot_dimension_numbers<[1], [0], [0], [1], [0, 0, 1, 1], [], []>} : vector<187x56xf32>, vector<56x100xf32>, vector<187x100xf32> -> vector<187x100xf32>
      %156 = arith.addf %151, %155 : vector<187x100xf32>
      %c1_135 = arith.constant 1 : index
      %c0_136 = arith.constant 0 : index
      %157 = vector.load %arg14[%c1_135, %c0_136] : memref<191x56xf32, #tpu.memory_space<vmem>>, vector<187x56xf32>
      %c1_137 = arith.constant 1 : index
      %c0_138 = arith.constant 0 : index
      %c0_139 = arith.constant 0 : index
      %158 = vector.load %arg6[%c1_137, %c0_138, %c0_139] : memref<5x56x100xf32, #tpu.memory_space<vmem>>, vector<1x56x100xf32>
      %159 = vector.shape_cast %158 : vector<1x56x100xf32> to vector<56x100xf32>
      %cst_140 = arith.constant dense<0.000000e+00> : vector<187x100xf32>
      %160 = tpu.matmul %157, %159, %cst_140 {dimension_numbers = #tpu.dot_dimension_numbers<[1], [0], [0], [1], [0, 0, 1, 1], [], []>} : vector<187x56xf32>, vector<56x100xf32>, vector<187x100xf32> -> vector<187x100xf32>
      %161 = arith.addf %156, %160 : vector<187x100xf32>
      %c2_141 = arith.constant 2 : index
      %c0_142 = arith.constant 0 : index
      %162 = vector.load %arg14[%c2_141, %c0_142] : memref<191x56xf32, #tpu.memory_space<vmem>>, vector<187x56xf32>
      %c2_143 = arith.constant 2 : index
      %c0_144 = arith.constant 0 : index
      %c0_145 = arith.constant 0 : index
      %163 = vector.load %arg6[%c2_143, %c0_144, %c0_145] : memref<5x56x100xf32, #tpu.memory_space<vmem>>, vector<1x56x100xf32>
      %164 = vector.shape_cast %163 : vector<1x56x100xf32> to vector<56x100xf32>
      %cst_146 = arith.constant dense<0.000000e+00> : vector<187x100xf32>
      %165 = tpu.matmul %162, %164, %cst_146 {dimension_numbers = #tpu.dot_dimension_numbers<[1], [0], [0], [1], [0, 0, 1, 1], [], []>} : vector<187x56xf32>, vector<56x100xf32>, vector<187x100xf32> -> vector<187x100xf32>
      %166 = arith.addf %161, %165 : vector<187x100xf32>
      %c3_147 = arith.constant 3 : index
      %c0_148 = arith.constant 0 : index
      %167 = vector.load %arg14[%c3_147, %c0_148] : memref<191x56xf32, #tpu.memory_space<vmem>>, vector<187x56xf32>
      %c3_149 = arith.constant 3 : index
      %c0_150 = arith.constant 0 : index
      %c0_151 = arith.constant 0 : index
      %168 = vector.load %arg6[%c3_149, %c0_150, %c0_151] : memref<5x56x100xf32, #tpu.memory_space<vmem>>, vector<1x56x100xf32>
      %169 = vector.shape_cast %168 : vector<1x56x100xf32> to vector<56x100xf32>
      %cst_152 = arith.constant dense<0.000000e+00> : vector<187x100xf32>
      %170 = tpu.matmul %167, %169, %cst_152 {dimension_numbers = #tpu.dot_dimension_numbers<[1], [0], [0], [1], [0, 0, 1, 1], [], []>} : vector<187x56xf32>, vector<56x100xf32>, vector<187x100xf32> -> vector<187x100xf32>
      %171 = arith.addf %166, %170 : vector<187x100xf32>
      %c4_153 = arith.constant 4 : index
      %c0_154 = arith.constant 0 : index
      %172 = vector.load %arg14[%c4_153, %c0_154] : memref<191x56xf32, #tpu.memory_space<vmem>>, vector<187x56xf32>
      %c4_155 = arith.constant 4 : index
      %c0_156 = arith.constant 0 : index
      %c0_157 = arith.constant 0 : index
      %173 = vector.load %arg6[%c4_155, %c0_156, %c0_157] : memref<5x56x100xf32, #tpu.memory_space<vmem>>, vector<1x56x100xf32>
      %174 = vector.shape_cast %173 : vector<1x56x100xf32> to vector<56x100xf32>
      %cst_158 = arith.constant dense<0.000000e+00> : vector<187x100xf32>
      %175 = tpu.matmul %172, %174, %cst_158 {dimension_numbers = #tpu.dot_dimension_numbers<[1], [0], [0], [1], [0, 0, 1, 1], [], []>} : vector<187x56xf32>, vector<56x100xf32>, vector<187x100xf32> -> vector<187x100xf32>
      %176 = arith.addf %171, %175 : vector<187x100xf32>
      %c0_159 = arith.constant 0 : index
      %c0_160 = arith.constant 0 : index
      %177 = vector.load %arg7[%c0_159, %c0_160] : memref<1x100xf32, #tpu.memory_space<vmem>>, vector<1x100xf32>
      %178 = vector.broadcast %177 : vector<1x100xf32> to vector<187x100xf32>
      %179 = arith.addf %176, %178 : vector<187x100xf32>
      %cst_161 = arith.constant 0.000000e+00 : f32
      %180 = vector.broadcast %cst_161 : f32 to vector<187x100xf32>
      %181 = arith.cmpf ogt, %179, %180 : vector<187x100xf32>
      %182 = math.exp %179 : vector<187x100xf32>
      %cst_162 = arith.constant 1.000000e+00 : f32
      %183 = vector.broadcast %cst_162 : f32 to vector<187x100xf32>
      %184 = arith.subf %182, %183 : vector<187x100xf32>
      %185 = arith.select %181, %179, %184 : vector<187x100xi1>, vector<187x100xf32>
      %c0_163 = arith.constant 0 : index
      %c0_164 = arith.constant 0 : index
      %186 = vector.load %arg16[%c0_163, %c0_164] : memref<375x100xf32, #tpu.memory_space<vmem>>, vector<187x100xf32>
      tpu.vector_store %arg16[%c0_163, %c0_164], %185 {strides = array<i32>} : memref<375x100xf32, #tpu.memory_space<vmem>>, vector<187x100xf32>,
      %c0_165 = arith.constant 0 : index
      %c0_166 = arith.constant 0 : index
      %187 = tpu.strided_load %arg16[%c0_165, %c0_166] {strides = array<i32: 2, 1>} : memref<375x100xf32, #tpu.memory_space<vmem>>, vector<93x100xf32>
      %c1_167 = arith.constant 1 : index
      %c0_168 = arith.constant 0 : index
      %188 = tpu.strided_load %arg16[%c1_167, %c0_168] {strides = array<i32: 2, 1>} : memref<375x100xf32, #tpu.memory_space<vmem>>, vector<93x100xf32>
      %189 = arith.addf %187, %188 : vector<93x100xf32>
      %cst_169 = arith.constant 5.000000e-01 : f32
      %190 = vector.broadcast %cst_169 : f32 to vector<93x100xf32>
      %191 = arith.mulf %190, %189 : vector<93x100xf32>
      %c2_170 = arith.constant 2 : index
      %c0_171 = arith.constant 0 : index
      %192 = vector.load %arg15[%c2_170, %c0_171] : memref<97x104xf32, #tpu.memory_space<vmem>>, vector<93x100xf32>
      tpu.vector_store %arg15[%c2_170, %c0_171], %191 {strides = array<i32>} : memref<97x104xf32, #tpu.memory_space<vmem>>, vector<93x100xf32>,
      %cst_172 = arith.constant 0.000000e+00 : f32
      %193 = vector.broadcast %cst_172 : f32 to vector<93x200xf32>
      %c0_173 = arith.constant 0 : index
      %c0_174 = arith.constant 0 : index
      %194 = vector.load %arg15[%c0_173, %c0_174] : memref<97x104xf32, #tpu.memory_space<vmem>>, vector<93x104xf32>
      %c0_175 = arith.constant 0 : index
      %c0_176 = arith.constant 0 : index
      %c0_177 = arith.constant 0 : index
      %195 = vector.load %arg8[%c0_175, %c0_176, %c0_177] : memref<5x104x200xf32, #tpu.memory_space<vmem>>, vector<1x104x200xf32>
      %196 = vector.shape_cast %195 : vector<1x104x200xf32> to vector<104x200xf32>
      %cst_178 = arith.constant dense<0.000000e+00> : vector<93x200xf32>
      %197 = tpu.matmul %194, %196, %cst_178 {dimension_numbers = #tpu.dot_dimension_numbers<[1], [0], [0], [1], [0, 0, 1, 1], [], []>} : vector<93x104xf32>, vector<104x200xf32>, vector<93x200xf32> -> vector<93x200xf32>
      %198 = arith.addf %193, %197 : vector<93x200xf32>
      %c1_179 = arith.constant 1 : index
      %c0_180 = arith.constant 0 : index
      %199 = vector.load %arg15[%c1_179, %c0_180] : memref<97x104xf32, #tpu.memory_space<vmem>>, vector<93x104xf32>
      %c1_181 = arith.constant 1 : index
      %c0_182 = arith.constant 0 : index
      %c0_183 = arith.constant 0 : index
      %200 = vector.load %arg8[%c1_181, %c0_182, %c0_183] : memref<5x104x200xf32, #tpu.memory_space<vmem>>, vector<1x104x200xf32>
      %201 = vector.shape_cast %200 : vector<1x104x200xf32> to vector<104x200xf32>
      %cst_184 = arith.constant dense<0.000000e+00> : vector<93x200xf32>
      %202 = tpu.matmul %199, %201, %cst_184 {dimension_numbers = #tpu.dot_dimension_numbers<[1], [0], [0], [1], [0, 0, 1, 1], [], []>} : vector<93x104xf32>, vector<104x200xf32>, vector<93x200xf32> -> vector<93x200xf32>
      %203 = arith.addf %198, %202 : vector<93x200xf32>
      %c2_185 = arith.constant 2 : index
      %c0_186 = arith.constant 0 : index
      %204 = vector.load %arg15[%c2_185, %c0_186] : memref<97x104xf32, #tpu.memory_space<vmem>>, vector<93x104xf32>
      %c2_187 = arith.constant 2 : index
      %c0_188 = arith.constant 0 : index
      %c0_189 = arith.constant 0 : index
      %205 = vector.load %arg8[%c2_187, %c0_188, %c0_189] : memref<5x104x200xf32, #tpu.memory_space<vmem>>, vector<1x104x200xf32>
      %206 = vector.shape_cast %205 : vector<1x104x200xf32> to vector<104x200xf32>
      %cst_190 = arith.constant dense<0.000000e+00> : vector<93x200xf32>
      %207 = tpu.matmul %204, %206, %cst_190 {dimension_numbers = #tpu.dot_dimension_numbers<[1], [0], [0], [1], [0, 0, 1, 1], [], []>} : vector<93x104xf32>, vector<104x200xf32>, vector<93x200xf32> -> vector<93x200xf32>
      %208 = arith.addf %203, %207 : vector<93x200xf32>
      %c3_191 = arith.constant 3 : index
      %c0_192 = arith.constant 0 : index
      %209 = vector.load %arg15[%c3_191, %c0_192] : memref<97x104xf32, #tpu.memory_space<vmem>>, vector<93x104xf32>
      %c3_193 = arith.constant 3 : index
      %c0_194 = arith.constant 0 : index
      %c0_195 = arith.constant 0 : index
      %210 = vector.load %arg8[%c3_193, %c0_194, %c0_195] : memref<5x104x200xf32, #tpu.memory_space<vmem>>, vector<1x104x200xf32>
      %211 = vector.shape_cast %210 : vector<1x104x200xf32> to vector<104x200xf32>
      %cst_196 = arith.constant dense<0.000000e+00> : vector<93x200xf32>
      %212 = tpu.matmul %209, %211, %cst_196 {dimension_numbers = #tpu.dot_dimension_numbers<[1], [0], [0], [1], [0, 0, 1, 1], [], []>} : vector<93x104xf32>, vector<104x200xf32>, vector<93x200xf32> -> vector<93x200xf32>
      %213 = arith.addf %208, %212 : vector<93x200xf32>
      %c4_197 = arith.constant 4 : index
      %c0_198 = arith.constant 0 : index
      %214 = vector.load %arg15[%c4_197, %c0_198] : memref<97x104xf32, #tpu.memory_space<vmem>>, vector<93x104xf32>
      %c4_199 = arith.constant 4 : index
      %c0_200 = arith.constant 0 : index
      %c0_201 = arith.constant 0 : index
      %215 = vector.load %arg8[%c4_199, %c0_200, %c0_201] : memref<5x104x200xf32, #tpu.memory_space<vmem>>, vector<1x104x200xf32>
      %216 = vector.shape_cast %215 : vector<1x104x200xf32> to vector<104x200xf32>
      %cst_202 = arith.constant dense<0.000000e+00> : vector<93x200xf32>
      %217 = tpu.matmul %214, %216, %cst_202 {dimension_numbers = #tpu.dot_dimension_numbers<[1], [0], [0], [1], [0, 0, 1, 1], [], []>} : vector<93x104xf32>, vector<104x200xf32>, vector<93x200xf32> -> vector<93x200xf32>
      %218 = arith.addf %213, %217 : vector<93x200xf32>
      %c0_203 = arith.constant 0 : index
      %c0_204 = arith.constant 0 : index
      %219 = vector.load %arg9[%c0_203, %c0_204] : memref<1x200xf32, #tpu.memory_space<vmem>>, vector<1x200xf32>
      %220 = vector.broadcast %219 : vector<1x200xf32> to vector<93x200xf32>
      %221 = arith.addf %218, %220 : vector<93x200xf32>
      %cst_205 = arith.constant 0.000000e+00 : f32
      %222 = vector.broadcast %cst_205 : f32 to vector<93x200xf32>
      %223 = arith.cmpf ogt, %221, %222 : vector<93x200xf32>
      %224 = math.exp %221 : vector<93x200xf32>
      %cst_206 = arith.constant 1.000000e+00 : f32
      %225 = vector.broadcast %cst_206 : f32 to vector<93x200xf32>
      %226 = arith.subf %224, %225 : vector<93x200xf32>
      %227 = arith.select %223, %221, %226 : vector<93x200xi1>, vector<93x200xf32>
      %228 = vector.extract_strided_slice %227 {offsets = [0, 0], sizes = [92, 200], strides = [1, 1]} : vector<93x200xf32> to vector<92x200xf32>
      %c0_207 = arith.constant 0 : index
      %c0_208 = arith.constant 0 : index
      %c0_209 = arith.constant 0 : index
      %229 = vector.load %arg10[%c0_207, %c0_208, %c0_209] : memref<2x92x200xf32, #tpu.memory_space<vmem>>, vector<1x92x200xf32>
      %230 = vector.shape_cast %229 : vector<1x92x200xf32> to vector<92x200xf32>
      %231 = arith.mulf %228, %230 : vector<92x200xf32>
      %cst_210 = arith.constant dense<0.000000e+00> : vector<92xf32>
      %232 = vector.multi_reduction <add>, %231, %cst_210 [1] : vector<92x200xf32> to vector<92xf32>
      %233 = vector.shape_cast %232 : vector<92xf32> to vector<92x1xf32>
      %cst_211 = arith.constant dense<0.000000e+00> : vector<1xf32>
      %234 = vector.multi_reduction <add>, %233, %cst_211 [0] : vector<92x1xf32> to vector<1xf32>
      %235 = vector.shape_cast %234 : vector<1xf32> to vector<1x1xf32>
      %c1_212 = arith.constant 1 : index
      %c0_213 = arith.constant 0 : index
      %c0_214 = arith.constant 0 : index
      %236 = vector.load %arg10[%c1_212, %c0_213, %c0_214] : memref<2x92x200xf32, #tpu.memory_space<vmem>>, vector<1x92x200xf32>
      %237 = vector.shape_cast %236 : vector<1x92x200xf32> to vector<92x200xf32>
      %238 = arith.mulf %228, %237 : vector<92x200xf32>
      %cst_215 = arith.constant dense<0.000000e+00> : vector<92xf32>
      %239 = vector.multi_reduction <add>, %238, %cst_215 [1] : vector<92x200xf32> to vector<92xf32>
      %240 = vector.shape_cast %239 : vector<92xf32> to vector<92x1xf32>
      %cst_216 = arith.constant dense<0.000000e+00> : vector<1xf32>
      %241 = vector.multi_reduction <add>, %240, %cst_216 [0] : vector<92x1xf32> to vector<1xf32>
      %242 = vector.shape_cast %241 : vector<1xf32> to vector<1x1xf32>
      %243 = tpu.concatenate %235, %242 in 1 : vector<1x1xf32>, vector<1x1xf32> -> vector<1x2xf32>
      %c0_217 = arith.constant 0 : index
      %c0_218 = arith.constant 0 : index
      %244 = vector.load %arg11[%c0_217, %c0_218] : memref<1x2xf32, #tpu.memory_space<vmem>>, vector<1x2xf32>
      %245 = arith.addf %243, %244 : vector<1x2xf32>
      %246 = arith.index_cast %8 : i32 to index
      %c0_219 = arith.constant 0 : index
      %247 = vector.load %arg12[%246, %c0_219] : memref<8x2xf32, #tpu.memory_space<vmem>>, vector<1x2xf32>
      tpu.vector_store %arg12[%246, %c0_219], %245 {strides = array<i32>} : memref<8x2xf32, #tpu.memory_space<vmem>>, vector<1x2xf32>,
    }
    %c8_i32_7 = arith.constant 8 : i32
    return
  }
  func.func @transform_0(%arg0: i32) -> (i32, i32, i32, i32) {
    %c0_i32 = arith.constant 0 : i32
    %c0_i32_0 = arith.constant 0 : i32
    %c0_i32_1 = arith.constant 0 : i32
    %c0_i32_2 = arith.constant 0 : i32
    return %arg0, %c0_i32, %c0_i32_0, %c0_i32_1 : i32, i32, i32, i32
  }
  func.func @transform_1(%arg0: i32) -> (i32, i32) {
    %c0_i32 = arith.constant 0 : i32
    %c0_i32_0 = arith.constant 0 : i32
    %c0_i32_1 = arith.constant 0 : i32
    return %c0_i32, %c0_i32_0 : i32, i32
  }
  func.func @transform_2(%arg0: i32) -> (i32, i32) {
    %c0_i32 = arith.constant 0 : i32
    %c0_i32_0 = arith.constant 0 : i32
    %c0_i32_1 = arith.constant 0 : i32
    return %c0_i32, %c0_i32_0 : i32, i32
  }
  func.func @transform_3(%arg0: i32) -> (i32, i32, i32) {
    %c0_i32 = arith.constant 0 : i32
    %c0_i32_0 = arith.constant 0 : i32
    %c0_i32_1 = arith.constant 0 : i32
    %c0_i32_2 = arith.constant 0 : i32
    return %c0_i32, %c0_i32_0, %c0_i32_1 : i32, i32, i32
  }
  func.func @transform_4(%arg0: i32) -> (i32, i32) {
    %c0_i32 = arith.constant 0 : i32
    %c0_i32_0 = arith.constant 0 : i32
    %c0_i32_1 = arith.constant 0 : i32
    return %c0_i32, %c0_i32_0 : i32, i32
  }
  func.func @transform_5(%arg0: i32) -> (i32, i32, i32) {
    %c0_i32 = arith.constant 0 : i32
    %c0_i32_0 = arith.constant 0 : i32
    %c0_i32_1 = arith.constant 0 : i32
    %c0_i32_2 = arith.constant 0 : i32
    return %c0_i32, %c0_i32_0, %c0_i32_1 : i32, i32, i32
  }
  func.func @transform_6(%arg0: i32) -> (i32, i32) {
    %c0_i32 = arith.constant 0 : i32
    %c0_i32_0 = arith.constant 0 : i32
    %c0_i32_1 = arith.constant 0 : i32
    return %c0_i32, %c0_i32_0 : i32, i32
  }
  func.func @transform_7(%arg0: i32) -> (i32, i32, i32) {
    %c0_i32 = arith.constant 0 : i32
    %c0_i32_0 = arith.constant 0 : i32
    %c0_i32_1 = arith.constant 0 : i32
    %c0_i32_2 = arith.constant 0 : i32
    return %c0_i32, %c0_i32_0, %c0_i32_1 : i32, i32, i32
  }
  func.func @transform_8(%arg0: i32) -> (i32, i32) {
    %c0_i32 = arith.constant 0 : i32
    %c0_i32_0 = arith.constant 0 : i32
    %c0_i32_1 = arith.constant 0 : i32
    return %c0_i32, %c0_i32_0 : i32, i32
  }
  func.func @transform_9(%arg0: i32) -> (i32, i32, i32) {
    %c0_i32 = arith.constant 0 : i32
    %c0_i32_0 = arith.constant 0 : i32
    %c0_i32_1 = arith.constant 0 : i32
    %c0_i32_2 = arith.constant 0 : i32
    return %c0_i32, %c0_i32_0, %c0_i32_1 : i32, i32, i32
  }
  func.func @transform_10(%arg0: i32) -> (i32, i32) {
    %c0_i32 = arith.constant 0 : i32
    %c0_i32_0 = arith.constant 0 : i32
    %c0_i32_1 = arith.constant 0 : i32
    return %c0_i32, %c0_i32_0 : i32, i32
  }
  func.func @transform_11(%arg0: i32) -> (i32, i32) {
    %c0_i32 = arith.constant 0 : i32
    %c0_i32_0 = arith.constant 0 : i32
    return %arg0, %c0_i32 : i32, i32
  }
}

</mosaic_0001>

<llo_original>
// kernel: deepconvnet_forward.1
$region0: #{deepconvnet_forward.1}
  #allocation0 [shape = 'u32[]', space=smem, size = 0x4, offset = 0x4, fixed_abs, tag = 'smem constant byte address 0x4 - core index']
  #allocation1 [shape = 'u32[144,128]{1,0:T(1,128)}', space=vmem, size = 0x12000, scoped, tag = 'internal scratch']
  #allocation2 [shape = 'f32[379,32]{1,0:T(8,128)}', space=vmem, size = 0x30000, scoped, tag = 'scratch operand']
  #allocation3 [shape = 'f32[191,56]{1,0:T(8,128)}', space=vmem, size = 0x18000, scoped, tag = 'scratch operand']
  #allocation4 [shape = 'f32[97,104]{1,0:T(8,128)}', space=vmem, size = 0xd000, scoped, tag = 'scratch operand']
  #allocation5 [shape = 'f32[375,100]{1,0:T(8,128)}', space=vmem, size = 0x2f000, scoped, tag = 'scratch operand']
  %s0 = inlined_call_operand.vmem [shape: f32[16,2,375,16], index: 0, kind: input, shape index: {}]
  %s1 = inlined_call_operand.vmem [shape: f32[16,25], index: 1, kind: input, shape index: {}]
  %s2 = inlined_call_operand.vmem [shape: f32[1,25], index: 2, kind: input, shape index: {}]
  %s3 = inlined_call_operand.vmem [shape: f32[5,32,50], index: 3, kind: input, shape index: {}]
  %s4 = inlined_call_operand.vmem [shape: f32[1,50], index: 4, kind: input, shape index: {}]
  %s5 = inlined_call_operand.vmem [shape: f32[5,56,100], index: 5, kind: input, shape index: {}]
  %s6 = inlined_call_operand.vmem [shape: f32[1,100], index: 6, kind: input, shape index: {}]
  %s7 = inlined_call_operand.vmem [shape: f32[5,104,200], index: 7, kind: input, shape index: {}]
  %s8 = inlined_call_operand.vmem [shape: f32[1,200], index: 8, kind: input, shape index: {}]
  %s9 = inlined_call_operand.vmem [shape: f32[2,92,200], index: 9, kind: input, shape index: {}]
  %s10 = inlined_call_operand.vmem [shape: f32[1,2], index: 10, kind: input, shape index: {}]
  %s11 = inlined_call_operand.vmem [shape: f32[16,2], index: 11, kind: output, shape index: {}]
  %s12 = sld [smem:[#allocation0]]
  $region84: #{deepconvnet_forward.1} parent=0
    _
  %s14 = ssub.s32 1, %s12
  %s15 = scalar_select 0, %s14, %s12
  loop: start=0, step=1, limit=4
  $region2: #{deepconvnet_forward.1} parent=0 // loop_pre_header
    _
  $region3: #{deepconvnet_forward.1} parent=0 // loop_header
    %s17 = sphi 0, %s21
    %p18 = scmp.ge.s32.totalorder %s17, 4
    %s27 = sphi 0, %s29
    %s30 = sphi 0, %s27
    %s31 = sphi 0, %s30
    %s47 = sphi 0, %s31
    %s51 = sphi 0, %s51
    %s53 = sphi 0, %s51
    %s54 = sphi 0, %s53
    %s68 = sphi 0, %s54
    %s72 = sphi 0, %s72
    %s74 = sphi 0, %s72
    %s75 = sphi 0, %s74
    %s89 = sphi 0, %s75
    %s93 = sphi 0, %s93
    %s95 = sphi 0, %s93
    %s96 = sphi 0, %s95
    %s110 = sphi 0, %s96
    %s114 = sphi 0, %s114
    %s116 = sphi 0, %s114
    %s117 = sphi 0, %s116
    %s131 = sphi 0, %s117
    %s135 = sphi 0, %s135
    %s137 = sphi 0, %s135
    %s138 = sphi 0, %s137
    %s152 = sphi 0, %s138
    %s156 = sphi 0, %s156
    %s158 = sphi 0, %s156
    %s159 = sphi 0, %s158
    %s173 = sphi 0, %s159
    %s177 = sphi 0, %s177
    %s179 = sphi 0, %s177
    %s180 = sphi 0, %s179
    %s194 = sphi 0, %s180
    %s198 = sphi 0, %s198
    %s200 = sphi 0, %s198
    %s201 = sphi 0, %s200
    %s215 = sphi 0, %s201
    %s219 = sphi 0, %s219
    %s221 = sphi 0, %s219
    %s222 = sphi 0, %s221
    %s236 = sphi 0, %s222
    %s240 = sphi 0, %s240
    %s242 = sphi 0, %s240
    %s243 = sphi 0, %s242
    %s257 = sphi 0, %s243
    %s263 = sphi 0, %s265
    %s266 = sphi 0, %s263
    %s267 = sphi 0, %s266
    %s283 = sphi 0, %s267
  $region4: #{deepconvnet_forward.1} parent=0 // loop_header_branch
    %20 = sbr.rel (%p18) target = $region8
  $region5: #{deepconvnet_forward.1} parent=0 // loop_body
    %s22 = ssub.s32 %s17, 1
    %s23 = ssub.s32 %s17, 2
    %s24 = sadd.s32 %s17, 1
    %s25 = ssub.s32 %s17, %s24
    %p26 = scmp.eq.s32.totalorder %s25, 0
    %s28 = sadd.s32 %s27, 1
    %s29 = scalar_select %p26, %s27, %s28
    %p32 = pneg %p26
    %p33 = scmp.eq.s32.totalorder %s17, 1
    %p34 = por %p32, %p33
    %p35 = scmp.ne.s32.totalorder %s27, %s30
    %p36 = scmp.eq.s32.totalorder %s17, 0
    %p37 = por %p35, %p36
    %p38 = scmp.ne.s32.totalorder %s27, %s30
    %p39 = scmp.eq.s32.totalorder %s22, 1
    %p40 = por %p38, %p39
    %p41 = scmp.ne.s32.totalorder %s30, %s31
    %p42 = scmp.eq.s32.totalorder %s22, 0
    %p43 = por %p41, %p42
    %p44 = scmp.ne.s32.totalorder %s30, %s31
    %p45 = scmp.eq.s32.totalorder %s23, 1
    %p46 = por %p44, %p45
    %p48 = scmp.ne.s32.totalorder %s31, %s47
    %p49 = scmp.eq.s32.totalorder %s23, 0
    %p50 = por %p48, %p49
    %s52 = sadd.s32 %s51, 1
    %p55 = scmp.eq.s32.totalorder %s17, 1
    %p56 = scmp.ne.s32.totalorder %s51, %s53
    %p57 = scmp.eq.s32.totalorder %s17, 0
    %p58 = por %p56, %p57
    %p59 = scmp.ne.s32.totalorder %s51, %s53
    %p60 = scmp.eq.s32.totalorder %s22, 1
    %p61 = por %p59, %p60
    %p62 = scmp.ne.s32.totalorder %s53, %s54
    %p63 = scmp.eq.s32.totalorder %s22, 0
    %p64 = por %p62, %p63
    %p65 = scmp.ne.s32.totalorder %s53, %s54
    %p66 = scmp.eq.s32.totalorder %s23, 1
    %p67 = por %p65, %p66
    %p69 = scmp.ne.s32.totalorder %s54, %s68
    %p70 = scmp.eq.s32.totalorder %s23, 0
    %p71 = por %p69, %p70
    %s73 = sadd.s32 %s72, 1
    %p76 = scmp.eq.s32.totalorder %s17, 1
    %p77 = scmp.ne.s32.totalorder %s72, %s74
    %p78 = scmp.eq.s32.totalorder %s17, 0
    %p79 = por %p77, %p78
    %p80 = scmp.ne.s32.totalorder %s72, %s74
    %p81 = scmp.eq.s32.totalorder %s22, 1
    %p82 = por %p80, %p81
    %p83 = scmp.ne.s32.totalorder %s74, %s75
    %p84 = scmp.eq.s32.totalorder %s22, 0
    %p85 = por %p83, %p84
    %p86 = scmp.ne.s32.totalorder %s74, %s75
    %p87 = scmp.eq.s32.totalorder %s23, 1
    %p88 = por %p86, %p87
    %p90 = scmp.ne.s32.totalorder %s75, %s89
    %p91 = scmp.eq.s32.totalorder %s23, 0
    %p92 = por %p90, %p91
    %s94 = sadd.s32 %s93, 1
    %p97 = scmp.eq.s32.totalorder %s17, 1
    %p98 = scmp.ne.s32.totalorder %s93, %s95
    %p99 = scmp.eq.s32.totalorder %s17, 0
    %p100 = por %p98, %p99
    %p101 = scmp.ne.s32.totalorder %s93, %s95
    %p102 = scmp.eq.s32.totalorder %s22, 1
    %p103 = por %p101, %p102
    %p104 = scmp.ne.s32.totalorder %s95, %s96
    %p105 = scmp.eq.s32.totalorder %s22, 0
    %p106 = por %p104, %p105
    %p107 = scmp.ne.s32.totalorder %s95, %s96
    %p108 = scmp.eq.s32.totalorder %s23, 1
    %p109 = por %p107, %p108
    %p111 = scmp.ne.s32.totalorder %s96, %s110
    %p112 = scmp.eq.s32.totalorder %s23, 0
    %p113 = por %p111, %p112
    %s115 = sadd.s32 %s114, 1
    %p118 = scmp.eq.s32.totalorder %s17, 1
    %p119 = scmp.ne.s32.totalorder %s114, %s116
    %p120 = scmp.eq.s32.totalorder %s17, 0
    %p121 = por %p119, %p120
    %p122 = scmp.ne.s32.totalorder %s114, %s116
    %p123 = scmp.eq.s32.totalorder %s22, 1
    %p124 = por %p122, %p123
    %p125 = scmp.ne.s32.totalorder %s116, %s117
    %p126 = scmp.eq.s32.totalorder %s22, 0
    %p127 = por %p125, %p126
    %p128 = scmp.ne.s32.totalorder %s116, %s117
    %p129 = scmp.eq.s32.totalorder %s23, 1
    %p130 = por %p128, %p129
    %p132 = scmp.ne.s32.totalorder %s117, %s131
    %p133 = scmp.eq.s32.totalorder %s23, 0
    %p134 = por %p132, %p133
    %s136 = sadd.s32 %s135, 1
    %p139 = scmp.eq.s32.totalorder %s17, 1
    %p140 = scmp.ne.s32.totalorder %s135, %s137
    %p141 = scmp.eq.s32.totalorder %s17, 0
    %p142 = por %p140, %p141
    %p143 = scmp.ne.s32.totalorder %s135, %s137
    %p144 = scmp.eq.s32.totalorder %s22, 1
    %p145 = por %p143, %p144
    %p146 = scmp.ne.s32.totalorder %s137, %s138
    %p147 = scmp.eq.s32.totalorder %s22, 0
    %p148 = por %p146, %p147
    %p149 = scmp.ne.s32.totalorder %s137, %s138
    %p150 = scmp.eq.s32.totalorder %s23, 1
    %p151 = por %p149, %p150
    %p153 = scmp.ne.s32.totalorder %s138, %s152
    %p154 = scmp.eq.s32.totalorder %s23, 0
    %p155 = por %p153, %p154
    %s157 = sadd.s32 %s156, 1
    %p160 = scmp.eq.s32.totalorder %s17, 1
    %p161 = scmp.ne.s32.totalorder %s156, %s158
    %p162 = scmp.eq.s32.totalorder %s17, 0
    %p163 = por %p161, %p162
    %p164 = scmp.ne.s32.totalorder %s156, %s158
    %p165 = scmp.eq.s32.totalorder %s22, 1
    %p166 = por %p164, %p165
    %p167 = scmp.ne.s32.totalorder %s158, %s159
    %p168 = scmp.eq.s32.totalorder %s22, 0
    %p169 = por %p167, %p168
    %p170 = scmp.ne.s32.totalorder %s158, %s159
    %p171 = scmp.eq.s32.totalorder %s23, 1
    %p172 = por %p170, %p171
    %p174 = scmp.ne.s32.totalorder %s159, %s173
    %p175 = scmp.eq.s32.totalorder %s23, 0
    %p176 = por %p174, %p175
    %s178 = sadd.s32 %s177, 1
    %p181 = scmp.eq.s32.totalorder %s17, 1
    %p182 = scmp.ne.s32.totalorder %s177, %s179
    %p183 = scmp.eq.s32.totalorder %s17, 0
    %p184 = por %p182, %p183
    %p185 = scmp.ne.s32.totalorder %s177, %s179
    %p186 = scmp.eq.s32.totalorder %s22, 1
    %p187 = por %p185, %p186
    %p188 = scmp.ne.s32.totalorder %s179, %s180
    %p189 = scmp.eq.s32.totalorder %s22, 0
    %p190 = por %p188, %p189
    %p191 = scmp.ne.s32.totalorder %s179, %s180
    %p192 = scmp.eq.s32.totalorder %s23, 1
    %p193 = por %p191, %p192
    %p195 = scmp.ne.s32.totalorder %s180, %s194
    %p196 = scmp.eq.s32.totalorder %s23, 0
    %p197 = por %p195, %p196
    %s199 = sadd.s32 %s198, 1
    %p202 = scmp.eq.s32.totalorder %s17, 1
    %p203 = scmp.ne.s32.totalorder %s198, %s200
    %p204 = scmp.eq.s32.totalorder %s17, 0
    %p205 = por %p203, %p204
    %p206 = scmp.ne.s32.totalorder %s198, %s200
    %p207 = scmp.eq.s32.totalorder %s22, 1
    %p208 = por %p206, %p207
    %p209 = scmp.ne.s32.totalorder %s200, %s201
    %p210 = scmp.eq.s32.totalorder %s22, 0
    %p211 = por %p209, %p210
    %p212 = scmp.ne.s32.totalorder %s200, %s201
    %p213 = scmp.eq.s32.totalorder %s23, 1
    %p214 = por %p212, %p213
    %p216 = scmp.ne.s32.totalorder %s201, %s215
    %p217 = scmp.eq.s32.totalorder %s23, 0
    %p218 = por %p216, %p217
    %s220 = sadd.s32 %s219, 1
    %p223 = scmp.eq.s32.totalorder %s17, 1
    %p224 = scmp.ne.s32.totalorder %s219, %s221
    %p225 = scmp.eq.s32.totalorder %s17, 0
    %p226 = por %p224, %p225
    %p227 = scmp.ne.s32.totalorder %s219, %s221
    %p228 = scmp.eq.s32.totalorder %s22, 1
    %p229 = por %p227, %p228
    %p230 = scmp.ne.s32.totalorder %s221, %s222
    %p231 = scmp.eq.s32.totalorder %s22, 0
    %p232 = por %p230, %p231
    %p233 = scmp.ne.s32.totalorder %s221, %s222
    %p234 = scmp.eq.s32.totalorder %s23, 1
    %p235 = por %p233, %p234
    %p237 = scmp.ne.s32.totalorder %s222, %s236
    %p238 = scmp.eq.s32.totalorder %s23, 0
    %p239 = por %p237, %p238
    %s241 = sadd.s32 %s240, 1
    %p244 = scmp.eq.s32.totalorder %s17, 1
    %p245 = scmp.ne.s32.totalorder %s240, %s242
    %p246 = scmp.eq.s32.totalorder %s17, 0
    %p247 = por %p245, %p246
    %p248 = scmp.ne.s32.totalorder %s240, %s242
    %p249 = scmp.eq.s32.totalorder %s22, 1
    %p250 = por %p248, %p249
    %p251 = scmp.ne.s32.totalorder %s242, %s243
    %p252 = scmp.eq.s32.totalorder %s22, 0
    %p253 = por %p251, %p252
    %p254 = scmp.ne.s32.totalorder %s242, %s243
    %p255 = scmp.eq.s32.totalorder %s23, 1
    %p256 = por %p254, %p255
    %p258 = scmp.ne.s32.totalorder %s243, %s257
    %p259 = scmp.eq.s32.totalorder %s23, 0
    %p260 = por %p258, %p259
    %s261 = ssub.s32 %s17, %s24
    %p262 = scmp.eq.s32.totalorder %s261, 0
    %s264 = sadd.s32 %s263, 1
    %s265 = scalar_select %p262, %s263, %s264
    %p268 = pneg %p262
    %p269 = scmp.eq.s32.totalorder %s17, 1
    %p270 = por %p268, %p269
    %p271 = scmp.ne.s32.totalorder %s263, %s266
    %p272 = scmp.eq.s32.totalorder %s17, 0
    %p273 = por %p271, %p272
    %p274 = scmp.ne.s32.totalorder %s263, %s266
    %p275 = scmp.eq.s32.totalorder %s22, 1
    %p276 = por %p274, %p275
    %p277 = scmp.ne.s32.totalorder %s266, %s267
    %p278 = scmp.eq.s32.totalorder %s22, 0
    %p279 = por %p277, %p278
    %p280 = scmp.ne.s32.totalorder %s266, %s267
    %p281 = scmp.eq.s32.totalorder %s23, 1
    %p282 = por %p280, %p281
    %p284 = scmp.ne.s32.totalorder %s267, %s283
    %p285 = scmp.eq.s32.totalorder %s23, 0
    %p286 = por %p284, %p285
    %p287 = scmp.le.s32.totalorder 1, %s17
    %p288 = scmp.lt.s32.totalorder %s17, 3
    %p289 = pnand %p287, %p288
    %p290 = pneg %p289
    // Predicated region
    $region9: #{deepconvnet_forward.1} parent=5 // pred_check
      _
    $region10: #{deepconvnet_forward.1} parent=5 // pred_check_branch
      %292 = sbr.rel (%p289) target = $region12
    $region11: #{deepconvnet_forward.1} parent=5 // pred_region
      %s293 = ssub.s32 %s17, 1
      // Predicated region
      $region13: #{deepconvnet_forward.1} parent=11 // pred_check
        %p294 = pneg %p64
      $region14: #{deepconvnet_forward.1} parent=11 // pred_check_branch
        %296 = sbr.rel (%p294) target = $region16
      $region15: #{deepconvnet_forward.1} parent=11 // pred_region
        _
      $region16: #{deepconvnet_forward.1} parent=11 // pred_fallthru
        _
      // Predicated region
      $region17: #{deepconvnet_forward.1} parent=11 // pred_check
        %p297 = pneg %p85
      $region18: #{deepconvnet_forward.1} parent=11 // pred_check_branch
        %299 = sbr.rel (%p297) target = $region20
      $region19: #{deepconvnet_forward.1} parent=11 // pred_region
        _
      $region20: #{deepconvnet_forward.1} parent=11 // pred_fallthru
        _
      // Predicated region
      $region21: #{deepconvnet_forward.1} parent=11 // pred_check
        %p300 = pneg %p106
      $region22: #{deepconvnet_forward.1} parent=11 // pred_check_branch
        %302 = sbr.rel (%p300) target = $region24
      $region23: #{deepconvnet_forward.1} parent=11 // pred_region
        _
      $region24: #{deepconvnet_forward.1} parent=11 // pred_fallthru
        _
      // Predicated region
      $region25: #{deepconvnet_forward.1} parent=11 // pred_check
        %p303 = pneg %p127
      $region26: #{deepconvnet_forward.1} parent=11 // pred_check_branch
        %305 = sbr.rel (%p303) target = $region28
      $region27: #{deepconvnet_forward.1} parent=11 // pred_region
        _
      $region28: #{deepconvnet_forward.1} parent=11 // pred_fallthru
        _
      // Predicated region
      $region29: #{deepconvnet_forward.1} parent=11 // pred_check
        %p306 = pneg %p148
      $region30: #{deepconvnet_forward.1} parent=11 // pred_check_branch
        %308 = sbr.rel (%p306) target = $region32
      $region31: #{deepconvnet_forward.1} parent=11 // pred_region
        _
      $region32: #{deepconvnet_forward.1} parent=11 // pred_fallthru
        _
      // Predicated region
      $region33: #{deepconvnet_forward.1} parent=11 // pred_check
        %p309 = pneg %p169
      $region34: #{deepconvnet_forward.1} parent=11 // pred_check_branch
        %311 = sbr.rel (%p309) target = $region36
      $region35: #{deepconvnet_forward.1} parent=11 // pred_region
        _
      $region36: #{deepconvnet_forward.1} parent=11 // pred_fallthru
        _
      // Predicated region
      $region37: #{deepconvnet_forward.1} parent=11 // pred_check
        %p312 = pneg %p190
      $region38: #{deepconvnet_forward.1} parent=11 // pred_check_branch
        %314 = sbr.rel (%p312) target = $region40
      $region39: #{deepconvnet_forward.1} parent=11 // pred_region
        _
      $region40: #{deepconvnet_forward.1} parent=11 // pred_fallthru
        _
      // Predicated region
      $region41: #{deepconvnet_forward.1} parent=11 // pred_check
        %p315 = pneg %p211
      $region42: #{deepconvnet_forward.1} parent=11 // pred_check_branch
        %317 = sbr.rel (%p315) target = $region44
      $region43: #{deepconvnet_forward.1} parent=11 // pred_region
        _
      $region44: #{deepconvnet_forward.1} parent=11 // pred_fallthru
        _
      // Predicated region
      $region45: #{deepconvnet_forward.1} parent=11 // pred_check
        %p318 = pneg %p232
      $region46: #{deepconvnet_forward.1} parent=11 // pred_check_branch
        %320 = sbr.rel (%p318) target = $region48
      $region47: #{deepconvnet_forward.1} parent=11 // pred_region
        _
      $region48: #{deepconvnet_forward.1} parent=11 // pred_fallthru
        _
      // Predicated region
      $region49: #{deepconvnet_forward.1} parent=11 // pred_check
        %p321 = pneg %p253
      $region50: #{deepconvnet_forward.1} parent=11 // pred_check_branch
        %323 = sbr.rel (%p321) target = $region52
      $region51: #{deepconvnet_forward.1} parent=11 // pred_region
        _
      $region52: #{deepconvnet_forward.1} parent=11 // pred_fallthru
        _
    $region12: #{deepconvnet_forward.1} parent=5 // pred_fallthru
      _
    %p324 = scmp.lt.s32.totalorder %s17, 2
    // Predicated region
    $region53: #{deepconvnet_forward.1} parent=5 // pred_check
      %p325 = pneg %p324
    $region54: #{deepconvnet_forward.1} parent=5 // pred_check_branch
      %327 = sbr.rel (%p325) target = $region56
    $region55: #{deepconvnet_forward.1} parent=5 // pred_region
      // Predicated region
      $region57: #{deepconvnet_forward.1} parent=55 // pred_check
        %p328 = pneg %p37
      $region58: #{deepconvnet_forward.1} parent=55 // pred_check_branch
        %330 = sbr.rel (%p328) target = $region60
      $region59: #{deepconvnet_forward.1} parent=55 // pred_region
        %s331 = smul.u32 8, %s17
        %p332 = scmp.lt.s32.totalorder %s331, 15
        %s333 = scalar_select %p332, %s331, 15
        %s334 = smul.addr %s333, 94
        %s335 = smul.addr %s334, 8
        %s336 = scalar_lea.vmem %s0, %s335
        %s337 = smul.u32 8, %s17
      $region60: #{deepconvnet_forward.1} parent=55 // pred_fallthru
        _
    $region56: #{deepconvnet_forward.1} parent=5 // pred_fallthru
      _
    %p338 = scmp.le.s32.totalorder 1, %s17
    %p339 = scmp.lt.s32.totalorder %s17, 3
    %p340 = pnand %p338, %p339
    %p341 = pneg %p340
    // Predicated region
    $region61: #{deepconvnet_forward.1} parent=5 // pred_check
      _
    $region62: #{deepconvnet_forward.1} parent=5 // pred_check_branch
      %343 = sbr.rel (%p340) target = $region64
    $region63: #{deepconvnet_forward.1} parent=5 // pred_region
      %s344 = ssub.s32 %s17, 1
      %s345 = smul.u32 8, %s22
      %p346 = scmp.lt.s32.totalorder %s345, 15
      %s347 = scalar_select %p346, %s345, 15
      %s348 = smul.addr %s347, 94
      %s349 = smul.addr %s348, 8
      %s350 = scalar_lea.vmem %s0, %s349
      %p351 = pneg %p43
      %p352 = pneg %p40
      %p353 = pneg %p64
      %p354 = pneg %p61
      %p355 = pneg %p85
      %p356 = pneg %p82
      %p357 = pneg %p106
      %p358 = pneg %p103
      %p359 = pneg %p127
      %p360 = pneg %p124
      %p361 = pneg %p148
      %p362 = pneg %p145
      %p363 = pneg %p169
      %p364 = pneg %p166
      %p365 = pneg %p190
      %p366 = pneg %p187
      %p367 = pneg %p211
      %p368 = pneg %p208
      %p369 = pneg %p232
      %p370 = pneg %p229
      %p371 = pneg %p253
      %p372 = pneg %p250
      %p373 = pneg %p279
      %p374 = pneg %p276
      %p375 = scmp.lt.s32.totalorder %s22, 1
      %s376 = scalar_select %p375, %s22, 1
      %s377 = smul.addr %s376, 8
      %s378 = scalar_lea.vmem %s11, %s377
      %s379 = smul.u32 8, %s22
      %p380 = scmp.lt.s32.totalorder %s379, 15
      %s381 = scalar_select %p380, %s379, 15
      %s382 = smul.addr %s381, 94
      %s383 = smul.addr %s382, 8
      %s384 = scalar_lea.vmem %s0, %s383
      %s385 = smul.u32 8, %s22
      %p386 = scmp.lt.s32.totalorder %s22, 1
      %s387 = scalar_select %p386, %s22, 1
      %s388 = smul.addr %s387, 8
      %s389 = scalar_lea.vmem %s11, %s388
      %vm390 = vcmask 261120
      %391 = vst.msk [vmem:[#allocation2] sm:$0xff] %vm390, 0.0
      %392 = vst.msk [vmem:[#allocation2 + $0x8] sm:$0xff] %vm390, 0.0
      %393 = vst.msk [vmem:[#allocation2 + $0x10] sm:$0xff] %vm390, 0.0
      %394 = vst.msk [vmem:[#allocation2 + $0x18] sm:$0xff] %vm390, 0.0
      %395 = vst.msk [vmem:[#allocation2 + $0x20] sm:$0xff] %vm390, 0.0
      %396 = vst.msk [vmem:[#allocation2 + $0x28] sm:$0xff] %vm390, 0.0
      %397 = vst.msk [vmem:[#allocation2 + $0x30] sm:$0xff] %vm390, 0.0
      %398 = vst.msk [vmem:[#allocation2 + $0x38] sm:$0xff] %vm390, 0.0
      %399 = vst.msk [vmem:[#allocation2 + $0x40] sm:$0xff] %vm390, 0.0
      %400 = vst.msk [vmem:[#allocation2 + $0x48] sm:$0xff] %vm390, 0.0
      %401 = vst.msk [vmem:[#allocation2 + $0x50] sm:$0xff] %vm390, 0.0
      %402 = vst.msk [vmem:[#allocation2 + $0x58] sm:$0xff] %vm390, 0.0
      %403 = vst.msk [vmem:[#allocation2 + $0x60] sm:$0xff] %vm390, 0.0
      %404 = vst.msk [vmem:[#allocation2 + $0x68] sm:$0xff] %vm390, 0.0
      %405 = vst.msk [vmem:[#allocation2 + $0x70] sm:$0xff] %vm390, 0.0
      %406 = vst.msk [vmem:[#allocation2 + $0x78] sm:$0xff] %vm390, 0.0
      %407 = vst.msk [vmem:[#allocation2 + $0x80] sm:$0xff] %vm390, 0.0
      %408 = vst.msk [vmem:[#allocation2 + $0x88] sm:$0xff] %vm390, 0.0
      %409 = vst.msk [vmem:[#allocation2 + $0x90] sm:$0xff] %vm390, 0.0
      %410 = vst.msk [vmem:[#allocation2 + $0x98] sm:$0xff] %vm390, 0.0
      %411 = vst.msk [vmem:[#allocation2 + $0xa0] sm:$0xff] %vm390, 0.0
      %412 = vst.msk [vmem:[#allocation2 + $0xa8] sm:$0xff] %vm390, 0.0
      %413 = vst.msk [vmem:[#allocation2 + $0xb0] sm:$0xff] %vm390, 0.0
      %414 = vst.msk [vmem:[#allocation2 + $0xb8] sm:$0xff] %vm390, 0.0
      %415 = vst.msk [vmem:[#allocation2 + $0xc0] sm:$0xff] %vm390, 0.0
      %416 = vst.msk [vmem:[#allocation2 + $0xc8] sm:$0xff] %vm390, 0.0
      %417 = vst.msk [vmem:[#allocation2 + $0xd0] sm:$0xff] %vm390, 0.0
      %418 = vst.msk [vmem:[#allocation2 + $0xd8] sm:$0xff] %vm390, 0.0
      %419 = vst.msk [vmem:[#allocation2 + $0xe0] sm:$0xff] %vm390, 0.0
      %420 = vst.msk [vmem:[#allocation2 + $0xe8] sm:$0xff] %vm390, 0.0
      %421 = vst.msk [vmem:[#allocation2 + $0xf0] sm:$0xff] %vm390, 0.0
      %422 = vst.msk [vmem:[#allocation2 + $0xf8] sm:$0xff] %vm390, 0.0
      %423 = vst.msk [vmem:[#allocation2 + $0x100] sm:$0xff] %vm390, 0.0
      %424 = vst.msk [vmem:[#allocation2 + $0x108] sm:$0xff] %vm390, 0.0
      %425 = vst.msk [vmem:[#allocation2 + $0x110] sm:$0xff] %vm390, 0.0
      %426 = vst.msk [vmem:[#allocation2 + $0x118] sm:$0xff] %vm390, 0.0
      %427 = vst.msk [vmem:[#allocation2 + $0x120] sm:$0xff] %vm390, 0.0
      %428 = vst.msk [vmem:[#allocation2 + $0x128] sm:$0xff] %vm390, 0.0
      %429 = vst.msk [vmem:[#allocation2 + $0x130] sm:$0xff] %vm390, 0.0
      %430 = vst.msk [vmem:[#allocation2 + $0x138] sm:$0xff] %vm390, 0.0
      %431 = vst.msk [vmem:[#allocation2 + $0x140] sm:$0xff] %vm390, 0.0
      %432 = vst.msk [vmem:[#allocation2 + $0x148] sm:$0xff] %vm390, 0.0
      %433 = vst.msk [vmem:[#allocation2 + $0x150] sm:$0xff] %vm390, 0.0
      %434 = vst.msk [vmem:[#allocation2 + $0x158] sm:$0xff] %vm390, 0.0
      %435 = vst.msk [vmem:[#allocation2 + $0x160] sm:$0xff] %vm390, 0.0
      %436 = vst.msk [vmem:[#allocation2 + $0x168] sm:$0xff] %vm390, 0.0
      %437 = vst.msk [vmem:[#allocation2 + $0x170] sm:$0xff] %vm390, 0.0
      %vm438 = vcmask 256000
      %439 = vst.msk [vmem:[#allocation2 + $0x178] sm:$0x7] %vm438, 0.0
      %vm440 = vcmask 457728
      %441 = vst.msk [vmem:[#allocation3] sm:$0xff] %vm440, 0.0
      %442 = vst.msk [vmem:[#allocation3 + $0x8] sm:$0xff] %vm440, 0.0
      %443 = vst.msk [vmem:[#allocation3 + $0x10] sm:$0xff] %vm440, 0.0
      %444 = vst.msk [vmem:[#allocation3 + $0x18] sm:$0xff] %vm440, 0.0
      %445 = vst.msk [vmem:[#allocation3 + $0x20] sm:$0xff] %vm440, 0.0
      %446 = vst.msk [vmem:[#allocation3 + $0x28] sm:$0xff] %vm440, 0.0
      %447 = vst.msk [vmem:[#allocation3 + $0x30] sm:$0xff] %vm440, 0.0
      %448 = vst.msk [vmem:[#allocation3 + $0x38] sm:$0xff] %vm440, 0.0
      %449 = vst.msk [vmem:[#allocation3 + $0x40] sm:$0xff] %vm440, 0.0
      %450 = vst.msk [vmem:[#allocation3 + $0x48] sm:$0xff] %vm440, 0.0
      %451 = vst.msk [vmem:[#allocation3 + $0x50] sm:$0xff] %vm440, 0.0
      %452 = vst.msk [vmem:[#allocation3 + $0x58] sm:$0xff] %vm440, 0.0
      %453 = vst.msk [vmem:[#allocation3 + $0x60] sm:$0xff] %vm440, 0.0
      %454 = vst.msk [vmem:[#allocation3 + $0x68] sm:$0xff] %vm440, 0.0
      %455 = vst.msk [vmem:[#allocation3 + $0x70] sm:$0xff] %vm440, 0.0
      %456 = vst.msk [vmem:[#allocation3 + $0x78] sm:$0xff] %vm440, 0.0
      %457 = vst.msk [vmem:[#allocation3 + $0x80] sm:$0xff] %vm440, 0.0
      %458 = vst.msk [vmem:[#allocation3 + $0x88] sm:$0xff] %vm440, 0.0
      %459 = vst.msk [vmem:[#allocation3 + $0x90] sm:$0xff] %vm440, 0.0
      %460 = vst.msk [vmem:[#allocation3 + $0x98] sm:$0xff] %vm440, 0.0
      %461 = vst.msk [vmem:[#allocation3 + $0xa0] sm:$0xff] %vm440, 0.0
      %462 = vst.msk [vmem:[#allocation3 + $0xa8] sm:$0xff] %vm440, 0.0
      %463 = vst.msk [vmem:[#allocation3 + $0xb0] sm:$0xff] %vm440, 0.0
      %vm464 = vcmask 456704
      %465 = vst.msk [vmem:[#allocation3 + $0xb8] sm:$0x7f] %vm464, 0.0
      %vm466 = vcmask 850944
      %467 = vst.msk [vmem:[#allocation4] sm:$0xff] %vm466, 0.0
      %468 = vst.msk [vmem:[#allocation4 + $0x8] sm:$0xff] %vm466, 0.0
      %469 = vst.msk [vmem:[#allocation4 + $0x10] sm:$0xff] %vm466, 0.0
      %470 = vst.msk [vmem:[#allocation4 + $0x18] sm:$0xff] %vm466, 0.0
      %471 = vst.msk [vmem:[#allocation4 + $0x20] sm:$0xff] %vm466, 0.0
      %472 = vst.msk [vmem:[#allocation4 + $0x28] sm:$0xff] %vm466, 0.0
      %473 = vst.msk [vmem:[#allocation4 + $0x30] sm:$0xff] %vm466, 0.0
      %474 = vst.msk [vmem:[#allocation4 + $0x38] sm:$0xff] %vm466, 0.0
      %475 = vst.msk [vmem:[#allocation4 + $0x40] sm:$0xff] %vm466, 0.0
      %476 = vst.msk [vmem:[#allocation4 + $0x48] sm:$0xff] %vm466, 0.0
      %477 = vst.msk [vmem:[#allocation4 + $0x50] sm:$0xff] %vm466, 0.0
      %478 = vst.msk [vmem:[#allocation4 + $0x58] sm:$0xff] %vm466, 0.0
      %vm479 = vcmask 843776
      %480 = vst.msk [vmem:[#allocation4 + $0x60] sm:$0x1] %vm479, 0.0
      loop: start=0, step=1, limit=8
      $region65: #{deepconvnet_forward.1} parent=63 // loop_pre_header
        _
      $region66: #{deepconvnet_forward.1} parent=63 // loop_header
        %s482 = sphi 0, %s486
        %p483 = scmp.ge.s32.totalorder %s482, 8
      $region67: #{deepconvnet_forward.1} parent=63 // loop_header_branch
        %485 = sbr.rel (%p483) target = $region71
      $region68: #{deepconvnet_forward.1} parent=63 // loop_body
        %s487 = smul.u32 %s482, 752
        %s488 = scalar_lea.vmem %s384, %s487
        %v489 = vld [vmem:[%s488] sm:$0xff]
        %v490 = vld [vmem:[%s488 + $0x8] sm:$0xff]
        %v491 = vld [vmem:[%s488 + $0x10] sm:$0xff]
        %v492 = vld [vmem:[%s488 + $0x18] sm:$0xff]
        %v493 = vld [vmem:[%s488 + $0x20] sm:$0xff]
        %v494 = vld [vmem:[%s488 + $0x28] sm:$0xff]
        %v495 = vld [vmem:[%s488 + $0x30] sm:$0xff]
        %v496 = vld [vmem:[%s488 + $0x38] sm:$0xff]
        %v497 = vld [vmem:[%s488 + $0x40] sm:$0xff]
        %v498 = vld [vmem:[%s488 + $0x48] sm:$0xff]
        %v499 = vld [vmem:[%s488 + $0x50] sm:$0xff]
        %v500 = vld [vmem:[%s488 + $0x58] sm:$0xff]
        %v501 = vld [vmem:[%s488 + $0x60] sm:$0xff]
        %v502 = vld [vmem:[%s488 + $0x68] sm:$0xff]
        %v503 = vld [vmem:[%s488 + $0x70] sm:$0xff]
        %v504 = vld [vmem:[%s488 + $0x78] sm:$0xff]
        %v505 = vld [vmem:[%s488 + $0x80] sm:$0xff]
        %v506 = vld [vmem:[%s488 + $0x88] sm:$0xff]
        %v507 = vld [vmem:[%s488 + $0x90] sm:$0xff]
        %v508 = vld [vmem:[%s488 + $0x98] sm:$0xff]
        %v509 = vld [vmem:[%s488 + $0xa0] sm:$0xff]
        %v510 = vld [vmem:[%s488 + $0xa8] sm:$0xff]
        %v511 = vld [vmem:[%s488 + $0xb0] sm:$0xff]
        %v512 = vld [vmem:[%s488 + $0xb8] sm:$0xff]
        %s513 = sadd.s32 376, %s487
        %s514 = scalar_lea.vmem %s384, %s513
        %v515 = vld [vmem:[%s514] sm:$0xff]
        %v516 = vld [vmem:[%s514 + $0x8] sm:$0xff]
        %v517 = vld [vmem:[%s514 + $0x10] sm:$0xff]
        %v518 = vld [vmem:[%s514 + $0x18] sm:$0xff]
        %v519 = vld [vmem:[%s514 + $0x20] sm:$0xff]
        %v520 = vld [vmem:[%s514 + $0x28] sm:$0xff]
        %v521 = vld [vmem:[%s514 + $0x30] sm:$0xff]
        %v522 = vld [vmem:[%s514 + $0x38] sm:$0xff]
        %v523 = vld [vmem:[%s514 + $0x40] sm:$0xff]
        %v524 = vld [vmem:[%s514 + $0x48] sm:$0xff]
        %v525 = vld [vmem:[%s514 + $0x50] sm:$0xff]
        %v526 = vld [vmem:[%s514 + $0x58] sm:$0xff]
        %v527 = vld [vmem:[%s514 + $0x60] sm:$0xff]
        %v528 = vld [vmem:[%s514 + $0x68] sm:$0xff]
        %v529 = vld [vmem:[%s514 + $0x70] sm:$0xff]
        %v530 = vld [vmem:[%s514 + $0x78] sm:$0xff]
        %v531 = vld [vmem:[%s514 + $0x80] sm:$0xff]
        %v532 = vld [vmem:[%s514 + $0x88] sm:$0xff]
        %v533 = vld [vmem:[%s514 + $0x90] sm:$0xff]
        %v534 = vld [vmem:[%s514 + $0x98] sm:$0xff]
        %v535 = vld [vmem:[%s514 + $0xa0] sm:$0xff]
        %v536 = vld [vmem:[%s514 + $0xa8] sm:$0xff]
        %v537 = vld [vmem:[%s514 + $0xb0] sm:$0xff]
        %v538 = vld [vmem:[%s514 + $0xb8] sm:$0xff]
        %v539 = vld [vmem:[%s1] sm:$0xff]
        %v540 = vld [vmem:[%s1 + $0x8] sm:$0xff]
        %v541 = vld [vmem:[%s2] sm:$0x1]
        %v543 = vlaneseq
        %v544 = vshrl.u32 %v543, 7
        %v545 = vsub.s32 0, %v544
        %v546 = vrot.slane %v541, %v545
        %vm548 = vcmask 130048
        %v550 = vsel %vm548, %v489, 0
        %v553 = vsel %vm548, %v490, 0
        %v556 = vsel %vm548, %v491, 0
        %v559 = vsel %vm548, %v492, 0
        %v562 = vsel %vm548, %v493, 0
        %v565 = vsel %vm548, %v494, 0
        %v568 = vsel %vm548, %v495, 0
        %v571 = vsel %vm548, %v496, 0
        %v574 = vsel %vm548, %v497, 0
        %v577 = vsel %vm548, %v498, 0
        %v580 = vsel %vm548, %v499, 0
        %v583 = vsel %vm548, %v500, 0
        %v586 = vsel %vm548, %v501, 0
        %v589 = vsel %vm548, %v502, 0
        %v592 = vsel %vm548, %v503, 0
        %v595 = vsel %vm548, %v504, 0
        %v598 = vsel %vm548, %v505, 0
        %v601 = vsel %vm548, %v506, 0
        %v604 = vsel %vm548, %v507, 0
        %v607 = vsel %vm548, %v508, 0
        %v610 = vsel %vm548, %v509, 0
        %v613 = vsel %vm548, %v510, 0
        %v616 = vsel %vm548, %v511, 0
        %v619 = vsel %vm548, %v512, 0
        %621 = vmatprep.subr.mxu0 0.0
        %622 = vmatpush1.msra.mxu0 %v539
        %623 = vmatprep.subr.mxu0 0.0
        %624 = vmatpush1.msra.mxu0 %v540
        %625 = vmatprep.subr.mxu0 0.0
        %626 = vmatpush1.msra.mxu0 0.0
        %627 = vmatprep.subr.mxu0 0.0
        %628 = vmatpush1.msra.mxu0 0.0
        %629 = vmatprep.subr.mxu0 0.0
        %630 = vmatpush1.msra.mxu0 0.0
        %631 = vmatprep.subr.mxu0 0.0
        %632 = vmatpush1.msra.mxu0 0.0
        %633 = vmatprep.subr.mxu0 0.0
        %634 = vmatpush1.msra.mxu0 0.0
        %635 = vmatprep.subr.mxu0 0.0
        %636 = vmatpush1.msra.mxu0 0.0
        %637 = vmatprep.subr.mxu0 0.0
        %638 = vmatpush1.msra.mxu0 0.0
        %639 = vmatprep.subr.mxu0 0.0
        %640 = vmatpush1.msra.mxu0 0.0
        %641 = vmatprep.subr.mxu0 0.0
        %642 = vmatpush1.msra.mxu0 0.0
        %643 = vmatprep.subr.mxu0 0.0
        %644 = vmatpush1.msra.mxu0 0.0
        %645 = vmatprep.subr.mxu0 0.0
        %646 = vmatpush1.msra.mxu0 0.0
        %647 = vmatprep.subr.mxu0 0.0
        %648 = vmatpush1.msra.mxu0 0.0
        %649 = vmatprep.subr.mxu0 0.0
        %650 = vmatpush1.msra.mxu0 0.0
        %651 = vmatprep.subr.mxu0 0.0
        %652 = vmatpush1.msra.mxu0 0.0
        %653 = vmatprep.subr.mxu0 0.0
        %654 = vmatpush1.msra.mxu0 0.0
        %655 = vmatprep.subr.mxu0 0.0
        %656 = vmatpush1.msra.mxu0 0.0
        %657 = vmatprep.subr.mxu0 0.0
        %658 = vmatpush1.msra.mxu0 0.0
        %659 = vmatprep.subr.mxu0 0.0
        %660 = vmatpush1.msra.mxu0 0.0
        %661 = vmatprep.subr.mxu0 0.0
        %662 = vmatpush1.msra.mxu0 0.0
        %663 = vmatprep.subr.mxu0 0.0
        %664 = vmatpush1.msra.mxu0 0.0
        %665 = vmatprep.subr.mxu0 0.0
        %666 = vmatpush1.msra.mxu0 0.0
        %667 = vmatprep.subr.mxu0 0.0
        %668 = vmatpush1.msra.mxu0 0.0
        %669 = vmatprep.subr.mxu0 0.0
        %670 = vmatpush1.msra.mxu0 0.0
        %671 = vmatprep.subr.mxu0 0.0
        %672 = vmatpush1.msra.mxu0 0.0
        %673 = vmatprep.subr.mxu0 0.0
        %674 = vmatpush1.msra.mxu0 0.0
        %675 = vmatprep.subr.mxu0 0.0
        %676 = vmatpush1.msra.mxu0 0.0
        %677 = vmatprep.subr.mxu0 0.0
        %678 = vmatpush1.msra.mxu0 0.0
        %679 = vmatprep.subr.mxu0 0.0
        %680 = vmatpush1.msra.mxu0 0.0
        %681 = vmatprep.subr.mxu0 0.0
        %682 = vmatpush1.msra.mxu0 0.0
        %683 = vmatprep.subr.mxu0 0.0
        %684 = vmatpush1.msra.mxu0 0.0
        %685 = vmatprep.mubr.f32.mxu0 0.0
        %686 = vmatmul.mubr.f32.gmra.mrb[0].mxu0 %v550
        %v687 = vpop.f32.mrb[0].mxu0
        %v688 = vadd.f32 %v546, %v687
        %v689 = vpop.f32.mrb[0].mxu0
        %690 = vmatprep.mubr.f32.mxu0 0.0
        %691 = vmatmul.mubr.f32.gmra.mrb[0].mxu0 %v553
        %v692 = vpop.f32.mrb[0].mxu0
        %v693 = vadd.f32 %v546, %v692
        %v694 = vpop.f32.mrb[0].mxu0
        %695 = vmatprep.mubr.f32.mxu0 0.0
        %696 = vmatmul.mubr.f32.gmra.mrb[0].mxu0 %v556
        %v697 = vpop.f32.mrb[0].mxu0
        %v698 = vadd.f32 %v546, %v697
        %v699 = vpop.f32.mrb[0].mxu0
        %700 = vmatprep.mubr.f32.mxu0 0.0
        %701 = vmatmul.mubr.f32.gmra.mrb[0].mxu0 %v559
        %v702 = vpop.f32.mrb[0].mxu0
        %v703 = vadd.f32 %v546, %v702
        %v704 = vpop.f32.mrb[0].mxu0
        %705 = vmatprep.mubr.f32.mxu0 0.0
        %706 = vmatmul.mubr.f32.gmra.mrb[0].mxu0 %v562
        %v707 = vpop.f32.mrb[0].mxu0
        %v708 = vadd.f32 %v546, %v707
        %v709 = vpop.f32.mrb[0].mxu0
        %710 = vmatprep.mubr.f32.mxu0 0.0
        %711 = vmatmul.mubr.f32.gmra.mrb[0].mxu0 %v565
        %v712 = vpop.f32.mrb[0].mxu0
        %v713 = vadd.f32 %v546, %v712
        %v714 = vpop.f32.mrb[0].mxu0
        %715 = vmatprep.mubr.f32.mxu0 0.0
        %716 = vmatmul.mubr.f32.gmra.mrb[0].mxu0 %v568
        %v717 = vpop.f32.mrb[0].mxu0
        %v718 = vadd.f32 %v546, %v717
        %v719 = vpop.f32.mrb[0].mxu0
        %720 = vmatprep.mubr.f32.mxu0 0.0
        %721 = vmatmul.mubr.f32.gmra.mrb[0].mxu0 %v571
        %v722 = vpop.f32.mrb[0].mxu0
        %v723 = vadd.f32 %v546, %v722
        %v724 = vpop.f32.mrb[0].mxu0
        %725 = vmatprep.mubr.f32.mxu0 0.0
        %726 = vmatmul.mubr.f32.gmra.mrb[0].mxu0 %v574
        %v727 = vpop.f32.mrb[0].mxu0
        %v728 = vadd.f32 %v546, %v727
        %v729 = vpop.f32.mrb[0].mxu0
        %730 = vmatprep.mubr.f32.mxu0 0.0
        %731 = vmatmul.mubr.f32.gmra.mrb[0].mxu0 %v577
        %v732 = vpop.f32.mrb[0].mxu0
        %v733 = vadd.f32 %v546, %v732
        %v734 = vpop.f32.mrb[0].mxu0
        %735 = vmatprep.mubr.f32.mxu0 0.0
        %736 = vmatmul.mubr.f32.gmra.mrb[0].mxu0 %v580
        %v737 = vpop.f32.mrb[0].mxu0
        %v738 = vadd.f32 %v546, %v737
        %v739 = vpop.f32.mrb[0].mxu0
        %740 = vmatprep.mubr.f32.mxu0 0.0
        %741 = vmatmul.mubr.f32.gmra.mrb[0].mxu0 %v583
        %v742 = vpop.f32.mrb[0].mxu0
        %v743 = vadd.f32 %v546, %v742
        %v744 = vpop.f32.mrb[0].mxu0
        %745 = vmatprep.mubr.f32.mxu0 0.0
        %746 = vmatmul.mubr.f32.gmra.mrb[0].mxu0 %v586
        %v747 = vpop.f32.mrb[0].mxu0
        %v748 = vadd.f32 %v546, %v747
        %v749 = vpop.f32.mrb[0].mxu0
        %750 = vmatprep.mubr.f32.mxu0 0.0
        %751 = vmatmul.mubr.f32.gmra.mrb[0].mxu0 %v589
        %v752 = vpop.f32.mrb[0].mxu0
        %v753 = vadd.f32 %v546, %v752
        %v754 = vpop.f32.mrb[0].mxu0
        %755 = vmatprep.mubr.f32.mxu0 0.0
        %756 = vmatmul.mubr.f32.gmra.mrb[0].mxu0 %v592
        %v757 = vpop.f32.mrb[0].mxu0
        %v758 = vadd.f32 %v546, %v757
        %v759 = vpop.f32.mrb[0].mxu0
        %760 = vmatprep.mubr.f32.mxu0 0.0
        %761 = vmatmul.mubr.f32.gmra.mrb[0].mxu0 %v595
        %v762 = vpop.f32.mrb[0].mxu0
        %v763 = vadd.f32 %v546, %v762
        %v764 = vpop.f32.mrb[0].mxu0
        %765 = vmatprep.mubr.f32.mxu0 0.0
        %766 = vmatmul.mubr.f32.gmra.mrb[0].mxu0 %v598
        %v767 = vpop.f32.mrb[0].mxu0
        %v768 = vadd.f32 %v546, %v767
        %v769 = vpop.f32.mrb[0].mxu0
        %770 = vmatprep.mubr.f32.mxu0 0.0
        %771 = vmatmul.mubr.f32.gmra.mrb[0].mxu0 %v601
        %v772 = vpop.f32.mrb[0].mxu0
        %v773 = vadd.f32 %v546, %v772
        %v774 = vpop.f32.mrb[0].mxu0
        %775 = vmatprep.mubr.f32.mxu0 0.0
        %776 = vmatmul.mubr.f32.gmra.mrb[0].mxu0 %v604
        %v777 = vpop.f32.mrb[0].mxu0
        %v778 = vadd.f32 %v546, %v777
        %v779 = vpop.f32.mrb[0].mxu0
        %780 = vmatprep.mubr.f32.mxu0 0.0
        %781 = vmatmul.mubr.f32.gmra.mrb[0].mxu0 %v607
        %v782 = vpop.f32.mrb[0].mxu0
        %v783 = vadd.f32 %v546, %v782
        %v784 = vpop.f32.mrb[0].mxu0
        %785 = vmatprep.mubr.f32.mxu0 0.0
        %786 = vmatmul.mubr.f32.gmra.mrb[0].mxu0 %v610
        %v787 = vpop.f32.mrb[0].mxu0
        %v788 = vadd.f32 %v546, %v787
        %v789 = vpop.f32.mrb[0].mxu0
        %790 = vmatprep.mubr.f32.mxu0 0.0
        %791 = vmatmul.mubr.f32.gmra.mrb[0].mxu0 %v613
        %v792 = vpop.f32.mrb[0].mxu0
        %v793 = vadd.f32 %v546, %v792
        %v794 = vpop.f32.mrb[0].mxu0
        %795 = vmatprep.mubr.f32.mxu0 0.0
        %796 = vmatmul.mubr.f32.gmra.mrb[0].mxu0 %v616
        %v797 = vpop.f32.mrb[0].mxu0
        %v798 = vadd.f32 %v546, %v797
        %v799 = vpop.f32.mrb[0].mxu0
        %800 = vmatprep.mubr.f32.mxu0 0.0
        %801 = vmatmul.mubr.f32.gmra.mrb[0].mxu0 %v619
        %v802 = vpop.f32.mrb[0].mxu0
        %v803 = vadd.f32 %v546, %v802
        %v804 = vpop.f32.mrb[0].mxu0
        %805 = vdwg.mxu0
        %vm806 = vcmp.gt.f32.partialorder %v688, 0.0
        %vm807 = vcmp.gt.f32.partialorder %v693, 0.0
        %vm808 = vcmp.gt.f32.partialorder %v698, 0.0
        %vm809 = vcmp.gt.f32.partialorder %v703, 0.0
        %vm810 = vcmp.gt.f32.partialorder %v708, 0.0
        %vm811 = vcmp.gt.f32.partialorder %v713, 0.0
        %vm812 = vcmp.gt.f32.partialorder %v718, 0.0
        %vm813 = vcmp.gt.f32.partialorder %v723, 0.0
        %vm814 = vcmp.gt.f32.partialorder %v728, 0.0
        %vm815 = vcmp.gt.f32.partialorder %v733, 0.0
        %vm816 = vcmp.gt.f32.partialorder %v738, 0.0
        %vm817 = vcmp.gt.f32.partialorder %v743, 0.0
        %vm818 = vcmp.gt.f32.partialorder %v748, 0.0
        %vm819 = vcmp.gt.f32.partialorder %v753, 0.0
        %vm820 = vcmp.gt.f32.partialorder %v758, 0.0
        %vm821 = vcmp.gt.f32.partialorder %v763, 0.0
        %vm822 = vcmp.gt.f32.partialorder %v768, 0.0
        %vm823 = vcmp.gt.f32.partialorder %v773, 0.0
        %vm824 = vcmp.gt.f32.partialorder %v778, 0.0
        %vm825 = vcmp.gt.f32.partialorder %v783, 0.0
        %vm826 = vcmp.gt.f32.partialorder %v788, 0.0
        %vm827 = vcmp.gt.f32.partialorder %v793, 0.0
        %vm828 = vcmp.gt.f32.partialorder %v798, 0.0
        %vm829 = vcmp.gt.f32.partialorder %v803, 0.0
        %v830 = vmul.f32 %v688, 1.442695
        %v831 = vpow.pop %v830
        %v832 = vmul.f32 %v693, 1.442695
        %v833 = vpow.pop %v832
        %v834 = vmul.f32 %v698, 1.442695
        %v835 = vpow.pop %v834
        %v836 = vmul.f32 %v703, 1.442695
        %v837 = vpow.pop %v836
        %v838 = vmul.f32 %v708, 1.442695
        %v839 = vpow.pop %v838
        %v840 = vmul.f32 %v713, 1.442695
        %v841 = vpow.pop %v840
        %v842 = vmul.f32 %v718, 1.442695
        %v843 = vpow.pop %v842
        %v844 = vmul.f32 %v723, 1.442695
        %v845 = vpow.pop %v844
        %v846 = vmul.f32 %v728, 1.442695
        %v847 = vpow.pop %v846
        %v848 = vmul.f32 %v733, 1.442695
        %v849 = vpow.pop %v848
        %v850 = vmul.f32 %v738, 1.442695
        %v851 = vpow.pop %v850
        %v852 = vmul.f32 %v743, 1.442695
        %v853 = vpow.pop %v852
        %v854 = vmul.f32 %v748, 1.442695
        %v855 = vpow.pop %v854
        %v856 = vmul.f32 %v753, 1.442695
        %v857 = vpow.pop %v856
        %v858 = vmul.f32 %v758, 1.442695
        %v859 = vpow.pop %v858
        %v860 = vmul.f32 %v763, 1.442695
        %v861 = vpow.pop %v860
        %v862 = vmul.f32 %v768, 1.442695
        %v863 = vpow.pop %v862
        %v864 = vmul.f32 %v773, 1.442695
        %v865 = vpow.pop %v864
        %v866 = vmul.f32 %v778, 1.442695
        %v867 = vpow.pop %v866
        %v868 = vmul.f32 %v783, 1.442695
        %v869 = vpow.pop %v868
        %v870 = vmul.f32 %v788, 1.442695
        %v871 = vpow.pop %v870
        %v872 = vmul.f32 %v793, 1.442695
        %v873 = vpow.pop %v872
        %v874 = vmul.f32 %v798, 1.442695
        %v875 = vpow.pop %v874
        %v876 = vmul.f32 %v803, 1.442695
        %v877 = vpow.pop %v876
        %v878 = vsub.f32 %v831, 1.0
        %v879 = vsub.f32 %v833, 1.0
        %v880 = vsub.f32 %v835, 1.0
        %v881 = vsub.f32 %v837, 1.0
        %v882 = vsub.f32 %v839, 1.0
        %v883 = vsub.f32 %v841, 1.0
        %v884 = vsub.f32 %v843, 1.0
        %v885 = vsub.f32 %v845, 1.0
        %v886 = vsub.f32 %v847, 1.0
        %v887 = vsub.f32 %v849, 1.0
        %v888 = vsub.f32 %v851, 1.0
        %v889 = vsub.f32 %v853, 1.0
        %v890 = vsub.f32 %v855, 1.0
        %v891 = vsub.f32 %v857, 1.0
        %v892 = vsub.f32 %v859, 1.0
        %v893 = vsub.f32 %v861, 1.0
        %v894 = vsub.f32 %v863, 1.0
        %v895 = vsub.f32 %v865, 1.0
        %v896 = vsub.f32 %v867, 1.0
        %v897 = vsub.f32 %v869, 1.0
        %v898 = vsub.f32 %v871, 1.0
        %v899 = vsub.f32 %v873, 1.0
        %v900 = vsub.f32 %v875, 1.0
        %v901 = vsub.f32 %v877, 1.0
        %v902 = vsel %vm806, %v688, %v878
        %v903 = vsel %vm807, %v693, %v879
        %v904 = vsel %vm808, %v698, %v880
        %v905 = vsel %vm809, %v703, %v881
        %v906 = vsel %vm810, %v708, %v882
        %v907 = vsel %vm811, %v713, %v883
        %v908 = vsel %vm812, %v718, %v884
        %v909 = vsel %vm813, %v723, %v885
        %v910 = vsel %vm814, %v728, %v886
        %v911 = vsel %vm815, %v733, %v887
        %v912 = vsel %vm816, %v738, %v888
        %v913 = vsel %vm817, %v743, %v889
        %v914 = vsel %vm818, %v748, %v890
        %v915 = vsel %vm819, %v753, %v891
        %v916 = vsel %vm820, %v758, %v892
        %v917 = vsel %vm821, %v763, %v893
        %v918 = vsel %vm822, %v768, %v894
        %v919 = vsel %vm823, %v773, %v895
        %v920 = vsel %vm824, %v778, %v896
        %v921 = vsel %vm825, %v783, %v897
        %v922 = vsel %vm826, %v788, %v898
        %v923 = vsel %vm827, %v793, %v899
        %v924 = vsel %vm828, %v798, %v900
        %v925 = vsel %vm829, %v803, %v901
        %v927 = vsel %vm548, %v515, 0
        %v930 = vsel %vm548, %v516, 0
        %v933 = vsel %vm548, %v517, 0
        %v936 = vsel %vm548, %v518, 0
        %v939 = vsel %vm548, %v519, 0
        %v942 = vsel %vm548, %v520, 0
        %v945 = vsel %vm548, %v521, 0
        %v948 = vsel %vm548, %v522, 0
        %v951 = vsel %vm548, %v523, 0
        %v954 = vsel %vm548, %v524, 0
        %v957 = vsel %vm548, %v525, 0
        %v960 = vsel %vm548, %v526, 0
        %v963 = vsel %vm548, %v527, 0
        %v966 = vsel %vm548, %v528, 0
        %v969 = vsel %vm548, %v529, 0
        %v972 = vsel %vm548, %v530, 0
        %v975 = vsel %vm548, %v531, 0
        %v978 = vsel %vm548, %v532, 0
        %v981 = vsel %vm548, %v533, 0
        %v984 = vsel %vm548, %v534, 0
        %v987 = vsel %vm548, %v535, 0
        %v990 = vsel %vm548, %v536, 0
        %v993 = vsel %vm548, %v537, 0
        %v996 = vsel %vm548, %v538, 0
        %998 = vmatprep.subr.mxu0 0.0
        %999 = vmatpush1.msra.mxu0 %v539
        %1000 = vmatprep.subr.mxu0 0.0
        %1001 = vmatpush1.msra.mxu0 %v540
        %1002 = vmatprep.subr.mxu0 0.0
        %1003 = vmatpush1.msra.mxu0 0.0
        %1004 = vmatprep.subr.mxu0 0.0
        %1005 = vmatpush1.msra.mxu0 0.0
        %1006 = vmatprep.subr.mxu0 0.0
        %1007 = vmatpush1.msra.mxu0 0.0
        %1008 = vmatprep.subr.mxu0 0.0
        %1009 = vmatpush1.msra.mxu0 0.0
        %1010 = vmatprep.subr.mxu0 0.0
        %1011 = vmatpush1.msra.mxu0 0.0
        %1012 = vmatprep.subr.mxu0 0.0
        %1013 = vmatpush1.msra.mxu0 0.0
        %1014 = vmatprep.subr.mxu0 0.0
        %1015 = vmatpush1.msra.mxu0 0.0
        %1016 = vmatprep.subr.mxu0 0.0
        %1017 = vmatpush1.msra.mxu0 0.0
        %1018 = vmatprep.subr.mxu0 0.0
        %1019 = vmatpush1.msra.mxu0 0.0
        %1020 = vmatprep.subr.mxu0 0.0
        %1021 = vmatpush1.msra.mxu0 0.0
        %1022 = vmatprep.subr.mxu0 0.0
        %1023 = vmatpush1.msra.mxu0 0.0
        %1024 = vmatprep.subr.mxu0 0.0
        %1025 = vmatpush1.msra.mxu0 0.0
        %1026 = vmatprep.subr.mxu0 0.0
        %1027 = vmatpush1.msra.mxu0 0.0
        %1028 = vmatprep.subr.mxu0 0.0
        %1029 = vmatpush1.msra.mxu0 0.0
        %1030 = vmatprep.subr.mxu0 0.0
        %1031 = vmatpush1.msra.mxu0 0.0
        %1032 = vmatprep.subr.mxu0 0.0
        %1033 = vmatpush1.msra.mxu0 0.0
        %1034 = vmatprep.subr.mxu0 0.0
        %1035 = vmatpush1.msra.mxu0 0.0
        %1036 = vmatprep.subr.mxu0 0.0
        %1037 = vmatpush1.msra.mxu0 0.0
        %1038 = vmatprep.subr.mxu0 0.0
        %1039 = vmatpush1.msra.mxu0 0.0
        %1040 = vmatprep.subr.mxu0 0.0
        %1041 = vmatpush1.msra.mxu0 0.0
        %1042 = vmatprep.subr.mxu0 0.0
        %1043 = vmatpush1.msra.mxu0 0.0
        %1044 = vmatprep.subr.mxu0 0.0
        %1045 = vmatpush1.msra.mxu0 0.0
        %1046 = vmatprep.subr.mxu0 0.0
        %1047 = vmatpush1.msra.mxu0 0.0
        %1048 = vmatprep.subr.mxu0 0.0
        %1049 = vmatpush1.msra.mxu0 0.0
        %1050 = vmatprep.subr.mxu0 0.0
        %1051 = vmatpush1.msra.mxu0 0.0
        %1052 = vmatprep.subr.mxu0 0.0
        %1053 = vmatpush1.msra.mxu0 0.0
        %1054 = vmatprep.subr.mxu0 0.0
        %1055 = vmatpush1.msra.mxu0 0.0
        %1056 = vmatprep.subr.mxu0 0.0
        %1057 = vmatpush1.msra.mxu0 0.0
        %1058 = vmatprep.subr.mxu0 0.0
        %1059 = vmatpush1.msra.mxu0 0.0
        %1060 = vmatprep.subr.mxu0 0.0
        %1061 = vmatpush1.msra.mxu0 0.0
        %1062 = vmatprep.mubr.f32.mxu0 0.0
        %1063 = vmatmul.mubr.f32.gmra.mrb[0].mxu0 %v927
        %v1064 = vpop.f32.mrb[0].mxu0
        %v1065 = vadd.f32 %v546, %v1064
        %v1066 = vpop.f32.mrb[0].mxu0
        %1067 = vmatprep.mubr.f32.mxu0 0.0
        %1068 = vmatmul.mubr.f32.gmra.mrb[0].mxu0 %v930
        %v1069 = vpop.f32.mrb[0].mxu0
        %v1070 = vadd.f32 %v546, %v1069
        %v1071 = vpop.f32.mrb[0].mxu0
        %1072 = vmatprep.mubr.f32.mxu0 0.0
        %1073 = vmatmul.mubr.f32.gmra.mrb[0].mxu0 %v933
        %v1074 = vpop.f32.mrb[0].mxu0
        %v1075 = vadd.f32 %v546, %v1074
        %v1076 = vpop.f32.mrb[0].mxu0
        %1077 = vmatprep.mubr.f32.mxu0 0.0
        %1078 = vmatmul.mubr.f32.gmra.mrb[0].mxu0 %v936
        %v1079 = vpop.f32.mrb[0].mxu0
        %v1080 = vadd.f32 %v546, %v1079
        %v1081 = vpop.f32.mrb[0].mxu0
        %1082 = vmatprep.mubr.f32.mxu0 0.0
        %1083 = vmatmul.mubr.f32.gmra.mrb[0].mxu0 %v939
        %v1084 = vpop.f32.mrb[0].mxu0
        %v1085 = vadd.f32 %v546, %v1084
        %v1086 = vpop.f32.mrb[0].mxu0
        %1087 = vmatprep.mubr.f32.mxu0 0.0
        %1088 = vmatmul.mubr.f32.gmra.mrb[0].mxu0 %v942
        %v1089 = vpop.f32.mrb[0].mxu0
        %v1090 = vadd.f32 %v546, %v1089
        %v1091 = vpop.f32.mrb[0].mxu0
        %1092 = vmatprep.mubr.f32.mxu0 0.0
        %1093 = vmatmul.mubr.f32.gmra.mrb[0].mxu0 %v945
        %v1094 = vpop.f32.mrb[0].mxu0
        %v1095 = vadd.f32 %v546, %v1094
        %v1096 = vpop.f32.mrb[0].mxu0
        %1097 = vmatprep.mubr.f32.mxu0 0.0
        %1098 = vmatmul.mubr.f32.gmra.mrb[0].mxu0 %v948
        %v1099 = vpop.f32.mrb[0].mxu0
        %v1100 = vadd.f32 %v546, %v1099
        %v1101 = vpop.f32.mrb[0].mxu0
        %1102 = vmatprep.mubr.f32.mxu0 0.0
        %1103 = vmatmul.mubr.f32.gmra.mrb[0].mxu0 %v951
        %v1104 = vpop.f32.mrb[0].mxu0
        %v1105 = vadd.f32 %v546, %v1104
        %v1106 = vpop.f32.mrb[0].mxu0
        %1107 = vmatprep.mubr.f32.mxu0 0.0
        %1108 = vmatmul.mubr.f32.gmra.mrb[0].mxu0 %v954
        %v1109 = vpop.f32.mrb[0].mxu0
        %v1110 = vadd.f32 %v546, %v1109
        %v1111 = vpop.f32.mrb[0].mxu0
        %1112 = vmatprep.mubr.f32.mxu0 0.0
        %1113 = vmatmul.mubr.f32.gmra.mrb[0].mxu0 %v957
        %v1114 = vpop.f32.mrb[0].mxu0
        %v1115 = vadd.f32 %v546, %v1114
        %v1116 = vpop.f32.mrb[0].mxu0
        %1117 = vmatprep.mubr.f32.mxu0 0.0
        %1118 = vmatmul.mubr.f32.gmra.mrb[0].mxu0 %v960
        %v1119 = vpop.f32.mrb[0].mxu0
        %v1120 = vadd.f32 %v546, %v1119
        %v1121 = vpop.f32.mrb[0].mxu0
        %1122 = vmatprep.mubr.f32.mxu0 0.0
        %1123 = vmatmul.mubr.f32.gmra.mrb[0].mxu0 %v963
        %v1124 = vpop.f32.mrb[0].mxu0
        %v1125 = vadd.f32 %v546, %v1124
        %v1126 = vpop.f32.mrb[0].mxu0
        %1127 = vmatprep.mubr.f32.mxu0 0.0
        %1128 = vmatmul.mubr.f32.gmra.mrb[0].mxu0 %v966
        %v1129 = vpop.f32.mrb[0].mxu0
        %v1130 = vadd.f32 %v546, %v1129
        %v1131 = vpop.f32.mrb[0].mxu0
        %1132 = vmatprep.mubr.f32.mxu0 0.0
        %1133 = vmatmul.mubr.f32.gmra.mrb[0].mxu0 %v969
        %v1134 = vpop.f32.mrb[0].mxu0
        %v1135 = vadd.f32 %v546, %v1134
        %v1136 = vpop.f32.mrb[0].mxu0
        %1137 = vmatprep.mubr.f32.mxu0 0.0
        %1138 = vmatmul.mubr.f32.gmra.mrb[0].mxu0 %v972
        %v1139 = vpop.f32.mrb[0].mxu0
        %v1140 = vadd.f32 %v546, %v1139
        %v1141 = vpop.f32.mrb[0].mxu0
        %1142 = vmatprep.mubr.f32.mxu0 0.0
        %1143 = vmatmul.mubr.f32.gmra.mrb[0].mxu0 %v975
        %v1144 = vpop.f32.mrb[0].mxu0
        %v1145 = vadd.f32 %v546, %v1144
        %v1146 = vpop.f32.mrb[0].mxu0
        %1147 = vmatprep.mubr.f32.mxu0 0.0
        %1148 = vmatmul.mubr.f32.gmra.mrb[0].mxu0 %v978
        %v1149 = vpop.f32.mrb[0].mxu0
        %v1150 = vadd.f32 %v546, %v1149
        %v1151 = vpop.f32.mrb[0].mxu0
        %1152 = vmatprep.mubr.f32.mxu0 0.0
        %1153 = vmatmul.mubr.f32.gmra.mrb[0].mxu0 %v981
        %v1154 = vpop.f32.mrb[0].mxu0
        %v1155 = vadd.f32 %v546, %v1154
        %v1156 = vpop.f32.mrb[0].mxu0
        %1157 = vmatprep.mubr.f32.mxu0 0.0
        %1158 = vmatmul.mubr.f32.gmra.mrb[0].mxu0 %v984
        %v1159 = vpop.f32.mrb[0].mxu0
        %v1160 = vadd.f32 %v546, %v1159
        %v1161 = vpop.f32.mrb[0].mxu0
        %1162 = vmatprep.mubr.f32.mxu0 0.0
        %1163 = vmatmul.mubr.f32.gmra.mrb[0].mxu0 %v987
        %v1164 = vpop.f32.mrb[0].mxu0
        %v1165 = vadd.f32 %v546, %v1164
        %v1166 = vpop.f32.mrb[0].mxu0
        %1167 = vmatprep.mubr.f32.mxu0 0.0
        %1168 = vmatmul.mubr.f32.gmra.mrb[0].mxu0 %v990
        %v1169 = vpop.f32.mrb[0].mxu0
        %v1170 = vadd.f32 %v546, %v1169
        %v1171 = vpop.f32.mrb[0].mxu0
        %1172 = vmatprep.mubr.f32.mxu0 0.0
        %1173 = vmatmul.mubr.f32.gmra.mrb[0].mxu0 %v993
        %v1174 = vpop.f32.mrb[0].mxu0
        %v1175 = vadd.f32 %v546, %v1174
        %v1176 = vpop.f32.mrb[0].mxu0
        %1177 = vmatprep.mubr.f32.mxu0 0.0
        %1178 = vmatmul.mubr.f32.gmra.mrb[0].mxu0 %v996
        %v1179 = vpop.f32.mrb[0].mxu0
        %v1180 = vadd.f32 %v546, %v1179
        %v1181 = vpop.f32.mrb[0].mxu0
        %1182 = vdwg.mxu0
        %vm1183 = vcmp.gt.f32.partialorder %v1065, 0.0
        %vm1184 = vcmp.gt.f32.partialorder %v1070, 0.0
        %vm1185 = vcmp.gt.f32.partialorder %v1075, 0.0
        %vm1186 = vcmp.gt.f32.partialorder %v1080, 0.0
        %vm1187 = vcmp.gt.f32.partialorder %v1085, 0.0
        %vm1188 = vcmp.gt.f32.partialorder %v1090, 0.0
        %vm1189 = vcmp.gt.f32.partialorder %v1095, 0.0
        %vm1190 = vcmp.gt.f32.partialorder %v1100, 0.0
        %vm1191 = vcmp.gt.f32.partialorder %v1105, 0.0
        %vm1192 = vcmp.gt.f32.partialorder %v1110, 0.0
        %vm1193 = vcmp.gt.f32.partialorder %v1115, 0.0
        %vm1194 = vcmp.gt.f32.partialorder %v1120, 0.0
        %vm1195 = vcmp.gt.f32.partialorder %v1125, 0.0
        %vm1196 = vcmp.gt.f32.partialorder %v1130, 0.0
        %vm1197 = vcmp.gt.f32.partialorder %v1135, 0.0
        %vm1198 = vcmp.gt.f32.partialorder %v1140, 0.0
        %vm1199 = vcmp.gt.f32.partialorder %v1145, 0.0
        %vm1200 = vcmp.gt.f32.partialorder %v1150, 0.0
        %vm1201 = vcmp.gt.f32.partialorder %v1155, 0.0
        %vm1202 = vcmp.gt.f32.partialorder %v1160, 0.0
        %vm1203 = vcmp.gt.f32.partialorder %v1165, 0.0
        %vm1204 = vcmp.gt.f32.partialorder %v1170, 0.0
        %vm1205 = vcmp.gt.f32.partialorder %v1175, 0.0
        %vm1206 = vcmp.gt.f32.partialorder %v1180, 0.0
        %v1207 = vmul.f32 %v1065, 1.442695
        %v1208 = vpow.pop %v1207
        %v1209 = vmul.f32 %v1070, 1.442695
        %v1210 = vpow.pop %v1209
        %v1211 = vmul.f32 %v1075, 1.442695
        %v1212 = vpow.pop %v1211
        %v1213 = vmul.f32 %v1080, 1.442695
        %v1214 = vpow.pop %v1213
        %v1215 = vmul.f32 %v1085, 1.442695
        %v1216 = vpow.pop %v1215
        %v1217 = vmul.f32 %v1090, 1.442695
        %v1218 = vpow.pop %v1217
        %v1219 = vmul.f32 %v1095, 1.442695
        %v1220 = vpow.pop %v1219
        %v1221 = vmul.f32 %v1100, 1.442695
        %v1222 = vpow.pop %v1221
        %v1223 = vmul.f32 %v1105, 1.442695
        %v1224 = vpow.pop %v1223
        %v1225 = vmul.f32 %v1110, 1.442695
        %v1226 = vpow.pop %v1225
        %v1227 = vmul.f32 %v1115, 1.442695
        %v1228 = vpow.pop %v1227
        %v1229 = vmul.f32 %v1120, 1.442695
        %v1230 = vpow.pop %v1229
        %v1231 = vmul.f32 %v1125, 1.442695
        %v1232 = vpow.pop %v1231
        %v1233 = vmul.f32 %v1130, 1.442695
        %v1234 = vpow.pop %v1233
        %v1235 = vmul.f32 %v1135, 1.442695
        %v1236 = vpow.pop %v1235
        %v1237 = vmul.f32 %v1140, 1.442695
        %v1238 = vpow.pop %v1237
        %v1239 = vmul.f32 %v1145, 1.442695
        %v1240 = vpow.pop %v1239
        %v1241 = vmul.f32 %v1150, 1.442695
        %v1242 = vpow.pop %v1241
        %v1243 = vmul.f32 %v1155, 1.442695
        %v1244 = vpow.pop %v1243
        %v1245 = vmul.f32 %v1160, 1.442695
        %v1246 = vpow.pop %v1245
        %v1247 = vmul.f32 %v1165, 1.442695
        %v1248 = vpow.pop %v1247
        %v1249 = vmul.f32 %v1170, 1.442695
        %v1250 = vpow.pop %v1249
        %v1251 = vmul.f32 %v1175, 1.442695
        %v1252 = vpow.pop %v1251
        %v1253 = vmul.f32 %v1180, 1.442695
        %v1254 = vpow.pop %v1253
        %v1255 = vsub.f32 %v1208, 1.0
        %v1256 = vsub.f32 %v1210, 1.0
        %v1257 = vsub.f32 %v1212, 1.0
        %v1258 = vsub.f32 %v1214, 1.0
        %v1259 = vsub.f32 %v1216, 1.0
        %v1260 = vsub.f32 %v1218, 1.0
        %v1261 = vsub.f32 %v1220, 1.0
        %v1262 = vsub.f32 %v1222, 1.0
        %v1263 = vsub.f32 %v1224, 1.0
        %v1264 = vsub.f32 %v1226, 1.0
        %v1265 = vsub.f32 %v1228, 1.0
        %v1266 = vsub.f32 %v1230, 1.0
        %v1267 = vsub.f32 %v1232, 1.0
        %v1268 = vsub.f32 %v1234, 1.0
        %v1269 = vsub.f32 %v1236, 1.0
        %v1270 = vsub.f32 %v1238, 1.0
        %v1271 = vsub.f32 %v1240, 1.0
        %v1272 = vsub.f32 %v1242, 1.0
        %v1273 = vsub.f32 %v1244, 1.0
        %v1274 = vsub.f32 %v1246, 1.0
        %v1275 = vsub.f32 %v1248, 1.0
        %v1276 = vsub.f32 %v1250, 1.0
        %v1277 = vsub.f32 %v1252, 1.0
        %v1278 = vsub.f32 %v1254, 1.0
        %v1279 = vsel %vm1183, %v1065, %v1255
        %v1280 = vsel %vm1184, %v1070, %v1256
        %v1281 = vsel %vm1185, %v1075, %v1257
        %v1282 = vsel %vm1186, %v1080, %v1258
        %v1283 = vsel %vm1187, %v1085, %v1259
        %v1284 = vsel %vm1188, %v1090, %v1260
        %v1285 = vsel %vm1189, %v1095, %v1261
        %v1286 = vsel %vm1190, %v1100, %v1262
        %v1287 = vsel %vm1191, %v1105, %v1263
        %v1288 = vsel %vm1192, %v1110, %v1264
        %v1289 = vsel %vm1193, %v1115, %v1265
        %v1290 = vsel %vm1194, %v1120, %v1266
        %v1291 = vsel %vm1195, %v1125, %v1267
        %v1292 = vsel %vm1196, %v1130, %v1268
        %v1293 = vsel %vm1197, %v1135, %v1269
        %v1294 = vsel %vm1198, %v1140, %v1270
        %v1295 = vsel %vm1199, %v1145, %v1271
        %v1296 = vsel %vm1200, %v1150, %v1272
        %v1297 = vsel %vm1201, %v1155, %v1273
        %v1298 = vsel %vm1202, %v1160, %v1274
        %v1299 = vsel %vm1203, %v1165, %v1275
        %v1300 = vsel %vm1204, %v1170, %v1276
        %v1301 = vsel %vm1205, %v1175, %v1277
        %v1302 = vsel %vm1206, %v1180, %v1278
        %v1303 = vadd.f32 %v902, %v1279
        %v1304 = vadd.f32 %v903, %v1280
        %v1305 = vadd.f32 %v904, %v1281
        %v1306 = vadd.f32 %v905, %v1282
        %v1307 = vadd.f32 %v906, %v1283
        %v1308 = vadd.f32 %v907, %v1284
        %v1309 = vadd.f32 %v908, %v1285
        %v1310 = vadd.f32 %v909, %v1286
        %v1311 = vadd.f32 %v910, %v1287
        %v1312 = vadd.f32 %v911, %v1288
        %v1313 = vadd.f32 %v912, %v1289
        %v1314 = vadd.f32 %v913, %v1290
        %v1315 = vadd.f32 %v914, %v1291
        %v1316 = vadd.f32 %v915, %v1292
        %v1317 = vadd.f32 %v916, %v1293
        %v1318 = vadd.f32 %v917, %v1294
        %v1319 = vadd.f32 %v918, %v1295
        %v1320 = vadd.f32 %v919, %v1296
        %v1321 = vadd.f32 %v920, %v1297
        %v1322 = vadd.f32 %v921, %v1298
        %v1323 = vadd.f32 %v922, %v1299
        %v1324 = vadd.f32 %v923, %v1300
        %v1325 = vadd.f32 %v924, %v1301
        %v1326 = vadd.f32 %v925, %v1302
        %v1327 = vmul.f32 %v1303, 0.5
        %v1328 = vmul.f32 %v1304, 0.5
        %v1329 = vmul.f32 %v1305, 0.5
        %v1330 = vmul.f32 %v1306, 0.5
        %v1331 = vmul.f32 %v1307, 0.5
        %v1332 = vmul.f32 %v1308, 0.5
        %v1333 = vmul.f32 %v1309, 0.5
        %v1334 = vmul.f32 %v1310, 0.5
        %v1335 = vmul.f32 %v1311, 0.5
        %v1336 = vmul.f32 %v1312, 0.5
        %v1337 = vmul.f32 %v1313, 0.5
        %v1338 = vmul.f32 %v1314, 0.5
        %v1339 = vmul.f32 %v1315, 0.5
        %v1340 = vmul.f32 %v1316, 0.5
        %v1341 = vmul.f32 %v1317, 0.5
        %v1342 = vmul.f32 %v1318, 0.5
        %v1343 = vmul.f32 %v1319, 0.5
        %v1344 = vmul.f32 %v1320, 0.5
        %v1345 = vmul.f32 %v1321, 0.5
        %v1346 = vmul.f32 %v1322, 0.5
        %v1347 = vmul.f32 %v1323, 0.5
        %v1348 = vmul.f32 %v1324, 0.5
        %v1349 = vmul.f32 %v1325, 0.5
        %v1350 = vmul.f32 %v1326, 0.5
        %vm1351 = vcmask 203776
        %1352 = vst.msk [vmem:[#allocation2 + $0x2] sm:$0xff] %vm1351, %v1327
        %1353 = vst.msk [vmem:[#allocation2 + $0xa] sm:$0xff] %vm1351, %v1328
        %1354 = vst.msk [vmem:[#allocation2 + $0x12] sm:$0xff] %vm1351, %v1329
        %1355 = vst.msk [vmem:[#allocation2 + $0x1a] sm:$0xff] %vm1351, %v1330
        %1356 = vst.msk [vmem:[#allocation2 + $0x22] sm:$0xff] %vm1351, %v1331
        %1357 = vst.msk [vmem:[#allocation2 + $0x2a] sm:$0xff] %vm1351, %v1332
        %1358 = vst.msk [vmem:[#allocation2 + $0x32] sm:$0xff] %vm1351, %v1333
        %1359 = vst.msk [vmem:[#allocation2 + $0x3a] sm:$0xff] %vm1351, %v1334
        %1360 = vst.msk [vmem:[#allocation2 + $0x42] sm:$0xff] %vm1351, %v1335
        %1361 = vst.msk [vmem:[#allocation2 + $0x4a] sm:$0xff] %vm1351, %v1336
        %1362 = vst.msk [vmem:[#allocation2 + $0x52] sm:$0xff] %vm1351, %v1337
        %1363 = vst.msk [vmem:[#allocation2 + $0x5a] sm:$0xff] %vm1351, %v1338
        %1364 = vst.msk [vmem:[#allocation2 + $0x62] sm:$0xff] %vm1351, %v1339
        %1365 = vst.msk [vmem:[#allocation2 + $0x6a] sm:$0xff] %vm1351, %v1340
        %1366 = vst.msk [vmem:[#allocation2 + $0x72] sm:$0xff] %vm1351, %v1341
        %1367 = vst.msk [vmem:[#allocation2 + $0x7a] sm:$0xff] %vm1351, %v1342
        %1368 = vst.msk [vmem:[#allocation2 + $0x82] sm:$0xff] %vm1351, %v1343
        %1369 = vst.msk [vmem:[#allocation2 + $0x8a] sm:$0xff] %vm1351, %v1344
        %1370 = vst.msk [vmem:[#allocation2 + $0x92] sm:$0xff] %vm1351, %v1345
        %1371 = vst.msk [vmem:[#allocation2 + $0x9a] sm:$0xff] %vm1351, %v1346
        %1372 = vst.msk [vmem:[#allocation2 + $0xa2] sm:$0xff] %vm1351, %v1347
        %1373 = vst.msk [vmem:[#allocation2 + $0xaa] sm:$0xff] %vm1351, %v1348
        %1374 = vst.msk [vmem:[#allocation2 + $0xb2] sm:$0xff] %vm1351, %v1349
        %1375 = vst.msk [vmem:[#allocation2 + $0xba] sm:$0xff] %vm1351, %v1350
        %v1376 = vld [vmem:[%s488 + $0xc0] sm:$0xff]
        %v1377 = vld [vmem:[%s488 + $0xc8] sm:$0xff]
        %v1378 = vld [vmem:[%s488 + $0xd0] sm:$0xff]
        %v1379 = vld [vmem:[%s488 + $0xd8] sm:$0xff]
        %v1380 = vld [vmem:[%s488 + $0xe0] sm:$0xff]
        %v1381 = vld [vmem:[%s488 + $0xe8] sm:$0xff]
        %v1382 = vld [vmem:[%s488 + $0xf0] sm:$0xff]
        %v1383 = vld [vmem:[%s488 + $0xf8] sm:$0xff]
        %v1384 = vld [vmem:[%s488 + $0x100] sm:$0xff]
        %v1385 = vld [vmem:[%s488 + $0x108] sm:$0xff]
        %v1386 = vld [vmem:[%s488 + $0x110] sm:$0xff]
        %v1387 = vld [vmem:[%s488 + $0x118] sm:$0xff]
        %v1388 = vld [vmem:[%s488 + $0x120] sm:$0xff]
        %v1389 = vld [vmem:[%s488 + $0x128] sm:$0xff]
        %v1390 = vld [vmem:[%s488 + $0x130] sm:$0xff]
        %v1391 = vld [vmem:[%s488 + $0x138] sm:$0xff]
        %v1392 = vld [vmem:[%s488 + $0x140] sm:$0xff]
        %v1393 = vld [vmem:[%s488 + $0x148] sm:$0xff]
        %v1394 = vld [vmem:[%s488 + $0x150] sm:$0xff]
        %v1395 = vld [vmem:[%s488 + $0x158] sm:$0xff]
        %v1396 = vld [vmem:[%s488 + $0x160] sm:$0xff]
        %v1397 = vld [vmem:[%s488 + $0x168] sm:$0xff]
        %v1398 = vld [vmem:[%s488 + $0x170] sm:$0x7f]
        %v1399 = vld [vmem:[%s514 + $0xc0] sm:$0xff]
        %v1400 = vld [vmem:[%s514 + $0xc8] sm:$0xff]
        %v1401 = vld [vmem:[%s514 + $0xd0] sm:$0xff]
        %v1402 = vld [vmem:[%s514 + $0xd8] sm:$0xff]
        %v1403 = vld [vmem:[%s514 + $0xe0] sm:$0xff]
        %v1404 = vld [vmem:[%s514 + $0xe8] sm:$0xff]
        %v1405 = vld [vmem:[%s514 + $0xf0] sm:$0xff]
        %v1406 = vld [vmem:[%s514 + $0xf8] sm:$0xff]
        %v1407 = vld [vmem:[%s514 + $0x100] sm:$0xff]
        %v1408 = vld [vmem:[%s514 + $0x108] sm:$0xff]
        %v1409 = vld [vmem:[%s514 + $0x110] sm:$0xff]
        %v1410 = vld [vmem:[%s514 + $0x118] sm:$0xff]
        %v1411 = vld [vmem:[%s514 + $0x120] sm:$0xff]
        %v1412 = vld [vmem:[%s514 + $0x128] sm:$0xff]
        %v1413 = vld [vmem:[%s514 + $0x130] sm:$0xff]
        %v1414 = vld [vmem:[%s514 + $0x138] sm:$0xff]
        %v1415 = vld [vmem:[%s514 + $0x140] sm:$0xff]
        %v1416 = vld [vmem:[%s514 + $0x148] sm:$0xff]
        %v1417 = vld [vmem:[%s514 + $0x150] sm:$0xff]
        %v1418 = vld [vmem:[%s514 + $0x158] sm:$0xff]
        %v1419 = vld [vmem:[%s514 + $0x160] sm:$0xff]
        %v1420 = vld [vmem:[%s514 + $0x168] sm:$0xff]
        %v1421 = vld [vmem:[%s514 + $0x170] sm:$0x7f]
        %v1422 = vld [vmem:[%s1] sm:$0xff]
        %v1423 = vld [vmem:[%s1 + $0x8] sm:$0xff]
        %v1424 = vld [vmem:[%s2] sm:$0x1]
        %v1426 = vlaneseq
        %v1427 = vshrl.u32 %v1426, 7
        %v1428 = vsub.s32 0, %v1427
        %v1429 = vrot.slane %v1424, %v1428
        %v1432 = vsel %vm548, %v1376, 0
        %v1435 = vsel %vm548, %v1377, 0
        %v1438 = vsel %vm548, %v1378, 0
        %v1441 = vsel %vm548, %v1379, 0
        %v1444 = vsel %vm548, %v1380, 0
        %v1447 = vsel %vm548, %v1381, 0
        %v1450 = vsel %vm548, %v1382, 0
        %v1453 = vsel %vm548, %v1383, 0
        %v1456 = vsel %vm548, %v1384, 0
        %v1459 = vsel %vm548, %v1385, 0
        %v1462 = vsel %vm548, %v1386, 0
        %v1465 = vsel %vm548, %v1387, 0
        %v1468 = vsel %vm548, %v1388, 0
        %v1471 = vsel %vm548, %v1389, 0
        %v1474 = vsel %vm548, %v1390, 0
        %v1477 = vsel %vm548, %v1391, 0
        %v1480 = vsel %vm548, %v1392, 0
        %v1483 = vsel %vm548, %v1393, 0
        %v1486 = vsel %vm548, %v1394, 0
        %v1489 = vsel %vm548, %v1395, 0
        %v1492 = vsel %vm548, %v1396, 0
        %v1495 = vsel %vm548, %v1397, 0
        %v1498 = vsel %vm548, %v1398, 0
        %1500 = vmatprep.subr.mxu0 0.0
        %1501 = vmatpush1.msra.mxu0 %v1422
        %1502 = vmatprep.subr.mxu0 0.0
        %1503 = vmatpush1.msra.mxu0 %v1423
        %1504 = vmatprep.subr.mxu0 0.0
        %1505 = vmatpush1.msra.mxu0 0.0
        %1506 = vmatprep.subr.mxu0 0.0
        %1507 = vmatpush1.msra.mxu0 0.0
        %1508 = vmatprep.subr.mxu0 0.0
        %1509 = vmatpush1.msra.mxu0 0.0
        %1510 = vmatprep.subr.mxu0 0.0
        %1511 = vmatpush1.msra.mxu0 0.0
        %1512 = vmatprep.subr.mxu0 0.0
        %1513 = vmatpush1.msra.mxu0 0.0
        %1514 = vmatprep.subr.mxu0 0.0
        %1515 = vmatpush1.msra.mxu0 0.0
        %1516 = vmatprep.subr.mxu0 0.0
        %1517 = vmatpush1.msra.mxu0 0.0
        %1518 = vmatprep.subr.mxu0 0.0
        %1519 = vmatpush1.msra.mxu0 0.0
        %1520 = vmatprep.subr.mxu0 0.0
        %1521 = vmatpush1.msra.mxu0 0.0
        %1522 = vmatprep.subr.mxu0 0.0
        %1523 = vmatpush1.msra.mxu0 0.0
        %1524 = vmatprep.subr.mxu0 0.0
        %1525 = vmatpush1.msra.mxu0 0.0
        %1526 = vmatprep.subr.mxu0 0.0
        %1527 = vmatpush1.msra.mxu0 0.0
        %1528 = vmatprep.subr.mxu0 0.0
        %1529 = vmatpush1.msra.mxu0 0.0
        %1530 = vmatprep.subr.mxu0 0.0
        %1531 = vmatpush1.msra.mxu0 0.0
        %1532 = vmatprep.subr.mxu0 0.0
        %1533 = vmatpush1.msra.mxu0 0.0
        %1534 = vmatprep.subr.mxu0 0.0
        %1535 = vmatpush1.msra.mxu0 0.0
        %1536 = vmatprep.subr.mxu0 0.0
        %1537 = vmatpush1.msra.mxu0 0.0
        %1538 = vmatprep.subr.mxu0 0.0
        %1539 = vmatpush1.msra.mxu0 0.0
        %1540 = vmatprep.subr.mxu0 0.0
        %1541 = vmatpush1.msra.mxu0 0.0
        %1542 = vmatprep.subr.mxu0 0.0
        %1543 = vmatpush1.msra.mxu0 0.0
        %1544 = vmatprep.subr.mxu0 0.0
        %1545 = vmatpush1.msra.mxu0 0.0
        %1546 = vmatprep.subr.mxu0 0.0
        %1547 = vmatpush1.msra.mxu0 0.0
        %1548 = vmatprep.subr.mxu0 0.0
        %1549 = vmatpush1.msra.mxu0 0.0
        %1550 = vmatprep.subr.mxu0 0.0
        %1551 = vmatpush1.msra.mxu0 0.0
        %1552 = vmatprep.subr.mxu0 0.0
        %1553 = vmatpush1.msra.mxu0 0.0
        %1554 = vmatprep.subr.mxu0 0.0
        %1555 = vmatpush1.msra.mxu0 0.0
        %1556 = vmatprep.subr.mxu0 0.0
        %1557 = vmatpush1.msra.mxu0 0.0
        %1558 = vmatprep.subr.mxu0 0.0
        %1559 = vmatpush1.msra.mxu0 0.0
        %1560 = vmatprep.subr.mxu0 0.0
        %1561 = vmatpush1.msra.mxu0 0.0
        %1562 = vmatprep.subr.mxu0 0.0
        %1563 = vmatpush1.msra.mxu0 0.0
        %1564 = vmatprep.mubr.f32.mxu0 0.0
        %1565 = vmatmul.mubr.f32.gmra.mrb[0].mxu0 %v1432
        %v1566 = vpop.f32.mrb[0].mxu0
        %v1567 = vadd.f32 %v1429, %v1566
        %v1568 = vpop.f32.mrb[0].mxu0
        %1569 = vmatprep.mubr.f32.mxu0 0.0
        %1570 = vmatmul.mubr.f32.gmra.mrb[0].mxu0 %v1435
        %v1571 = vpop.f32.mrb[0].mxu0
        %v1572 = vadd.f32 %v1429, %v1571
        %v1573 = vpop.f32.mrb[0].mxu0
        %1574 = vmatprep.mubr.f32.mxu0 0.0
        %1575 = vmatmul.mubr.f32.gmra.mrb[0].mxu0 %v1438
        %v1576 = vpop.f32.mrb[0].mxu0
        %v1577 = vadd.f32 %v1429, %v1576
        %v1578 = vpop.f32.mrb[0].mxu0
        %1579 = vmatprep.mubr.f32.mxu0 0.0
        %1580 = vmatmul.mubr.f32.gmra.mrb[0].mxu0 %v1441
        %v1581 = vpop.f32.mrb[0].mxu0
        %v1582 = vadd.f32 %v1429, %v1581
        %v1583 = vpop.f32.mrb[0].mxu0
        %1584 = vmatprep.mubr.f32.mxu0 0.0
        %1585 = vmatmul.mubr.f32.gmra.mrb[0].mxu0 %v1444
        %v1586 = vpop.f32.mrb[0].mxu0
        %v1587 = vadd.f32 %v1429, %v1586
        %v1588 = vpop.f32.mrb[0].mxu0
        %1589 = vmatprep.mubr.f32.mxu0 0.0
        %1590 = vmatmul.mubr.f32.gmra.mrb[0].mxu0 %v1447
        %v1591 = vpop.f32.mrb[0].mxu0
        %v1592 = vadd.f32 %v1429, %v1591
        %v1593 = vpop.f32.mrb[0].mxu0
        %1594 = vmatprep.mubr.f32.mxu0 0.0
        %1595 = vmatmul.mubr.f32.gmra.mrb[0].mxu0 %v1450
        %v1596 = vpop.f32.mrb[0].mxu0
        %v1597 = vadd.f32 %v1429, %v1596
        %v1598 = vpop.f32.mrb[0].mxu0
        %1599 = vmatprep.mubr.f32.mxu0 0.0
        %1600 = vmatmul.mubr.f32.gmra.mrb[0].mxu0 %v1453
        %v1601 = vpop.f32.mrb[0].mxu0
        %v1602 = vadd.f32 %v1429, %v1601
        %v1603 = vpop.f32.mrb[0].mxu0
        %1604 = vmatprep.mubr.f32.mxu0 0.0
        %1605 = vmatmul.mubr.f32.gmra.mrb[0].mxu0 %v1456
        %v1606 = vpop.f32.mrb[0].mxu0
        %v1607 = vadd.f32 %v1429, %v1606
        %v1608 = vpop.f32.mrb[0].mxu0
        %1609 = vmatprep.mubr.f32.mxu0 0.0
        %1610 = vmatmul.mubr.f32.gmra.mrb[0].mxu0 %v1459
        %v1611 = vpop.f32.mrb[0].mxu0
        %v1612 = vadd.f32 %v1429, %v1611
        %v1613 = vpop.f32.mrb[0].mxu0
        %1614 = vmatprep.mubr.f32.mxu0 0.0
        %1615 = vmatmul.mubr.f32.gmra.mrb[0].mxu0 %v1462
        %v1616 = vpop.f32.mrb[0].mxu0
        %v1617 = vadd.f32 %v1429, %v1616
        %v1618 = vpop.f32.mrb[0].mxu0
        %1619 = vmatprep.mubr.f32.mxu0 0.0
        %1620 = vmatmul.mubr.f32.gmra.mrb[0].mxu0 %v1465
        %v1621 = vpop.f32.mrb[0].mxu0
        %v1622 = vadd.f32 %v1429, %v1621
        %v1623 = vpop.f32.mrb[0].mxu0
        %1624 = vmatprep.mubr.f32.mxu0 0.0
        %1625 = vmatmul.mubr.f32.gmra.mrb[0].mxu0 %v1468
        %v1626 = vpop.f32.mrb[0].mxu0
        %v1627 = vadd.f32 %v1429, %v1626
        %v1628 = vpop.f32.mrb[0].mxu0
        %1629 = vmatprep.mubr.f32.mxu0 0.0
        %1630 = vmatmul.mubr.f32.gmra.mrb[0].mxu0 %v1471
        %v1631 = vpop.f32.mrb[0].mxu0
        %v1632 = vadd.f32 %v1429, %v1631
        %v1633 = vpop.f32.mrb[0].mxu0
        %1634 = vmatprep.mubr.f32.mxu0 0.0
        %1635 = vmatmul.mubr.f32.gmra.mrb[0].mxu0 %v1474
        %v1636 = vpop.f32.mrb[0].mxu0
        %v1637 = vadd.f32 %v1429, %v1636
        %v1638 = vpop.f32.mrb[0].mxu0
        %1639 = vmatprep.mubr.f32.mxu0 0.0
        %1640 = vmatmul.mubr.f32.gmra.mrb[0].mxu0 %v1477
        %v1641 = vpop.f32.mrb[0].mxu0
        %v1642 = vadd.f32 %v1429, %v1641
        %v1643 = vpop.f32.mrb[0].mxu0
        %1644 = vmatprep.mubr.f32.mxu0 0.0
        %1645 = vmatmul.mubr.f32.gmra.mrb[0].mxu0 %v1480
        %v1646 = vpop.f32.mrb[0].mxu0
        %v1647 = vadd.f32 %v1429, %v1646
        %v1648 = vpop.f32.mrb[0].mxu0
        %1649 = vmatprep.mubr.f32.mxu0 0.0
        %1650 = vmatmul.mubr.f32.gmra.mrb[0].mxu0 %v1483
        %v1651 = vpop.f32.mrb[0].mxu0
        %v1652 = vadd.f32 %v1429, %v1651
        %v1653 = vpop.f32.mrb[0].mxu0
        %1654 = vmatprep.mubr.f32.mxu0 0.0
        %1655 = vmatmul.mubr.f32.gmra.mrb[0].mxu0 %v1486
        %v1656 = vpop.f32.mrb[0].mxu0
        %v1657 = vadd.f32 %v1429, %v1656
        %v1658 = vpop.f32.mrb[0].mxu0
        %1659 = vmatprep.mubr.f32.mxu0 0.0
        %1660 = vmatmul.mubr.f32.gmra.mrb[0].mxu0 %v1489
        %v1661 = vpop.f32.mrb[0].mxu0
        %v1662 = vadd.f32 %v1429, %v1661
        %v1663 = vpop.f32.mrb[0].mxu0
        %1664 = vmatprep.mubr.f32.mxu0 0.0
        %1665 = vmatmul.mubr.f32.gmra.mrb[0].mxu0 %v1492
        %v1666 = vpop.f32.mrb[0].mxu0
        %v1667 = vadd.f32 %v1429, %v1666
        %v1668 = vpop.f32.mrb[0].mxu0
        %1669 = vmatprep.mubr.f32.mxu0 0.0
        %1670 = vmatmul.mubr.f32.gmra.mrb[0].mxu0 %v1495
        %v1671 = vpop.f32.mrb[0].mxu0
        %v1672 = vadd.f32 %v1429, %v1671
        %v1673 = vpop.f32.mrb[0].mxu0
        %1674 = vmatprep.mubr.f32.mxu0 0.0
        %1675 = vmatmul.mubr.f32.gmra.mrb[0].mxu0 %v1498
        %v1676 = vpop.f32.mrb[0].mxu0
        %v1677 = vadd.f32 %v1429, %v1676
        %v1678 = vpop.f32.mrb[0].mxu0
        %1679 = vdwg.mxu0
        %vm1680 = vcmp.gt.f32.partialorder %v1567, 0.0
        %vm1681 = vcmp.gt.f32.partialorder %v1572, 0.0
        %vm1682 = vcmp.gt.f32.partialorder %v1577, 0.0
        %vm1683 = vcmp.gt.f32.partialorder %v1582, 0.0
        %vm1684 = vcmp.gt.f32.partialorder %v1587, 0.0
        %vm1685 = vcmp.gt.f32.partialorder %v1592, 0.0
        %vm1686 = vcmp.gt.f32.partialorder %v1597, 0.0
        %vm1687 = vcmp.gt.f32.partialorder %v1602, 0.0
        %vm1688 = vcmp.gt.f32.partialorder %v1607, 0.0
        %vm1689 = vcmp.gt.f32.partialorder %v1612, 0.0
        %vm1690 = vcmp.gt.f32.partialorder %v1617, 0.0
        %vm1691 = vcmp.gt.f32.partialorder %v1622, 0.0
        %vm1692 = vcmp.gt.f32.partialorder %v1627, 0.0
        %vm1693 = vcmp.gt.f32.partialorder %v1632, 0.0
        %vm1694 = vcmp.gt.f32.partialorder %v1637, 0.0
        %vm1695 = vcmp.gt.f32.partialorder %v1642, 0.0
        %vm1696 = vcmp.gt.f32.partialorder %v1647, 0.0
        %vm1697 = vcmp.gt.f32.partialorder %v1652, 0.0
        %vm1698 = vcmp.gt.f32.partialorder %v1657, 0.0
        %vm1699 = vcmp.gt.f32.partialorder %v1662, 0.0
        %vm1700 = vcmp.gt.f32.partialorder %v1667, 0.0
        %vm1701 = vcmp.gt.f32.partialorder %v1672, 0.0
        %vm1702 = vcmp.gt.f32.partialorder %v1677, 0.0
        %v1703 = vmul.f32 %v1567, 1.442695
        %v1704 = vpow.pop %v1703
        %v1705 = vmul.f32 %v1572, 1.442695
        %v1706 = vpow.pop %v1705
        %v1707 = vmul.f32 %v1577, 1.442695
        %v1708 = vpow.pop %v1707
        %v1709 = vmul.f32 %v1582, 1.442695
        %v1710 = vpow.pop %v1709
        %v1711 = vmul.f32 %v1587, 1.442695
        %v1712 = vpow.pop %v1711
        %v1713 = vmul.f32 %v1592, 1.442695
        %v1714 = vpow.pop %v1713
        %v1715 = vmul.f32 %v1597, 1.442695
        %v1716 = vpow.pop %v1715
        %v1717 = vmul.f32 %v1602, 1.442695
        %v1718 = vpow.pop %v1717
        %v1719 = vmul.f32 %v1607, 1.442695
        %v1720 = vpow.pop %v1719
        %v1721 = vmul.f32 %v1612, 1.442695
        %v1722 = vpow.pop %v1721
        %v1723 = vmul.f32 %v1617, 1.442695
        %v1724 = vpow.pop %v1723
        %v1725 = vmul.f32 %v1622, 1.442695
        %v1726 = vpow.pop %v1725
        %v1727 = vmul.f32 %v1627, 1.442695
        %v1728 = vpow.pop %v1727
        %v1729 = vmul.f32 %v1632, 1.442695
        %v1730 = vpow.pop %v1729
        %v1731 = vmul.f32 %v1637, 1.442695
        %v1732 = vpow.pop %v1731
        %v1733 = vmul.f32 %v1642, 1.442695
        %v1734 = vpow.pop %v1733
        %v1735 = vmul.f32 %v1647, 1.442695
        %v1736 = vpow.pop %v1735
        %v1737 = vmul.f32 %v1652, 1.442695
        %v1738 = vpow.pop %v1737
        %v1739 = vmul.f32 %v1657, 1.442695
        %v1740 = vpow.pop %v1739
        %v1741 = vmul.f32 %v1662, 1.442695
        %v1742 = vpow.pop %v1741
        %v1743 = vmul.f32 %v1667, 1.442695
        %v1744 = vpow.pop %v1743
        %v1745 = vmul.f32 %v1672, 1.442695
        %v1746 = vpow.pop %v1745
        %v1747 = vmul.f32 %v1677, 1.442695
        %v1748 = vpow.pop %v1747
        %v1749 = vsub.f32 %v1704, 1.0
        %v1750 = vsub.f32 %v1706, 1.0
        %v1751 = vsub.f32 %v1708, 1.0
        %v1752 = vsub.f32 %v1710, 1.0
        %v1753 = vsub.f32 %v1712, 1.0
        %v1754 = vsub.f32 %v1714, 1.0
        %v1755 = vsub.f32 %v1716, 1.0
        %v1756 = vsub.f32 %v1718, 1.0
        %v1757 = vsub.f32 %v1720, 1.0
        %v1758 = vsub.f32 %v1722, 1.0
        %v1759 = vsub.f32 %v1724, 1.0
        %v1760 = vsub.f32 %v1726, 1.0
        %v1761 = vsub.f32 %v1728, 1.0
        %v1762 = vsub.f32 %v1730, 1.0
        %v1763 = vsub.f32 %v1732, 1.0
        %v1764 = vsub.f32 %v1734, 1.0
        %v1765 = vsub.f32 %v1736, 1.0
        %v1766 = vsub.f32 %v1738, 1.0
        %v1767 = vsub.f32 %v1740, 1.0
        %v1768 = vsub.f32 %v1742, 1.0
        %v1769 = vsub.f32 %v1744, 1.0
        %v1770 = vsub.f32 %v1746, 1.0
        %v1771 = vsub.f32 %v1748, 1.0
        %v1772 = vsel %vm1680, %v1567, %v1749
        %v1773 = vsel %vm1681, %v1572, %v1750
        %v1774 = vsel %vm1682, %v1577, %v1751
        %v1775 = vsel %vm1683, %v1582, %v1752
        %v1776 = vsel %vm1684, %v1587, %v1753
        %v1777 = vsel %vm1685, %v1592, %v1754
        %v1778 = vsel %vm1686, %v1597, %v1755
        %v1779 = vsel %vm1687, %v1602, %v1756
        %v1780 = vsel %vm1688, %v1607, %v1757
        %v1781 = vsel %vm1689, %v1612, %v1758
        %v1782 = vsel %vm1690, %v1617, %v1759
        %v1783 = vsel %vm1691, %v1622, %v1760
        %v1784 = vsel %vm1692, %v1627, %v1761
        %v1785 = vsel %vm1693, %v1632, %v1762
        %v1786 = vsel %vm1694, %v1637, %v1763
        %v1787 = vsel %vm1695, %v1642, %v1764
        %v1788 = vsel %vm1696, %v1647, %v1765
        %v1789 = vsel %vm1697, %v1652, %v1766
        %v1790 = vsel %vm1698, %v1657, %v1767
        %v1791 = vsel %vm1699, %v1662, %v1768
        %v1792 = vsel %vm1700, %v1667, %v1769
        %v1793 = vsel %vm1701, %v1672, %v1770
        %v1794 = vsel %vm1702, %v1677, %v1771
        %v1796 = vsel %vm548, %v1399, 0
        %v1799 = vsel %vm548, %v1400, 0
        %v1802 = vsel %vm548, %v1401, 0
        %v1805 = vsel %vm548, %v1402, 0
        %v1808 = vsel %vm548, %v1403, 0
        %v1811 = vsel %vm548, %v1404, 0
        %v1814 = vsel %vm548, %v1405, 0
        %v1817 = vsel %vm548, %v1406, 0
        %v1820 = vsel %vm548, %v1407, 0
        %v1823 = vsel %vm548, %v1408, 0
        %v1826 = vsel %vm548, %v1409, 0
        %v1829 = vsel %vm548, %v1410, 0
        %v1832 = vsel %vm548, %v1411, 0
        %v1835 = vsel %vm548, %v1412, 0
        %v1838 = vsel %vm548, %v1413, 0
        %v1841 = vsel %vm548, %v1414, 0
        %v1844 = vsel %vm548, %v1415, 0
        %v1847 = vsel %vm548, %v1416, 0
        %v1850 = vsel %vm548, %v1417, 0
        %v1853 = vsel %vm548, %v1418, 0
        %v1856 = vsel %vm548, %v1419, 0
        %v1859 = vsel %vm548, %v1420, 0
        %v1862 = vsel %vm548, %v1421, 0
        %1864 = vmatprep.subr.mxu0 0.0
        %1865 = vmatpush1.msra.mxu0 %v1422
        %1866 = vmatprep.subr.mxu0 0.0
        %1867 = vmatpush1.msra.mxu0 %v1423
        %1868 = vmatprep.subr.mxu0 0.0
        %1869 = vmatpush1.msra.mxu0 0.0
        %1870 = vmatprep.subr.mxu0 0.0
        %1871 = vmatpush1.msra.mxu0 0.0
        %1872 = vmatprep.subr.mxu0 0.0
        %1873 = vmatpush1.msra.mxu0 0.0
        %1874 = vmatprep.subr.mxu0 0.0
        %1875 = vmatpush1.msra.mxu0 0.0
        %1876 = vmatprep.subr.mxu0 0.0
        %1877 = vmatpush1.msra.mxu0 0.0
        %1878 = vmatprep.subr.mxu0 0.0
        %1879 = vmatpush1.msra.mxu0 0.0
        %1880 = vmatprep.subr.mxu0 0.0
        %1881 = vmatpush1.msra.mxu0 0.0
        %1882 = vmatprep.subr.mxu0 0.0
        %1883 = vmatpush1.msra.mxu0 0.0
        %1884 = vmatprep.subr.mxu0 0.0
        %1885 = vmatpush1.msra.mxu0 0.0
        %1886 = vmatprep.subr.mxu0 0.0
        %1887 = vmatpush1.msra.mxu0 0.0
        %1888 = vmatprep.subr.mxu0 0.0
        %1889 = vmatpush1.msra.mxu0 0.0
        %1890 = vmatprep.subr.mxu0 0.0
        %1891 = vmatpush1.msra.mxu0 0.0
        %1892 = vmatprep.subr.mxu0 0.0
        %1893 = vmatpush1.msra.mxu0 0.0
        %1894 = vmatprep.subr.mxu0 0.0
        %1895 = vmatpush1.msra.mxu0 0.0
        %1896 = vmatprep.subr.mxu0 0.0
        %1897 = vmatpush1.msra.mxu0 0.0
        %1898 = vmatprep.subr.mxu0 0.0
        %1899 = vmatpush1.msra.mxu0 0.0
        %1900 = vmatprep.subr.mxu0 0.0
        %1901 = vmatpush1.msra.mxu0 0.0
        %1902 = vmatprep.subr.mxu0 0.0
        %1903 = vmatpush1.msra.mxu0 0.0
        %1904 = vmatprep.subr.mxu0 0.0
        %1905 = vmatpush1.msra.mxu0 0.0
        %1906 = vmatprep.subr.mxu0 0.0
        %1907 = vmatpush1.msra.mxu0 0.0
        %1908 = vmatprep.subr.mxu0 0.0
        %1909 = vmatpush1.msra.mxu0 0.0
        %1910 = vmatprep.subr.mxu0 0.0
        %1911 = vmatpush1.msra.mxu0 0.0
        %1912 = vmatprep.subr.mxu0 0.0
        %1913 = vmatpush1.msra.mxu0 0.0
        %1914 = vmatprep.subr.mxu0 0.0
        %1915 = vmatpush1.msra.mxu0 0.0
        %1916 = vmatprep.subr.mxu0 0.0
        %1917 = vmatpush1.msra.mxu0 0.0
        %1918 = vmatprep.subr.mxu0 0.0
        %1919 = vmatpush1.msra.mxu0 0.0
        %1920 = vmatprep.subr.mxu0 0.0
        %1921 = vmatpush1.msra.mxu0 0.0
        %1922 = vmatprep.subr.mxu0 0.0
        %1923 = vmatpush1.msra.mxu0 0.0
        %1924 = vmatprep.subr.mxu0 0.0
        %1925 = vmatpush1.msra.mxu0 0.0
        %1926 = vmatprep.subr.mxu0 0.0
        %1927 = vmatpush1.msra.mxu0 0.0
        %1928 = vmatprep.mubr.f32.mxu0 0.0
        %1929 = vmatmul.mubr.f32.gmra.mrb[0].mxu0 %v1796
        %v1930 = vpop.f32.mrb[0].mxu0
        %v1931 = vadd.f32 %v1429, %v1930
        %v1932 = vpop.f32.mrb[0].mxu0
        %1933 = vmatprep.mubr.f32.mxu0 0.0
        %1934 = vmatmul.mubr.f32.gmra.mrb[0].mxu0 %v1799
        %v1935 = vpop.f32.mrb[0].mxu0
        %v1936 = vadd.f32 %v1429, %v1935
        %v1937 = vpop.f32.mrb[0].mxu0
        %1938 = vmatprep.mubr.f32.mxu0 0.0
        %1939 = vmatmul.mubr.f32.gmra.mrb[0].mxu0 %v1802
        %v1940 = vpop.f32.mrb[0].mxu0
        %v1941 = vadd.f32 %v1429, %v1940
        %v1942 = vpop.f32.mrb[0].mxu0
        %1943 = vmatprep.mubr.f32.mxu0 0.0
        %1944 = vmatmul.mubr.f32.gmra.mrb[0].mxu0 %v1805
        %v1945 = vpop.f32.mrb[0].mxu0
        %v1946 = vadd.f32 %v1429, %v1945
        %v1947 = vpop.f32.mrb[0].mxu0
        %1948 = vmatprep.mubr.f32.mxu0 0.0
        %1949 = vmatmul.mubr.f32.gmra.mrb[0].mxu0 %v1808
        %v1950 = vpop.f32.mrb[0].mxu0
        %v1951 = vadd.f32 %v1429, %v1950
        %v1952 = vpop.f32.mrb[0].mxu0
        %1953 = vmatprep.mubr.f32.mxu0 0.0
        %1954 = vmatmul.mubr.f32.gmra.mrb[0].mxu0 %v1811
        %v1955 = vpop.f32.mrb[0].mxu0
        %v1956 = vadd.f32 %v1429, %v1955
        %v1957 = vpop.f32.mrb[0].mxu0
        %1958 = vmatprep.mubr.f32.mxu0 0.0
        %1959 = vmatmul.mubr.f32.gmra.mrb[0].mxu0 %v1814
        %v1960 = vpop.f32.mrb[0].mxu0
        %v1961 = vadd.f32 %v1429, %v1960
        %v1962 = vpop.f32.mrb[0].mxu0
        %1963 = vmatprep.mubr.f32.mxu0 0.0
        %1964 = vmatmul.mubr.f32.gmra.mrb[0].mxu0 %v1817
        %v1965 = vpop.f32.mrb[0].mxu0
        %v1966 = vadd.f32 %v1429, %v1965
        %v1967 = vpop.f32.mrb[0].mxu0
        %1968 = vmatprep.mubr.f32.mxu0 0.0
        %1969 = vmatmul.mubr.f32.gmra.mrb[0].mxu0 %v1820
        %v1970 = vpop.f32.mrb[0].mxu0
        %v1971 = vadd.f32 %v1429, %v1970
        %v1972 = vpop.f32.mrb[0].mxu0
        %1973 = vmatprep.mubr.f32.mxu0 0.0
        %1974 = vmatmul.mubr.f32.gmra.mrb[0].mxu0 %v1823
        %v1975 = vpop.f32.mrb[0].mxu0
        %v1976 = vadd.f32 %v1429, %v1975
        %v1977 = vpop.f32.mrb[0].mxu0
        %1978 = vmatprep.mubr.f32.mxu0 0.0
        %1979 = vmatmul.mubr.f32.gmra.mrb[0].mxu0 %v1826
        %v1980 = vpop.f32.mrb[0].mxu0
        %v1981 = vadd.f32 %v1429, %v1980
        %v1982 = vpop.f32.mrb[0].mxu0
        %1983 = vmatprep.mubr.f32.mxu0 0.0
        %1984 = vmatmul.mubr.f32.gmra.mrb[0].mxu0 %v1829
        %v1985 = vpop.f32.mrb[0].mxu0
        %v1986 = vadd.f32 %v1429, %v1985
        %v1987 = vpop.f32.mrb[0].mxu0
        %1988 = vmatprep.mubr.f32.mxu0 0.0
        %1989 = vmatmul.mubr.f32.gmra.mrb[0].mxu0 %v1832
        %v1990 = vpop.f32.mrb[0].mxu0
        %v1991 = vadd.f32 %v1429, %v1990
        %v1992 = vpop.f32.mrb[0].mxu0
        %1993 = vmatprep.mubr.f32.mxu0 0.0
        %1994 = vmatmul.mubr.f32.gmra.mrb[0].mxu0 %v1835
        %v1995 = vpop.f32.mrb[0].mxu0
        %v1996 = vadd.f32 %v1429, %v1995
        %v1997 = vpop.f32.mrb[0].mxu0
        %1998 = vmatprep.mubr.f32.mxu0 0.0
        %1999 = vmatmul.mubr.f32.gmra.mrb[0].mxu0 %v1838
        %v2000 = vpop.f32.mrb[0].mxu0
        %v2001 = vadd.f32 %v1429, %v2000
        %v2002 = vpop.f32.mrb[0].mxu0
        %2003 = vmatprep.mubr.f32.mxu0 0.0
        %2004 = vmatmul.mubr.f32.gmra.mrb[0].mxu0 %v1841
        %v2005 = vpop.f32.mrb[0].mxu0
        %v2006 = vadd.f32 %v1429, %v2005
        %v2007 = vpop.f32.mrb[0].mxu0
        %2008 = vmatprep.mubr.f32.mxu0 0.0
        %2009 = vmatmul.mubr.f32.gmra.mrb[0].mxu0 %v1844
        %v2010 = vpop.f32.mrb[0].mxu0
        %v2011 = vadd.f32 %v1429, %v2010
        %v2012 = vpop.f32.mrb[0].mxu0
        %2013 = vmatprep.mubr.f32.mxu0 0.0
        %2014 = vmatmul.mubr.f32.gmra.mrb[0].mxu0 %v1847
        %v2015 = vpop.f32.mrb[0].mxu0
        %v2016 = vadd.f32 %v1429, %v2015
        %v2017 = vpop.f32.mrb[0].mxu0
        %2018 = vmatprep.mubr.f32.mxu0 0.0
        %2019 = vmatmul.mubr.f32.gmra.mrb[0].mxu0 %v1850
        %v2020 = vpop.f32.mrb[0].mxu0
        %v2021 = vadd.f32 %v1429, %v2020
        %v2022 = vpop.f32.mrb[0].mxu0
        %2023 = vmatprep.mubr.f32.mxu0 0.0
        %2024 = vmatmul.mubr.f32.gmra.mrb[0].mxu0 %v1853
        %v2025 = vpop.f32.mrb[0].mxu0
        %v2026 = vadd.f32 %v1429, %v2025
        %v2027 = vpop.f32.mrb[0].mxu0
        %2028 = vmatprep.mubr.f32.mxu0 0.0
        %2029 = vmatmul.mubr.f32.gmra.mrb[0].mxu0 %v1856
        %v2030 = vpop.f32.mrb[0].mxu0
        %v2031 = vadd.f32 %v1429, %v2030
        %v2032 = vpop.f32.mrb[0].mxu0
        %2033 = vmatprep.mubr.f32.mxu0 0.0
        %2034 = vmatmul.mubr.f32.gmra.mrb[0].mxu0 %v1859
        %v2035 = vpop.f32.mrb[0].mxu0
        %v2036 = vadd.f32 %v1429, %v2035
        %v2037 = vpop.f32.mrb[0].mxu0
        %2038 = vmatprep.mubr.f32.mxu0 0.0
        %2039 = vmatmul.mubr.f32.gmra.mrb[0].mxu0 %v1862
        %v2040 = vpop.f32.mrb[0].mxu0
        %v2041 = vadd.f32 %v1429, %v2040
        %v2042 = vpop.f32.mrb[0].mxu0
        %2043 = vdwg.mxu0
        %vm2044 = vcmp.gt.f32.partialorder %v1931, 0.0
        %vm2045 = vcmp.gt.f32.partialorder %v1936, 0.0
        %vm2046 = vcmp.gt.f32.partialorder %v1941, 0.0
        %vm2047 = vcmp.gt.f32.partialorder %v1946, 0.0
        %vm2048 = vcmp.gt.f32.partialorder %v1951, 0.0
        %vm2049 = vcmp.gt.f32.partialorder %v1956, 0.0
        %vm2050 = vcmp.gt.f32.partialorder %v1961, 0.0
        %vm2051 = vcmp.gt.f32.partialorder %v1966, 0.0
        %vm2052 = vcmp.gt.f32.partialorder %v1971, 0.0
        %vm2053 = vcmp.gt.f32.partialorder %v1976, 0.0
        %vm2054 = vcmp.gt.f32.partialorder %v1981, 0.0
        %vm2055 = vcmp.gt.f32.partialorder %v1986, 0.0
        %vm2056 = vcmp.gt.f32.partialorder %v1991, 0.0
        %vm2057 = vcmp.gt.f32.partialorder %v1996, 0.0
        %vm2058 = vcmp.gt.f32.partialorder %v2001, 0.0
        %vm2059 = vcmp.gt.f32.partialorder %v2006, 0.0
        %vm2060 = vcmp.gt.f32.partialorder %v2011, 0.0
        %vm2061 = vcmp.gt.f32.partialorder %v2016, 0.0
        %vm2062 = vcmp.gt.f32.partialorder %v2021, 0.0
        %vm2063 = vcmp.gt.f32.partialorder %v2026, 0.0
        %vm2064 = vcmp.gt.f32.partialorder %v2031, 0.0
        %vm2065 = vcmp.gt.f32.partialorder %v2036, 0.0
        %vm2066 = vcmp.gt.f32.partialorder %v2041, 0.0
        %v2067 = vmul.f32 %v1931, 1.442695
        %v2068 = vpow.pop %v2067
        %v2069 = vmul.f32 %v1936, 1.442695
        %v2070 = vpow.pop %v2069
        %v2071 = vmul.f32 %v1941, 1.442695
        %v2072 = vpow.pop %v2071
        %v2073 = vmul.f32 %v1946, 1.442695
        %v2074 = vpow.pop %v2073
        %v2075 = vmul.f32 %v1951, 1.442695
        %v2076 = vpow.pop %v2075
        %v2077 = vmul.f32 %v1956, 1.442695
        %v2078 = vpow.pop %v2077
        %v2079 = vmul.f32 %v1961, 1.442695
        %v2080 = vpow.pop %v2079
        %v2081 = vmul.f32 %v1966, 1.442695
        %v2082 = vpow.pop %v2081
        %v2083 = vmul.f32 %v1971, 1.442695
        %v2084 = vpow.pop %v2083
        %v2085 = vmul.f32 %v1976, 1.442695
        %v2086 = vpow.pop %v2085
        %v2087 = vmul.f32 %v1981, 1.442695
        %v2088 = vpow.pop %v2087
        %v2089 = vmul.f32 %v1986, 1.442695
        %v2090 = vpow.pop %v2089
        %v2091 = vmul.f32 %v1991, 1.442695
        %v2092 = vpow.pop %v2091
        %v2093 = vmul.f32 %v1996, 1.442695
        %v2094 = vpow.pop %v2093
        %v2095 = vmul.f32 %v2001, 1.442695
        %v2096 = vpow.pop %v2095
        %v2097 = vmul.f32 %v2006, 1.442695
        %v2098 = vpow.pop %v2097
        %v2099 = vmul.f32 %v2011, 1.442695
        %v2100 = vpow.pop %v2099
        %v2101 = vmul.f32 %v2016, 1.442695
        %v2102 = vpow.pop %v2101
        %v2103 = vmul.f32 %v2021, 1.442695
        %v2104 = vpow.pop %v2103
        %v2105 = vmul.f32 %v2026, 1.442695
        %v2106 = vpow.pop %v2105
        %v2107 = vmul.f32 %v2031, 1.442695
        %v2108 = vpow.pop %v2107
        %v2109 = vmul.f32 %v2036, 1.442695
        %v2110 = vpow.pop %v2109
        %v2111 = vmul.f32 %v2041, 1.442695
        %v2112 = vpow.pop %v2111
        %v2113 = vsub.f32 %v2068, 1.0
        %v2114 = vsub.f32 %v2070, 1.0
        %v2115 = vsub.f32 %v2072, 1.0
        %v2116 = vsub.f32 %v2074, 1.0
        %v2117 = vsub.f32 %v2076, 1.0
        %v2118 = vsub.f32 %v2078, 1.0
        %v2119 = vsub.f32 %v2080, 1.0
        %v2120 = vsub.f32 %v2082, 1.0
        %v2121 = vsub.f32 %v2084, 1.0
        %v2122 = vsub.f32 %v2086, 1.0
        %v2123 = vsub.f32 %v2088, 1.0
        %v2124 = vsub.f32 %v2090, 1.0
        %v2125 = vsub.f32 %v2092, 1.0
        %v2126 = vsub.f32 %v2094, 1.0
        %v2127 = vsub.f32 %v2096, 1.0
        %v2128 = vsub.f32 %v2098, 1.0
        %v2129 = vsub.f32 %v2100, 1.0
        %v2130 = vsub.f32 %v2102, 1.0
        %v2131 = vsub.f32 %v2104, 1.0
        %v2132 = vsub.f32 %v2106, 1.0
        %v2133 = vsub.f32 %v2108, 1.0
        %v2134 = vsub.f32 %v2110, 1.0
        %v2135 = vsub.f32 %v2112, 1.0
        %v2136 = vsel %vm2044, %v1931, %v2113
        %v2137 = vsel %vm2045, %v1936, %v2114
        %v2138 = vsel %vm2046, %v1941, %v2115
        %v2139 = vsel %vm2047, %v1946, %v2116
        %v2140 = vsel %vm2048, %v1951, %v2117
        %v2141 = vsel %vm2049, %v1956, %v2118
        %v2142 = vsel %vm2050, %v1961, %v2119
        %v2143 = vsel %vm2051, %v1966, %v2120
        %v2144 = vsel %vm2052, %v1971, %v2121
        %v2145 = vsel %vm2053, %v1976, %v2122
        %v2146 = vsel %vm2054, %v1981, %v2123
        %v2147 = vsel %vm2055, %v1986, %v2124
        %v2148 = vsel %vm2056, %v1991, %v2125
        %v2149 = vsel %vm2057, %v1996, %v2126
        %v2150 = vsel %vm2058, %v2001, %v2127
        %v2151 = vsel %vm2059, %v2006, %v2128
        %v2152 = vsel %vm2060, %v2011, %v2129
        %v2153 = vsel %vm2061, %v2016, %v2130
        %v2154 = vsel %vm2062, %v2021, %v2131
        %v2155 = vsel %vm2063, %v2026, %v2132
        %v2156 = vsel %vm2064, %v2031, %v2133
        %v2157 = vsel %vm2065, %v2036, %v2134
        %v2158 = vsel %vm2066, %v2041, %v2135
        %v2159 = vadd.f32 %v1772, %v2136
        %v2160 = vadd.f32 %v1773, %v2137
        %v2161 = vadd.f32 %v1774, %v2138
        %v2162 = vadd.f32 %v1775, %v2139
        %v2163 = vadd.f32 %v1776, %v2140
        %v2164 = vadd.f32 %v1777, %v2141
        %v2165 = vadd.f32 %v1778, %v2142
        %v2166 = vadd.f32 %v1779, %v2143
        %v2167 = vadd.f32 %v1780, %v2144
        %v2168 = vadd.f32 %v1781, %v2145
        %v2169 = vadd.f32 %v1782, %v2146
        %v2170 = vadd.f32 %v1783, %v2147
        %v2171 = vadd.f32 %v1784, %v2148
        %v2172 = vadd.f32 %v1785, %v2149
        %v2173 = vadd.f32 %v1786, %v2150
        %v2174 = vadd.f32 %v1787, %v2151
        %v2175 = vadd.f32 %v1788, %v2152
        %v2176 = vadd.f32 %v1789, %v2153
        %v2177 = vadd.f32 %v1790, %v2154
        %v2178 = vadd.f32 %v1791, %v2155
        %v2179 = vadd.f32 %v1792, %v2156
        %v2180 = vadd.f32 %v1793, %v2157
        %v2181 = vadd.f32 %v1794, %v2158
        %v2182 = vmul.f32 %v2159, 0.5
        %v2183 = vmul.f32 %v2160, 0.5
        %v2184 = vmul.f32 %v2161, 0.5
        %v2185 = vmul.f32 %v2162, 0.5
        %v2186 = vmul.f32 %v2163, 0.5
        %v2187 = vmul.f32 %v2164, 0.5
        %v2188 = vmul.f32 %v2165, 0.5
        %v2189 = vmul.f32 %v2166, 0.5
        %v2190 = vmul.f32 %v2167, 0.5
        %v2191 = vmul.f32 %v2168, 0.5
        %v2192 = vmul.f32 %v2169, 0.5
        %v2193 = vmul.f32 %v2170, 0.5
        %v2194 = vmul.f32 %v2171, 0.5
        %v2195 = vmul.f32 %v2172, 0.5
        %v2196 = vmul.f32 %v2173, 0.5
        %v2197 = vmul.f32 %v2174, 0.5
        %v2198 = vmul.f32 %v2175, 0.5
        %v2199 = vmul.f32 %v2176, 0.5
        %v2200 = vmul.f32 %v2177, 0.5
        %v2201 = vmul.f32 %v2178, 0.5
        %v2202 = vmul.f32 %v2179, 0.5
        %v2203 = vmul.f32 %v2180, 0.5
        %v2204 = vmul.f32 %v2181, 0.5
        %2205 = vst.msk [vmem:[#allocation2 + $0xc2] sm:$0xff] %vm1351, %v2182
        %2206 = vst.msk [vmem:[#allocation2 + $0xca] sm:$0xff] %vm1351, %v2183
        %2207 = vst.msk [vmem:[#allocation2 + $0xd2] sm:$0xff] %vm1351, %v2184
        %2208 = vst.msk [vmem:[#allocation2 + $0xda] sm:$0xff] %vm1351, %v2185
        %2209 = vst.msk [vmem:[#allocation2 + $0xe2] sm:$0xff] %vm1351, %v2186
        %2210 = vst.msk [vmem:[#allocation2 + $0xea] sm:$0xff] %vm1351, %v2187
        %2211 = vst.msk [vmem:[#allocation2 + $0xf2] sm:$0xff] %vm1351, %v2188
        %2212 = vst.msk [vmem:[#allocation2 + $0xfa] sm:$0xff] %vm1351, %v2189
        %2213 = vst.msk [vmem:[#allocation2 + $0x102] sm:$0xff] %vm1351, %v2190
        %2214 = vst.msk [vmem:[#allocation2 + $0x10a] sm:$0xff] %vm1351, %v2191
        %2215 = vst.msk [vmem:[#allocation2 + $0x112] sm:$0xff] %vm1351, %v2192
        %2216 = vst.msk [vmem:[#allocation2 + $0x11a] sm:$0xff] %vm1351, %v2193
        %2217 = vst.msk [vmem:[#allocation2 + $0x122] sm:$0xff] %vm1351, %v2194
        %2218 = vst.msk [vmem:[#allocation2 + $0x12a] sm:$0xff] %vm1351, %v2195
        %2219 = vst.msk [vmem:[#allocation2 + $0x132] sm:$0xff] %vm1351, %v2196
        %2220 = vst.msk [vmem:[#allocation2 + $0x13a] sm:$0xff] %vm1351, %v2197
        %2221 = vst.msk [vmem:[#allocation2 + $0x142] sm:$0xff] %vm1351, %v2198
        %2222 = vst.msk [vmem:[#allocation2 + $0x14a] sm:$0xff] %vm1351, %v2199
        %2223 = vst.msk [vmem:[#allocation2 + $0x152] sm:$0xff] %vm1351, %v2200
        %2224 = vst.msk [vmem:[#allocation2 + $0x15a] sm:$0xff] %vm1351, %v2201
        %2225 = vst.msk [vmem:[#allocation2 + $0x162] sm:$0xff] %vm1351, %v2202
        %2226 = vst.msk [vmem:[#allocation2 + $0x16a] sm:$0xff] %vm1351, %v2203
        %vm2227 = vcmask 202752
        %2228 = vst.msk [vmem:[#allocation2 + $0x172] sm:$0x7f] %vm2227, %v2204
        %v2229 = vld [vmem:[#allocation2] sm:$0xff]
        %v2230 = vld [vmem:[#allocation2 + $0x8] sm:$0xff]
        %v2231 = vld [vmem:[#allocation2 + $0x10] sm:$0xff]
        %v2232 = vld [vmem:[#allocation2 + $0x18] sm:$0xff]
        %v2233 = vld [vmem:[#allocation2 + $0x20] sm:$0xff]
        %v2234 = vld [vmem:[#allocation2 + $0x28] sm:$0xff]
        %v2235 = vld [vmem:[#allocation2 + $0x30] sm:$0xff]
        %v2236 = vld [vmem:[#allocation2 + $0x38] sm:$0xff]
        %v2237 = vld [vmem:[#allocation2 + $0x40] sm:$0xff]
        %v2238 = vld [vmem:[#allocation2 + $0x48] sm:$0xff]
        %v2239 = vld [vmem:[#allocation2 + $0x50] sm:$0xff]
        %v2240 = vld [vmem:[#allocation2 + $0x58] sm:$0xff]
        %v2241 = vld [vmem:[#allocation2 + $0x60] sm:$0xff]
        %v2242 = vld [vmem:[#allocation2 + $0x68] sm:$0xff]
        %v2243 = vld [vmem:[#allocation2 + $0x70] sm:$0xff]
        %v2244 = vld [vmem:[#allocation2 + $0x78] sm:$0xff]
        %v2245 = vld [vmem:[#allocation2 + $0x80] sm:$0xff]
        %v2246 = vld [vmem:[#allocation2 + $0x88] sm:$0xff]
        %v2247 = vld [vmem:[#allocation2 + $0x90] sm:$0xff]
        %v2248 = vld [vmem:[#allocation2 + $0x98] sm:$0xff]
        %v2249 = vld [vmem:[#allocation2 + $0xa0] sm:$0xff]
        %v2250 = vld [vmem:[#allocation2 + $0xa8] sm:$0xff]
        %v2251 = vld [vmem:[#allocation2 + $0xb0] sm:$0xff]
        %v2252 = vld [vmem:[#allocation2 + $0xb8] sm:$0xff]
        %v2253 = vld [vmem:[%s3] sm:$0xff]
        %v2254 = vld [vmem:[%s3 + $0x8] sm:$0xff]
        %v2255 = vld [vmem:[%s3 + $0x10] sm:$0xff]
        %v2256 = vld [vmem:[%s3 + $0x18] sm:$0xff]
        %v2257 = vld [vmem:[#allocation2 + $0x1] sm:$0xff]
        %v2258 = vld [vmem:[#allocation2 + $0x9] sm:$0xff]
        %v2259 = vld [vmem:[#allocation2 + $0x11] sm:$0xff]
        %v2260 = vld [vmem:[#allocation2 + $0x19] sm:$0xff]
        %v2261 = vld [vmem:[#allocation2 + $0x21] sm:$0xff]
        %v2262 = vld [vmem:[#allocation2 + $0x29] sm:$0xff]
        %v2263 = vld [vmem:[#allocation2 + $0x31] sm:$0xff]
        %v2264 = vld [vmem:[#allocation2 + $0x39] sm:$0xff]
        %v2265 = vld [vmem:[#allocation2 + $0x41] sm:$0xff]
        %v2266 = vld [vmem:[#allocation2 + $0x49] sm:$0xff]
        %v2267 = vld [vmem:[#allocation2 + $0x51] sm:$0xff]
        %v2268 = vld [vmem:[#allocation2 + $0x59] sm:$0xff]
        %v2269 = vld [vmem:[#allocation2 + $0x61] sm:$0xff]
        %v2270 = vld [vmem:[#allocation2 + $0x69] sm:$0xff]
        %v2271 = vld [vmem:[#allocation2 + $0x71] sm:$0xff]
        %v2272 = vld [vmem:[#allocation2 + $0x79] sm:$0xff]
        %v2273 = vld [vmem:[#allocation2 + $0x81] sm:$0xff]
        %v2274 = vld [vmem:[#allocation2 + $0x89] sm:$0xff]
        %v2275 = vld [vmem:[#allocation2 + $0x91] sm:$0xff]
        %v2276 = vld [vmem:[#allocation2 + $0x99] sm:$0xff]
        %v2277 = vld [vmem:[#allocation2 + $0xa1] sm:$0xff]
        %v2278 = vld [vmem:[#allocation2 + $0xa9] sm:$0xff]
        %v2279 = vld [vmem:[#allocation2 + $0xb1] sm:$0xff]
        %v2280 = vld [vmem:[#allocation2 + $0xb9] sm:$0xff]
        %s2281 = scalar_lea.vmem %s3, 32
        %v2282 = vld [vmem:[%s2281] sm:$0xff]
        %v2283 = vld [vmem:[%s2281 + $0x8] sm:$0xff]
        %v2284 = vld [vmem:[%s2281 + $0x10] sm:$0xff]
        %v2285 = vld [vmem:[%s2281 + $0x18] sm:$0xff]
        %v2287 = vsel %vm390, %v2257, 0
        %v2290 = vsel %vm390, %v2258, 0
        %v2293 = vsel %vm390, %v2259, 0
        %v2296 = vsel %vm390, %v2260, 0
        %v2299 = vsel %vm390, %v2261, 0
        %v2302 = vsel %vm390, %v2262, 0
        %v2305 = vsel %vm390, %v2263, 0
        %v2308 = vsel %vm390, %v2264, 0
        %v2311 = vsel %vm390, %v2265, 0
        %v2314 = vsel %vm390, %v2266, 0
        %v2317 = vsel %vm390, %v2267, 0
        %v2320 = vsel %vm390, %v2268, 0
        %v2323 = vsel %vm390, %v2269, 0
        %v2326 = vsel %vm390, %v2270, 0
        %v2329 = vsel %vm390, %v2271, 0
        %v2332 = vsel %vm390, %v2272, 0
        %v2335 = vsel %vm390, %v2273, 0
        %v2338 = vsel %vm390, %v2274, 0
        %v2341 = vsel %vm390, %v2275, 0
        %v2344 = vsel %vm390, %v2276, 0
        %v2347 = vsel %vm390, %v2277, 0
        %v2350 = vsel %vm390, %v2278, 0
        %v2353 = vsel %vm390, %v2279, 0
        %v2356 = vsel %vm390, %v2280, 0
        %2358 = vmatprep.subr.mxu0 0.0
        %2359 = vmatpush1.msra.mxu0 %v2282
        %2360 = vmatprep.subr.mxu0 0.0
        %2361 = vmatpush1.msra.mxu0 %v2283
        %2362 = vmatprep.subr.mxu0 0.0
        %2363 = vmatpush1.msra.mxu0 %v2284
        %2364 = vmatprep.subr.mxu0 0.0
        %2365 = vmatpush1.msra.mxu0 %v2285
        %2366 = vmatprep.subr.mxu0 0.0
        %2367 = vmatpush1.msra.mxu0 0.0
        %2368 = vmatprep.subr.mxu0 0.0
        %2369 = vmatpush1.msra.mxu0 0.0
        %2370 = vmatprep.subr.mxu0 0.0
        %2371 = vmatpush1.msra.mxu0 0.0
        %2372 = vmatprep.subr.mxu0 0.0
        %2373 = vmatpush1.msra.mxu0 0.0
        %2374 = vmatprep.subr.mxu0 0.0
        %2375 = vmatpush1.msra.mxu0 0.0
        %2376 = vmatprep.subr.mxu0 0.0
        %2377 = vmatpush1.msra.mxu0 0.0
        %2378 = vmatprep.subr.mxu0 0.0
        %2379 = vmatpush1.msra.mxu0 0.0
        %2380 = vmatprep.subr.mxu0 0.0
        %2381 = vmatpush1.msra.mxu0 0.0
        %2382 = vmatprep.subr.mxu0 0.0
        %2383 = vmatpush1.msra.mxu0 0.0
        %2384 = vmatprep.subr.mxu0 0.0
        %2385 = vmatpush1.msra.mxu0 0.0
        %2386 = vmatprep.subr.mxu0 0.0
        %2387 = vmatpush1.msra.mxu0 0.0
        %2388 = vmatprep.subr.mxu0 0.0
        %2389 = vmatpush1.msra.mxu0 0.0
        %2390 = vmatprep.subr.mxu0 0.0
        %2391 = vmatpush1.msra.mxu0 0.0
        %2392 = vmatprep.subr.mxu0 0.0
        %2393 = vmatpush1.msra.mxu0 0.0
        %2394 = vmatprep.subr.mxu0 0.0
        %2395 = vmatpush1.msra.mxu0 0.0
        %2396 = vmatprep.subr.mxu0 0.0
        %2397 = vmatpush1.msra.mxu0 0.0
        %2398 = vmatprep.subr.mxu0 0.0
        %2399 = vmatpush1.msra.mxu0 0.0
        %2400 = vmatprep.subr.mxu0 0.0
        %2401 = vmatpush1.msra.mxu0 0.0
        %2402 = vmatprep.subr.mxu0 0.0
        %2403 = vmatpush1.msra.mxu0 0.0
        %2404 = vmatprep.subr.mxu0 0.0
        %2405 = vmatpush1.msra.mxu0 0.0
        %2406 = vmatprep.subr.mxu0 0.0
        %2407 = vmatpush1.msra.mxu0 0.0
        %2408 = vmatprep.subr.mxu0 0.0
        %2409 = vmatpush1.msra.mxu0 0.0
        %2410 = vmatprep.subr.mxu0 0.0
        %2411 = vmatpush1.msra.mxu0 0.0
        %2412 = vmatprep.subr.mxu0 0.0
        %2413 = vmatpush1.msra.mxu0 0.0
        %2414 = vmatprep.subr.mxu0 0.0
        %2415 = vmatpush1.msra.mxu0 0.0
        %2416 = vmatprep.subr.mxu0 0.0
        %2417 = vmatpush1.msra.mxu0 0.0
        %2418 = vmatprep.subr.mxu0 0.0
        %2419 = vmatpush1.msra.mxu0 0.0
        %2420 = vmatprep.subr.mxu0 0.0
        %2421 = vmatpush1.msra.mxu0 0.0
        %2422 = vmatprep.mubr.f32.mxu0 0.0
        %2423 = vmatmul.mubr.f32.gmra.mrb[0].mxu0 %v2287
        %v2424 = vpop.f32.mrb[0].mxu0
        %v2425 = vadd.f32 0.0, %v2424
        %v2426 = vpop.f32.mrb[0].mxu0
        %2427 = vmatprep.mubr.f32.mxu0 0.0
        %2428 = vmatmul.mubr.f32.gmra.mrb[0].mxu0 %v2290
        %v2429 = vpop.f32.mrb[0].mxu0
        %v2430 = vadd.f32 0.0, %v2429
        %v2431 = vpop.f32.mrb[0].mxu0
        %2432 = vmatprep.mubr.f32.mxu0 0.0
        %2433 = vmatmul.mubr.f32.gmra.mrb[0].mxu0 %v2293
        %v2434 = vpop.f32.mrb[0].mxu0
        %v2435 = vadd.f32 0.0, %v2434
        %v2436 = vpop.f32.mrb[0].mxu0
        %2437 = vmatprep.mubr.f32.mxu0 0.0
        %2438 = vmatmul.mubr.f32.gmra.mrb[0].mxu0 %v2296
        %v2439 = vpop.f32.mrb[0].mxu0
        %v2440 = vadd.f32 0.0, %v2439
        %v2441 = vpop.f32.mrb[0].mxu0
        %2442 = vmatprep.mubr.f32.mxu0 0.0
        %2443 = vmatmul.mubr.f32.gmra.mrb[0].mxu0 %v2299
        %v2444 = vpop.f32.mrb[0].mxu0
        %v2445 = vadd.f32 0.0, %v2444
        %v2446 = vpop.f32.mrb[0].mxu0
        %2447 = vmatprep.mubr.f32.mxu0 0.0
        %2448 = vmatmul.mubr.f32.gmra.mrb[0].mxu0 %v2302
        %v2449 = vpop.f32.mrb[0].mxu0
        %v2450 = vadd.f32 0.0, %v2449
        %v2451 = vpop.f32.mrb[0].mxu0
        %2452 = vmatprep.mubr.f32.mxu0 0.0
        %2453 = vmatmul.mubr.f32.gmra.mrb[0].mxu0 %v2305
        %v2454 = vpop.f32.mrb[0].mxu0
        %v2455 = vadd.f32 0.0, %v2454
        %v2456 = vpop.f32.mrb[0].mxu0
        %2457 = vmatprep.mubr.f32.mxu0 0.0
        %2458 = vmatmul.mubr.f32.gmra.mrb[0].mxu0 %v2308
        %v2459 = vpop.f32.mrb[0].mxu0
        %v2460 = vadd.f32 0.0, %v2459
        %v2461 = vpop.f32.mrb[0].mxu0
        %2462 = vmatprep.mubr.f32.mxu0 0.0
        %2463 = vmatmul.mubr.f32.gmra.mrb[0].mxu0 %v2311
        %v2464 = vpop.f32.mrb[0].mxu0
        %v2465 = vadd.f32 0.0, %v2464
        %v2466 = vpop.f32.mrb[0].mxu0
        %2467 = vmatprep.mubr.f32.mxu0 0.0
        %2468 = vmatmul.mubr.f32.gmra.mrb[0].mxu0 %v2314
        %v2469 = vpop.f32.mrb[0].mxu0
        %v2470 = vadd.f32 0.0, %v2469
        %v2471 = vpop.f32.mrb[0].mxu0
        %2472 = vmatprep.mubr.f32.mxu0 0.0
        %2473 = vmatmul.mubr.f32.gmra.mrb[0].mxu0 %v2317
        %v2474 = vpop.f32.mrb[0].mxu0
        %v2475 = vadd.f32 0.0, %v2474
        %v2476 = vpop.f32.mrb[0].mxu0
        %2477 = vmatprep.mubr.f32.mxu0 0.0
        %2478 = vmatmul.mubr.f32.gmra.mrb[0].mxu0 %v2320
        %v2479 = vpop.f32.mrb[0].mxu0
        %v2480 = vadd.f32 0.0, %v2479
        %v2481 = vpop.f32.mrb[0].mxu0
        %2482 = vmatprep.mubr.f32.mxu0 0.0
        %2483 = vmatmul.mubr.f32.gmra.mrb[0].mxu0 %v2323
        %v2484 = vpop.f32.mrb[0].mxu0
        %v2485 = vadd.f32 0.0, %v2484
        %v2486 = vpop.f32.mrb[0].mxu0
        %2487 = vmatprep.mubr.f32.mxu0 0.0
        %2488 = vmatmul.mubr.f32.gmra.mrb[0].mxu0 %v2326
        %v2489 = vpop.f32.mrb[0].mxu0
        %v2490 = vadd.f32 0.0, %v2489
        %v2491 = vpop.f32.mrb[0].mxu0
        %2492 = vmatprep.mubr.f32.mxu0 0.0
        %2493 = vmatmul.mubr.f32.gmra.mrb[0].mxu0 %v2329
        %v2494 = vpop.f32.mrb[0].mxu0
        %v2495 = vadd.f32 0.0, %v2494
        %v2496 = vpop.f32.mrb[0].mxu0
        %2497 = vmatprep.mubr.f32.mxu0 0.0
        %2498 = vmatmul.mubr.f32.gmra.mrb[0].mxu0 %v2332
        %v2499 = vpop.f32.mrb[0].mxu0
        %v2500 = vadd.f32 0.0, %v2499
        %v2501 = vpop.f32.mrb[0].mxu0
        %2502 = vmatprep.mubr.f32.mxu0 0.0
        %2503 = vmatmul.mubr.f32.gmra.mrb[0].mxu0 %v2335
        %v2504 = vpop.f32.mrb[0].mxu0
        %v2505 = vadd.f32 0.0, %v2504
        %v2506 = vpop.f32.mrb[0].mxu0
        %2507 = vmatprep.mubr.f32.mxu0 0.0
        %2508 = vmatmul.mubr.f32.gmra.mrb[0].mxu0 %v2338
        %v2509 = vpop.f32.mrb[0].mxu0
        %v2510 = vadd.f32 0.0, %v2509
        %v2511 = vpop.f32.mrb[0].mxu0
        %2512 = vmatprep.mubr.f32.mxu0 0.0
        %2513 = vmatmul.mubr.f32.gmra.mrb[0].mxu0 %v2341
        %v2514 = vpop.f32.mrb[0].mxu0
        %v2515 = vadd.f32 0.0, %v2514
        %v2516 = vpop.f32.mrb[0].mxu0
        %2517 = vmatprep.mubr.f32.mxu0 0.0
        %2518 = vmatmul.mubr.f32.gmra.mrb[0].mxu0 %v2344
        %v2519 = vpop.f32.mrb[0].mxu0
        %v2520 = vadd.f32 0.0, %v2519
        %v2521 = vpop.f32.mrb[0].mxu0
        %2522 = vmatprep.mubr.f32.mxu0 0.0
        %2523 = vmatmul.mubr.f32.gmra.mrb[0].mxu0 %v2347
        %v2524 = vpop.f32.mrb[0].mxu0
        %v2525 = vadd.f32 0.0, %v2524
        %v2526 = vpop.f32.mrb[0].mxu0
        %2527 = vmatprep.mubr.f32.mxu0 0.0
        %2528 = vmatmul.mubr.f32.gmra.mrb[0].mxu0 %v2350
        %v2529 = vpop.f32.mrb[0].mxu0
        %v2530 = vadd.f32 0.0, %v2529
        %v2531 = vpop.f32.mrb[0].mxu0
        %2532 = vmatprep.mubr.f32.mxu0 0.0
        %2533 = vmatmul.mubr.f32.gmra.mrb[0].mxu0 %v2353
        %v2534 = vpop.f32.mrb[0].mxu0
        %v2535 = vadd.f32 0.0, %v2534
        %v2536 = vpop.f32.mrb[0].mxu0
        %2537 = vmatprep.mubr.f32.mxu0 0.0
        %2538 = vmatmul.mubr.f32.gmra.mrb[0].mxu0 %v2356
        %v2539 = vpop.f32.mrb[0].mxu0
        %v2540 = vadd.f32 0.0, %v2539
        %v2541 = vpop.f32.mrb[0].mxu0
        %2542 = vdwg.mxu0
        %v2544 = vsel %vm390, %v2229, 0
        %v2547 = vsel %vm390, %v2230, 0
        %v2550 = vsel %vm390, %v2231, 0
        %v2553 = vsel %vm390, %v2232, 0
        %v2556 = vsel %vm390, %v2233, 0
        %v2559 = vsel %vm390, %v2234, 0
        %v2562 = vsel %vm390, %v2235, 0
        %v2565 = vsel %vm390, %v2236, 0
        %v2568 = vsel %vm390, %v2237, 0
        %v2571 = vsel %vm390, %v2238, 0
        %v2574 = vsel %vm390, %v2239, 0
        %v2577 = vsel %vm390, %v2240, 0
        %v2580 = vsel %vm390, %v2241, 0
        %v2583 = vsel %vm390, %v2242, 0
        %v2586 = vsel %vm390, %v2243, 0
        %v2589 = vsel %vm390, %v2244, 0
        %v2592 = vsel %vm390, %v2245, 0
        %v2595 = vsel %vm390, %v2246, 0
        %v2598 = vsel %vm390, %v2247, 0
        %v2601 = vsel %vm390, %v2248, 0
        %v2604 = vsel %vm390, %v2249, 0
        %v2607 = vsel %vm390, %v2250, 0
        %v2610 = vsel %vm390, %v2251, 0
        %v2613 = vsel %vm390, %v2252, 0
        %2615 = vmatprep.subr.mxu0 0.0
        %2616 = vmatpush1.msra.mxu0 %v2253
        %2617 = vmatprep.subr.mxu0 0.0
        %2618 = vmatpush1.msra.mxu0 %v2254
        %2619 = vmatprep.subr.mxu0 0.0
        %2620 = vmatpush1.msra.mxu0 %v2255
        %2621 = vmatprep.subr.mxu0 0.0
        %2622 = vmatpush1.msra.mxu0 %v2256
        %2623 = vmatprep.subr.mxu0 0.0
        %2624 = vmatpush1.msra.mxu0 0.0
        %2625 = vmatprep.subr.mxu0 0.0
        %2626 = vmatpush1.msra.mxu0 0.0
        %2627 = vmatprep.subr.mxu0 0.0
        %2628 = vmatpush1.msra.mxu0 0.0
        %2629 = vmatprep.subr.mxu0 0.0
        %2630 = vmatpush1.msra.mxu0 0.0
        %2631 = vmatprep.subr.mxu0 0.0
        %2632 = vmatpush1.msra.mxu0 0.0
        %2633 = vmatprep.subr.mxu0 0.0
        %2634 = vmatpush1.msra.mxu0 0.0
        %2635 = vmatprep.subr.mxu0 0.0
        %2636 = vmatpush1.msra.mxu0 0.0
        %2637 = vmatprep.subr.mxu0 0.0
        %2638 = vmatpush1.msra.mxu0 0.0
        %2639 = vmatprep.subr.mxu0 0.0
        %2640 = vmatpush1.msra.mxu0 0.0
        %2641 = vmatprep.subr.mxu0 0.0
        %2642 = vmatpush1.msra.mxu0 0.0
        %2643 = vmatprep.subr.mxu0 0.0
        %2644 = vmatpush1.msra.mxu0 0.0
        %2645 = vmatprep.subr.mxu0 0.0
        %2646 = vmatpush1.msra.mxu0 0.0
        %2647 = vmatprep.subr.mxu0 0.0
        %2648 = vmatpush1.msra.mxu0 0.0
        %2649 = vmatprep.subr.mxu0 0.0
        %2650 = vmatpush1.msra.mxu0 0.0
        %2651 = vmatprep.subr.mxu0 0.0
        %2652 = vmatpush1.msra.mxu0 0.0
        %2653 = vmatprep.subr.mxu0 0.0
        %2654 = vmatpush1.msra.mxu0 0.0
        %2655 = vmatprep.subr.mxu0 0.0
        %2656 = vmatpush1.msra.mxu0 0.0
        %2657 = vmatprep.subr.mxu0 0.0
        %2658 = vmatpush1.msra.mxu0 0.0
        %2659 = vmatprep.subr.mxu0 0.0
        %2660 = vmatpush1.msra.mxu0 0.0
        %2661 = vmatprep.subr.mxu0 0.0
        %2662 = vmatpush1.msra.mxu0 0.0
        %2663 = vmatprep.subr.mxu0 0.0
        %2664 = vmatpush1.msra.mxu0 0.0
        %2665 = vmatprep.subr.mxu0 0.0
        %2666 = vmatpush1.msra.mxu0 0.0
        %2667 = vmatprep.subr.mxu0 0.0
        %2668 = vmatpush1.msra.mxu0 0.0
        %2669 = vmatprep.subr.mxu0 0.0
        %2670 = vmatpush1.msra.mxu0 0.0
        %2671 = vmatprep.subr.mxu0 0.0
        %2672 = vmatpush1.msra.mxu0 0.0
        %2673 = vmatprep.subr.mxu0 0.0
        %2674 = vmatpush1.msra.mxu0 0.0
        %2675 = vmatprep.subr.mxu0 0.0
        %2676 = vmatpush1.msra.mxu0 0.0
        %2677 = vmatprep.subr.mxu0 0.0
        %2678 = vmatpush1.msra.mxu0 0.0
        %2679 = vmatprep.mubr.f32.mxu0 0.0
        %2680 = vmatmul.mubr.f32.gmra.mrb[0].mxu0 %v2544
        %v2681 = vpop.f32.mrb[0].mxu0
        %v2682 = vadd.f32 %v2425, %v2681
        %v2683 = vpop.f32.mrb[0].mxu0
        %2684 = vmatprep.mubr.f32.mxu0 0.0
        %2685 = vmatmul.mubr.f32.gmra.mrb[0].mxu0 %v2547
        %v2686 = vpop.f32.mrb[0].mxu0
        %v2687 = vadd.f32 %v2430, %v2686
        %v2688 = vpop.f32.mrb[0].mxu0
        %2689 = vmatprep.mubr.f32.mxu0 0.0
        %2690 = vmatmul.mubr.f32.gmra.mrb[0].mxu0 %v2550
        %v2691 = vpop.f32.mrb[0].mxu0
        %v2692 = vadd.f32 %v2435, %v2691
        %v2693 = vpop.f32.mrb[0].mxu0
        %2694 = vmatprep.mubr.f32.mxu0 0.0
        %2695 = vmatmul.mubr.f32.gmra.mrb[0].mxu0 %v2553
        %v2696 = vpop.f32.mrb[0].mxu0
        %v2697 = vadd.f32 %v2440, %v2696
        %v2698 = vpop.f32.mrb[0].mxu0
        %2699 = vmatprep.mubr.f32.mxu0 0.0
        %2700 = vmatmul.mubr.f32.gmra.mrb[0].mxu0 %v2556
        %v2701 = vpop.f32.mrb[0].mxu0
        %v2702 = vadd.f32 %v2445, %v2701
        %v2703 = vpop.f32.mrb[0].mxu0
        %2704 = vmatprep.mubr.f32.mxu0 0.0
        %2705 = vmatmul.mubr.f32.gmra.mrb[0].mxu0 %v2559
        %v2706 = vpop.f32.mrb[0].mxu0
        %v2707 = vadd.f32 %v2450, %v2706
        %v2708 = vpop.f32.mrb[0].mxu0
        %2709 = vmatprep.mubr.f32.mxu0 0.0
        %2710 = vmatmul.mubr.f32.gmra.mrb[0].mxu0 %v2562
        %v2711 = vpop.f32.mrb[0].mxu0
        %v2712 = vadd.f32 %v2455, %v2711
        %v2713 = vpop.f32.mrb[0].mxu0
        %2714 = vmatprep.mubr.f32.mxu0 0.0
        %2715 = vmatmul.mubr.f32.gmra.mrb[0].mxu0 %v2565
        %v2716 = vpop.f32.mrb[0].mxu0
        %v2717 = vadd.f32 %v2460, %v2716
        %v2718 = vpop.f32.mrb[0].mxu0
        %2719 = vmatprep.mubr.f32.mxu0 0.0
        %2720 = vmatmul.mubr.f32.gmra.mrb[0].mxu0 %v2568
        %v2721 = vpop.f32.mrb[0].mxu0
        %v2722 = vadd.f32 %v2465, %v2721
        %v2723 = vpop.f32.mrb[0].mxu0
        %2724 = vmatprep.mubr.f32.mxu0 0.0
        %2725 = vmatmul.mubr.f32.gmra.mrb[0].mxu0 %v2571
        %v2726 = vpop.f32.mrb[0].mxu0
        %v2727 = vadd.f32 %v2470, %v2726
        %v2728 = vpop.f32.mrb[0].mxu0
        %2729 = vmatprep.mubr.f32.mxu0 0.0
        %2730 = vmatmul.mubr.f32.gmra.mrb[0].mxu0 %v2574
        %v2731 = vpop.f32.mrb[0].mxu0
        %v2732 = vadd.f32 %v2475, %v2731
        %v2733 = vpop.f32.mrb[0].mxu0
        %2734 = vmatprep.mubr.f32.mxu0 0.0
        %2735 = vmatmul.mubr.f32.gmra.mrb[0].mxu0 %v2577
        %v2736 = vpop.f32.mrb[0].mxu0
        %v2737 = vadd.f32 %v2480, %v2736
        %v2738 = vpop.f32.mrb[0].mxu0
        %2739 = vmatprep.mubr.f32.mxu0 0.0
        %2740 = vmatmul.mubr.f32.gmra.mrb[0].mxu0 %v2580
        %v2741 = vpop.f32.mrb[0].mxu0
        %v2742 = vadd.f32 %v2485, %v2741
        %v2743 = vpop.f32.mrb[0].mxu0
        %2744 = vmatprep.mubr.f32.mxu0 0.0
        %2745 = vmatmul.mubr.f32.gmra.mrb[0].mxu0 %v2583
        %v2746 = vpop.f32.mrb[0].mxu0
        %v2747 = vadd.f32 %v2490, %v2746
        %v2748 = vpop.f32.mrb[0].mxu0
        %2749 = vmatprep.mubr.f32.mxu0 0.0
        %2750 = vmatmul.mubr.f32.gmra.mrb[0].mxu0 %v2586
        %v2751 = vpop.f32.mrb[0].mxu0
        %v2752 = vadd.f32 %v2495, %v2751
        %v2753 = vpop.f32.mrb[0].mxu0
        %2754 = vmatprep.mubr.f32.mxu0 0.0
        %2755 = vmatmul.mubr.f32.gmra.mrb[0].mxu0 %v2589
        %v2756 = vpop.f32.mrb[0].mxu0
        %v2757 = vadd.f32 %v2500, %v2756
        %v2758 = vpop.f32.mrb[0].mxu0
        %2759 = vmatprep.mubr.f32.mxu0 0.0
        %2760 = vmatmul.mubr.f32.gmra.mrb[0].mxu0 %v2592
        %v2761 = vpop.f32.mrb[0].mxu0
        %v2762 = vadd.f32 %v2505, %v2761
        %v2763 = vpop.f32.mrb[0].mxu0
        %2764 = vmatprep.mubr.f32.mxu0 0.0
        %2765 = vmatmul.mubr.f32.gmra.mrb[0].mxu0 %v2595
        %v2766 = vpop.f32.mrb[0].mxu0
        %v2767 = vadd.f32 %v2510, %v2766
        %v2768 = vpop.f32.mrb[0].mxu0
        %2769 = vmatprep.mubr.f32.mxu0 0.0
        %2770 = vmatmul.mubr.f32.gmra.mrb[0].mxu0 %v2598
        %v2771 = vpop.f32.mrb[0].mxu0
        %v2772 = vadd.f32 %v2515, %v2771
        %v2773 = vpop.f32.mrb[0].mxu0
        %2774 = vmatprep.mubr.f32.mxu0 0.0
        %2775 = vmatmul.mubr.f32.gmra.mrb[0].mxu0 %v2601
        %v2776 = vpop.f32.mrb[0].mxu0
        %v2777 = vadd.f32 %v2520, %v2776
        %v2778 = vpop.f32.mrb[0].mxu0
        %2779 = vmatprep.mubr.f32.mxu0 0.0
        %2780 = vmatmul.mubr.f32.gmra.mrb[0].mxu0 %v2604
        %v2781 = vpop.f32.mrb[0].mxu0
        %v2782 = vadd.f32 %v2525, %v2781
        %v2783 = vpop.f32.mrb[0].mxu0
        %2784 = vmatprep.mubr.f32.mxu0 0.0
        %2785 = vmatmul.mubr.f32.gmra.mrb[0].mxu0 %v2607
        %v2786 = vpop.f32.mrb[0].mxu0
        %v2787 = vadd.f32 %v2530, %v2786
        %v2788 = vpop.f32.mrb[0].mxu0
        %2789 = vmatprep.mubr.f32.mxu0 0.0
        %2790 = vmatmul.mubr.f32.gmra.mrb[0].mxu0 %v2610
        %v2791 = vpop.f32.mrb[0].mxu0
        %v2792 = vadd.f32 %v2535, %v2791
        %v2793 = vpop.f32.mrb[0].mxu0
        %2794 = vmatprep.mubr.f32.mxu0 0.0
        %2795 = vmatmul.mubr.f32.gmra.mrb[0].mxu0 %v2613
        %v2796 = vpop.f32.mrb[0].mxu0
        %v2797 = vadd.f32 %v2540, %v2796
        %v2798 = vpop.f32.mrb[0].mxu0
        %2799 = vdwg.mxu0
        %v2800 = vld [vmem:[#allocation2 + $0x2] sm:$0xff]
        %v2801 = vld [vmem:[#allocation2 + $0xa] sm:$0xff]
        %v2802 = vld [vmem:[#allocation2 + $0x12] sm:$0xff]
        %v2803 = vld [vmem:[#allocation2 + $0x1a] sm:$0xff]
        %v2804 = vld [vmem:[#allocation2 + $0x22] sm:$0xff]
        %v2805 = vld [vmem:[#allocation2 + $0x2a] sm:$0xff]
        %v2806 = vld [vmem:[#allocation2 + $0x32] sm:$0xff]
        %v2807 = vld [vmem:[#allocation2 + $0x3a] sm:$0xff]
        %v2808 = vld [vmem:[#allocation2 + $0x42] sm:$0xff]
        %v2809 = vld [vmem:[#allocation2 + $0x4a] sm:$0xff]
        %v2810 = vld [vmem:[#allocation2 + $0x52] sm:$0xff]
        %v2811 = vld [vmem:[#allocation2 + $0x5a] sm:$0xff]
        %v2812 = vld [vmem:[#allocation2 + $0x62] sm:$0xff]
        %v2813 = vld [vmem:[#allocation2 + $0x6a] sm:$0xff]
        %v2814 = vld [vmem:[#allocation2 + $0x72] sm:$0xff]
        %v2815 = vld [vmem:[#allocation2 + $0x7a] sm:$0xff]
        %v2816 = vld [vmem:[#allocation2 + $0x82] sm:$0xff]
        %v2817 = vld [vmem:[#allocation2 + $0x8a] sm:$0xff]
        %v2818 = vld [vmem:[#allocation2 + $0x92] sm:$0xff]
        %v2819 = vld [vmem:[#allocation2 + $0x9a] sm:$0xff]
        %v2820 = vld [vmem:[#allocation2 + $0xa2] sm:$0xff]
        %v2821 = vld [vmem:[#allocation2 + $0xaa] sm:$0xff]
        %v2822 = vld [vmem:[#allocation2 + $0xb2] sm:$0xff]
        %v2823 = vld [vmem:[#allocation2 + $0xba] sm:$0xff]
        %s2824 = scalar_lea.vmem %s3, 64
        %v2825 = vld [vmem:[%s2824] sm:$0xff]
        %v2826 = vld [vmem:[%s2824 + $0x8] sm:$0xff]
        %v2827 = vld [vmem:[%s2824 + $0x10] sm:$0xff]
        %v2828 = vld [vmem:[%s2824 + $0x18] sm:$0xff]
        %v2830 = vsel %vm390, %v2800, 0
        %v2833 = vsel %vm390, %v2801, 0
        %v2836 = vsel %vm390, %v2802, 0
        %v2839 = vsel %vm390, %v2803, 0
        %v2842 = vsel %vm390, %v2804, 0
        %v2845 = vsel %vm390, %v2805, 0
        %v2848 = vsel %vm390, %v2806, 0
        %v2851 = vsel %vm390, %v2807, 0
        %v2854 = vsel %vm390, %v2808, 0
        %v2857 = vsel %vm390, %v2809, 0
        %v2860 = vsel %vm390, %v2810, 0
        %v2863 = vsel %vm390, %v2811, 0
        %v2866 = vsel %vm390, %v2812, 0
        %v2869 = vsel %vm390, %v2813, 0
        %v2872 = vsel %vm390, %v2814, 0
        %v2875 = vsel %vm390, %v2815, 0
        %v2878 = vsel %vm390, %v2816, 0
        %v2881 = vsel %vm390, %v2817, 0
        %v2884 = vsel %vm390, %v2818, 0
        %v2887 = vsel %vm390, %v2819, 0
        %v2890 = vsel %vm390, %v2820, 0
        %v2893 = vsel %vm390, %v2821, 0
        %v2896 = vsel %vm390, %v2822, 0
        %v2899 = vsel %vm390, %v2823, 0
        %2901 = vmatprep.subr.mxu0 0.0
        %2902 = vmatpush1.msra.mxu0 %v2825
        %2903 = vmatprep.subr.mxu0 0.0
        %2904 = vmatpush1.msra.mxu0 %v2826
        %2905 = vmatprep.subr.mxu0 0.0
        %2906 = vmatpush1.msra.mxu0 %v2827
        %2907 = vmatprep.subr.mxu0 0.0
        %2908 = vmatpush1.msra.mxu0 %v2828
        %2909 = vmatprep.subr.mxu0 0.0
        %2910 = vmatpush1.msra.mxu0 0.0
        %2911 = vmatprep.subr.mxu0 0.0
        %2912 = vmatpush1.msra.mxu0 0.0
        %2913 = vmatprep.subr.mxu0 0.0
        %2914 = vmatpush1.msra.mxu0 0.0
        %2915 = vmatprep.subr.mxu0 0.0
        %2916 = vmatpush1.msra.mxu0 0.0
        %2917 = vmatprep.subr.mxu0 0.0
        %2918 = vmatpush1.msra.mxu0 0.0
        %2919 = vmatprep.subr.mxu0 0.0
        %2920 = vmatpush1.msra.mxu0 0.0
        %2921 = vmatprep.subr.mxu0 0.0
        %2922 = vmatpush1.msra.mxu0 0.0
        %2923 = vmatprep.subr.mxu0 0.0
        %2924 = vmatpush1.msra.mxu0 0.0
        %2925 = vmatprep.subr.mxu0 0.0
        %2926 = vmatpush1.msra.mxu0 0.0
        %2927 = vmatprep.subr.mxu0 0.0
        %2928 = vmatpush1.msra.mxu0 0.0
        %2929 = vmatprep.subr.mxu0 0.0
        %2930 = vmatpush1.msra.mxu0 0.0
        %2931 = vmatprep.subr.mxu0 0.0
        %2932 = vmatpush1.msra.mxu0 0.0
        %2933 = vmatprep.subr.mxu0 0.0
        %2934 = vmatpush1.msra.mxu0 0.0
        %2935 = vmatprep.subr.mxu0 0.0
        %2936 = vmatpush1.msra.mxu0 0.0
        %2937 = vmatprep.subr.mxu0 0.0
        %2938 = vmatpush1.msra.mxu0 0.0
        %2939 = vmatprep.subr.mxu0 0.0
        %2940 = vmatpush1.msra.mxu0 0.0
        %2941 = vmatprep.subr.mxu0 0.0
        %2942 = vmatpush1.msra.mxu0 0.0
        %2943 = vmatprep.subr.mxu0 0.0
        %2944 = vmatpush1.msra.mxu0 0.0
        %2945 = vmatprep.subr.mxu0 0.0
        %2946 = vmatpush1.msra.mxu0 0.0
        %2947 = vmatprep.subr.mxu0 0.0
        %2948 = vmatpush1.msra.mxu0 0.0
        %2949 = vmatprep.subr.mxu0 0.0
        %2950 = vmatpush1.msra.mxu0 0.0
        %2951 = vmatprep.subr.mxu0 0.0
        %2952 = vmatpush1.msra.mxu0 0.0
        %2953 = vmatprep.subr.mxu0 0.0
        %2954 = vmatpush1.msra.mxu0 0.0
        %2955 = vmatprep.subr.mxu0 0.0
        %2956 = vmatpush1.msra.mxu0 0.0
        %2957 = vmatprep.subr.mxu0 0.0
        %2958 = vmatpush1.msra.mxu0 0.0
        %2959 = vmatprep.subr.mxu0 0.0
        %2960 = vmatpush1.msra.mxu0 0.0
        %2961 = vmatprep.subr.mxu0 0.0
        %2962 = vmatpush1.msra.mxu0 0.0
        %2963 = vmatprep.subr.mxu0 0.0
        %2964 = vmatpush1.msra.mxu0 0.0
        %2965 = vmatprep.mubr.f32.mxu0 0.0
        %2966 = vmatmul.mubr.f32.gmra.mrb[0].mxu0 %v2830
        %v2967 = vpop.f32.mrb[0].mxu0
        %v2968 = vadd.f32 0.0, %v2967
        %v2969 = vpop.f32.mrb[0].mxu0
        %2970 = vmatprep.mubr.f32.mxu0 0.0
        %2971 = vmatmul.mubr.f32.gmra.mrb[0].mxu0 %v2833
        %v2972 = vpop.f32.mrb[0].mxu0
        %v2973 = vadd.f32 0.0, %v2972
        %v2974 = vpop.f32.mrb[0].mxu0
        %2975 = vmatprep.mubr.f32.mxu0 0.0
        %2976 = vmatmul.mubr.f32.gmra.mrb[0].mxu0 %v2836
        %v2977 = vpop.f32.mrb[0].mxu0
        %v2978 = vadd.f32 0.0, %v2977
        %v2979 = vpop.f32.mrb[0].mxu0
        %2980 = vmatprep.mubr.f32.mxu0 0.0
        %2981 = vmatmul.mubr.f32.gmra.mrb[0].mxu0 %v2839
        %v2982 = vpop.f32.mrb[0].mxu0
        %v2983 = vadd.f32 0.0, %v2982
        %v2984 = vpop.f32.mrb[0].mxu0
        %2985 = vmatprep.mubr.f32.mxu0 0.0
        %2986 = vmatmul.mubr.f32.gmra.mrb[0].mxu0 %v2842
        %v2987 = vpop.f32.mrb[0].mxu0
        %v2988 = vadd.f32 0.0, %v2987
        %v2989 = vpop.f32.mrb[0].mxu0
        %2990 = vmatprep.mubr.f32.mxu0 0.0
        %2991 = vmatmul.mubr.f32.gmra.mrb[0].mxu0 %v2845
        %v2992 = vpop.f32.mrb[0].mxu0
        %v2993 = vadd.f32 0.0, %v2992
        %v2994 = vpop.f32.mrb[0].mxu0
        %2995 = vmatprep.mubr.f32.mxu0 0.0
        %2996 = vmatmul.mubr.f32.gmra.mrb[0].mxu0 %v2848
        %v2997 = vpop.f32.mrb[0].mxu0
        %v2998 = vadd.f32 0.0, %v2997
        %v2999 = vpop.f32.mrb[0].mxu0
        %3000 = vmatprep.mubr.f32.mxu0 0.0
        %3001 = vmatmul.mubr.f32.gmra.mrb[0].mxu0 %v2851
        %v3002 = vpop.f32.mrb[0].mxu0
        %v3003 = vadd.f32 0.0, %v3002
        %v3004 = vpop.f32.mrb[0].mxu0
        %3005 = vmatprep.mubr.f32.mxu0 0.0
        %3006 = vmatmul.mubr.f32.gmra.mrb[0].mxu0 %v2854
        %v3007 = vpop.f32.mrb[0].mxu0
        %v3008 = vadd.f32 0.0, %v3007
        %v3009 = vpop.f32.mrb[0].mxu0
        %3010 = vmatprep.mubr.f32.mxu0 0.0
        %3011 = vmatmul.mubr.f32.gmra.mrb[0].mxu0 %v2857
        %v3012 = vpop.f32.mrb[0].mxu0
        %v3013 = vadd.f32 0.0, %v3012
        %v3014 = vpop.f32.mrb[0].mxu0
        %3015 = vmatprep.mubr.f32.mxu0 0.0
        %3016 = vmatmul.mubr.f32.gmra.mrb[0].mxu0 %v2860
        %v3017 = vpop.f32.mrb[0].mxu0
        %v3018 = vadd.f32 0.0, %v3017
        %v3019 = vpop.f32.mrb[0].mxu0
        %3020 = vmatprep.mubr.f32.mxu0 0.0
        %3021 = vmatmul.mubr.f32.gmra.mrb[0].mxu0 %v2863
        %v3022 = vpop.f32.mrb[0].mxu0
        %v3023 = vadd.f32 0.0, %v3022
        %v3024 = vpop.f32.mrb[0].mxu0
        %3025 = vmatprep.mubr.f32.mxu0 0.0
        %3026 = vmatmul.mubr.f32.gmra.mrb[0].mxu0 %v2866
        %v3027 = vpop.f32.mrb[0].mxu0
        %v3028 = vadd.f32 0.0, %v3027
        %v3029 = vpop.f32.mrb[0].mxu0
        %3030 = vmatprep.mubr.f32.mxu0 0.0
        %3031 = vmatmul.mubr.f32.gmra.mrb[0].mxu0 %v2869
        %v3032 = vpop.f32.mrb[0].mxu0
        %v3033 = vadd.f32 0.0, %v3032
        %v3034 = vpop.f32.mrb[0].mxu0
        %3035 = vmatprep.mubr.f32.mxu0 0.0
        %3036 = vmatmul.mubr.f32.gmra.mrb[0].mxu0 %v2872
        %v3037 = vpop.f32.mrb[0].mxu0
        %v3038 = vadd.f32 0.0, %v3037
        %v3039 = vpop.f32.mrb[0].mxu0
        %3040 = vmatprep.mubr.f32.mxu0 0.0
        %3041 = vmatmul.mubr.f32.gmra.mrb[0].mxu0 %v2875
        %v3042 = vpop.f32.mrb[0].mxu0
        %v3043 = vadd.f32 0.0, %v3042
        %v3044 = vpop.f32.mrb[0].mxu0
        %3045 = vmatprep.mubr.f32.mxu0 0.0
        %3046 = vmatmul.mubr.f32.gmra.mrb[0].mxu0 %v2878
        %v3047 = vpop.f32.mrb[0].mxu0
        %v3048 = vadd.f32 0.0, %v3047
        %v3049 = vpop.f32.mrb[0].mxu0
        %3050 = vmatprep.mubr.f32.mxu0 0.0
        %3051 = vmatmul.mubr.f32.gmra.mrb[0].mxu0 %v2881
        %v3052 = vpop.f32.mrb[0].mxu0
        %v3053 = vadd.f32 0.0, %v3052
        %v3054 = vpop.f32.mrb[0].mxu0
        %3055 = vmatprep.mubr.f32.mxu0 0.0
        %3056 = vmatmul.mubr.f32.gmra.mrb[0].mxu0 %v2884
        %v3057 = vpop.f32.mrb[0].mxu0
        %v3058 = vadd.f32 0.0, %v3057
        %v3059 = vpop.f32.mrb[0].mxu0
        %3060 = vmatprep.mubr.f32.mxu0 0.0
        %3061 = vmatmul.mubr.f32.gmra.mrb[0].mxu0 %v2887
        %v3062 = vpop.f32.mrb[0].mxu0
        %v3063 = vadd.f32 0.0, %v3062
        %v3064 = vpop.f32.mrb[0].mxu0
        %3065 = vmatprep.mubr.f32.mxu0 0.0
        %3066 = vmatmul.mubr.f32.gmra.mrb[0].mxu0 %v2890
        %v3067 = vpop.f32.mrb[0].mxu0
        %v3068 = vadd.f32 0.0, %v3067
        %v3069 = vpop.f32.mrb[0].mxu0
        %3070 = vmatprep.mubr.f32.mxu0 0.0
        %3071 = vmatmul.mubr.f32.gmra.mrb[0].mxu0 %v2893
        %v3072 = vpop.f32.mrb[0].mxu0
        %v3073 = vadd.f32 0.0, %v3072
        %v3074 = vpop.f32.mrb[0].mxu0
        %3075 = vmatprep.mubr.f32.mxu0 0.0
        %3076 = vmatmul.mubr.f32.gmra.mrb[0].mxu0 %v2896
        %v3077 = vpop.f32.mrb[0].mxu0
        %v3078 = vadd.f32 0.0, %v3077
        %v3079 = vpop.f32.mrb[0].mxu0
        %3080 = vmatprep.mubr.f32.mxu0 0.0
        %3081 = vmatmul.mubr.f32.gmra.mrb[0].mxu0 %v2899
        %v3082 = vpop.f32.mrb[0].mxu0
        %v3083 = vadd.f32 0.0, %v3082
        %v3084 = vpop.f32.mrb[0].mxu0
        %3085 = vdwg.mxu0
        %v3086 = vadd.f32 %v2682, %v2968
        %v3087 = vadd.f32 %v2687, %v2973
        %v3088 = vadd.f32 %v2692, %v2978
        %v3089 = vadd.f32 %v2697, %v2983
        %v3090 = vadd.f32 %v2702, %v2988
        %v3091 = vadd.f32 %v2707, %v2993
        %v3092 = vadd.f32 %v2712, %v2998
        %v3093 = vadd.f32 %v2717, %v3003
        %v3094 = vadd.f32 %v2722, %v3008
        %v3095 = vadd.f32 %v2727, %v3013
        %v3096 = vadd.f32 %v2732, %v3018
        %v3097 = vadd.f32 %v2737, %v3023
        %v3098 = vadd.f32 %v2742, %v3028
        %v3099 = vadd.f32 %v2747, %v3033
        %v3100 = vadd.f32 %v2752, %v3038
        %v3101 = vadd.f32 %v2757, %v3043
        %v3102 = vadd.f32 %v2762, %v3048
        %v3103 = vadd.f32 %v2767, %v3053
        %v3104 = vadd.f32 %v2772, %v3058
        %v3105 = vadd.f32 %v2777, %v3063
        %v3106 = vadd.f32 %v2782, %v3068
        %v3107 = vadd.f32 %v2787, %v3073
        %v3108 = vadd.f32 %v2792, %v3078
        %v3109 = vadd.f32 %v2797, %v3083
        %v3110 = vld [vmem:[#allocation2 + $0x3] sm:$0xff]
        %v3111 = vld [vmem:[#allocation2 + $0xb] sm:$0xff]
        %v3112 = vld [vmem:[#allocation2 + $0x13] sm:$0xff]
        %v3113 = vld [vmem:[#allocation2 + $0x1b] sm:$0xff]
        %v3114 = vld [vmem:[#allocation2 + $0x23] sm:$0xff]
        %v3115 = vld [vmem:[#allocation2 + $0x2b] sm:$0xff]
        %v3116 = vld [vmem:[#allocation2 + $0x33] sm:$0xff]
        %v3117 = vld [vmem:[#allocation2 + $0x3b] sm:$0xff]
        %v3118 = vld [vmem:[#allocation2 + $0x43] sm:$0xff]
        %v3119 = vld [vmem:[#allocation2 + $0x4b] sm:$0xff]
        %v3120 = vld [vmem:[#allocation2 + $0x53] sm:$0xff]
        %v3121 = vld [vmem:[#allocation2 + $0x5b] sm:$0xff]
        %v3122 = vld [vmem:[#allocation2 + $0x63] sm:$0xff]
        %v3123 = vld [vmem:[#allocation2 + $0x6b] sm:$0xff]
        %v3124 = vld [vmem:[#allocation2 + $0x73] sm:$0xff]
        %v3125 = vld [vmem:[#allocation2 + $0x7b] sm:$0xff]
        %v3126 = vld [vmem:[#allocation2 + $0x83] sm:$0xff]
        %v3127 = vld [vmem:[#allocation2 + $0x8b] sm:$0xff]
        %v3128 = vld [vmem:[#allocation2 + $0x93] sm:$0xff]
        %v3129 = vld [vmem:[#allocation2 + $0x9b] sm:$0xff]
        %v3130 = vld [vmem:[#allocation2 + $0xa3] sm:$0xff]
        %v3131 = vld [vmem:[#allocation2 + $0xab] sm:$0xff]
        %v3132 = vld [vmem:[#allocation2 + $0xb3] sm:$0xff]
        %v3133 = vld [vmem:[#allocation2 + $0xbb] sm:$0xff]
        %s3134 = scalar_lea.vmem %s3, 96
        %v3135 = vld [vmem:[%s3134] sm:$0xff]
        %v3136 = vld [vmem:[%s3134 + $0x8] sm:$0xff]
        %v3137 = vld [vmem:[%s3134 + $0x10] sm:$0xff]
        %v3138 = vld [vmem:[%s3134 + $0x18] sm:$0xff]
        %v3140 = vsel %vm390, %v3110, 0
        %v3143 = vsel %vm390, %v3111, 0
        %v3146 = vsel %vm390, %v3112, 0
        %v3149 = vsel %vm390, %v3113, 0
        %v3152 = vsel %vm390, %v3114, 0
        %v3155 = vsel %vm390, %v3115, 0
        %v3158 = vsel %vm390, %v3116, 0
        %v3161 = vsel %vm390, %v3117, 0
        %v3164 = vsel %vm390, %v3118, 0
        %v3167 = vsel %vm390, %v3119, 0
        %v3170 = vsel %vm390, %v3120, 0
        %v3173 = vsel %vm390, %v3121, 0
        %v3176 = vsel %vm390, %v3122, 0
        %v3179 = vsel %vm390, %v3123, 0
        %v3182 = vsel %vm390, %v3124, 0
        %v3185 = vsel %vm390, %v3125, 0
        %v3188 = vsel %vm390, %v3126, 0
        %v3191 = vsel %vm390, %v3127, 0
        %v3194 = vsel %vm390, %v3128, 0
        %v3197 = vsel %vm390, %v3129, 0
        %v3200 = vsel %vm390, %v3130, 0
        %v3203 = vsel %vm390, %v3131, 0
        %v3206 = vsel %vm390, %v3132, 0
        %v3209 = vsel %vm390, %v3133, 0
        %3211 = vmatprep.subr.mxu0 0.0
        %3212 = vmatpush1.msra.mxu0 %v3135
        %3213 = vmatprep.subr.mxu0 0.0
        %3214 = vmatpush1.msra.mxu0 %v3136
        %3215 = vmatprep.subr.mxu0 0.0
        %3216 = vmatpush1.msra.mxu0 %v3137
        %3217 = vmatprep.subr.mxu0 0.0
        %3218 = vmatpush1.msra.mxu0 %v3138
        %3219 = vmatprep.subr.mxu0 0.0
        %3220 = vmatpush1.msra.mxu0 0.0
        %3221 = vmatprep.subr.mxu0 0.0
        %3222 = vmatpush1.msra.mxu0 0.0
        %3223 = vmatprep.subr.mxu0 0.0
        %3224 = vmatpush1.msra.mxu0 0.0
        %3225 = vmatprep.subr.mxu0 0.0
        %3226 = vmatpush1.msra.mxu0 0.0
        %3227 = vmatprep.subr.mxu0 0.0
        %3228 = vmatpush1.msra.mxu0 0.0
        %3229 = vmatprep.subr.mxu0 0.0
        %3230 = vmatpush1.msra.mxu0 0.0
        %3231 = vmatprep.subr.mxu0 0.0
        %3232 = vmatpush1.msra.mxu0 0.0
        %3233 = vmatprep.subr.mxu0 0.0
        %3234 = vmatpush1.msra.mxu0 0.0
        %3235 = vmatprep.subr.mxu0 0.0
        %3236 = vmatpush1.msra.mxu0 0.0
        %3237 = vmatprep.subr.mxu0 0.0
        %3238 = vmatpush1.msra.mxu0 0.0
        %3239 = vmatprep.subr.mxu0 0.0
        %3240 = vmatpush1.msra.mxu0 0.0
        %3241 = vmatprep.subr.mxu0 0.0
        %3242 = vmatpush1.msra.mxu0 0.0
        %3243 = vmatprep.subr.mxu0 0.0
        %3244 = vmatpush1.msra.mxu0 0.0
        %3245 = vmatprep.subr.mxu0 0.0
        %3246 = vmatpush1.msra.mxu0 0.0
        %3247 = vmatprep.subr.mxu0 0.0
        %3248 = vmatpush1.msra.mxu0 0.0
        %3249 = vmatprep.subr.mxu0 0.0
        %3250 = vmatpush1.msra.mxu0 0.0
        %3251 = vmatprep.subr.mxu0 0.0
        %3252 = vmatpush1.msra.mxu0 0.0
        %3253 = vmatprep.subr.mxu0 0.0
        %3254 = vmatpush1.msra.mxu0 0.0
        %3255 = vmatprep.subr.mxu0 0.0
        %3256 = vmatpush1.msra.mxu0 0.0
        %3257 = vmatprep.subr.mxu0 0.0
        %3258 = vmatpush1.msra.mxu0 0.0
        %3259 = vmatprep.subr.mxu0 0.0
        %3260 = vmatpush1.msra.mxu0 0.0
        %3261 = vmatprep.subr.mxu0 0.0
        %3262 = vmatpush1.msra.mxu0 0.0
        %3263 = vmatprep.subr.mxu0 0.0
        %3264 = vmatpush1.msra.mxu0 0.0
        %3265 = vmatprep.subr.mxu0 0.0
        %3266 = vmatpush1.msra.mxu0 0.0
        %3267 = vmatprep.subr.mxu0 0.0
        %3268 = vmatpush1.msra.mxu0 0.0
        %3269 = vmatprep.subr.mxu0 0.0
        %3270 = vmatpush1.msra.mxu0 0.0
        %3271 = vmatprep.subr.mxu0 0.0
        %3272 = vmatpush1.msra.mxu0 0.0
        %3273 = vmatprep.subr.mxu0 0.0
        %3274 = vmatpush1.msra.mxu0 0.0
        %3275 = vmatprep.mubr.f32.mxu0 0.0
        %3276 = vmatmul.mubr.f32.gmra.mrb[0].mxu0 %v3140
        %v3277 = vpop.f32.mrb[0].mxu0
        %v3278 = vadd.f32 0.0, %v3277
        %v3279 = vpop.f32.mrb[0].mxu0
        %3280 = vmatprep.mubr.f32.mxu0 0.0
        %3281 = vmatmul.mubr.f32.gmra.mrb[0].mxu0 %v3143
        %v3282 = vpop.f32.mrb[0].mxu0
        %v3283 = vadd.f32 0.0, %v3282
        %v3284 = vpop.f32.mrb[0].mxu0
        %3285 = vmatprep.mubr.f32.mxu0 0.0
        %3286 = vmatmul.mubr.f32.gmra.mrb[0].mxu0 %v3146
        %v3287 = vpop.f32.mrb[0].mxu0
        %v3288 = vadd.f32 0.0, %v3287
        %v3289 = vpop.f32.mrb[0].mxu0
        %3290 = vmatprep.mubr.f32.mxu0 0.0
        %3291 = vmatmul.mubr.f32.gmra.mrb[0].mxu0 %v3149
        %v3292 = vpop.f32.mrb[0].mxu0
        %v3293 = vadd.f32 0.0, %v3292
        %v3294 = vpop.f32.mrb[0].mxu0
        %3295 = vmatprep.mubr.f32.mxu0 0.0
        %3296 = vmatmul.mubr.f32.gmra.mrb[0].mxu0 %v3152
        %v3297 = vpop.f32.mrb[0].mxu0
        %v3298 = vadd.f32 0.0, %v3297
        %v3299 = vpop.f32.mrb[0].mxu0
        %3300 = vmatprep.mubr.f32.mxu0 0.0
        %3301 = vmatmul.mubr.f32.gmra.mrb[0].mxu0 %v3155
        %v3302 = vpop.f32.mrb[0].mxu0
        %v3303 = vadd.f32 0.0, %v3302
        %v3304 = vpop.f32.mrb[0].mxu0
        %3305 = vmatprep.mubr.f32.mxu0 0.0
        %3306 = vmatmul.mubr.f32.gmra.mrb[0].mxu0 %v3158
        %v3307 = vpop.f32.mrb[0].mxu0
        %v3308 = vadd.f32 0.0, %v3307
        %v3309 = vpop.f32.mrb[0].mxu0
        %3310 = vmatprep.mubr.f32.mxu0 0.0
        %3311 = vmatmul.mubr.f32.gmra.mrb[0].mxu0 %v3161
        %v3312 = vpop.f32.mrb[0].mxu0
        %v3313 = vadd.f32 0.0, %v3312
        %v3314 = vpop.f32.mrb[0].mxu0
        %3315 = vmatprep.mubr.f32.mxu0 0.0
        %3316 = vmatmul.mubr.f32.gmra.mrb[0].mxu0 %v3164
        %v3317 = vpop.f32.mrb[0].mxu0
        %v3318 = vadd.f32 0.0, %v3317
        %v3319 = vpop.f32.mrb[0].mxu0
        %3320 = vmatprep.mubr.f32.mxu0 0.0
        %3321 = vmatmul.mubr.f32.gmra.mrb[0].mxu0 %v3167
        %v3322 = vpop.f32.mrb[0].mxu0
        %v3323 = vadd.f32 0.0, %v3322
        %v3324 = vpop.f32.mrb[0].mxu0
        %3325 = vmatprep.mubr.f32.mxu0 0.0
        %3326 = vmatmul.mubr.f32.gmra.mrb[0].mxu0 %v3170
        %v3327 = vpop.f32.mrb[0].mxu0
        %v3328 = vadd.f32 0.0, %v3327
        %v3329 = vpop.f32.mrb[0].mxu0
        %3330 = vmatprep.mubr.f32.mxu0 0.0
        %3331 = vmatmul.mubr.f32.gmra.mrb[0].mxu0 %v3173
        %v3332 = vpop.f32.mrb[0].mxu0
        %v3333 = vadd.f32 0.0, %v3332
        %v3334 = vpop.f32.mrb[0].mxu0
        %3335 = vmatprep.mubr.f32.mxu0 0.0
        %3336 = vmatmul.mubr.f32.gmra.mrb[0].mxu0 %v3176
        %v3337 = vpop.f32.mrb[0].mxu0
        %v3338 = vadd.f32 0.0, %v3337
        %v3339 = vpop.f32.mrb[0].mxu0
        %3340 = vmatprep.mubr.f32.mxu0 0.0
        %3341 = vmatmul.mubr.f32.gmra.mrb[0].mxu0 %v3179
        %v3342 = vpop.f32.mrb[0].mxu0
        %v3343 = vadd.f32 0.0, %v3342
        %v3344 = vpop.f32.mrb[0].mxu0
        %3345 = vmatprep.mubr.f32.mxu0 0.0
        %3346 = vmatmul.mubr.f32.gmra.mrb[0].mxu0 %v3182
        %v3347 = vpop.f32.mrb[0].mxu0
        %v3348 = vadd.f32 0.0, %v3347
        %v3349 = vpop.f32.mrb[0].mxu0
        %3350 = vmatprep.mubr.f32.mxu0 0.0
        %3351 = vmatmul.mubr.f32.gmra.mrb[0].mxu0 %v3185
        %v3352 = vpop.f32.mrb[0].mxu0
        %v3353 = vadd.f32 0.0, %v3352
        %v3354 = vpop.f32.mrb[0].mxu0
        %3355 = vmatprep.mubr.f32.mxu0 0.0
        %3356 = vmatmul.mubr.f32.gmra.mrb[0].mxu0 %v3188
        %v3357 = vpop.f32.mrb[0].mxu0
        %v3358 = vadd.f32 0.0, %v3357
        %v3359 = vpop.f32.mrb[0].mxu0
        %3360 = vmatprep.mubr.f32.mxu0 0.0
        %3361 = vmatmul.mubr.f32.gmra.mrb[0].mxu0 %v3191
        %v3362 = vpop.f32.mrb[0].mxu0
        %v3363 = vadd.f32 0.0, %v3362
        %v3364 = vpop.f32.mrb[0].mxu0
        %3365 = vmatprep.mubr.f32.mxu0 0.0
        %3366 = vmatmul.mubr.f32.gmra.mrb[0].mxu0 %v3194
        %v3367 = vpop.f32.mrb[0].mxu0
        %v3368 = vadd.f32 0.0, %v3367
        %v3369 = vpop.f32.mrb[0].mxu0
        %3370 = vmatprep.mubr.f32.mxu0 0.0
        %3371 = vmatmul.mubr.f32.gmra.mrb[0].mxu0 %v3197
        %v3372 = vpop.f32.mrb[0].mxu0
        %v3373 = vadd.f32 0.0, %v3372
        %v3374 = vpop.f32.mrb[0].mxu0
        %3375 = vmatprep.mubr.f32.mxu0 0.0
        %3376 = vmatmul.mubr.f32.gmra.mrb[0].mxu0 %v3200
        %v3377 = vpop.f32.mrb[0].mxu0
        %v3378 = vadd.f32 0.0, %v3377
        %v3379 = vpop.f32.mrb[0].mxu0
        %3380 = vmatprep.mubr.f32.mxu0 0.0
        %3381 = vmatmul.mubr.f32.gmra.mrb[0].mxu0 %v3203
        %v3382 = vpop.f32.mrb[0].mxu0
        %v3383 = vadd.f32 0.0, %v3382
        %v3384 = vpop.f32.mrb[0].mxu0
        %3385 = vmatprep.mubr.f32.mxu0 0.0
        %3386 = vmatmul.mubr.f32.gmra.mrb[0].mxu0 %v3206
        %v3387 = vpop.f32.mrb[0].mxu0
        %v3388 = vadd.f32 0.0, %v3387
        %v3389 = vpop.f32.mrb[0].mxu0
        %3390 = vmatprep.mubr.f32.mxu0 0.0
        %3391 = vmatmul.mubr.f32.gmra.mrb[0].mxu0 %v3209
        %v3392 = vpop.f32.mrb[0].mxu0
        %v3393 = vadd.f32 0.0, %v3392
        %v3394 = vpop.f32.mrb[0].mxu0
        %3395 = vdwg.mxu0
        %v3396 = vadd.f32 %v3086, %v3278
        %v3397 = vadd.f32 %v3087, %v3283
        %v3398 = vadd.f32 %v3088, %v3288
        %v3399 = vadd.f32 %v3089, %v3293
        %v3400 = vadd.f32 %v3090, %v3298
        %v3401 = vadd.f32 %v3091, %v3303
        %v3402 = vadd.f32 %v3092, %v3308
        %v3403 = vadd.f32 %v3093, %v3313
        %v3404 = vadd.f32 %v3094, %v3318
        %v3405 = vadd.f32 %v3095, %v3323
        %v3406 = vadd.f32 %v3096, %v3328
        %v3407 = vadd.f32 %v3097, %v3333
        %v3408 = vadd.f32 %v3098, %v3338
        %v3409 = vadd.f32 %v3099, %v3343
        %v3410 = vadd.f32 %v3100, %v3348
        %v3411 = vadd.f32 %v3101, %v3353
        %v3412 = vadd.f32 %v3102, %v3358
        %v3413 = vadd.f32 %v3103, %v3363
        %v3414 = vadd.f32 %v3104, %v3368
        %v3415 = vadd.f32 %v3105, %v3373
        %v3416 = vadd.f32 %v3106, %v3378
        %v3417 = vadd.f32 %v3107, %v3383
        %v3418 = vadd.f32 %v3108, %v3388
        %v3419 = vadd.f32 %v3109, %v3393
        %v3420 = vld [vmem:[#allocation2 + $0x4] sm:$0xff]
        %v3421 = vld [vmem:[#allocation2 + $0xc] sm:$0xff]
        %v3422 = vld [vmem:[#allocation2 + $0x14] sm:$0xff]
        %v3423 = vld [vmem:[#allocation2 + $0x1c] sm:$0xff]
        %v3424 = vld [vmem:[#allocation2 + $0x24] sm:$0xff]
        %v3425 = vld [vmem:[#allocation2 + $0x2c] sm:$0xff]
        %v3426 = vld [vmem:[#allocation2 + $0x34] sm:$0xff]
        %v3427 = vld [vmem:[#allocation2 + $0x3c] sm:$0xff]
        %v3428 = vld [vmem:[#allocation2 + $0x44] sm:$0xff]
        %v3429 = vld [vmem:[#allocation2 + $0x4c] sm:$0xff]
        %v3430 = vld [vmem:[#allocation2 + $0x54] sm:$0xff]
        %v3431 = vld [vmem:[#allocation2 + $0x5c] sm:$0xff]
        %v3432 = vld [vmem:[#allocation2 + $0x64] sm:$0xff]
        %v3433 = vld [vmem:[#allocation2 + $0x6c] sm:$0xff]
        %v3434 = vld [vmem:[#allocation2 + $0x74] sm:$0xff]
        %v3435 = vld [vmem:[#allocation2 + $0x7c] sm:$0xff]
        %v3436 = vld [vmem:[#allocation2 + $0x84] sm:$0xff]
        %v3437 = vld [vmem:[#allocation2 + $0x8c] sm:$0xff]
        %v3438 = vld [vmem:[#allocation2 + $0x94] sm:$0xff]
        %v3439 = vld [vmem:[#allocation2 + $0x9c] sm:$0xff]
        %v3440 = vld [vmem:[#allocation2 + $0xa4] sm:$0xff]
        %v3441 = vld [vmem:[#allocation2 + $0xac] sm:$0xff]
        %v3442 = vld [vmem:[#allocation2 + $0xb4] sm:$0xff]
        %v3443 = vld [vmem:[#allocation2 + $0xbc] sm:$0xff]
        %s3444 = scalar_lea.vmem %s3, 128
        %v3445 = vld [vmem:[%s3444] sm:$0xff]
        %v3446 = vld [vmem:[%s3444 + $0x8] sm:$0xff]
        %v3447 = vld [vmem:[%s3444 + $0x10] sm:$0xff]
        %v3448 = vld [vmem:[%s3444 + $0x18] sm:$0xff]
        %v3450 = vsel %vm390, %v3420, 0
        %v3453 = vsel %vm390, %v3421, 0
        %v3456 = vsel %vm390, %v3422, 0
        %v3459 = vsel %vm390, %v3423, 0
        %v3462 = vsel %vm390, %v3424, 0
        %v3465 = vsel %vm390, %v3425, 0
        %v3468 = vsel %vm390, %v3426, 0
        %v3471 = vsel %vm390, %v3427, 0
        %v3474 = vsel %vm390, %v3428, 0
        %v3477 = vsel %vm390, %v3429, 0
        %v3480 = vsel %vm390, %v3430, 0
        %v3483 = vsel %vm390, %v3431, 0
        %v3486 = vsel %vm390, %v3432, 0
        %v3489 = vsel %vm390, %v3433, 0
        %v3492 = vsel %vm390, %v3434, 0
        %v3495 = vsel %vm390, %v3435, 0
        %v3498 = vsel %vm390, %v3436, 0
        %v3501 = vsel %vm390, %v3437, 0
        %v3504 = vsel %vm390, %v3438, 0
        %v3507 = vsel %vm390, %v3439, 0
        %v3510 = vsel %vm390, %v3440, 0
        %v3513 = vsel %vm390, %v3441, 0
        %v3516 = vsel %vm390, %v3442, 0
        %v3519 = vsel %vm390, %v3443, 0
        %3521 = vmatprep.subr.mxu0 0.0
        %3522 = vmatpush1.msra.mxu0 %v3445
        %3523 = vmatprep.subr.mxu0 0.0
        %3524 = vmatpush1.msra.mxu0 %v3446
        %3525 = vmatprep.subr.mxu0 0.0
        %3526 = vmatpush1.msra.mxu0 %v3447
        %3527 = vmatprep.subr.mxu0 0.0
        %3528 = vmatpush1.msra.mxu0 %v3448
        %3529 = vmatprep.subr.mxu0 0.0
        %3530 = vmatpush1.msra.mxu0 0.0
        %3531 = vmatprep.subr.mxu0 0.0
        %3532 = vmatpush1.msra.mxu0 0.0
        %3533 = vmatprep.subr.mxu0 0.0
        %3534 = vmatpush1.msra.mxu0 0.0
        %3535 = vmatprep.subr.mxu0 0.0
        %3536 = vmatpush1.msra.mxu0 0.0
        %3537 = vmatprep.subr.mxu0 0.0
        %3538 = vmatpush1.msra.mxu0 0.0
        %3539 = vmatprep.subr.mxu0 0.0
        %3540 = vmatpush1.msra.mxu0 0.0
        %3541 = vmatprep.subr.mxu0 0.0
        %3542 = vmatpush1.msra.mxu0 0.0
        %3543 = vmatprep.subr.mxu0 0.0
        %3544 = vmatpush1.msra.mxu0 0.0
        %3545 = vmatprep.subr.mxu0 0.0
        %3546 = vmatpush1.msra.mxu0 0.0
        %3547 = vmatprep.subr.mxu0 0.0
        %3548 = vmatpush1.msra.mxu0 0.0
        %3549 = vmatprep.subr.mxu0 0.0
        %3550 = vmatpush1.msra.mxu0 0.0
        %3551 = vmatprep.subr.mxu0 0.0
        %3552 = vmatpush1.msra.mxu0 0.0
        %3553 = vmatprep.subr.mxu0 0.0
        %3554 = vmatpush1.msra.mxu0 0.0
        %3555 = vmatprep.subr.mxu0 0.0
        %3556 = vmatpush1.msra.mxu0 0.0
        %3557 = vmatprep.subr.mxu0 0.0
        %3558 = vmatpush1.msra.mxu0 0.0
        %3559 = vmatprep.subr.mxu0 0.0
        %3560 = vmatpush1.msra.mxu0 0.0
        %3561 = vmatprep.subr.mxu0 0.0
        %3562 = vmatpush1.msra.mxu0 0.0
        %3563 = vmatprep.subr.mxu0 0.0
        %3564 = vmatpush1.msra.mxu0 0.0
        %3565 = vmatprep.subr.mxu0 0.0
        %3566 = vmatpush1.msra.mxu0 0.0
        %3567 = vmatprep.subr.mxu0 0.0
        %3568 = vmatpush1.msra.mxu0 0.0
        %3569 = vmatprep.subr.mxu0 0.0
        %3570 = vmatpush1.msra.mxu0 0.0
        %3571 = vmatprep.subr.mxu0 0.0
        %3572 = vmatpush1.msra.mxu0 0.0
        %3573 = vmatprep.subr.mxu0 0.0
        %3574 = vmatpush1.msra.mxu0 0.0
        %3575 = vmatprep.subr.mxu0 0.0
        %3576 = vmatpush1.msra.mxu0 0.0
        %3577 = vmatprep.subr.mxu0 0.0
        %3578 = vmatpush1.msra.mxu0 0.0
        %3579 = vmatprep.subr.mxu0 0.0
        %3580 = vmatpush1.msra.mxu0 0.0
        %3581 = vmatprep.subr.mxu0 0.0
        %3582 = vmatpush1.msra.mxu0 0.0
        %3583 = vmatprep.subr.mxu0 0.0
        %3584 = vmatpush1.msra.mxu0 0.0
        %3585 = vmatprep.mubr.f32.mxu0 0.0
        %3586 = vmatmul.mubr.f32.gmra.mrb[0].mxu0 %v3450
        %v3587 = vpop.f32.mrb[0].mxu0
        %v3588 = vadd.f32 0.0, %v3587
        %v3589 = vpop.f32.mrb[0].mxu0
        %3590 = vmatprep.mubr.f32.mxu0 0.0
        %3591 = vmatmul.mubr.f32.gmra.mrb[0].mxu0 %v3453
        %v3592 = vpop.f32.mrb[0].mxu0
        %v3593 = vadd.f32 0.0, %v3592
        %v3594 = vpop.f32.mrb[0].mxu0
        %3595 = vmatprep.mubr.f32.mxu0 0.0
        %3596 = vmatmul.mubr.f32.gmra.mrb[0].mxu0 %v3456
        %v3597 = vpop.f32.mrb[0].mxu0
        %v3598 = vadd.f32 0.0, %v3597
        %v3599 = vpop.f32.mrb[0].mxu0
        %3600 = vmatprep.mubr.f32.mxu0 0.0
        %3601 = vmatmul.mubr.f32.gmra.mrb[0].mxu0 %v3459
        %v3602 = vpop.f32.mrb[0].mxu0
        %v3603 = vadd.f32 0.0, %v3602
        %v3604 = vpop.f32.mrb[0].mxu0
        %3605 = vmatprep.mubr.f32.mxu0 0.0
        %3606 = vmatmul.mubr.f32.gmra.mrb[0].mxu0 %v3462
        %v3607 = vpop.f32.mrb[0].mxu0
        %v3608 = vadd.f32 0.0, %v3607
        %v3609 = vpop.f32.mrb[0].mxu0
        %3610 = vmatprep.mubr.f32.mxu0 0.0
        %3611 = vmatmul.mubr.f32.gmra.mrb[0].mxu0 %v3465
        %v3612 = vpop.f32.mrb[0].mxu0
        %v3613 = vadd.f32 0.0, %v3612
        %v3614 = vpop.f32.mrb[0].mxu0
        %3615 = vmatprep.mubr.f32.mxu0 0.0
        %3616 = vmatmul.mubr.f32.gmra.mrb[0].mxu0 %v3468
        %v3617 = vpop.f32.mrb[0].mxu0
        %v3618 = vadd.f32 0.0, %v3617
        %v3619 = vpop.f32.mrb[0].mxu0
        %3620 = vmatprep.mubr.f32.mxu0 0.0
        %3621 = vmatmul.mubr.f32.gmra.mrb[0].mxu0 %v3471
        %v3622 = vpop.f32.mrb[0].mxu0
        %v3623 = vadd.f32 0.0, %v3622
        %v3624 = vpop.f32.mrb[0].mxu0
        %3625 = vmatprep.mubr.f32.mxu0 0.0
        %3626 = vmatmul.mubr.f32.gmra.mrb[0].mxu0 %v3474
        %v3627 = vpop.f32.mrb[0].mxu0
        %v3628 = vadd.f32 0.0, %v3627
        %v3629 = vpop.f32.mrb[0].mxu0
        %3630 = vmatprep.mubr.f32.mxu0 0.0
        %3631 = vmatmul.mubr.f32.gmra.mrb[0].mxu0 %v3477
        %v3632 = vpop.f32.mrb[0].mxu0
        %v3633 = vadd.f32 0.0, %v3632
        %v3634 = vpop.f32.mrb[0].mxu0
        %3635 = vmatprep.mubr.f32.mxu0 0.0
        %3636 = vmatmul.mubr.f32.gmra.mrb[0].mxu0 %v3480
        %v3637 = vpop.f32.mrb[0].mxu0
        %v3638 = vadd.f32 0.0, %v3637
        %v3639 = vpop.f32.mrb[0].mxu0
        %3640 = vmatprep.mubr.f32.mxu0 0.0
        %3641 = vmatmul.mubr.f32.gmra.mrb[0].mxu0 %v3483
        %v3642 = vpop.f32.mrb[0].mxu0
        %v3643 = vadd.f32 0.0, %v3642
        %v3644 = vpop.f32.mrb[0].mxu0
        %3645 = vmatprep.mubr.f32.mxu0 0.0
        %3646 = vmatmul.mubr.f32.gmra.mrb[0].mxu0 %v3486
        %v3647 = vpop.f32.mrb[0].mxu0
        %v3648 = vadd.f32 0.0, %v3647
        %v3649 = vpop.f32.mrb[0].mxu0
        %3650 = vmatprep.mubr.f32.mxu0 0.0
        %3651 = vmatmul.mubr.f32.gmra.mrb[0].mxu0 %v3489
        %v3652 = vpop.f32.mrb[0].mxu0
        %v3653 = vadd.f32 0.0, %v3652
        %v3654 = vpop.f32.mrb[0].mxu0
        %3655 = vmatprep.mubr.f32.mxu0 0.0
        %3656 = vmatmul.mubr.f32.gmra.mrb[0].mxu0 %v3492
        %v3657 = vpop.f32.mrb[0].mxu0
        %v3658 = vadd.f32 0.0, %v3657
        %v3659 = vpop.f32.mrb[0].mxu0
        %3660 = vmatprep.mubr.f32.mxu0 0.0
        %3661 = vmatmul.mubr.f32.gmra.mrb[0].mxu0 %v3495
        %v3662 = vpop.f32.mrb[0].mxu0
        %v3663 = vadd.f32 0.0, %v3662
        %v3664 = vpop.f32.mrb[0].mxu0
        %3665 = vmatprep.mubr.f32.mxu0 0.0
        %3666 = vmatmul.mubr.f32.gmra.mrb[0].mxu0 %v3498
        %v3667 = vpop.f32.mrb[0].mxu0
        %v3668 = vadd.f32 0.0, %v3667
        %v3669 = vpop.f32.mrb[0].mxu0
        %3670 = vmatprep.mubr.f32.mxu0 0.0
        %3671 = vmatmul.mubr.f32.gmra.mrb[0].mxu0 %v3501
        %v3672 = vpop.f32.mrb[0].mxu0
        %v3673 = vadd.f32 0.0, %v3672
        %v3674 = vpop.f32.mrb[0].mxu0
        %3675 = vmatprep.mubr.f32.mxu0 0.0
        %3676 = vmatmul.mubr.f32.gmra.mrb[0].mxu0 %v3504
        %v3677 = vpop.f32.mrb[0].mxu0
        %v3678 = vadd.f32 0.0, %v3677
        %v3679 = vpop.f32.mrb[0].mxu0
        %3680 = vmatprep.mubr.f32.mxu0 0.0
        %3681 = vmatmul.mubr.f32.gmra.mrb[0].mxu0 %v3507
        %v3682 = vpop.f32.mrb[0].mxu0
        %v3683 = vadd.f32 0.0, %v3682
        %v3684 = vpop.f32.mrb[0].mxu0
        %3685 = vmatprep.mubr.f32.mxu0 0.0
        %3686 = vmatmul.mubr.f32.gmra.mrb[0].mxu0 %v3510
        %v3687 = vpop.f32.mrb[0].mxu0
        %v3688 = vadd.f32 0.0, %v3687
        %v3689 = vpop.f32.mrb[0].mxu0
        %3690 = vmatprep.mubr.f32.mxu0 0.0
        %3691 = vmatmul.mubr.f32.gmra.mrb[0].mxu0 %v3513
        %v3692 = vpop.f32.mrb[0].mxu0
        %v3693 = vadd.f32 0.0, %v3692
        %v3694 = vpop.f32.mrb[0].mxu0
        %3695 = vmatprep.mubr.f32.mxu0 0.0
        %3696 = vmatmul.mubr.f32.gmra.mrb[0].mxu0 %v3516
        %v3697 = vpop.f32.mrb[0].mxu0
        %v3698 = vadd.f32 0.0, %v3697
        %v3699 = vpop.f32.mrb[0].mxu0
        %3700 = vmatprep.mubr.f32.mxu0 0.0
        %3701 = vmatmul.mubr.f32.gmra.mrb[0].mxu0 %v3519
        %v3702 = vpop.f32.mrb[0].mxu0
        %v3703 = vadd.f32 0.0, %v3702
        %v3704 = vpop.f32.mrb[0].mxu0
        %3705 = vdwg.mxu0
        %v3706 = vadd.f32 %v3396, %v3588
        %v3707 = vadd.f32 %v3397, %v3593
        %v3708 = vadd.f32 %v3398, %v3598
        %v3709 = vadd.f32 %v3399, %v3603
        %v3710 = vadd.f32 %v3400, %v3608
        %v3711 = vadd.f32 %v3401, %v3613
        %v3712 = vadd.f32 %v3402, %v3618
        %v3713 = vadd.f32 %v3403, %v3623
        %v3714 = vadd.f32 %v3404, %v3628
        %v3715 = vadd.f32 %v3405, %v3633
        %v3716 = vadd.f32 %v3406, %v3638
        %v3717 = vadd.f32 %v3407, %v3643
        %v3718 = vadd.f32 %v3408, %v3648
        %v3719 = vadd.f32 %v3409, %v3653
        %v3720 = vadd.f32 %v3410, %v3658
        %v3721 = vadd.f32 %v3411, %v3663
        %v3722 = vadd.f32 %v3412, %v3668
        %v3723 = vadd.f32 %v3413, %v3673
        %v3724 = vadd.f32 %v3414, %v3678
        %v3725 = vadd.f32 %v3415, %v3683
        %v3726 = vadd.f32 %v3416, %v3688
        %v3727 = vadd.f32 %v3417, %v3693
        %v3728 = vadd.f32 %v3418, %v3698
        %v3729 = vadd.f32 %v3419, %v3703
        %v3730 = vld [vmem:[%s4] sm:$0x1]
        %v3732 = vlaneseq
        %v3733 = vshrl.u32 %v3732, 7
        %v3734 = vsub.s32 0, %v3733
        %v3735 = vrot.slane %v3730, %v3734
        %v3737 = vadd.f32 %v3706, %v3735
        %v3738 = vadd.f32 %v3707, %v3735
        %v3739 = vadd.f32 %v3708, %v3735
        %v3740 = vadd.f32 %v3709, %v3735
        %v3741 = vadd.f32 %v3710, %v3735
        %v3742 = vadd.f32 %v3711, %v3735
        %v3743 = vadd.f32 %v3712, %v3735
        %v3744 = vadd.f32 %v3713, %v3735
        %v3745 = vadd.f32 %v3714, %v3735
        %v3746 = vadd.f32 %v3715, %v3735
        %v3747 = vadd.f32 %v3716, %v3735
        %v3748 = vadd.f32 %v3717, %v3735
        %v3749 = vadd.f32 %v3718, %v3735
        %v3750 = vadd.f32 %v3719, %v3735
        %v3751 = vadd.f32 %v3720, %v3735
        %v3752 = vadd.f32 %v3721, %v3735
        %v3753 = vadd.f32 %v3722, %v3735
        %v3754 = vadd.f32 %v3723, %v3735
        %v3755 = vadd.f32 %v3724, %v3735
        %v3756 = vadd.f32 %v3725, %v3735
        %v3757 = vadd.f32 %v3726, %v3735
        %v3758 = vadd.f32 %v3727, %v3735
        %v3759 = vadd.f32 %v3728, %v3735
        %v3760 = vadd.f32 %v3729, %v3735
        %vm3761 = vcmp.gt.f32.partialorder %v3737, 0.0
        %vm3762 = vcmp.gt.f32.partialorder %v3738, 0.0
        %vm3763 = vcmp.gt.f32.partialorder %v3739, 0.0
        %vm3764 = vcmp.gt.f32.partialorder %v3740, 0.0
        %vm3765 = vcmp.gt.f32.partialorder %v3741, 0.0
        %vm3766 = vcmp.gt.f32.partialorder %v3742, 0.0
        %vm3767 = vcmp.gt.f32.partialorder %v3743, 0.0
        %vm3768 = vcmp.gt.f32.partialorder %v3744, 0.0
        %vm3769 = vcmp.gt.f32.partialorder %v3745, 0.0
        %vm3770 = vcmp.gt.f32.partialorder %v3746, 0.0
        %vm3771 = vcmp.gt.f32.partialorder %v3747, 0.0
        %vm3772 = vcmp.gt.f32.partialorder %v3748, 0.0
        %vm3773 = vcmp.gt.f32.partialorder %v3749, 0.0
        %vm3774 = vcmp.gt.f32.partialorder %v3750, 0.0
        %vm3775 = vcmp.gt.f32.partialorder %v3751, 0.0
        %vm3776 = vcmp.gt.f32.partialorder %v3752, 0.0
        %vm3777 = vcmp.gt.f32.partialorder %v3753, 0.0
        %vm3778 = vcmp.gt.f32.partialorder %v3754, 0.0
        %vm3779 = vcmp.gt.f32.partialorder %v3755, 0.0
        %vm3780 = vcmp.gt.f32.partialorder %v3756, 0.0
        %vm3781 = vcmp.gt.f32.partialorder %v3757, 0.0
        %vm3782 = vcmp.gt.f32.partialorder %v3758, 0.0
        %vm3783 = vcmp.gt.f32.partialorder %v3759, 0.0
        %vm3784 = vcmp.gt.f32.partialorder %v3760, 0.0
        %v3785 = vmul.f32 %v3737, 1.442695
        %v3786 = vpow.pop %v3785
        %v3787 = vmul.f32 %v3738, 1.442695
        %v3788 = vpow.pop %v3787
        %v3789 = vmul.f32 %v3739, 1.442695
        %v3790 = vpow.pop %v3789
        %v3791 = vmul.f32 %v3740, 1.442695
        %v3792 = vpow.pop %v3791
        %v3793 = vmul.f32 %v3741, 1.442695
        %v3794 = vpow.pop %v3793
        %v3795 = vmul.f32 %v3742, 1.442695
        %v3796 = vpow.pop %v3795
        %v3797 = vmul.f32 %v3743, 1.442695
        %v3798 = vpow.pop %v3797
        %v3799 = vmul.f32 %v3744, 1.442695
        %v3800 = vpow.pop %v3799
        %v3801 = vmul.f32 %v3745, 1.442695
        %v3802 = vpow.pop %v3801
        %v3803 = vmul.f32 %v3746, 1.442695
        %v3804 = vpow.pop %v3803
        %v3805 = vmul.f32 %v3747, 1.442695
        %v3806 = vpow.pop %v3805
        %v3807 = vmul.f32 %v3748, 1.442695
        %v3808 = vpow.pop %v3807
        %v3809 = vmul.f32 %v3749, 1.442695
        %v3810 = vpow.pop %v3809
        %v3811 = vmul.f32 %v3750, 1.442695
        %v3812 = vpow.pop %v3811
        %v3813 = vmul.f32 %v3751, 1.442695
        %v3814 = vpow.pop %v3813
        %v3815 = vmul.f32 %v3752, 1.442695
        %v3816 = vpow.pop %v3815
        %v3817 = vmul.f32 %v3753, 1.442695
        %v3818 = vpow.pop %v3817
        %v3819 = vmul.f32 %v3754, 1.442695
        %v3820 = vpow.pop %v3819
        %v3821 = vmul.f32 %v3755, 1.442695
        %v3822 = vpow.pop %v3821
        %v3823 = vmul.f32 %v3756, 1.442695
        %v3824 = vpow.pop %v3823
        %v3825 = vmul.f32 %v3757, 1.442695
        %v3826 = vpow.pop %v3825
        %v3827 = vmul.f32 %v3758, 1.442695
        %v3828 = vpow.pop %v3827
        %v3829 = vmul.f32 %v3759, 1.442695
        %v3830 = vpow.pop %v3829
        %v3831 = vmul.f32 %v3760, 1.442695
        %v3832 = vpow.pop %v3831
        %v3833 = vsub.f32 %v3786, 1.0
        %v3834 = vsub.f32 %v3788, 1.0
        %v3835 = vsub.f32 %v3790, 1.0
        %v3836 = vsub.f32 %v3792, 1.0
        %v3837 = vsub.f32 %v3794, 1.0
        %v3838 = vsub.f32 %v3796, 1.0
        %v3839 = vsub.f32 %v3798, 1.0
        %v3840 = vsub.f32 %v3800, 1.0
        %v3841 = vsub.f32 %v3802, 1.0
        %v3842 = vsub.f32 %v3804, 1.0
        %v3843 = vsub.f32 %v3806, 1.0
        %v3844 = vsub.f32 %v3808, 1.0
        %v3845 = vsub.f32 %v3810, 1.0
        %v3846 = vsub.f32 %v3812, 1.0
        %v3847 = vsub.f32 %v3814, 1.0
        %v3848 = vsub.f32 %v3816, 1.0
        %v3849 = vsub.f32 %v3818, 1.0
        %v3850 = vsub.f32 %v3820, 1.0
        %v3851 = vsub.f32 %v3822, 1.0
        %v3852 = vsub.f32 %v3824, 1.0
        %v3853 = vsub.f32 %v3826, 1.0
        %v3854 = vsub.f32 %v3828, 1.0
        %v3855 = vsub.f32 %v3830, 1.0
        %v3856 = vsub.f32 %v3832, 1.0
        %v3857 = vsel %vm3761, %v3737, %v3833
        %v3858 = vsel %vm3762, %v3738, %v3834
        %v3859 = vsel %vm3763, %v3739, %v3835
        %v3860 = vsel %vm3764, %v3740, %v3836
        %v3861 = vsel %vm3765, %v3741, %v3837
        %v3862 = vsel %vm3766, %v3742, %v3838
        %v3863 = vsel %vm3767, %v3743, %v3839
        %v3864 = vsel %vm3768, %v3744, %v3840
        %v3865 = vsel %vm3769, %v3745, %v3841
        %v3866 = vsel %vm3770, %v3746, %v3842
        %v3867 = vsel %vm3771, %v3747, %v3843
        %v3868 = vsel %vm3772, %v3748, %v3844
        %v3869 = vsel %vm3773, %v3749, %v3845
        %v3870 = vsel %vm3774, %v3750, %v3846
        %v3871 = vsel %vm3775, %v3751, %v3847
        %v3872 = vsel %vm3776, %v3752, %v3848
        %v3873 = vsel %vm3777, %v3753, %v3849
        %v3874 = vsel %vm3778, %v3754, %v3850
        %v3875 = vsel %vm3779, %v3755, %v3851
        %v3876 = vsel %vm3780, %v3756, %v3852
        %v3877 = vsel %vm3781, %v3757, %v3853
        %v3878 = vsel %vm3782, %v3758, %v3854
        %v3879 = vsel %vm3783, %v3759, %v3855
        %v3880 = vsel %vm3784, %v3760, %v3856
        %vm3881 = vcmask 408576
        %3882 = vst.msk [vmem:[#allocation5] sm:$0xff] %vm3881, %v3857
        %3883 = vst.msk [vmem:[#allocation5 + $0x8] sm:$0xff] %vm3881, %v3858
        %3884 = vst.msk [vmem:[#allocation5 + $0x10] sm:$0xff] %vm3881, %v3859
        %3885 = vst.msk [vmem:[#allocation5 + $0x18] sm:$0xff] %vm3881, %v3860
        %3886 = vst.msk [vmem:[#allocation5 + $0x20] sm:$0xff] %vm3881, %v3861
        %3887 = vst.msk [vmem:[#allocation5 + $0x28] sm:$0xff] %vm3881, %v3862
        %3888 = vst.msk [vmem:[#allocation5 + $0x30] sm:$0xff] %vm3881, %v3863
        %3889 = vst.msk [vmem:[#allocation5 + $0x38] sm:$0xff] %vm3881, %v3864
        %3890 = vst.msk [vmem:[#allocation5 + $0x40] sm:$0xff] %vm3881, %v3865
        %3891 = vst.msk [vmem:[#allocation5 + $0x48] sm:$0xff] %vm3881, %v3866
        %3892 = vst.msk [vmem:[#allocation5 + $0x50] sm:$0xff] %vm3881, %v3867
        %3893 = vst.msk [vmem:[#allocation5 + $0x58] sm:$0xff] %vm3881, %v3868
        %3894 = vst.msk [vmem:[#allocation5 + $0x60] sm:$0xff] %vm3881, %v3869
        %3895 = vst.msk [vmem:[#allocation5 + $0x68] sm:$0xff] %vm3881, %v3870
        %3896 = vst.msk [vmem:[#allocation5 + $0x70] sm:$0xff] %vm3881, %v3871
        %3897 = vst.msk [vmem:[#allocation5 + $0x78] sm:$0xff] %vm3881, %v3872
        %3898 = vst.msk [vmem:[#allocation5 + $0x80] sm:$0xff] %vm3881, %v3873
        %3899 = vst.msk [vmem:[#allocation5 + $0x88] sm:$0xff] %vm3881, %v3874
        %3900 = vst.msk [vmem:[#allocation5 + $0x90] sm:$0xff] %vm3881, %v3875
        %3901 = vst.msk [vmem:[#allocation5 + $0x98] sm:$0xff] %vm3881, %v3876
        %3902 = vst.msk [vmem:[#allocation5 + $0xa0] sm:$0xff] %vm3881, %v3877
        %3903 = vst.msk [vmem:[#allocation5 + $0xa8] sm:$0xff] %vm3881, %v3878
        %3904 = vst.msk [vmem:[#allocation5 + $0xb0] sm:$0xff] %vm3881, %v3879
        %3905 = vst.msk [vmem:[#allocation5 + $0xb8] sm:$0xff] %vm3881, %v3880
        %v3906 = vld [vmem:[#allocation2 + $0xc0] sm:$0xff]
        %v3907 = vld [vmem:[#allocation2 + $0xc8] sm:$0xff]
        %v3908 = vld [vmem:[#allocation2 + $0xd0] sm:$0xff]
        %v3909 = vld [vmem:[#allocation2 + $0xd8] sm:$0xff]
        %v3910 = vld [vmem:[#allocation2 + $0xe0] sm:$0xff]
        %v3911 = vld [vmem:[#allocation2 + $0xe8] sm:$0xff]
        %v3912 = vld [vmem:[#allocation2 + $0xf0] sm:$0xff]
        %v3913 = vld [vmem:[#allocation2 + $0xf8] sm:$0xff]
        %v3914 = vld [vmem:[#allocation2 + $0x100] sm:$0xff]
        %v3915 = vld [vmem:[#allocation2 + $0x108] sm:$0xff]
        %v3916 = vld [vmem:[#allocation2 + $0x110] sm:$0xff]
        %v3917 = vld [vmem:[#allocation2 + $0x118] sm:$0xff]
        %v3918 = vld [vmem:[#allocation2 + $0x120] sm:$0xff]
        %v3919 = vld [vmem:[#allocation2 + $0x128] sm:$0xff]
        %v3920 = vld [vmem:[#allocation2 + $0x130] sm:$0xff]
        %v3921 = vld [vmem:[#allocation2 + $0x138] sm:$0xff]
        %v3922 = vld [vmem:[#allocation2 + $0x140] sm:$0xff]
        %v3923 = vld [vmem:[#allocation2 + $0x148] sm:$0xff]
        %v3924 = vld [vmem:[#allocation2 + $0x150] sm:$0xff]
        %v3925 = vld [vmem:[#allocation2 + $0x158] sm:$0xff]
        %v3926 = vld [vmem:[#allocation2 + $0x160] sm:$0xff]
        %v3927 = vld [vmem:[#allocation2 + $0x168] sm:$0xff]
        %v3928 = vld [vmem:[#allocation2 + $0x170] sm:$0x7f]
        %v3929 = vld [vmem:[%s3] sm:$0xff]
        %v3930 = vld [vmem:[%s3 + $0x8] sm:$0xff]
        %v3931 = vld [vmem:[%s3 + $0x10] sm:$0xff]
        %v3932 = vld [vmem:[%s3 + $0x18] sm:$0xff]
        %v3933 = vld [vmem:[#allocation2 + $0xc1] sm:$0xff]
        %v3934 = vld [vmem:[#allocation2 + $0xc9] sm:$0xff]
        %v3935 = vld [vmem:[#allocation2 + $0xd1] sm:$0xff]
        %v3936 = vld [vmem:[#allocation2 + $0xd9] sm:$0xff]
        %v3937 = vld [vmem:[#allocation2 + $0xe1] sm:$0xff]
        %v3938 = vld [vmem:[#allocation2 + $0xe9] sm:$0xff]
        %v3939 = vld [vmem:[#allocation2 + $0xf1] sm:$0xff]
        %v3940 = vld [vmem:[#allocation2 + $0xf9] sm:$0xff]
        %v3941 = vld [vmem:[#allocation2 + $0x101] sm:$0xff]
        %v3942 = vld [vmem:[#allocation2 + $0x109] sm:$0xff]
        %v3943 = vld [vmem:[#allocation2 + $0x111] sm:$0xff]
        %v3944 = vld [vmem:[#allocation2 + $0x119] sm:$0xff]
        %v3945 = vld [vmem:[#allocation2 + $0x121] sm:$0xff]
        %v3946 = vld [vmem:[#allocation2 + $0x129] sm:$0xff]
        %v3947 = vld [vmem:[#allocation2 + $0x131] sm:$0xff]
        %v3948 = vld [vmem:[#allocation2 + $0x139] sm:$0xff]
        %v3949 = vld [vmem:[#allocation2 + $0x141] sm:$0xff]
        %v3950 = vld [vmem:[#allocation2 + $0x149] sm:$0xff]
        %v3951 = vld [vmem:[#allocation2 + $0x151] sm:$0xff]
        %v3952 = vld [vmem:[#allocation2 + $0x159] sm:$0xff]
        %v3953 = vld [vmem:[#allocation2 + $0x161] sm:$0xff]
        %v3954 = vld [vmem:[#allocation2 + $0x169] sm:$0xff]
        %v3955 = vld [vmem:[#allocation2 + $0x171] sm:$0x7f]
        %v3956 = vld [vmem:[%s2281] sm:$0xff]
        %v3957 = vld [vmem:[%s2281 + $0x8] sm:$0xff]
        %v3958 = vld [vmem:[%s2281 + $0x10] sm:$0xff]
        %v3959 = vld [vmem:[%s2281 + $0x18] sm:$0xff]
        %v3961 = vsel %vm390, %v3933, 0
        %v3964 = vsel %vm390, %v3934, 0
        %v3967 = vsel %vm390, %v3935, 0
        %v3970 = vsel %vm390, %v3936, 0
        %v3973 = vsel %vm390, %v3937, 0
        %v3976 = vsel %vm390, %v3938, 0
        %v3979 = vsel %vm390, %v3939, 0
        %v3982 = vsel %vm390, %v3940, 0
        %v3985 = vsel %vm390, %v3941, 0
        %v3988 = vsel %vm390, %v3942, 0
        %v3991 = vsel %vm390, %v3943, 0
        %v3994 = vsel %vm390, %v3944, 0
        %v3997 = vsel %vm390, %v3945, 0
        %v4000 = vsel %vm390, %v3946, 0
        %v4003 = vsel %vm390, %v3947, 0
        %v4006 = vsel %vm390, %v3948, 0
        %v4009 = vsel %vm390, %v3949, 0
        %v4012 = vsel %vm390, %v3950, 0
        %v4015 = vsel %vm390, %v3951, 0
        %v4018 = vsel %vm390, %v3952, 0
        %v4021 = vsel %vm390, %v3953, 0
        %v4024 = vsel %vm390, %v3954, 0
        %v4027 = vsel %vm390, %v3955, 0
        %4029 = vmatprep.subr.mxu0 0.0
        %4030 = vmatpush1.msra.mxu0 %v3956
        %4031 = vmatprep.subr.mxu0 0.0
        %4032 = vmatpush1.msra.mxu0 %v3957
        %4033 = vmatprep.subr.mxu0 0.0
        %4034 = vmatpush1.msra.mxu0 %v3958
        %4035 = vmatprep.subr.mxu0 0.0
        %4036 = vmatpush1.msra.mxu0 %v3959
        %4037 = vmatprep.subr.mxu0 0.0
        %4038 = vmatpush1.msra.mxu0 0.0
        %4039 = vmatprep.subr.mxu0 0.0
        %4040 = vmatpush1.msra.mxu0 0.0
        %4041 = vmatprep.subr.mxu0 0.0
        %4042 = vmatpush1.msra.mxu0 0.0
        %4043 = vmatprep.subr.mxu0 0.0
        %4044 = vmatpush1.msra.mxu0 0.0
        %4045 = vmatprep.subr.mxu0 0.0
        %4046 = vmatpush1.msra.mxu0 0.0
        %4047 = vmatprep.subr.mxu0 0.0
        %4048 = vmatpush1.msra.mxu0 0.0
        %4049 = vmatprep.subr.mxu0 0.0
        %4050 = vmatpush1.msra.mxu0 0.0
        %4051 = vmatprep.subr.mxu0 0.0
        %4052 = vmatpush1.msra.mxu0 0.0
        %4053 = vmatprep.subr.mxu0 0.0
        %4054 = vmatpush1.msra.mxu0 0.0
        %4055 = vmatprep.subr.mxu0 0.0
        %4056 = vmatpush1.msra.mxu0 0.0
        %4057 = vmatprep.subr.mxu0 0.0
        %4058 = vmatpush1.msra.mxu0 0.0
        %4059 = vmatprep.subr.mxu0 0.0
        %4060 = vmatpush1.msra.mxu0 0.0
        %4061 = vmatprep.subr.mxu0 0.0
        %4062 = vmatpush1.msra.mxu0 0.0
        %4063 = vmatprep.subr.mxu0 0.0
        %4064 = vmatpush1.msra.mxu0 0.0
        %4065 = vmatprep.subr.mxu0 0.0
        %4066 = vmatpush1.msra.mxu0 0.0
        %4067 = vmatprep.subr.mxu0 0.0
        %4068 = vmatpush1.msra.mxu0 0.0
        %4069 = vmatprep.subr.mxu0 0.0
        %4070 = vmatpush1.msra.mxu0 0.0
        %4071 = vmatprep.subr.mxu0 0.0
        %4072 = vmatpush1.msra.mxu0 0.0
        %4073 = vmatprep.subr.mxu0 0.0
        %4074 = vmatpush1.msra.mxu0 0.0
        %4075 = vmatprep.subr.mxu0 0.0
        %4076 = vmatpush1.msra.mxu0 0.0
        %4077 = vmatprep.subr.mxu0 0.0
        %4078 = vmatpush1.msra.mxu0 0.0
        %4079 = vmatprep.subr.mxu0 0.0
        %4080 = vmatpush1.msra.mxu0 0.0
        %4081 = vmatprep.subr.mxu0 0.0
        %4082 = vmatpush1.msra.mxu0 0.0
        %4083 = vmatprep.subr.mxu0 0.0
        %4084 = vmatpush1.msra.mxu0 0.0
        %4085 = vmatprep.subr.mxu0 0.0
        %4086 = vmatpush1.msra.mxu0 0.0
        %4087 = vmatprep.subr.mxu0 0.0
        %4088 = vmatpush1.msra.mxu0 0.0
        %4089 = vmatprep.subr.mxu0 0.0
        %4090 = vmatpush1.msra.mxu0 0.0
        %4091 = vmatprep.subr.mxu0 0.0
        %4092 = vmatpush1.msra.mxu0 0.0
        %4093 = vmatprep.mubr.f32.mxu0 0.0
        %4094 = vmatmul.mubr.f32.gmra.mrb[0].mxu0 %v3961
        %v4095 = vpop.f32.mrb[0].mxu0
        %v4096 = vadd.f32 0.0, %v4095
        %v4097 = vpop.f32.mrb[0].mxu0
        %4098 = vmatprep.mubr.f32.mxu0 0.0
        %4099 = vmatmul.mubr.f32.gmra.mrb[0].mxu0 %v3964
        %v4100 = vpop.f32.mrb[0].mxu0
        %v4101 = vadd.f32 0.0, %v4100
        %v4102 = vpop.f32.mrb[0].mxu0
        %4103 = vmatprep.mubr.f32.mxu0 0.0
        %4104 = vmatmul.mubr.f32.gmra.mrb[0].mxu0 %v3967
        %v4105 = vpop.f32.mrb[0].mxu0
        %v4106 = vadd.f32 0.0, %v4105
        %v4107 = vpop.f32.mrb[0].mxu0
        %4108 = vmatprep.mubr.f32.mxu0 0.0
        %4109 = vmatmul.mubr.f32.gmra.mrb[0].mxu0 %v3970
        %v4110 = vpop.f32.mrb[0].mxu0
        %v4111 = vadd.f32 0.0, %v4110
        %v4112 = vpop.f32.mrb[0].mxu0
        %4113 = vmatprep.mubr.f32.mxu0 0.0
        %4114 = vmatmul.mubr.f32.gmra.mrb[0].mxu0 %v3973
        %v4115 = vpop.f32.mrb[0].mxu0
        %v4116 = vadd.f32 0.0, %v4115
        %v4117 = vpop.f32.mrb[0].mxu0
        %4118 = vmatprep.mubr.f32.mxu0 0.0
        %4119 = vmatmul.mubr.f32.gmra.mrb[0].mxu0 %v3976
        %v4120 = vpop.f32.mrb[0].mxu0
        %v4121 = vadd.f32 0.0, %v4120
        %v4122 = vpop.f32.mrb[0].mxu0
        %4123 = vmatprep.mubr.f32.mxu0 0.0
        %4124 = vmatmul.mubr.f32.gmra.mrb[0].mxu0 %v3979
        %v4125 = vpop.f32.mrb[0].mxu0
        %v4126 = vadd.f32 0.0, %v4125
        %v4127 = vpop.f32.mrb[0].mxu0
        %4128 = vmatprep.mubr.f32.mxu0 0.0
        %4129 = vmatmul.mubr.f32.gmra.mrb[0].mxu0 %v3982
        %v4130 = vpop.f32.mrb[0].mxu0
        %v4131 = vadd.f32 0.0, %v4130
        %v4132 = vpop.f32.mrb[0].mxu0
        %4133 = vmatprep.mubr.f32.mxu0 0.0
        %4134 = vmatmul.mubr.f32.gmra.mrb[0].mxu0 %v3985
        %v4135 = vpop.f32.mrb[0].mxu0
        %v4136 = vadd.f32 0.0, %v4135
        %v4137 = vpop.f32.mrb[0].mxu0
        %4138 = vmatprep.mubr.f32.mxu0 0.0
        %4139 = vmatmul.mubr.f32.gmra.mrb[0].mxu0 %v3988
        %v4140 = vpop.f32.mrb[0].mxu0
        %v4141 = vadd.f32 0.0, %v4140
        %v4142 = vpop.f32.mrb[0].mxu0
        %4143 = vmatprep.mubr.f32.mxu0 0.0
        %4144 = vmatmul.mubr.f32.gmra.mrb[0].mxu0 %v3991
        %v4145 = vpop.f32.mrb[0].mxu0
        %v4146 = vadd.f32 0.0, %v4145
        %v4147 = vpop.f32.mrb[0].mxu0
        %4148 = vmatprep.mubr.f32.mxu0 0.0
        %4149 = vmatmul.mubr.f32.gmra.mrb[0].mxu0 %v3994
        %v4150 = vpop.f32.mrb[0].mxu0
        %v4151 = vadd.f32 0.0, %v4150
        %v4152 = vpop.f32.mrb[0].mxu0
        %4153 = vmatprep.mubr.f32.mxu0 0.0
        %4154 = vmatmul.mubr.f32.gmra.mrb[0].mxu0 %v3997
        %v4155 = vpop.f32.mrb[0].mxu0
        %v4156 = vadd.f32 0.0, %v4155
        %v4157 = vpop.f32.mrb[0].mxu0
        %4158 = vmatprep.mubr.f32.mxu0 0.0
        %4159 = vmatmul.mubr.f32.gmra.mrb[0].mxu0 %v4000
        %v4160 = vpop.f32.mrb[0].mxu0
        %v4161 = vadd.f32 0.0, %v4160
        %v4162 = vpop.f32.mrb[0].mxu0
        %4163 = vmatprep.mubr.f32.mxu0 0.0
        %4164 = vmatmul.mubr.f32.gmra.mrb[0].mxu0 %v4003
        %v4165 = vpop.f32.mrb[0].mxu0
        %v4166 = vadd.f32 0.0, %v4165
        %v4167 = vpop.f32.mrb[0].mxu0
        %4168 = vmatprep.mubr.f32.mxu0 0.0
        %4169 = vmatmul.mubr.f32.gmra.mrb[0].mxu0 %v4006
        %v4170 = vpop.f32.mrb[0].mxu0
        %v4171 = vadd.f32 0.0, %v4170
        %v4172 = vpop.f32.mrb[0].mxu0
        %4173 = vmatprep.mubr.f32.mxu0 0.0
        %4174 = vmatmul.mubr.f32.gmra.mrb[0].mxu0 %v4009
        %v4175 = vpop.f32.mrb[0].mxu0
        %v4176 = vadd.f32 0.0, %v4175
        %v4177 = vpop.f32.mrb[0].mxu0
        %4178 = vmatprep.mubr.f32.mxu0 0.0
        %4179 = vmatmul.mubr.f32.gmra.mrb[0].mxu0 %v4012
        %v4180 = vpop.f32.mrb[0].mxu0
        %v4181 = vadd.f32 0.0, %v4180
        %v4182 = vpop.f32.mrb[0].mxu0
        %4183 = vmatprep.mubr.f32.mxu0 0.0
        %4184 = vmatmul.mubr.f32.gmra.mrb[0].mxu0 %v4015
        %v4185 = vpop.f32.mrb[0].mxu0
        %v4186 = vadd.f32 0.0, %v4185
        %v4187 = vpop.f32.mrb[0].mxu0
        %4188 = vmatprep.mubr.f32.mxu0 0.0
        %4189 = vmatmul.mubr.f32.gmra.mrb[0].mxu0 %v4018
        %v4190 = vpop.f32.mrb[0].mxu0
        %v4191 = vadd.f32 0.0, %v4190
        %v4192 = vpop.f32.mrb[0].mxu0
        %4193 = vmatprep.mubr.f32.mxu0 0.0
        %4194 = vmatmul.mubr.f32.gmra.mrb[0].mxu0 %v4021
        %v4195 = vpop.f32.mrb[0].mxu0
        %v4196 = vadd.f32 0.0, %v4195
        %v4197 = vpop.f32.mrb[0].mxu0
        %4198 = vmatprep.mubr.f32.mxu0 0.0
        %4199 = vmatmul.mubr.f32.gmra.mrb[0].mxu0 %v4024
        %v4200 = vpop.f32.mrb[0].mxu0
        %v4201 = vadd.f32 0.0, %v4200
        %v4202 = vpop.f32.mrb[0].mxu0
        %4203 = vmatprep.mubr.f32.mxu0 0.0
        %4204 = vmatmul.mubr.f32.gmra.mrb[0].mxu0 %v4027
        %v4205 = vpop.f32.mrb[0].mxu0
        %v4206 = vadd.f32 0.0, %v4205
        %v4207 = vpop.f32.mrb[0].mxu0
        %4208 = vdwg.mxu0
        %v4210 = vsel %vm390, %v3906, 0
        %v4213 = vsel %vm390, %v3907, 0
        %v4216 = vsel %vm390, %v3908, 0
        %v4219 = vsel %vm390, %v3909, 0
        %v4222 = vsel %vm390, %v3910, 0
        %v4225 = vsel %vm390, %v3911, 0
        %v4228 = vsel %vm390, %v3912, 0
        %v4231 = vsel %vm390, %v3913, 0
        %v4234 = vsel %vm390, %v3914, 0
        %v4237 = vsel %vm390, %v3915, 0
        %v4240 = vsel %vm390, %v3916, 0
        %v4243 = vsel %vm390, %v3917, 0
        %v4246 = vsel %vm390, %v3918, 0
        %v4249 = vsel %vm390, %v3919, 0
        %v4252 = vsel %vm390, %v3920, 0
        %v4255 = vsel %vm390, %v3921, 0
        %v4258 = vsel %vm390, %v3922, 0
        %v4261 = vsel %vm390, %v3923, 0
        %v4264 = vsel %vm390, %v3924, 0
        %v4267 = vsel %vm390, %v3925, 0
        %v4270 = vsel %vm390, %v3926, 0
        %v4273 = vsel %vm390, %v3927, 0
        %v4276 = vsel %vm390, %v3928, 0
        %4278 = vmatprep.subr.mxu0 0.0
        %4279 = vmatpush1.msra.mxu0 %v3929
        %4280 = vmatprep.subr.mxu0 0.0
        %4281 = vmatpush1.msra.mxu0 %v3930
        %4282 = vmatprep.subr.mxu0 0.0
        %4283 = vmatpush1.msra.mxu0 %v3931
        %4284 = vmatprep.subr.mxu0 0.0
        %4285 = vmatpush1.msra.mxu0 %v3932
        %4286 = vmatprep.subr.mxu0 0.0
        %4287 = vmatpush1.msra.mxu0 0.0
        %4288 = vmatprep.subr.mxu0 0.0
        %4289 = vmatpush1.msra.mxu0 0.0
        %4290 = vmatprep.subr.mxu0 0.0
        %4291 = vmatpush1.msra.mxu0 0.0
        %4292 = vmatprep.subr.mxu0 0.0
        %4293 = vmatpush1.msra.mxu0 0.0
        %4294 = vmatprep.subr.mxu0 0.0
        %4295 = vmatpush1.msra.mxu0 0.0
        %4296 = vmatprep.subr.mxu0 0.0
        %4297 = vmatpush1.msra.mxu0 0.0
        %4298 = vmatprep.subr.mxu0 0.0
        %4299 = vmatpush1.msra.mxu0 0.0
        %4300 = vmatprep.subr.mxu0 0.0
        %4301 = vmatpush1.msra.mxu0 0.0
        %4302 = vmatprep.subr.mxu0 0.0
        %4303 = vmatpush1.msra.mxu0 0.0
        %4304 = vmatprep.subr.mxu0 0.0
        %4305 = vmatpush1.msra.mxu0 0.0
        %4306 = vmatprep.subr.mxu0 0.0
        %4307 = vmatpush1.msra.mxu0 0.0
        %4308 = vmatprep.subr.mxu0 0.0
        %4309 = vmatpush1.msra.mxu0 0.0
        %4310 = vmatprep.subr.mxu0 0.0
        %4311 = vmatpush1.msra.mxu0 0.0
        %4312 = vmatprep.subr.mxu0 0.0
        %4313 = vmatpush1.msra.mxu0 0.0
        %4314 = vmatprep.subr.mxu0 0.0
        %4315 = vmatpush1.msra.mxu0 0.0
        %4316 = vmatprep.subr.mxu0 0.0
        %4317 = vmatpush1.msra.mxu0 0.0
        %4318 = vmatprep.subr.mxu0 0.0
        %4319 = vmatpush1.msra.mxu0 0.0
        %4320 = vmatprep.subr.mxu0 0.0
        %4321 = vmatpush1.msra.mxu0 0.0
        %4322 = vmatprep.subr.mxu0 0.0
        %4323 = vmatpush1.msra.mxu0 0.0
        %4324 = vmatprep.subr.mxu0 0.0
        %4325 = vmatpush1.msra.mxu0 0.0
        %4326 = vmatprep.subr.mxu0 0.0
        %4327 = vmatpush1.msra.mxu0 0.0
        %4328 = vmatprep.subr.mxu0 0.0
        %4329 = vmatpush1.msra.mxu0 0.0
        %4330 = vmatprep.subr.mxu0 0.0
        %4331 = vmatpush1.msra.mxu0 0.0
        %4332 = vmatprep.subr.mxu0 0.0
        %4333 = vmatpush1.msra.mxu0 0.0
        %4334 = vmatprep.subr.mxu0 0.0
        %4335 = vmatpush1.msra.mxu0 0.0
        %4336 = vmatprep.subr.mxu0 0.0
        %4337 = vmatpush1.msra.mxu0 0.0
        %4338 = vmatprep.subr.mxu0 0.0
        %4339 = vmatpush1.msra.mxu0 0.0
        %4340 = vmatprep.subr.mxu0 0.0
        %4341 = vmatpush1.msra.mxu0 0.0
        %4342 = vmatprep.mubr.f32.mxu0 0.0
        %4343 = vmatmul.mubr.f32.gmra.mrb[0].mxu0 %v4210
        %v4344 = vpop.f32.mrb[0].mxu0
        %v4345 = vadd.f32 %v4096, %v4344
        %v4346 = vpop.f32.mrb[0].mxu0
        %4347 = vmatprep.mubr.f32.mxu0 0.0
        %4348 = vmatmul.mubr.f32.gmra.mrb[0].mxu0 %v4213
        %v4349 = vpop.f32.mrb[0].mxu0
        %v4350 = vadd.f32 %v4101, %v4349
        %v4351 = vpop.f32.mrb[0].mxu0
        %4352 = vmatprep.mubr.f32.mxu0 0.0
        %4353 = vmatmul.mubr.f32.gmra.mrb[0].mxu0 %v4216
        %v4354 = vpop.f32.mrb[0].mxu0
        %v4355 = vadd.f32 %v4106, %v4354
        %v4356 = vpop.f32.mrb[0].mxu0
        %4357 = vmatprep.mubr.f32.mxu0 0.0
        %4358 = vmatmul.mubr.f32.gmra.mrb[0].mxu0 %v4219
        %v4359 = vpop.f32.mrb[0].mxu0
        %v4360 = vadd.f32 %v4111, %v4359
        %v4361 = vpop.f32.mrb[0].mxu0
        %4362 = vmatprep.mubr.f32.mxu0 0.0
        %4363 = vmatmul.mubr.f32.gmra.mrb[0].mxu0 %v4222
        %v4364 = vpop.f32.mrb[0].mxu0
        %v4365 = vadd.f32 %v4116, %v4364
        %v4366 = vpop.f32.mrb[0].mxu0
        %4367 = vmatprep.mubr.f32.mxu0 0.0
        %4368 = vmatmul.mubr.f32.gmra.mrb[0].mxu0 %v4225
        %v4369 = vpop.f32.mrb[0].mxu0
        %v4370 = vadd.f32 %v4121, %v4369
        %v4371 = vpop.f32.mrb[0].mxu0
        %4372 = vmatprep.mubr.f32.mxu0 0.0
        %4373 = vmatmul.mubr.f32.gmra.mrb[0].mxu0 %v4228
        %v4374 = vpop.f32.mrb[0].mxu0
        %v4375 = vadd.f32 %v4126, %v4374
        %v4376 = vpop.f32.mrb[0].mxu0
        %4377 = vmatprep.mubr.f32.mxu0 0.0
        %4378 = vmatmul.mubr.f32.gmra.mrb[0].mxu0 %v4231
        %v4379 = vpop.f32.mrb[0].mxu0
        %v4380 = vadd.f32 %v4131, %v4379
        %v4381 = vpop.f32.mrb[0].mxu0
        %4382 = vmatprep.mubr.f32.mxu0 0.0
        %4383 = vmatmul.mubr.f32.gmra.mrb[0].mxu0 %v4234
        %v4384 = vpop.f32.mrb[0].mxu0
        %v4385 = vadd.f32 %v4136, %v4384
        %v4386 = vpop.f32.mrb[0].mxu0
        %4387 = vmatprep.mubr.f32.mxu0 0.0
        %4388 = vmatmul.mubr.f32.gmra.mrb[0].mxu0 %v4237
        %v4389 = vpop.f32.mrb[0].mxu0
        %v4390 = vadd.f32 %v4141, %v4389
        %v4391 = vpop.f32.mrb[0].mxu0
        %4392 = vmatprep.mubr.f32.mxu0 0.0
        %4393 = vmatmul.mubr.f32.gmra.mrb[0].mxu0 %v4240
        %v4394 = vpop.f32.mrb[0].mxu0
        %v4395 = vadd.f32 %v4146, %v4394
        %v4396 = vpop.f32.mrb[0].mxu0
        %4397 = vmatprep.mubr.f32.mxu0 0.0
        %4398 = vmatmul.mubr.f32.gmra.mrb[0].mxu0 %v4243
        %v4399 = vpop.f32.mrb[0].mxu0
        %v4400 = vadd.f32 %v4151, %v4399
        %v4401 = vpop.f32.mrb[0].mxu0
        %4402 = vmatprep.mubr.f32.mxu0 0.0
        %4403 = vmatmul.mubr.f32.gmra.mrb[0].mxu0 %v4246
        %v4404 = vpop.f32.mrb[0].mxu0
        %v4405 = vadd.f32 %v4156, %v4404
        %v4406 = vpop.f32.mrb[0].mxu0
        %4407 = vmatprep.mubr.f32.mxu0 0.0
        %4408 = vmatmul.mubr.f32.gmra.mrb[0].mxu0 %v4249
        %v4409 = vpop.f32.mrb[0].mxu0
        %v4410 = vadd.f32 %v4161, %v4409
        %v4411 = vpop.f32.mrb[0].mxu0
        %4412 = vmatprep.mubr.f32.mxu0 0.0
        %4413 = vmatmul.mubr.f32.gmra.mrb[0].mxu0 %v4252
        %v4414 = vpop.f32.mrb[0].mxu0
        %v4415 = vadd.f32 %v4166, %v4414
        %v4416 = vpop.f32.mrb[0].mxu0
        %4417 = vmatprep.mubr.f32.mxu0 0.0
        %4418 = vmatmul.mubr.f32.gmra.mrb[0].mxu0 %v4255
        %v4419 = vpop.f32.mrb[0].mxu0
        %v4420 = vadd.f32 %v4171, %v4419
        %v4421 = vpop.f32.mrb[0].mxu0
        %4422 = vmatprep.mubr.f32.mxu0 0.0
        %4423 = vmatmul.mubr.f32.gmra.mrb[0].mxu0 %v4258
        %v4424 = vpop.f32.mrb[0].mxu0
        %v4425 = vadd.f32 %v4176, %v4424
        %v4426 = vpop.f32.mrb[0].mxu0
        %4427 = vmatprep.mubr.f32.mxu0 0.0
        %4428 = vmatmul.mubr.f32.gmra.mrb[0].mxu0 %v4261
        %v4429 = vpop.f32.mrb[0].mxu0
        %v4430 = vadd.f32 %v4181, %v4429
        %v4431 = vpop.f32.mrb[0].mxu0
        %4432 = vmatprep.mubr.f32.mxu0 0.0
        %4433 = vmatmul.mubr.f32.gmra.mrb[0].mxu0 %v4264
        %v4434 = vpop.f32.mrb[0].mxu0
        %v4435 = vadd.f32 %v4186, %v4434
        %v4436 = vpop.f32.mrb[0].mxu0
        %4437 = vmatprep.mubr.f32.mxu0 0.0
        %4438 = vmatmul.mubr.f32.gmra.mrb[0].mxu0 %v4267
        %v4439 = vpop.f32.mrb[0].mxu0
        %v4440 = vadd.f32 %v4191, %v4439
        %v4441 = vpop.f32.mrb[0].mxu0
        %4442 = vmatprep.mubr.f32.mxu0 0.0
        %4443 = vmatmul.mubr.f32.gmra.mrb[0].mxu0 %v4270
        %v4444 = vpop.f32.mrb[0].mxu0
        %v4445 = vadd.f32 %v4196, %v4444
        %v4446 = vpop.f32.mrb[0].mxu0
        %4447 = vmatprep.mubr.f32.mxu0 0.0
        %4448 = vmatmul.mubr.f32.gmra.mrb[0].mxu0 %v4273
        %v4449 = vpop.f32.mrb[0].mxu0
        %v4450 = vadd.f32 %v4201, %v4449
        %v4451 = vpop.f32.mrb[0].mxu0
        %4452 = vmatprep.mubr.f32.mxu0 0.0
        %4453 = vmatmul.mubr.f32.gmra.mrb[0].mxu0 %v4276
        %v4454 = vpop.f32.mrb[0].mxu0
        %v4455 = vadd.f32 %v4206, %v4454
        %v4456 = vpop.f32.mrb[0].mxu0
        %4457 = vdwg.mxu0
        %v4458 = vld [vmem:[#allocation2 + $0xc2] sm:$0xff]
        %v4459 = vld [vmem:[#allocation2 + $0xca] sm:$0xff]
        %v4460 = vld [vmem:[#allocation2 + $0xd2] sm:$0xff]
        %v4461 = vld [vmem:[#allocation2 + $0xda] sm:$0xff]
        %v4462 = vld [vmem:[#allocation2 + $0xe2] sm:$0xff]
        %v4463 = vld [vmem:[#allocation2 + $0xea] sm:$0xff]
        %v4464 = vld [vmem:[#allocation2 + $0xf2] sm:$0xff]
        %v4465 = vld [vmem:[#allocation2 + $0xfa] sm:$0xff]
        %v4466 = vld [vmem:[#allocation2 + $0x102] sm:$0xff]
        %v4467 = vld [vmem:[#allocation2 + $0x10a] sm:$0xff]
        %v4468 = vld [vmem:[#allocation2 + $0x112] sm:$0xff]
        %v4469 = vld [vmem:[#allocation2 + $0x11a] sm:$0xff]
        %v4470 = vld [vmem:[#allocation2 + $0x122] sm:$0xff]
        %v4471 = vld [vmem:[#allocation2 + $0x12a] sm:$0xff]
        %v4472 = vld [vmem:[#allocation2 + $0x132] sm:$0xff]
        %v4473 = vld [vmem:[#allocation2 + $0x13a] sm:$0xff]
        %v4474 = vld [vmem:[#allocation2 + $0x142] sm:$0xff]
        %v4475 = vld [vmem:[#allocation2 + $0x14a] sm:$0xff]
        %v4476 = vld [vmem:[#allocation2 + $0x152] sm:$0xff]
        %v4477 = vld [vmem:[#allocation2 + $0x15a] sm:$0xff]
        %v4478 = vld [vmem:[#allocation2 + $0x162] sm:$0xff]
        %v4479 = vld [vmem:[#allocation2 + $0x16a] sm:$0xff]
        %v4480 = vld [vmem:[#allocation2 + $0x172] sm:$0x7f]
        %v4481 = vld [vmem:[%s2824] sm:$0xff]
        %v4482 = vld [vmem:[%s2824 + $0x8] sm:$0xff]
        %v4483 = vld [vmem:[%s2824 + $0x10] sm:$0xff]
        %v4484 = vld [vmem:[%s2824 + $0x18] sm:$0xff]
        %v4486 = vsel %vm390, %v4458, 0
        %v4489 = vsel %vm390, %v4459, 0
        %v4492 = vsel %vm390, %v4460, 0
        %v4495 = vsel %vm390, %v4461, 0
        %v4498 = vsel %vm390, %v4462, 0
        %v4501 = vsel %vm390, %v4463, 0
        %v4504 = vsel %vm390, %v4464, 0
        %v4507 = vsel %vm390, %v4465, 0
        %v4510 = vsel %vm390, %v4466, 0
        %v4513 = vsel %vm390, %v4467, 0
        %v4516 = vsel %vm390, %v4468, 0
        %v4519 = vsel %vm390, %v4469, 0
        %v4522 = vsel %vm390, %v4470, 0
        %v4525 = vsel %vm390, %v4471, 0
        %v4528 = vsel %vm390, %v4472, 0
        %v4531 = vsel %vm390, %v4473, 0
        %v4534 = vsel %vm390, %v4474, 0
        %v4537 = vsel %vm390, %v4475, 0
        %v4540 = vsel %vm390, %v4476, 0
        %v4543 = vsel %vm390, %v4477, 0
        %v4546 = vsel %vm390, %v4478, 0
        %v4549 = vsel %vm390, %v4479, 0
        %v4552 = vsel %vm390, %v4480, 0
        %4554 = vmatprep.subr.mxu0 0.0
        %4555 = vmatpush1.msra.mxu0 %v4481
        %4556 = vmatprep.subr.mxu0 0.0
        %4557 = vmatpush1.msra.mxu0 %v4482
        %4558 = vmatprep.subr.mxu0 0.0
        %4559 = vmatpush1.msra.mxu0 %v4483
        %4560 = vmatprep.subr.mxu0 0.0
        %4561 = vmatpush1.msra.mxu0 %v4484
        %4562 = vmatprep.subr.mxu0 0.0
        %4563 = vmatpush1.msra.mxu0 0.0
        %4564 = vmatprep.subr.mxu0 0.0
        %4565 = vmatpush1.msra.mxu0 0.0
        %4566 = vmatprep.subr.mxu0 0.0
        %4567 = vmatpush1.msra.mxu0 0.0
        %4568 = vmatprep.subr.mxu0 0.0
        %4569 = vmatpush1.msra.mxu0 0.0
        %4570 = vmatprep.subr.mxu0 0.0
        %4571 = vmatpush1.msra.mxu0 0.0
        %4572 = vmatprep.subr.mxu0 0.0
        %4573 = vmatpush1.msra.mxu0 0.0
        %4574 = vmatprep.subr.mxu0 0.0
        %4575 = vmatpush1.msra.mxu0 0.0
        %4576 = vmatprep.subr.mxu0 0.0
        %4577 = vmatpush1.msra.mxu0 0.0
        %4578 = vmatprep.subr.mxu0 0.0
        %4579 = vmatpush1.msra.mxu0 0.0
        %4580 = vmatprep.subr.mxu0 0.0
        %4581 = vmatpush1.msra.mxu0 0.0
        %4582 = vmatprep.subr.mxu0 0.0
        %4583 = vmatpush1.msra.mxu0 0.0
        %4584 = vmatprep.subr.mxu0 0.0
        %4585 = vmatpush1.msra.mxu0 0.0
        %4586 = vmatprep.subr.mxu0 0.0
        %4587 = vmatpush1.msra.mxu0 0.0
        %4588 = vmatprep.subr.mxu0 0.0
        %4589 = vmatpush1.msra.mxu0 0.0
        %4590 = vmatprep.subr.mxu0 0.0
        %4591 = vmatpush1.msra.mxu0 0.0
        %4592 = vmatprep.subr.mxu0 0.0
        %4593 = vmatpush1.msra.mxu0 0.0
        %4594 = vmatprep.subr.mxu0 0.0
        %4595 = vmatpush1.msra.mxu0 0.0
        %4596 = vmatprep.subr.mxu0 0.0
        %4597 = vmatpush1.msra.mxu0 0.0
        %4598 = vmatprep.subr.mxu0 0.0
        %4599 = vmatpush1.msra.mxu0 0.0
        %4600 = vmatprep.subr.mxu0 0.0
        %4601 = vmatpush1.msra.mxu0 0.0
        %4602 = vmatprep.subr.mxu0 0.0
        %4603 = vmatpush1.msra.mxu0 0.0
        %4604 = vmatprep.subr.mxu0 0.0
        %4605 = vmatpush1.msra.mxu0 0.0
        %4606 = vmatprep.subr.mxu0 0.0
        %4607 = vmatpush1.msra.mxu0 0.0
        %4608 = vmatprep.subr.mxu0 0.0
        %4609 = vmatpush1.msra.mxu0 0.0
        %4610 = vmatprep.subr.mxu0 0.0
        %4611 = vmatpush1.msra.mxu0 0.0
        %4612 = vmatprep.subr.mxu0 0.0
        %4613 = vmatpush1.msra.mxu0 0.0
        %4614 = vmatprep.subr.mxu0 0.0
        %4615 = vmatpush1.msra.mxu0 0.0
        %4616 = vmatprep.subr.mxu0 0.0
        %4617 = vmatpush1.msra.mxu0 0.0
        %4618 = vmatprep.mubr.f32.mxu0 0.0
        %4619 = vmatmul.mubr.f32.gmra.mrb[0].mxu0 %v4486
        %v4620 = vpop.f32.mrb[0].mxu0
        %v4621 = vadd.f32 0.0, %v4620
        %v4622 = vpop.f32.mrb[0].mxu0
        %4623 = vmatprep.mubr.f32.mxu0 0.0
        %4624 = vmatmul.mubr.f32.gmra.mrb[0].mxu0 %v4489
        %v4625 = vpop.f32.mrb[0].mxu0
        %v4626 = vadd.f32 0.0, %v4625
        %v4627 = vpop.f32.mrb[0].mxu0
        %4628 = vmatprep.mubr.f32.mxu0 0.0
        %4629 = vmatmul.mubr.f32.gmra.mrb[0].mxu0 %v4492
        %v4630 = vpop.f32.mrb[0].mxu0
        %v4631 = vadd.f32 0.0, %v4630
        %v4632 = vpop.f32.mrb[0].mxu0
        %4633 = vmatprep.mubr.f32.mxu0 0.0
        %4634 = vmatmul.mubr.f32.gmra.mrb[0].mxu0 %v4495
        %v4635 = vpop.f32.mrb[0].mxu0
        %v4636 = vadd.f32 0.0, %v4635
        %v4637 = vpop.f32.mrb[0].mxu0
        %4638 = vmatprep.mubr.f32.mxu0 0.0
        %4639 = vmatmul.mubr.f32.gmra.mrb[0].mxu0 %v4498
        %v4640 = vpop.f32.mrb[0].mxu0
        %v4641 = vadd.f32 0.0, %v4640
        %v4642 = vpop.f32.mrb[0].mxu0
        %4643 = vmatprep.mubr.f32.mxu0 0.0
        %4644 = vmatmul.mubr.f32.gmra.mrb[0].mxu0 %v4501
        %v4645 = vpop.f32.mrb[0].mxu0
        %v4646 = vadd.f32 0.0, %v4645
        %v4647 = vpop.f32.mrb[0].mxu0
        %4648 = vmatprep.mubr.f32.mxu0 0.0
        %4649 = vmatmul.mubr.f32.gmra.mrb[0].mxu0 %v4504
        %v4650 = vpop.f32.mrb[0].mxu0
        %v4651 = vadd.f32 0.0, %v4650
        %v4652 = vpop.f32.mrb[0].mxu0
        %4653 = vmatprep.mubr.f32.mxu0 0.0
        %4654 = vmatmul.mubr.f32.gmra.mrb[0].mxu0 %v4507
        %v4655 = vpop.f32.mrb[0].mxu0
        %v4656 = vadd.f32 0.0, %v4655
        %v4657 = vpop.f32.mrb[0].mxu0
        %4658 = vmatprep.mubr.f32.mxu0 0.0
        %4659 = vmatmul.mubr.f32.gmra.mrb[0].mxu0 %v4510
        %v4660 = vpop.f32.mrb[0].mxu0
        %v4661 = vadd.f32 0.0, %v4660
        %v4662 = vpop.f32.mrb[0].mxu0
        %4663 = vmatprep.mubr.f32.mxu0 0.0
        %4664 = vmatmul.mubr.f32.gmra.mrb[0].mxu0 %v4513
        %v4665 = vpop.f32.mrb[0].mxu0
        %v4666 = vadd.f32 0.0, %v4665
        %v4667 = vpop.f32.mrb[0].mxu0
        %4668 = vmatprep.mubr.f32.mxu0 0.0
        %4669 = vmatmul.mubr.f32.gmra.mrb[0].mxu0 %v4516
        %v4670 = vpop.f32.mrb[0].mxu0
        %v4671 = vadd.f32 0.0, %v4670
        %v4672 = vpop.f32.mrb[0].mxu0
        %4673 = vmatprep.mubr.f32.mxu0 0.0
        %4674 = vmatmul.mubr.f32.gmra.mrb[0].mxu0 %v4519
        %v4675 = vpop.f32.mrb[0].mxu0
        %v4676 = vadd.f32 0.0, %v4675
        %v4677 = vpop.f32.mrb[0].mxu0
        %4678 = vmatprep.mubr.f32.mxu0 0.0
        %4679 = vmatmul.mubr.f32.gmra.mrb[0].mxu0 %v4522
        %v4680 = vpop.f32.mrb[0].mxu0
        %v4681 = vadd.f32 0.0, %v4680
        %v4682 = vpop.f32.mrb[0].mxu0
        %4683 = vmatprep.mubr.f32.mxu0 0.0
        %4684 = vmatmul.mubr.f32.gmra.mrb[0].mxu0 %v4525
        %v4685 = vpop.f32.mrb[0].mxu0
        %v4686 = vadd.f32 0.0, %v4685
        %v4687 = vpop.f32.mrb[0].mxu0
        %4688 = vmatprep.mubr.f32.mxu0 0.0
        %4689 = vmatmul.mubr.f32.gmra.mrb[0].mxu0 %v4528
        %v4690 = vpop.f32.mrb[0].mxu0
        %v4691 = vadd.f32 0.0, %v4690
        %v4692 = vpop.f32.mrb[0].mxu0
        %4693 = vmatprep.mubr.f32.mxu0 0.0
        %4694 = vmatmul.mubr.f32.gmra.mrb[0].mxu0 %v4531
        %v4695 = vpop.f32.mrb[0].mxu0
        %v4696 = vadd.f32 0.0, %v4695
        %v4697 = vpop.f32.mrb[0].mxu0
        %4698 = vmatprep.mubr.f32.mxu0 0.0
        %4699 = vmatmul.mubr.f32.gmra.mrb[0].mxu0 %v4534
        %v4700 = vpop.f32.mrb[0].mxu0
        %v4701 = vadd.f32 0.0, %v4700
        %v4702 = vpop.f32.mrb[0].mxu0
        %4703 = vmatprep.mubr.f32.mxu0 0.0
        %4704 = vmatmul.mubr.f32.gmra.mrb[0].mxu0 %v4537
        %v4705 = vpop.f32.mrb[0].mxu0
        %v4706 = vadd.f32 0.0, %v4705
        %v4707 = vpop.f32.mrb[0].mxu0
        %4708 = vmatprep.mubr.f32.mxu0 0.0
        %4709 = vmatmul.mubr.f32.gmra.mrb[0].mxu0 %v4540
        %v4710 = vpop.f32.mrb[0].mxu0
        %v4711 = vadd.f32 0.0, %v4710
        %v4712 = vpop.f32.mrb[0].mxu0
        %4713 = vmatprep.mubr.f32.mxu0 0.0
        %4714 = vmatmul.mubr.f32.gmra.mrb[0].mxu0 %v4543
        %v4715 = vpop.f32.mrb[0].mxu0
        %v4716 = vadd.f32 0.0, %v4715
        %v4717 = vpop.f32.mrb[0].mxu0
        %4718 = vmatprep.mubr.f32.mxu0 0.0
        %4719 = vmatmul.mubr.f32.gmra.mrb[0].mxu0 %v4546
        %v4720 = vpop.f32.mrb[0].mxu0
        %v4721 = vadd.f32 0.0, %v4720
        %v4722 = vpop.f32.mrb[0].mxu0
        %4723 = vmatprep.mubr.f32.mxu0 0.0
        %4724 = vmatmul.mubr.f32.gmra.mrb[0].mxu0 %v4549
        %v4725 = vpop.f32.mrb[0].mxu0
        %v4726 = vadd.f32 0.0, %v4725
        %v4727 = vpop.f32.mrb[0].mxu0
        %4728 = vmatprep.mubr.f32.mxu0 0.0
        %4729 = vmatmul.mubr.f32.gmra.mrb[0].mxu0 %v4552
        %v4730 = vpop.f32.mrb[0].mxu0
        %v4731 = vadd.f32 0.0, %v4730
        %v4732 = vpop.f32.mrb[0].mxu0
        %4733 = vdwg.mxu0
        %v4734 = vadd.f32 %v4345, %v4621
        %v4735 = vadd.f32 %v4350, %v4626
        %v4736 = vadd.f32 %v4355, %v4631
        %v4737 = vadd.f32 %v4360, %v4636
        %v4738 = vadd.f32 %v4365, %v4641
        %v4739 = vadd.f32 %v4370, %v4646
        %v4740 = vadd.f32 %v4375, %v4651
        %v4741 = vadd.f32 %v4380, %v4656
        %v4742 = vadd.f32 %v4385, %v4661
        %v4743 = vadd.f32 %v4390, %v4666
        %v4744 = vadd.f32 %v4395, %v4671
        %v4745 = vadd.f32 %v4400, %v4676
        %v4746 = vadd.f32 %v4405, %v4681
        %v4747 = vadd.f32 %v4410, %v4686
        %v4748 = vadd.f32 %v4415, %v4691
        %v4749 = vadd.f32 %v4420, %v4696
        %v4750 = vadd.f32 %v4425, %v4701
        %v4751 = vadd.f32 %v4430, %v4706
        %v4752 = vadd.f32 %v4435, %v4711
        %v4753 = vadd.f32 %v4440, %v4716
        %v4754 = vadd.f32 %v4445, %v4721
        %v4755 = vadd.f32 %v4450, %v4726
        %v4756 = vadd.f32 %v4455, %v4731
        %v4757 = vld [vmem:[#allocation2 + $0xc3] sm:$0xff]
        %v4758 = vld [vmem:[#allocation2 + $0xcb] sm:$0xff]
        %v4759 = vld [vmem:[#allocation2 + $0xd3] sm:$0xff]
        %v4760 = vld [vmem:[#allocation2 + $0xdb] sm:$0xff]
        %v4761 = vld [vmem:[#allocation2 + $0xe3] sm:$0xff]
        %v4762 = vld [vmem:[#allocation2 + $0xeb] sm:$0xff]
        %v4763 = vld [vmem:[#allocation2 + $0xf3] sm:$0xff]
        %v4764 = vld [vmem:[#allocation2 + $0xfb] sm:$0xff]
        %v4765 = vld [vmem:[#allocation2 + $0x103] sm:$0xff]
        %v4766 = vld [vmem:[#allocation2 + $0x10b] sm:$0xff]
        %v4767 = vld [vmem:[#allocation2 + $0x113] sm:$0xff]
        %v4768 = vld [vmem:[#allocation2 + $0x11b] sm:$0xff]
        %v4769 = vld [vmem:[#allocation2 + $0x123] sm:$0xff]
        %v4770 = vld [vmem:[#allocation2 + $0x12b] sm:$0xff]
        %v4771 = vld [vmem:[#allocation2 + $0x133] sm:$0xff]
        %v4772 = vld [vmem:[#allocation2 + $0x13b] sm:$0xff]
        %v4773 = vld [vmem:[#allocation2 + $0x143] sm:$0xff]
        %v4774 = vld [vmem:[#allocation2 + $0x14b] sm:$0xff]
        %v4775 = vld [vmem:[#allocation2 + $0x153] sm:$0xff]
        %v4776 = vld [vmem:[#allocation2 + $0x15b] sm:$0xff]
        %v4777 = vld [vmem:[#allocation2 + $0x163] sm:$0xff]
        %v4778 = vld [vmem:[#allocation2 + $0x16b] sm:$0xff]
        %v4779 = vld [vmem:[#allocation2 + $0x173] sm:$0x7f]
        %v4780 = vld [vmem:[%s3134] sm:$0xff]
        %v4781 = vld [vmem:[%s3134 + $0x8] sm:$0xff]
        %v4782 = vld [vmem:[%s3134 + $0x10] sm:$0xff]
        %v4783 = vld [vmem:[%s3134 + $0x18] sm:$0xff]
        %v4785 = vsel %vm390, %v4757, 0
        %v4788 = vsel %vm390, %v4758, 0
        %v4791 = vsel %vm390, %v4759, 0
        %v4794 = vsel %vm390, %v4760, 0
        %v4797 = vsel %vm390, %v4761, 0
        %v4800 = vsel %vm390, %v4762, 0
        %v4803 = vsel %vm390, %v4763, 0
        %v4806 = vsel %vm390, %v4764, 0
        %v4809 = vsel %vm390, %v4765, 0
        %v4812 = vsel %vm390, %v4766, 0
        %v4815 = vsel %vm390, %v4767, 0
        %v4818 = vsel %vm390, %v4768, 0
        %v4821 = vsel %vm390, %v4769, 0
        %v4824 = vsel %vm390, %v4770, 0
        %v4827 = vsel %vm390, %v4771, 0
        %v4830 = vsel %vm390, %v4772, 0
        %v4833 = vsel %vm390, %v4773, 0
        %v4836 = vsel %vm390, %v4774, 0
        %v4839 = vsel %vm390, %v4775, 0
        %v4842 = vsel %vm390, %v4776, 0
        %v4845 = vsel %vm390, %v4777, 0
        %v4848 = vsel %vm390, %v4778, 0
        %v4851 = vsel %vm390, %v4779, 0
        %4853 = vmatprep.subr.mxu0 0.0
        %4854 = vmatpush1.msra.mxu0 %v4780
        %4855 = vmatprep.subr.mxu0 0.0
        %4856 = vmatpush1.msra.mxu0 %v4781
        %4857 = vmatprep.subr.mxu0 0.0
        %4858 = vmatpush1.msra.mxu0 %v4782
        %4859 = vmatprep.subr.mxu0 0.0
        %4860 = vmatpush1.msra.mxu0 %v4783
        %4861 = vmatprep.subr.mxu0 0.0
        %4862 = vmatpush1.msra.mxu0 0.0
        %4863 = vmatprep.subr.mxu0 0.0
        %4864 = vmatpush1.msra.mxu0 0.0
        %4865 = vmatprep.subr.mxu0 0.0
        %4866 = vmatpush1.msra.mxu0 0.0
        %4867 = vmatprep.subr.mxu0 0.0
        %4868 = vmatpush1.msra.mxu0 0.0
        %4869 = vmatprep.subr.mxu0 0.0
        %4870 = vmatpush1.msra.mxu0 0.0
        %4871 = vmatprep.subr.mxu0 0.0
        %4872 = vmatpush1.msra.mxu0 0.0
        %4873 = vmatprep.subr.mxu0 0.0
        %4874 = vmatpush1.msra.mxu0 0.0
        %4875 = vmatprep.subr.mxu0 0.0
        %4876 = vmatpush1.msra.mxu0 0.0
        %4877 = vmatprep.subr.mxu0 0.0
        %4878 = vmatpush1.msra.mxu0 0.0
        %4879 = vmatprep.subr.mxu0 0.0
        %4880 = vmatpush1.msra.mxu0 0.0
        %4881 = vmatprep.subr.mxu0 0.0
        %4882 = vmatpush1.msra.mxu0 0.0
        %4883 = vmatprep.subr.mxu0 0.0
        %4884 = vmatpush1.msra.mxu0 0.0
        %4885 = vmatprep.subr.mxu0 0.0
        %4886 = vmatpush1.msra.mxu0 0.0
        %4887 = vmatprep.subr.mxu0 0.0
        %4888 = vmatpush1.msra.mxu0 0.0
        %4889 = vmatprep.subr.mxu0 0.0
        %4890 = vmatpush1.msra.mxu0 0.0
        %4891 = vmatprep.subr.mxu0 0.0
        %4892 = vmatpush1.msra.mxu0 0.0
        %4893 = vmatprep.subr.mxu0 0.0
        %4894 = vmatpush1.msra.mxu0 0.0
        %4895 = vmatprep.subr.mxu0 0.0
        %4896 = vmatpush1.msra.mxu0 0.0
        %4897 = vmatprep.subr.mxu0 0.0
        %4898 = vmatpush1.msra.mxu0 0.0
        %4899 = vmatprep.subr.mxu0 0.0
        %4900 = vmatpush1.msra.mxu0 0.0
        %4901 = vmatprep.subr.mxu0 0.0
        %4902 = vmatpush1.msra.mxu0 0.0
        %4903 = vmatprep.subr.mxu0 0.0
        %4904 = vmatpush1.msra.mxu0 0.0
        %4905 = vmatprep.subr.mxu0 0.0
        %4906 = vmatpush1.msra.mxu0 0.0
        %4907 = vmatprep.subr.mxu0 0.0
        %4908 = vmatpush1.msra.mxu0 0.0
        %4909 = vmatprep.subr.mxu0 0.0
        %4910 = vmatpush1.msra.mxu0 0.0
        %4911 = vmatprep.subr.mxu0 0.0
        %4912 = vmatpush1.msra.mxu0 0.0
        %4913 = vmatprep.subr.mxu0 0.0
        %4914 = vmatpush1.msra.mxu0 0.0
        %4915 = vmatprep.subr.mxu0 0.0
        %4916 = vmatpush1.msra.mxu0 0.0
        %4917 = vmatprep.mubr.f32.mxu0 0.0
        %4918 = vmatmul.mubr.f32.gmra.mrb[0].mxu0 %v4785
        %v4919 = vpop.f32.mrb[0].mxu0
        %v4920 = vadd.f32 0.0, %v4919
        %v4921 = vpop.f32.mrb[0].mxu0
        %4922 = vmatprep.mubr.f32.mxu0 0.0
        %4923 = vmatmul.mubr.f32.gmra.mrb[0].mxu0 %v4788
        %v4924 = vpop.f32.mrb[0].mxu0
        %v4925 = vadd.f32 0.0, %v4924
        %v4926 = vpop.f32.mrb[0].mxu0
        %4927 = vmatprep.mubr.f32.mxu0 0.0
        %4928 = vmatmul.mubr.f32.gmra.mrb[0].mxu0 %v4791
        %v4929 = vpop.f32.mrb[0].mxu0
        %v4930 = vadd.f32 0.0, %v4929
        %v4931 = vpop.f32.mrb[0].mxu0
        %4932 = vmatprep.mubr.f32.mxu0 0.0
        %4933 = vmatmul.mubr.f32.gmra.mrb[0].mxu0 %v4794
        %v4934 = vpop.f32.mrb[0].mxu0
        %v4935 = vadd.f32 0.0, %v4934
        %v4936 = vpop.f32.mrb[0].mxu0
        %4937 = vmatprep.mubr.f32.mxu0 0.0
        %4938 = vmatmul.mubr.f32.gmra.mrb[0].mxu0 %v4797
        %v4939 = vpop.f32.mrb[0].mxu0
        %v4940 = vadd.f32 0.0, %v4939
        %v4941 = vpop.f32.mrb[0].mxu0
        %4942 = vmatprep.mubr.f32.mxu0 0.0
        %4943 = vmatmul.mubr.f32.gmra.mrb[0].mxu0 %v4800
        %v4944 = vpop.f32.mrb[0].mxu0
        %v4945 = vadd.f32 0.0, %v4944
        %v4946 = vpop.f32.mrb[0].mxu0
        %4947 = vmatprep.mubr.f32.mxu0 0.0
        %4948 = vmatmul.mubr.f32.gmra.mrb[0].mxu0 %v4803
        %v4949 = vpop.f32.mrb[0].mxu0
        %v4950 = vadd.f32 0.0, %v4949
        %v4951 = vpop.f32.mrb[0].mxu0
        %4952 = vmatprep.mubr.f32.mxu0 0.0
        %4953 = vmatmul.mubr.f32.gmra.mrb[0].mxu0 %v4806
        %v4954 = vpop.f32.mrb[0].mxu0
        %v4955 = vadd.f32 0.0, %v4954
        %v4956 = vpop.f32.mrb[0].mxu0
        %4957 = vmatprep.mubr.f32.mxu0 0.0
        %4958 = vmatmul.mubr.f32.gmra.mrb[0].mxu0 %v4809
        %v4959 = vpop.f32.mrb[0].mxu0
        %v4960 = vadd.f32 0.0, %v4959
        %v4961 = vpop.f32.mrb[0].mxu0
        %4962 = vmatprep.mubr.f32.mxu0 0.0
        %4963 = vmatmul.mubr.f32.gmra.mrb[0].mxu0 %v4812
        %v4964 = vpop.f32.mrb[0].mxu0
        %v4965 = vadd.f32 0.0, %v4964
        %v4966 = vpop.f32.mrb[0].mxu0
        %4967 = vmatprep.mubr.f32.mxu0 0.0
        %4968 = vmatmul.mubr.f32.gmra.mrb[0].mxu0 %v4815
        %v4969 = vpop.f32.mrb[0].mxu0
        %v4970 = vadd.f32 0.0, %v4969
        %v4971 = vpop.f32.mrb[0].mxu0
        %4972 = vmatprep.mubr.f32.mxu0 0.0
        %4973 = vmatmul.mubr.f32.gmra.mrb[0].mxu0 %v4818
        %v4974 = vpop.f32.mrb[0].mxu0
        %v4975 = vadd.f32 0.0, %v4974
        %v4976 = vpop.f32.mrb[0].mxu0
        %4977 = vmatprep.mubr.f32.mxu0 0.0
        %4978 = vmatmul.mubr.f32.gmra.mrb[0].mxu0 %v4821
        %v4979 = vpop.f32.mrb[0].mxu0
        %v4980 = vadd.f32 0.0, %v4979
        %v4981 = vpop.f32.mrb[0].mxu0
        %4982 = vmatprep.mubr.f32.mxu0 0.0
        %4983 = vmatmul.mubr.f32.gmra.mrb[0].mxu0 %v4824
        %v4984 = vpop.f32.mrb[0].mxu0
        %v4985 = vadd.f32 0.0, %v4984
        %v4986 = vpop.f32.mrb[0].mxu0
        %4987 = vmatprep.mubr.f32.mxu0 0.0
        %4988 = vmatmul.mubr.f32.gmra.mrb[0].mxu0 %v4827
        %v4989 = vpop.f32.mrb[0].mxu0
        %v4990 = vadd.f32 0.0, %v4989
        %v4991 = vpop.f32.mrb[0].mxu0
        %4992 = vmatprep.mubr.f32.mxu0 0.0
        %4993 = vmatmul.mubr.f32.gmra.mrb[0].mxu0 %v4830
        %v4994 = vpop.f32.mrb[0].mxu0
        %v4995 = vadd.f32 0.0, %v4994
        %v4996 = vpop.f32.mrb[0].mxu0
        %4997 = vmatprep.mubr.f32.mxu0 0.0
        %4998 = vmatmul.mubr.f32.gmra.mrb[0].mxu0 %v4833
        %v4999 = vpop.f32.mrb[0].mxu0
        %v5000 = vadd.f32 0.0, %v4999
        %v5001 = vpop.f32.mrb[0].mxu0
        %5002 = vmatprep.mubr.f32.mxu0 0.0
        %5003 = vmatmul.mubr.f32.gmra.mrb[0].mxu0 %v4836
        %v5004 = vpop.f32.mrb[0].mxu0
        %v5005 = vadd.f32 0.0, %v5004
        %v5006 = vpop.f32.mrb[0].mxu0
        %5007 = vmatprep.mubr.f32.mxu0 0.0
        %5008 = vmatmul.mubr.f32.gmra.mrb[0].mxu0 %v4839
        %v5009 = vpop.f32.mrb[0].mxu0
        %v5010 = vadd.f32 0.0, %v5009
        %v5011 = vpop.f32.mrb[0].mxu0
        %5012 = vmatprep.mubr.f32.mxu0 0.0
        %5013 = vmatmul.mubr.f32.gmra.mrb[0].mxu0 %v4842
        %v5014 = vpop.f32.mrb[0].mxu0
        %v5015 = vadd.f32 0.0, %v5014
        %v5016 = vpop.f32.mrb[0].mxu0
        %5017 = vmatprep.mubr.f32.mxu0 0.0
        %5018 = vmatmul.mubr.f32.gmra.mrb[0].mxu0 %v4845
        %v5019 = vpop.f32.mrb[0].mxu0
        %v5020 = vadd.f32 0.0, %v5019
        %v5021 = vpop.f32.mrb[0].mxu0
        %5022 = vmatprep.mubr.f32.mxu0 0.0
        %5023 = vmatmul.mubr.f32.gmra.mrb[0].mxu0 %v4848
        %v5024 = vpop.f32.mrb[0].mxu0
        %v5025 = vadd.f32 0.0, %v5024
        %v5026 = vpop.f32.mrb[0].mxu0
        %5027 = vmatprep.mubr.f32.mxu0 0.0
        %5028 = vmatmul.mubr.f32.gmra.mrb[0].mxu0 %v4851
        %v5029 = vpop.f32.mrb[0].mxu0
        %v5030 = vadd.f32 0.0, %v5029
        %v5031 = vpop.f32.mrb[0].mxu0
        %5032 = vdwg.mxu0
        %v5033 = vadd.f32 %v4734, %v4920
        %v5034 = vadd.f32 %v4735, %v4925
        %v5035 = vadd.f32 %v4736, %v4930
        %v5036 = vadd.f32 %v4737, %v4935
        %v5037 = vadd.f32 %v4738, %v4940
        %v5038 = vadd.f32 %v4739, %v4945
        %v5039 = vadd.f32 %v4740, %v4950
        %v5040 = vadd.f32 %v4741, %v4955
        %v5041 = vadd.f32 %v4742, %v4960
        %v5042 = vadd.f32 %v4743, %v4965
        %v5043 = vadd.f32 %v4744, %v4970
        %v5044 = vadd.f32 %v4745, %v4975
        %v5045 = vadd.f32 %v4746, %v4980
        %v5046 = vadd.f32 %v4747, %v4985
        %v5047 = vadd.f32 %v4748, %v4990
        %v5048 = vadd.f32 %v4749, %v4995
        %v5049 = vadd.f32 %v4750, %v5000
        %v5050 = vadd.f32 %v4751, %v5005
        %v5051 = vadd.f32 %v4752, %v5010
        %v5052 = vadd.f32 %v4753, %v5015
        %v5053 = vadd.f32 %v4754, %v5020
        %v5054 = vadd.f32 %v4755, %v5025
        %v5055 = vadd.f32 %v4756, %v5030
        %v5056 = vld [vmem:[#allocation2 + $0xc4] sm:$0xff]
        %v5057 = vld [vmem:[#allocation2 + $0xcc] sm:$0xff]
        %v5058 = vld [vmem:[#allocation2 + $0xd4] sm:$0xff]
        %v5059 = vld [vmem:[#allocation2 + $0xdc] sm:$0xff]
        %v5060 = vld [vmem:[#allocation2 + $0xe4] sm:$0xff]
        %v5061 = vld [vmem:[#allocation2 + $0xec] sm:$0xff]
        %v5062 = vld [vmem:[#allocation2 + $0xf4] sm:$0xff]
        %v5063 = vld [vmem:[#allocation2 + $0xfc] sm:$0xff]
        %v5064 = vld [vmem:[#allocation2 + $0x104] sm:$0xff]
        %v5065 = vld [vmem:[#allocation2 + $0x10c] sm:$0xff]
        %v5066 = vld [vmem:[#allocation2 + $0x114] sm:$0xff]
        %v5067 = vld [vmem:[#allocation2 + $0x11c] sm:$0xff]
        %v5068 = vld [vmem:[#allocation2 + $0x124] sm:$0xff]
        %v5069 = vld [vmem:[#allocation2 + $0x12c] sm:$0xff]
        %v5070 = vld [vmem:[#allocation2 + $0x134] sm:$0xff]
        %v5071 = vld [vmem:[#allocation2 + $0x13c] sm:$0xff]
        %v5072 = vld [vmem:[#allocation2 + $0x144] sm:$0xff]
        %v5073 = vld [vmem:[#allocation2 + $0x14c] sm:$0xff]
        %v5074 = vld [vmem:[#allocation2 + $0x154] sm:$0xff]
        %v5075 = vld [vmem:[#allocation2 + $0x15c] sm:$0xff]
        %v5076 = vld [vmem:[#allocation2 + $0x164] sm:$0xff]
        %v5077 = vld [vmem:[#allocation2 + $0x16c] sm:$0xff]
        %v5078 = vld [vmem:[#allocation2 + $0x174] sm:$0x7f]
        %v5079 = vld [vmem:[%s3444] sm:$0xff]
        %v5080 = vld [vmem:[%s3444 + $0x8] sm:$0xff]
        %v5081 = vld [vmem:[%s3444 + $0x10] sm:$0xff]
        %v5082 = vld [vmem:[%s3444 + $0x18] sm:$0xff]
        %v5084 = vsel %vm390, %v5056, 0
        %v5087 = vsel %vm390, %v5057, 0
        %v5090 = vsel %vm390, %v5058, 0
        %v5093 = vsel %vm390, %v5059, 0
        %v5096 = vsel %vm390, %v5060, 0
        %v5099 = vsel %vm390, %v5061, 0
        %v5102 = vsel %vm390, %v5062, 0
        %v5105 = vsel %vm390, %v5063, 0
        %v5108 = vsel %vm390, %v5064, 0
        %v5111 = vsel %vm390, %v5065, 0
        %v5114 = vsel %vm390, %v5066, 0
        %v5117 = vsel %vm390, %v5067, 0
        %v5120 = vsel %vm390, %v5068, 0
        %v5123 = vsel %vm390, %v5069, 0
        %v5126 = vsel %vm390, %v5070, 0
        %v5129 = vsel %vm390, %v5071, 0
        %v5132 = vsel %vm390, %v5072, 0
        %v5135 = vsel %vm390, %v5073, 0
        %v5138 = vsel %vm390, %v5074, 0
        %v5141 = vsel %vm390, %v5075, 0
        %v5144 = vsel %vm390, %v5076, 0
        %v5147 = vsel %vm390, %v5077, 0
        %v5150 = vsel %vm390, %v5078, 0
        %5152 = vmatprep.subr.mxu0 0.0
        %5153 = vmatpush1.msra.mxu0 %v5079
        %5154 = vmatprep.subr.mxu0 0.0
        %5155 = vmatpush1.msra.mxu0 %v5080
        %5156 = vmatprep.subr.mxu0 0.0
        %5157 = vmatpush1.msra.mxu0 %v5081
        %5158 = vmatprep.subr.mxu0 0.0
        %5159 = vmatpush1.msra.mxu0 %v5082
        %5160 = vmatprep.subr.mxu0 0.0
        %5161 = vmatpush1.msra.mxu0 0.0
        %5162 = vmatprep.subr.mxu0 0.0
        %5163 = vmatpush1.msra.mxu0 0.0
        %5164 = vmatprep.subr.mxu0 0.0
        %5165 = vmatpush1.msra.mxu0 0.0
        %5166 = vmatprep.subr.mxu0 0.0
        %5167 = vmatpush1.msra.mxu0 0.0
        %5168 = vmatprep.subr.mxu0 0.0
        %5169 = vmatpush1.msra.mxu0 0.0
        %5170 = vmatprep.subr.mxu0 0.0
        %5171 = vmatpush1.msra.mxu0 0.0
        %5172 = vmatprep.subr.mxu0 0.0
        %5173 = vmatpush1.msra.mxu0 0.0
        %5174 = vmatprep.subr.mxu0 0.0
        %5175 = vmatpush1.msra.mxu0 0.0
        %5176 = vmatprep.subr.mxu0 0.0
        %5177 = vmatpush1.msra.mxu0 0.0
        %5178 = vmatprep.subr.mxu0 0.0
        %5179 = vmatpush1.msra.mxu0 0.0
        %5180 = vmatprep.subr.mxu0 0.0
        %5181 = vmatpush1.msra.mxu0 0.0
        %5182 = vmatprep.subr.mxu0 0.0
        %5183 = vmatpush1.msra.mxu0 0.0
        %5184 = vmatprep.subr.mxu0 0.0
        %5185 = vmatpush1.msra.mxu0 0.0
        %5186 = vmatprep.subr.mxu0 0.0
        %5187 = vmatpush1.msra.mxu0 0.0
        %5188 = vmatprep.subr.mxu0 0.0
        %5189 = vmatpush1.msra.mxu0 0.0
        %5190 = vmatprep.subr.mxu0 0.0
        %5191 = vmatpush1.msra.mxu0 0.0
        %5192 = vmatprep.subr.mxu0 0.0
        %5193 = vmatpush1.msra.mxu0 0.0
        %5194 = vmatprep.subr.mxu0 0.0
        %5195 = vmatpush1.msra.mxu0 0.0
        %5196 = vmatprep.subr.mxu0 0.0
        %5197 = vmatpush1.msra.mxu0 0.0
        %5198 = vmatprep.subr.mxu0 0.0
        %5199 = vmatpush1.msra.mxu0 0.0
        %5200 = vmatprep.subr.mxu0 0.0
        %5201 = vmatpush1.msra.mxu0 0.0
        %5202 = vmatprep.subr.mxu0 0.0
        %5203 = vmatpush1.msra.mxu0 0.0
        %5204 = vmatprep.subr.mxu0 0.0
        %5205 = vmatpush1.msra.mxu0 0.0
        %5206 = vmatprep.subr.mxu0 0.0
        %5207 = vmatpush1.msra.mxu0 0.0
        %5208 = vmatprep.subr.mxu0 0.0
        %5209 = vmatpush1.msra.mxu0 0.0
        %5210 = vmatprep.subr.mxu0 0.0
        %5211 = vmatpush1.msra.mxu0 0.0
        %5212 = vmatprep.subr.mxu0 0.0
        %5213 = vmatpush1.msra.mxu0 0.0
        %5214 = vmatprep.subr.mxu0 0.0
        %5215 = vmatpush1.msra.mxu0 0.0
        %5216 = vmatprep.mubr.f32.mxu0 0.0
        %5217 = vmatmul.mubr.f32.gmra.mrb[0].mxu0 %v5084
        %v5218 = vpop.f32.mrb[0].mxu0
        %v5219 = vadd.f32 0.0, %v5218
        %v5220 = vpop.f32.mrb[0].mxu0
        %5221 = vmatprep.mubr.f32.mxu0 0.0
        %5222 = vmatmul.mubr.f32.gmra.mrb[0].mxu0 %v5087
        %v5223 = vpop.f32.mrb[0].mxu0
        %v5224 = vadd.f32 0.0, %v5223
        %v5225 = vpop.f32.mrb[0].mxu0
        %5226 = vmatprep.mubr.f32.mxu0 0.0
        %5227 = vmatmul.mubr.f32.gmra.mrb[0].mxu0 %v5090
        %v5228 = vpop.f32.mrb[0].mxu0
        %v5229 = vadd.f32 0.0, %v5228
        %v5230 = vpop.f32.mrb[0].mxu0
        %5231 = vmatprep.mubr.f32.mxu0 0.0
        %5232 = vmatmul.mubr.f32.gmra.mrb[0].mxu0 %v5093
        %v5233 = vpop.f32.mrb[0].mxu0
        %v5234 = vadd.f32 0.0, %v5233
        %v5235 = vpop.f32.mrb[0].mxu0
        %5236 = vmatprep.mubr.f32.mxu0 0.0
        %5237 = vmatmul.mubr.f32.gmra.mrb[0].mxu0 %v5096
        %v5238 = vpop.f32.mrb[0].mxu0
        %v5239 = vadd.f32 0.0, %v5238
        %v5240 = vpop.f32.mrb[0].mxu0
        %5241 = vmatprep.mubr.f32.mxu0 0.0
        %5242 = vmatmul.mubr.f32.gmra.mrb[0].mxu0 %v5099
        %v5243 = vpop.f32.mrb[0].mxu0
        %v5244 = vadd.f32 0.0, %v5243
        %v5245 = vpop.f32.mrb[0].mxu0
        %5246 = vmatprep.mubr.f32.mxu0 0.0
        %5247 = vmatmul.mubr.f32.gmra.mrb[0].mxu0 %v5102
        %v5248 = vpop.f32.mrb[0].mxu0
        %v5249 = vadd.f32 0.0, %v5248
        %v5250 = vpop.f32.mrb[0].mxu0
        %5251 = vmatprep.mubr.f32.mxu0 0.0
        %5252 = vmatmul.mubr.f32.gmra.mrb[0].mxu0 %v5105
        %v5253 = vpop.f32.mrb[0].mxu0
        %v5254 = vadd.f32 0.0, %v5253
        %v5255 = vpop.f32.mrb[0].mxu0
        %5256 = vmatprep.mubr.f32.mxu0 0.0
        %5257 = vmatmul.mubr.f32.gmra.mrb[0].mxu0 %v5108
        %v5258 = vpop.f32.mrb[0].mxu0
        %v5259 = vadd.f32 0.0, %v5258
        %v5260 = vpop.f32.mrb[0].mxu0
        %5261 = vmatprep.mubr.f32.mxu0 0.0
        %5262 = vmatmul.mubr.f32.gmra.mrb[0].mxu0 %v5111
        %v5263 = vpop.f32.mrb[0].mxu0
        %v5264 = vadd.f32 0.0, %v5263
        %v5265 = vpop.f32.mrb[0].mxu0
        %5266 = vmatprep.mubr.f32.mxu0 0.0
        %5267 = vmatmul.mubr.f32.gmra.mrb[0].mxu0 %v5114
        %v5268 = vpop.f32.mrb[0].mxu0
        %v5269 = vadd.f32 0.0, %v5268
        %v5270 = vpop.f32.mrb[0].mxu0
        %5271 = vmatprep.mubr.f32.mxu0 0.0
        %5272 = vmatmul.mubr.f32.gmra.mrb[0].mxu0 %v5117
        %v5273 = vpop.f32.mrb[0].mxu0
        %v5274 = vadd.f32 0.0, %v5273
        %v5275 = vpop.f32.mrb[0].mxu0
        %5276 = vmatprep.mubr.f32.mxu0 0.0
        %5277 = vmatmul.mubr.f32.gmra.mrb[0].mxu0 %v5120
        %v5278 = vpop.f32.mrb[0].mxu0
        %v5279 = vadd.f32 0.0, %v5278
        %v5280 = vpop.f32.mrb[0].mxu0
        %5281 = vmatprep.mubr.f32.mxu0 0.0
        %5282 = vmatmul.mubr.f32.gmra.mrb[0].mxu0 %v5123
        %v5283 = vpop.f32.mrb[0].mxu0
        %v5284 = vadd.f32 0.0, %v5283
        %v5285 = vpop.f32.mrb[0].mxu0
        %5286 = vmatprep.mubr.f32.mxu0 0.0
        %5287 = vmatmul.mubr.f32.gmra.mrb[0].mxu0 %v5126
        %v5288 = vpop.f32.mrb[0].mxu0
        %v5289 = vadd.f32 0.0, %v5288
        %v5290 = vpop.f32.mrb[0].mxu0
        %5291 = vmatprep.mubr.f32.mxu0 0.0
        %5292 = vmatmul.mubr.f32.gmra.mrb[0].mxu0 %v5129
        %v5293 = vpop.f32.mrb[0].mxu0
        %v5294 = vadd.f32 0.0, %v5293
        %v5295 = vpop.f32.mrb[0].mxu0
        %5296 = vmatprep.mubr.f32.mxu0 0.0
        %5297 = vmatmul.mubr.f32.gmra.mrb[0].mxu0 %v5132
        %v5298 = vpop.f32.mrb[0].mxu0
        %v5299 = vadd.f32 0.0, %v5298
        %v5300 = vpop.f32.mrb[0].mxu0
        %5301 = vmatprep.mubr.f32.mxu0 0.0
        %5302 = vmatmul.mubr.f32.gmra.mrb[0].mxu0 %v5135
        %v5303 = vpop.f32.mrb[0].mxu0
        %v5304 = vadd.f32 0.0, %v5303
        %v5305 = vpop.f32.mrb[0].mxu0
        %5306 = vmatprep.mubr.f32.mxu0 0.0
        %5307 = vmatmul.mubr.f32.gmra.mrb[0].mxu0 %v5138
        %v5308 = vpop.f32.mrb[0].mxu0
        %v5309 = vadd.f32 0.0, %v5308
        %v5310 = vpop.f32.mrb[0].mxu0
        %5311 = vmatprep.mubr.f32.mxu0 0.0
        %5312 = vmatmul.mubr.f32.gmra.mrb[0].mxu0 %v5141
        %v5313 = vpop.f32.mrb[0].mxu0
        %v5314 = vadd.f32 0.0, %v5313
        %v5315 = vpop.f32.mrb[0].mxu0
        %5316 = vmatprep.mubr.f32.mxu0 0.0
        %5317 = vmatmul.mubr.f32.gmra.mrb[0].mxu0 %v5144
        %v5318 = vpop.f32.mrb[0].mxu0
        %v5319 = vadd.f32 0.0, %v5318
        %v5320 = vpop.f32.mrb[0].mxu0
        %5321 = vmatprep.mubr.f32.mxu0 0.0
        %5322 = vmatmul.mubr.f32.gmra.mrb[0].mxu0 %v5147
        %v5323 = vpop.f32.mrb[0].mxu0
        %v5324 = vadd.f32 0.0, %v5323
        %v5325 = vpop.f32.mrb[0].mxu0
        %5326 = vmatprep.mubr.f32.mxu0 0.0
        %5327 = vmatmul.mubr.f32.gmra.mrb[0].mxu0 %v5150
        %v5328 = vpop.f32.mrb[0].mxu0
        %v5329 = vadd.f32 0.0, %v5328
        %v5330 = vpop.f32.mrb[0].mxu0
        %5331 = vdwg.mxu0
        %v5332 = vadd.f32 %v5033, %v5219
        %v5333 = vadd.f32 %v5034, %v5224
        %v5334 = vadd.f32 %v5035, %v5229
        %v5335 = vadd.f32 %v5036, %v5234
        %v5336 = vadd.f32 %v5037, %v5239
        %v5337 = vadd.f32 %v5038, %v5244
        %v5338 = vadd.f32 %v5039, %v5249
        %v5339 = vadd.f32 %v5040, %v5254
        %v5340 = vadd.f32 %v5041, %v5259
        %v5341 = vadd.f32 %v5042, %v5264
        %v5342 = vadd.f32 %v5043, %v5269
        %v5343 = vadd.f32 %v5044, %v5274
        %v5344 = vadd.f32 %v5045, %v5279
        %v5345 = vadd.f32 %v5046, %v5284
        %v5346 = vadd.f32 %v5047, %v5289
        %v5347 = vadd.f32 %v5048, %v5294
        %v5348 = vadd.f32 %v5049, %v5299
        %v5349 = vadd.f32 %v5050, %v5304
        %v5350 = vadd.f32 %v5051, %v5309
        %v5351 = vadd.f32 %v5052, %v5314
        %v5352 = vadd.f32 %v5053, %v5319
        %v5353 = vadd.f32 %v5054, %v5324
        %v5354 = vadd.f32 %v5055, %v5329
        %v5355 = vld [vmem:[%s4] sm:$0x1]
        %v5357 = vlaneseq
        %v5358 = vshrl.u32 %v5357, 7
        %v5359 = vsub.s32 0, %v5358
        %v5360 = vrot.slane %v5355, %v5359
        %v5362 = vadd.f32 %v5332, %v5360
        %v5363 = vadd.f32 %v5333, %v5360
        %v5364 = vadd.f32 %v5334, %v5360
        %v5365 = vadd.f32 %v5335, %v5360
        %v5366 = vadd.f32 %v5336, %v5360
        %v5367 = vadd.f32 %v5337, %v5360
        %v5368 = vadd.f32 %v5338, %v5360
        %v5369 = vadd.f32 %v5339, %v5360
        %v5370 = vadd.f32 %v5340, %v5360
        %v5371 = vadd.f32 %v5341, %v5360
        %v5372 = vadd.f32 %v5342, %v5360
        %v5373 = vadd.f32 %v5343, %v5360
        %v5374 = vadd.f32 %v5344, %v5360
        %v5375 = vadd.f32 %v5345, %v5360
        %v5376 = vadd.f32 %v5346, %v5360
        %v5377 = vadd.f32 %v5347, %v5360
        %v5378 = vadd.f32 %v5348, %v5360
        %v5379 = vadd.f32 %v5349, %v5360
        %v5380 = vadd.f32 %v5350, %v5360
        %v5381 = vadd.f32 %v5351, %v5360
        %v5382 = vadd.f32 %v5352, %v5360
        %v5383 = vadd.f32 %v5353, %v5360
        %v5384 = vadd.f32 %v5354, %v5360
        %vm5385 = vcmp.gt.f32.partialorder %v5362, 0.0
        %vm5386 = vcmp.gt.f32.partialorder %v5363, 0.0
        %vm5387 = vcmp.gt.f32.partialorder %v5364, 0.0
        %vm5388 = vcmp.gt.f32.partialorder %v5365, 0.0
        %vm5389 = vcmp.gt.f32.partialorder %v5366, 0.0
        %vm5390 = vcmp.gt.f32.partialorder %v5367, 0.0
        %vm5391 = vcmp.gt.f32.partialorder %v5368, 0.0
        %vm5392 = vcmp.gt.f32.partialorder %v5369, 0.0
        %vm5393 = vcmp.gt.f32.partialorder %v5370, 0.0
        %vm5394 = vcmp.gt.f32.partialorder %v5371, 0.0
        %vm5395 = vcmp.gt.f32.partialorder %v5372, 0.0
        %vm5396 = vcmp.gt.f32.partialorder %v5373, 0.0
        %vm5397 = vcmp.gt.f32.partialorder %v5374, 0.0
        %vm5398 = vcmp.gt.f32.partialorder %v5375, 0.0
        %vm5399 = vcmp.gt.f32.partialorder %v5376, 0.0
        %vm5400 = vcmp.gt.f32.partialorder %v5377, 0.0
        %vm5401 = vcmp.gt.f32.partialorder %v5378, 0.0
        %vm5402 = vcmp.gt.f32.partialorder %v5379, 0.0
        %vm5403 = vcmp.gt.f32.partialorder %v5380, 0.0
        %vm5404 = vcmp.gt.f32.partialorder %v5381, 0.0
        %vm5405 = vcmp.gt.f32.partialorder %v5382, 0.0
        %vm5406 = vcmp.gt.f32.partialorder %v5383, 0.0
        %vm5407 = vcmp.gt.f32.partialorder %v5384, 0.0
        %v5408 = vmul.f32 %v5362, 1.442695
        %v5409 = vpow.pop %v5408
        %v5410 = vmul.f32 %v5363, 1.442695
        %v5411 = vpow.pop %v5410
        %v5412 = vmul.f32 %v5364, 1.442695
        %v5413 = vpow.pop %v5412
        %v5414 = vmul.f32 %v5365, 1.442695
        %v5415 = vpow.pop %v5414
        %v5416 = vmul.f32 %v5366, 1.442695
        %v5417 = vpow.pop %v5416
        %v5418 = vmul.f32 %v5367, 1.442695
        %v5419 = vpow.pop %v5418
        %v5420 = vmul.f32 %v5368, 1.442695
        %v5421 = vpow.pop %v5420
        %v5422 = vmul.f32 %v5369, 1.442695
        %v5423 = vpow.pop %v5422
        %v5424 = vmul.f32 %v5370, 1.442695
        %v5425 = vpow.pop %v5424
        %v5426 = vmul.f32 %v5371, 1.442695
        %v5427 = vpow.pop %v5426
        %v5428 = vmul.f32 %v5372, 1.442695
        %v5429 = vpow.pop %v5428
        %v5430 = vmul.f32 %v5373, 1.442695
        %v5431 = vpow.pop %v5430
        %v5432 = vmul.f32 %v5374, 1.442695
        %v5433 = vpow.pop %v5432
        %v5434 = vmul.f32 %v5375, 1.442695
        %v5435 = vpow.pop %v5434
        %v5436 = vmul.f32 %v5376, 1.442695
        %v5437 = vpow.pop %v5436
        %v5438 = vmul.f32 %v5377, 1.442695
        %v5439 = vpow.pop %v5438
        %v5440 = vmul.f32 %v5378, 1.442695
        %v5441 = vpow.pop %v5440
        %v5442 = vmul.f32 %v5379, 1.442695
        %v5443 = vpow.pop %v5442
        %v5444 = vmul.f32 %v5380, 1.442695
        %v5445 = vpow.pop %v5444
        %v5446 = vmul.f32 %v5381, 1.442695
        %v5447 = vpow.pop %v5446
        %v5448 = vmul.f32 %v5382, 1.442695
        %v5449 = vpow.pop %v5448
        %v5450 = vmul.f32 %v5383, 1.442695
        %v5451 = vpow.pop %v5450
        %v5452 = vmul.f32 %v5384, 1.442695
        %v5453 = vpow.pop %v5452
        %v5454 = vsub.f32 %v5409, 1.0
        %v5455 = vsub.f32 %v5411, 1.0
        %v5456 = vsub.f32 %v5413, 1.0
        %v5457 = vsub.f32 %v5415, 1.0
        %v5458 = vsub.f32 %v5417, 1.0
        %v5459 = vsub.f32 %v5419, 1.0
        %v5460 = vsub.f32 %v5421, 1.0
        %v5461 = vsub.f32 %v5423, 1.0
        %v5462 = vsub.f32 %v5425, 1.0
        %v5463 = vsub.f32 %v5427, 1.0
        %v5464 = vsub.f32 %v5429, 1.0
        %v5465 = vsub.f32 %v5431, 1.0
        %v5466 = vsub.f32 %v5433, 1.0
        %v5467 = vsub.f32 %v5435, 1.0
        %v5468 = vsub.f32 %v5437, 1.0
        %v5469 = vsub.f32 %v5439, 1.0
        %v5470 = vsub.f32 %v5441, 1.0
        %v5471 = vsub.f32 %v5443, 1.0
        %v5472 = vsub.f32 %v5445, 1.0
        %v5473 = vsub.f32 %v5447, 1.0
        %v5474 = vsub.f32 %v5449, 1.0
        %v5475 = vsub.f32 %v5451, 1.0
        %v5476 = vsub.f32 %v5453, 1.0
        %v5477 = vsel %vm5385, %v5362, %v5454
        %v5478 = vsel %vm5386, %v5363, %v5455
        %v5479 = vsel %vm5387, %v5364, %v5456
        %v5480 = vsel %vm5388, %v5365, %v5457
        %v5481 = vsel %vm5389, %v5366, %v5458
        %v5482 = vsel %vm5390, %v5367, %v5459
        %v5483 = vsel %vm5391, %v5368, %v5460
        %v5484 = vsel %vm5392, %v5369, %v5461
        %v5485 = vsel %vm5393, %v5370, %v5462
        %v5486 = vsel %vm5394, %v5371, %v5463
        %v5487 = vsel %vm5395, %v5372, %v5464
        %v5488 = vsel %vm5396, %v5373, %v5465
        %v5489 = vsel %vm5397, %v5374, %v5466
        %v5490 = vsel %vm5398, %v5375, %v5467
        %v5491 = vsel %vm5399, %v5376, %v5468
        %v5492 = vsel %vm5400, %v5377, %v5469
        %v5493 = vsel %vm5401, %v5378, %v5470
        %v5494 = vsel %vm5402, %v5379, %v5471
        %v5495 = vsel %vm5403, %v5380, %v5472
        %v5496 = vsel %vm5404, %v5381, %v5473
        %v5497 = vsel %vm5405, %v5382, %v5474
        %v5498 = vsel %vm5406, %v5383, %v5475
        %v5499 = vsel %vm5407, %v5384, %v5476
        %5500 = vst.msk [vmem:[#allocation5 + $0xc0] sm:$0xff] %vm3881, %v5477
        %5501 = vst.msk [vmem:[#allocation5 + $0xc8] sm:$0xff] %vm3881, %v5478
        %5502 = vst.msk [vmem:[#allocation5 + $0xd0] sm:$0xff] %vm3881, %v5479
        %5503 = vst.msk [vmem:[#allocation5 + $0xd8] sm:$0xff] %vm3881, %v5480
        %5504 = vst.msk [vmem:[#allocation5 + $0xe0] sm:$0xff] %vm3881, %v5481
        %5505 = vst.msk [vmem:[#allocation5 + $0xe8] sm:$0xff] %vm3881, %v5482
        %5506 = vst.msk [vmem:[#allocation5 + $0xf0] sm:$0xff] %vm3881, %v5483
        %5507 = vst.msk [vmem:[#allocation5 + $0xf8] sm:$0xff] %vm3881, %v5484
        %5508 = vst.msk [vmem:[#allocation5 + $0x100] sm:$0xff] %vm3881, %v5485
        %5509 = vst.msk [vmem:[#allocation5 + $0x108] sm:$0xff] %vm3881, %v5486
        %5510 = vst.msk [vmem:[#allocation5 + $0x110] sm:$0xff] %vm3881, %v5487
        %5511 = vst.msk [vmem:[#allocation5 + $0x118] sm:$0xff] %vm3881, %v5488
        %5512 = vst.msk [vmem:[#allocation5 + $0x120] sm:$0xff] %vm3881, %v5489
        %5513 = vst.msk [vmem:[#allocation5 + $0x128] sm:$0xff] %vm3881, %v5490
        %5514 = vst.msk [vmem:[#allocation5 + $0x130] sm:$0xff] %vm3881, %v5491
        %5515 = vst.msk [vmem:[#allocation5 + $0x138] sm:$0xff] %vm3881, %v5492
        %5516 = vst.msk [vmem:[#allocation5 + $0x140] sm:$0xff] %vm3881, %v5493
        %5517 = vst.msk [vmem:[#allocation5 + $0x148] sm:$0xff] %vm3881, %v5494
        %5518 = vst.msk [vmem:[#allocation5 + $0x150] sm:$0xff] %vm3881, %v5495
        %5519 = vst.msk [vmem:[#allocation5 + $0x158] sm:$0xff] %vm3881, %v5496
        %5520 = vst.msk [vmem:[#allocation5 + $0x160] sm:$0xff] %vm3881, %v5497
        %5521 = vst.msk [vmem:[#allocation5 + $0x168] sm:$0xff] %vm3881, %v5498
        %vm5522 = vcmask 407552
        %5523 = vst.msk [vmem:[#allocation5 + $0x170] sm:$0x7f] %vm5522, %v5499
        %v5524 = vld [vmem:[#allocation5] ss:$2 sm:$0xff]
        %s5525 = scalar_lea.vmem [#allocation5], 16
        %v5526 = vld [vmem:[%s5525] ss:$2 sm:$0xff]
        %s5527 = scalar_lea.vmem [#allocation5], 32
        %v5528 = vld [vmem:[%s5527] ss:$2 sm:$0xff]
        %s5529 = scalar_lea.vmem [#allocation5], 48
        %v5530 = vld [vmem:[%s5529] ss:$2 sm:$0xff]
        %s5531 = scalar_lea.vmem [#allocation5], 64
        %v5532 = vld [vmem:[%s5531] ss:$2 sm:$0xff]
        %s5533 = scalar_lea.vmem [#allocation5], 80
        %v5534 = vld [vmem:[%s5533] ss:$2 sm:$0xff]
        %s5535 = scalar_lea.vmem [#allocation5], 96
        %v5536 = vld [vmem:[%s5535] ss:$2 sm:$0xff]
        %s5537 = scalar_lea.vmem [#allocation5], 112
        %v5538 = vld [vmem:[%s5537] ss:$2 sm:$0xff]
        %s5539 = scalar_lea.vmem [#allocation5], 128
        %v5540 = vld [vmem:[%s5539] ss:$2 sm:$0xff]
        %s5541 = scalar_lea.vmem [#allocation5], 144
        %v5542 = vld [vmem:[%s5541] ss:$2 sm:$0xff]
        %s5543 = scalar_lea.vmem [#allocation5], 160
        %v5544 = vld [vmem:[%s5543] ss:$2 sm:$0xff]
        %s5545 = scalar_lea.vmem [#allocation5], 176
        %v5546 = vld [vmem:[%s5545] ss:$2 sm:$0xff]
        %s5547 = scalar_lea.vmem [#allocation5], 192
        %v5548 = vld [vmem:[%s5547] ss:$2 sm:$0xff]
        %s5549 = scalar_lea.vmem [#allocation5], 208
        %v5550 = vld [vmem:[%s5549] ss:$2 sm:$0xff]
        %s5551 = scalar_lea.vmem [#allocation5], 224
        %v5552 = vld [vmem:[%s5551] ss:$2 sm:$0xff]
        %s5553 = scalar_lea.vmem [#allocation5], 240
        %v5554 = vld [vmem:[%s5553] ss:$2 sm:$0xff]
        %s5555 = scalar_lea.vmem [#allocation5], 256
        %v5556 = vld [vmem:[%s5555] ss:$2 sm:$0xff]
        %s5557 = scalar_lea.vmem [#allocation5], 272
        %v5558 = vld [vmem:[%s5557] ss:$2 sm:$0xff]
        %s5559 = scalar_lea.vmem [#allocation5], 288
        %v5560 = vld [vmem:[%s5559] ss:$2 sm:$0xff]
        %s5561 = scalar_lea.vmem [#allocation5], 304
        %v5562 = vld [vmem:[%s5561] ss:$2 sm:$0xff]
        %s5563 = scalar_lea.vmem [#allocation5], 320
        %v5564 = vld [vmem:[%s5563] ss:$2 sm:$0xff]
        %s5565 = scalar_lea.vmem [#allocation5], 336
        %v5566 = vld [vmem:[%s5565] ss:$2 sm:$0xff]
        %s5567 = scalar_lea.vmem [#allocation5], 352
        %v5568 = vld [vmem:[%s5567] ss:$2 sm:$0xff]
        %s5569 = scalar_lea.vmem [#allocation5], 368
        %v5570 = vld [vmem:[%s5569] ss:$2 sm:$0x7]
        %s5571 = scalar_lea.vmem [#allocation5], 1
        %v5572 = vld [vmem:[%s5571] ss:$2 sm:$0xff]
        %s5573 = scalar_lea.vmem [#allocation5], 17
        %v5574 = vld [vmem:[%s5573] ss:$2 sm:$0xff]
        %s5575 = scalar_lea.vmem [#allocation5], 33
        %v5576 = vld [vmem:[%s5575] ss:$2 sm:$0xff]
        %s5577 = scalar_lea.vmem [#allocation5], 49
        %v5578 = vld [vmem:[%s5577] ss:$2 sm:$0xff]
        %s5579 = scalar_lea.vmem [#allocation5], 65
        %v5580 = vld [vmem:[%s5579] ss:$2 sm:$0xff]
        %s5581 = scalar_lea.vmem [#allocation5], 81
        %v5582 = vld [vmem:[%s5581] ss:$2 sm:$0xff]
        %s5583 = scalar_lea.vmem [#allocation5], 97
        %v5584 = vld [vmem:[%s5583] ss:$2 sm:$0xff]
        %s5585 = scalar_lea.vmem [#allocation5], 113
        %v5586 = vld [vmem:[%s5585] ss:$2 sm:$0xff]
        %s5587 = scalar_lea.vmem [#allocation5], 129
        %v5588 = vld [vmem:[%s5587] ss:$2 sm:$0xff]
        %s5589 = scalar_lea.vmem [#allocation5], 145
        %v5590 = vld [vmem:[%s5589] ss:$2 sm:$0xff]
        %s5591 = scalar_lea.vmem [#allocation5], 161
        %v5592 = vld [vmem:[%s5591] ss:$2 sm:$0xff]
        %s5593 = scalar_lea.vmem [#allocation5], 177
        %v5594 = vld [vmem:[%s5593] ss:$2 sm:$0xff]
        %s5595 = scalar_lea.vmem [#allocation5], 193
        %v5596 = vld [vmem:[%s5595] ss:$2 sm:$0xff]
        %s5597 = scalar_lea.vmem [#allocation5], 209
        %v5598 = vld [vmem:[%s5597] ss:$2 sm:$0xff]
        %s5599 = scalar_lea.vmem [#allocation5], 225
        %v5600 = vld [vmem:[%s5599] ss:$2 sm:$0xff]
        %s5601 = scalar_lea.vmem [#allocation5], 241
        %v5602 = vld [vmem:[%s5601] ss:$2 sm:$0xff]
        %s5603 = scalar_lea.vmem [#allocation5], 257
        %v5604 = vld [vmem:[%s5603] ss:$2 sm:$0xff]
        %s5605 = scalar_lea.vmem [#allocation5], 273
        %v5606 = vld [vmem:[%s5605] ss:$2 sm:$0xff]
        %s5607 = scalar_lea.vmem [#allocation5], 289
        %v5608 = vld [vmem:[%s5607] ss:$2 sm:$0xff]
        %s5609 = scalar_lea.vmem [#allocation5], 305
        %v5610 = vld [vmem:[%s5609] ss:$2 sm:$0xff]
        %s5611 = scalar_lea.vmem [#allocation5], 321
        %v5612 = vld [vmem:[%s5611] ss:$2 sm:$0xff]
        %s5613 = scalar_lea.vmem [#allocation5], 337
        %v5614 = vld [vmem:[%s5613] ss:$2 sm:$0xff]
        %s5615 = scalar_lea.vmem [#allocation5], 353
        %v5616 = vld [vmem:[%s5615] ss:$2 sm:$0xff]
        %s5617 = scalar_lea.vmem [#allocation5], 369
        %v5618 = vld [vmem:[%s5617] ss:$2 sm:$0x7]
        %v5619 = vadd.f32 %v5524, %v5572
        %v5620 = vadd.f32 %v5526, %v5574
        %v5621 = vadd.f32 %v5528, %v5576
        %v5622 = vadd.f32 %v5530, %v5578
        %v5623 = vadd.f32 %v5532, %v5580
        %v5624 = vadd.f32 %v5534, %v5582
        %v5625 = vadd.f32 %v5536, %v5584
        %v5626 = vadd.f32 %v5538, %v5586
        %v5627 = vadd.f32 %v5540, %v5588
        %v5628 = vadd.f32 %v5542, %v5590
        %v5629 = vadd.f32 %v5544, %v5592
        %v5630 = vadd.f32 %v5546, %v5594
        %v5631 = vadd.f32 %v5548, %v5596
        %v5632 = vadd.f32 %v5550, %v5598
        %v5633 = vadd.f32 %v5552, %v5600
        %v5634 = vadd.f32 %v5554, %v5602
        %v5635 = vadd.f32 %v5556, %v5604
        %v5636 = vadd.f32 %v5558, %v5606
        %v5637 = vadd.f32 %v5560, %v5608
        %v5638 = vadd.f32 %v5562, %v5610
        %v5639 = vadd.f32 %v5564, %v5612
        %v5640 = vadd.f32 %v5566, %v5614
        %v5641 = vadd.f32 %v5568, %v5616
        %v5642 = vadd.f32 %v5570, %v5618
        %v5643 = vmul.f32 %v5619, 0.5
        %v5644 = vmul.f32 %v5620, 0.5
        %v5645 = vmul.f32 %v5621, 0.5
        %v5646 = vmul.f32 %v5622, 0.5
        %v5647 = vmul.f32 %v5623, 0.5
        %v5648 = vmul.f32 %v5624, 0.5
        %v5649 = vmul.f32 %v5625, 0.5
        %v5650 = vmul.f32 %v5626, 0.5
        %v5651 = vmul.f32 %v5627, 0.5
        %v5652 = vmul.f32 %v5628, 0.5
        %v5653 = vmul.f32 %v5629, 0.5
        %v5654 = vmul.f32 %v5630, 0.5
        %v5655 = vmul.f32 %v5631, 0.5
        %v5656 = vmul.f32 %v5632, 0.5
        %v5657 = vmul.f32 %v5633, 0.5
        %v5658 = vmul.f32 %v5634, 0.5
        %v5659 = vmul.f32 %v5635, 0.5
        %v5660 = vmul.f32 %v5636, 0.5
        %v5661 = vmul.f32 %v5637, 0.5
        %v5662 = vmul.f32 %v5638, 0.5
        %v5663 = vmul.f32 %v5639, 0.5
        %v5664 = vmul.f32 %v5640, 0.5
        %v5665 = vmul.f32 %v5641, 0.5
        %v5666 = vmul.f32 %v5642, 0.5
        %5667 = vst.msk [vmem:[#allocation3 + $0x2] sm:$0xff] %vm3881, %v5643
        %5668 = vst.msk [vmem:[#allocation3 + $0xa] sm:$0xff] %vm3881, %v5644
        %5669 = vst.msk [vmem:[#allocation3 + $0x12] sm:$0xff] %vm3881, %v5645
        %5670 = vst.msk [vmem:[#allocation3 + $0x1a] sm:$0xff] %vm3881, %v5646
        %5671 = vst.msk [vmem:[#allocation3 + $0x22] sm:$0xff] %vm3881, %v5647
        %5672 = vst.msk [vmem:[#allocation3 + $0x2a] sm:$0xff] %vm3881, %v5648
        %5673 = vst.msk [vmem:[#allocation3 + $0x32] sm:$0xff] %vm3881, %v5649
        %5674 = vst.msk [vmem:[#allocation3 + $0x3a] sm:$0xff] %vm3881, %v5650
        %5675 = vst.msk [vmem:[#allocation3 + $0x42] sm:$0xff] %vm3881, %v5651
        %5676 = vst.msk [vmem:[#allocation3 + $0x4a] sm:$0xff] %vm3881, %v5652
        %5677 = vst.msk [vmem:[#allocation3 + $0x52] sm:$0xff] %vm3881, %v5653
        %5678 = vst.msk [vmem:[#allocation3 + $0x5a] sm:$0xff] %vm3881, %v5654
        %5679 = vst.msk [vmem:[#allocation3 + $0x62] sm:$0xff] %vm3881, %v5655
        %5680 = vst.msk [vmem:[#allocation3 + $0x6a] sm:$0xff] %vm3881, %v5656
        %5681 = vst.msk [vmem:[#allocation3 + $0x72] sm:$0xff] %vm3881, %v5657
        %5682 = vst.msk [vmem:[#allocation3 + $0x7a] sm:$0xff] %vm3881, %v5658
        %5683 = vst.msk [vmem:[#allocation3 + $0x82] sm:$0xff] %vm3881, %v5659
        %5684 = vst.msk [vmem:[#allocation3 + $0x8a] sm:$0xff] %vm3881, %v5660
        %5685 = vst.msk [vmem:[#allocation3 + $0x92] sm:$0xff] %vm3881, %v5661
        %5686 = vst.msk [vmem:[#allocation3 + $0x9a] sm:$0xff] %vm3881, %v5662
        %5687 = vst.msk [vmem:[#allocation3 + $0xa2] sm:$0xff] %vm3881, %v5663
        %5688 = vst.msk [vmem:[#allocation3 + $0xaa] sm:$0xff] %vm3881, %v5664
        %5689 = vst.msk [vmem:[#allocation3 + $0xb2] sm:$0xff] %vm3881, %v5665
        %vm5690 = vcmask 403456
        %5691 = vst.msk [vmem:[#allocation3 + $0xba] sm:$0x7] %vm5690, %v5666
        %v5692 = vld [vmem:[#allocation3] sm:$0xff]
        %v5693 = vld [vmem:[#allocation3 + $0x8] sm:$0xff]
        %v5694 = vld [vmem:[#allocation3 + $0x10] sm:$0xff]
        %v5695 = vld [vmem:[#allocation3 + $0x18] sm:$0xff]
        %v5696 = vld [vmem:[#allocation3 + $0x20] sm:$0xff]
        %v5697 = vld [vmem:[#allocation3 + $0x28] sm:$0xff]
        %v5698 = vld [vmem:[#allocation3 + $0x30] sm:$0xff]
        %v5699 = vld [vmem:[#allocation3 + $0x38] sm:$0xff]
        %v5700 = vld [vmem:[#allocation3 + $0x40] sm:$0xff]
        %v5701 = vld [vmem:[#allocation3 + $0x48] sm:$0xff]
        %v5702 = vld [vmem:[#allocation3 + $0x50] sm:$0xff]
        %v5703 = vld [vmem:[#allocation3 + $0x58] sm:$0xff]
        %v5704 = vld [vmem:[#allocation3 + $0x60] sm:$0xff]
        %v5705 = vld [vmem:[#allocation3 + $0x68] sm:$0xff]
        %v5706 = vld [vmem:[#allocation3 + $0x70] sm:$0xff]
        %v5707 = vld [vmem:[#allocation3 + $0x78] sm:$0xff]
        %v5708 = vld [vmem:[#allocation3 + $0x80] sm:$0xff]
        %v5709 = vld [vmem:[#allocation3 + $0x88] sm:$0xff]
        %v5710 = vld [vmem:[#allocation3 + $0x90] sm:$0xff]
        %v5711 = vld [vmem:[#allocation3 + $0x98] sm:$0xff]
        %v5712 = vld [vmem:[#allocation3 + $0xa0] sm:$0xff]
        %v5713 = vld [vmem:[#allocation3 + $0xa8] sm:$0xff]
        %v5714 = vld [vmem:[#allocation3 + $0xb0] sm:$0xff]
        %v5715 = vld [vmem:[#allocation3 + $0xb8] sm:$0x7]
        %v5716 = vld [vmem:[%s5] sm:$0xff]
        %v5717 = vld [vmem:[%s5 + $0x8] sm:$0xff]
        %v5718 = vld [vmem:[%s5 + $0x10] sm:$0xff]
        %v5719 = vld [vmem:[%s5 + $0x18] sm:$0xff]
        %v5720 = vld [vmem:[%s5 + $0x20] sm:$0xff]
        %v5721 = vld [vmem:[%s5 + $0x28] sm:$0xff]
        %v5722 = vld [vmem:[%s5 + $0x30] sm:$0xff]
        %v5723 = vld [vmem:[#allocation3 + $0x1] sm:$0xff]
        %v5724 = vld [vmem:[#allocation3 + $0x9] sm:$0xff]
        %v5725 = vld [vmem:[#allocation3 + $0x11] sm:$0xff]
        %v5726 = vld [vmem:[#allocation3 + $0x19] sm:$0xff]
        %v5727 = vld [vmem:[#allocation3 + $0x21] sm:$0xff]
        %v5728 = vld [vmem:[#allocation3 + $0x29] sm:$0xff]
        %v5729 = vld [vmem:[#allocation3 + $0x31] sm:$0xff]
        %v5730 = vld [vmem:[#allocation3 + $0x39] sm:$0xff]
        %v5731 = vld [vmem:[#allocation3 + $0x41] sm:$0xff]
        %v5732 = vld [vmem:[#allocation3 + $0x49] sm:$0xff]
        %v5733 = vld [vmem:[#allocation3 + $0x51] sm:$0xff]
        %v5734 = vld [vmem:[#allocation3 + $0x59] sm:$0xff]
        %v5735 = vld [vmem:[#allocation3 + $0x61] sm:$0xff]
        %v5736 = vld [vmem:[#allocation3 + $0x69] sm:$0xff]
        %v5737 = vld [vmem:[#allocation3 + $0x71] sm:$0xff]
        %v5738 = vld [vmem:[#allocation3 + $0x79] sm:$0xff]
        %v5739 = vld [vmem:[#allocation3 + $0x81] sm:$0xff]
        %v5740 = vld [vmem:[#allocation3 + $0x89] sm:$0xff]
        %v5741 = vld [vmem:[#allocation3 + $0x91] sm:$0xff]
        %v5742 = vld [vmem:[#allocation3 + $0x99] sm:$0xff]
        %v5743 = vld [vmem:[#allocation3 + $0xa1] sm:$0xff]
        %v5744 = vld [vmem:[#allocation3 + $0xa9] sm:$0xff]
        %v5745 = vld [vmem:[#allocation3 + $0xb1] sm:$0xff]
        %v5746 = vld [vmem:[#allocation3 + $0xb9] sm:$0x7]
        %s5747 = scalar_lea.vmem %s5, 56
        %v5748 = vld [vmem:[%s5747] sm:$0xff]
        %v5749 = vld [vmem:[%s5747 + $0x8] sm:$0xff]
        %v5750 = vld [vmem:[%s5747 + $0x10] sm:$0xff]
        %v5751 = vld [vmem:[%s5747 + $0x18] sm:$0xff]
        %v5752 = vld [vmem:[%s5747 + $0x20] sm:$0xff]
        %v5753 = vld [vmem:[%s5747 + $0x28] sm:$0xff]
        %v5754 = vld [vmem:[%s5747 + $0x30] sm:$0xff]
        %v5756 = vsel %vm440, %v5723, 0
        %v5759 = vsel %vm440, %v5724, 0
        %v5762 = vsel %vm440, %v5725, 0
        %v5765 = vsel %vm440, %v5726, 0
        %v5768 = vsel %vm440, %v5727, 0
        %v5771 = vsel %vm440, %v5728, 0
        %v5774 = vsel %vm440, %v5729, 0
        %v5777 = vsel %vm440, %v5730, 0
        %v5780 = vsel %vm440, %v5731, 0
        %v5783 = vsel %vm440, %v5732, 0
        %v5786 = vsel %vm440, %v5733, 0
        %v5789 = vsel %vm440, %v5734, 0
        %v5792 = vsel %vm440, %v5735, 0
        %v5795 = vsel %vm440, %v5736, 0
        %v5798 = vsel %vm440, %v5737, 0
        %v5801 = vsel %vm440, %v5738, 0
        %v5804 = vsel %vm440, %v5739, 0
        %v5807 = vsel %vm440, %v5740, 0
        %v5810 = vsel %vm440, %v5741, 0
        %v5813 = vsel %vm440, %v5742, 0
        %v5816 = vsel %vm440, %v5743, 0
        %v5819 = vsel %vm440, %v5744, 0
        %v5822 = vsel %vm440, %v5745, 0
        %v5825 = vsel %vm440, %v5746, 0
        %5827 = vmatprep.subr.mxu0 0.0
        %5828 = vmatpush1.msra.mxu0 %v5748
        %5829 = vmatprep.subr.mxu0 0.0
        %5830 = vmatpush1.msra.mxu0 %v5749
        %5831 = vmatprep.subr.mxu0 0.0
        %5832 = vmatpush1.msra.mxu0 %v5750
        %5833 = vmatprep.subr.mxu0 0.0
        %5834 = vmatpush1.msra.mxu0 %v5751
        %5835 = vmatprep.subr.mxu0 0.0
        %5836 = vmatpush1.msra.mxu0 %v5752
        %5837 = vmatprep.subr.mxu0 0.0
        %5838 = vmatpush1.msra.mxu0 %v5753
        %5839 = vmatprep.subr.mxu0 0.0
        %5840 = vmatpush1.msra.mxu0 %v5754
        %5841 = vmatprep.subr.mxu0 0.0
        %5842 = vmatpush1.msra.mxu0 0.0
        %5843 = vmatprep.subr.mxu0 0.0
        %5844 = vmatpush1.msra.mxu0 0.0
        %5845 = vmatprep.subr.mxu0 0.0
        %5846 = vmatpush1.msra.mxu0 0.0
        %5847 = vmatprep.subr.mxu0 0.0
        %5848 = vmatpush1.msra.mxu0 0.0
        %5849 = vmatprep.subr.mxu0 0.0
        %5850 = vmatpush1.msra.mxu0 0.0
        %5851 = vmatprep.subr.mxu0 0.0
        %5852 = vmatpush1.msra.mxu0 0.0
        %5853 = vmatprep.subr.mxu0 0.0
        %5854 = vmatpush1.msra.mxu0 0.0
        %5855 = vmatprep.subr.mxu0 0.0
        %5856 = vmatpush1.msra.mxu0 0.0
        %5857 = vmatprep.subr.mxu0 0.0
        %5858 = vmatpush1.msra.mxu0 0.0
        %5859 = vmatprep.subr.mxu0 0.0
        %5860 = vmatpush1.msra.mxu0 0.0
        %5861 = vmatprep.subr.mxu0 0.0
        %5862 = vmatpush1.msra.mxu0 0.0
        %5863 = vmatprep.subr.mxu0 0.0
        %5864 = vmatpush1.msra.mxu0 0.0
        %5865 = vmatprep.subr.mxu0 0.0
        %5866 = vmatpush1.msra.mxu0 0.0
        %5867 = vmatprep.subr.mxu0 0.0
        %5868 = vmatpush1.msra.mxu0 0.0
        %5869 = vmatprep.subr.mxu0 0.0
        %5870 = vmatpush1.msra.mxu0 0.0
        %5871 = vmatprep.subr.mxu0 0.0
        %5872 = vmatpush1.msra.mxu0 0.0
        %5873 = vmatprep.subr.mxu0 0.0
        %5874 = vmatpush1.msra.mxu0 0.0
        %5875 = vmatprep.subr.mxu0 0.0
        %5876 = vmatpush1.msra.mxu0 0.0
        %5877 = vmatprep.subr.mxu0 0.0
        %5878 = vmatpush1.msra.mxu0 0.0
        %5879 = vmatprep.subr.mxu0 0.0
        %5880 = vmatpush1.msra.mxu0 0.0
        %5881 = vmatprep.subr.mxu0 0.0
        %5882 = vmatpush1.msra.mxu0 0.0
        %5883 = vmatprep.subr.mxu0 0.0
        %5884 = vmatpush1.msra.mxu0 0.0
        %5885 = vmatprep.subr.mxu0 0.0
        %5886 = vmatpush1.msra.mxu0 0.0
        %5887 = vmatprep.subr.mxu0 0.0
        %5888 = vmatpush1.msra.mxu0 0.0
        %5889 = vmatprep.subr.mxu0 0.0
        %5890 = vmatpush1.msra.mxu0 0.0
        %5891 = vmatprep.mubr.f32.mxu0 0.0
        %5892 = vmatmul.mubr.f32.gmra.mrb[0].mxu0 %v5756
        %v5893 = vpop.f32.mrb[0].mxu0
        %v5894 = vadd.f32 0.0, %v5893
        %v5895 = vpop.f32.mrb[0].mxu0
        %5896 = vmatprep.mubr.f32.mxu0 0.0
        %5897 = vmatmul.mubr.f32.gmra.mrb[0].mxu0 %v5759
        %v5898 = vpop.f32.mrb[0].mxu0
        %v5899 = vadd.f32 0.0, %v5898
        %v5900 = vpop.f32.mrb[0].mxu0
        %5901 = vmatprep.mubr.f32.mxu0 0.0
        %5902 = vmatmul.mubr.f32.gmra.mrb[0].mxu0 %v5762
        %v5903 = vpop.f32.mrb[0].mxu0
        %v5904 = vadd.f32 0.0, %v5903
        %v5905 = vpop.f32.mrb[0].mxu0
        %5906 = vmatprep.mubr.f32.mxu0 0.0
        %5907 = vmatmul.mubr.f32.gmra.mrb[0].mxu0 %v5765
        %v5908 = vpop.f32.mrb[0].mxu0
        %v5909 = vadd.f32 0.0, %v5908
        %v5910 = vpop.f32.mrb[0].mxu0
        %5911 = vmatprep.mubr.f32.mxu0 0.0
        %5912 = vmatmul.mubr.f32.gmra.mrb[0].mxu0 %v5768
        %v5913 = vpop.f32.mrb[0].mxu0
        %v5914 = vadd.f32 0.0, %v5913
        %v5915 = vpop.f32.mrb[0].mxu0
        %5916 = vmatprep.mubr.f32.mxu0 0.0
        %5917 = vmatmul.mubr.f32.gmra.mrb[0].mxu0 %v5771
        %v5918 = vpop.f32.mrb[0].mxu0
        %v5919 = vadd.f32 0.0, %v5918
        %v5920 = vpop.f32.mrb[0].mxu0
        %5921 = vmatprep.mubr.f32.mxu0 0.0
        %5922 = vmatmul.mubr.f32.gmra.mrb[0].mxu0 %v5774
        %v5923 = vpop.f32.mrb[0].mxu0
        %v5924 = vadd.f32 0.0, %v5923
        %v5925 = vpop.f32.mrb[0].mxu0
        %5926 = vmatprep.mubr.f32.mxu0 0.0
        %5927 = vmatmul.mubr.f32.gmra.mrb[0].mxu0 %v5777
        %v5928 = vpop.f32.mrb[0].mxu0
        %v5929 = vadd.f32 0.0, %v5928
        %v5930 = vpop.f32.mrb[0].mxu0
        %5931 = vmatprep.mubr.f32.mxu0 0.0
        %5932 = vmatmul.mubr.f32.gmra.mrb[0].mxu0 %v5780
        %v5933 = vpop.f32.mrb[0].mxu0
        %v5934 = vadd.f32 0.0, %v5933
        %v5935 = vpop.f32.mrb[0].mxu0
        %5936 = vmatprep.mubr.f32.mxu0 0.0
        %5937 = vmatmul.mubr.f32.gmra.mrb[0].mxu0 %v5783
        %v5938 = vpop.f32.mrb[0].mxu0
        %v5939 = vadd.f32 0.0, %v5938
        %v5940 = vpop.f32.mrb[0].mxu0
        %5941 = vmatprep.mubr.f32.mxu0 0.0
        %5942 = vmatmul.mubr.f32.gmra.mrb[0].mxu0 %v5786
        %v5943 = vpop.f32.mrb[0].mxu0
        %v5944 = vadd.f32 0.0, %v5943
        %v5945 = vpop.f32.mrb[0].mxu0
        %5946 = vmatprep.mubr.f32.mxu0 0.0
        %5947 = vmatmul.mubr.f32.gmra.mrb[0].mxu0 %v5789
        %v5948 = vpop.f32.mrb[0].mxu0
        %v5949 = vadd.f32 0.0, %v5948
        %v5950 = vpop.f32.mrb[0].mxu0
        %5951 = vmatprep.mubr.f32.mxu0 0.0
        %5952 = vmatmul.mubr.f32.gmra.mrb[0].mxu0 %v5792
        %v5953 = vpop.f32.mrb[0].mxu0
        %v5954 = vadd.f32 0.0, %v5953
        %v5955 = vpop.f32.mrb[0].mxu0
        %5956 = vmatprep.mubr.f32.mxu0 0.0
        %5957 = vmatmul.mubr.f32.gmra.mrb[0].mxu0 %v5795
        %v5958 = vpop.f32.mrb[0].mxu0
        %v5959 = vadd.f32 0.0, %v5958
        %v5960 = vpop.f32.mrb[0].mxu0
        %5961 = vmatprep.mubr.f32.mxu0 0.0
        %5962 = vmatmul.mubr.f32.gmra.mrb[0].mxu0 %v5798
        %v5963 = vpop.f32.mrb[0].mxu0
        %v5964 = vadd.f32 0.0, %v5963
        %v5965 = vpop.f32.mrb[0].mxu0
        %5966 = vmatprep.mubr.f32.mxu0 0.0
        %5967 = vmatmul.mubr.f32.gmra.mrb[0].mxu0 %v5801
        %v5968 = vpop.f32.mrb[0].mxu0
        %v5969 = vadd.f32 0.0, %v5968
        %v5970 = vpop.f32.mrb[0].mxu0
        %5971 = vmatprep.mubr.f32.mxu0 0.0
        %5972 = vmatmul.mubr.f32.gmra.mrb[0].mxu0 %v5804
        %v5973 = vpop.f32.mrb[0].mxu0
        %v5974 = vadd.f32 0.0, %v5973
        %v5975 = vpop.f32.mrb[0].mxu0
        %5976 = vmatprep.mubr.f32.mxu0 0.0
        %5977 = vmatmul.mubr.f32.gmra.mrb[0].mxu0 %v5807
        %v5978 = vpop.f32.mrb[0].mxu0
        %v5979 = vadd.f32 0.0, %v5978
        %v5980 = vpop.f32.mrb[0].mxu0
        %5981 = vmatprep.mubr.f32.mxu0 0.0
        %5982 = vmatmul.mubr.f32.gmra.mrb[0].mxu0 %v5810
        %v5983 = vpop.f32.mrb[0].mxu0
        %v5984 = vadd.f32 0.0, %v5983
        %v5985 = vpop.f32.mrb[0].mxu0
        %5986 = vmatprep.mubr.f32.mxu0 0.0
        %5987 = vmatmul.mubr.f32.gmra.mrb[0].mxu0 %v5813
        %v5988 = vpop.f32.mrb[0].mxu0
        %v5989 = vadd.f32 0.0, %v5988
        %v5990 = vpop.f32.mrb[0].mxu0
        %5991 = vmatprep.mubr.f32.mxu0 0.0
        %5992 = vmatmul.mubr.f32.gmra.mrb[0].mxu0 %v5816
        %v5993 = vpop.f32.mrb[0].mxu0
        %v5994 = vadd.f32 0.0, %v5993
        %v5995 = vpop.f32.mrb[0].mxu0
        %5996 = vmatprep.mubr.f32.mxu0 0.0
        %5997 = vmatmul.mubr.f32.gmra.mrb[0].mxu0 %v5819
        %v5998 = vpop.f32.mrb[0].mxu0
        %v5999 = vadd.f32 0.0, %v5998
        %v6000 = vpop.f32.mrb[0].mxu0
        %6001 = vmatprep.mubr.f32.mxu0 0.0
        %6002 = vmatmul.mubr.f32.gmra.mrb[0].mxu0 %v5822
        %v6003 = vpop.f32.mrb[0].mxu0
        %v6004 = vadd.f32 0.0, %v6003
        %v6005 = vpop.f32.mrb[0].mxu0
        %6006 = vmatprep.mubr.f32.mxu0 0.0
        %6007 = vmatmul.mubr.f32.gmra.mrb[0].mxu0 %v5825
        %v6008 = vpop.f32.mrb[0].mxu0
        %v6009 = vadd.f32 0.0, %v6008
        %v6010 = vpop.f32.mrb[0].mxu0
        %6011 = vdwg.mxu0
        %v6013 = vsel %vm440, %v5692, 0
        %v6016 = vsel %vm440, %v5693, 0
        %v6019 = vsel %vm440, %v5694, 0
        %v6022 = vsel %vm440, %v5695, 0
        %v6025 = vsel %vm440, %v5696, 0
        %v6028 = vsel %vm440, %v5697, 0
        %v6031 = vsel %vm440, %v5698, 0
        %v6034 = vsel %vm440, %v5699, 0
        %v6037 = vsel %vm440, %v5700, 0
        %v6040 = vsel %vm440, %v5701, 0
        %v6043 = vsel %vm440, %v5702, 0
        %v6046 = vsel %vm440, %v5703, 0
        %v6049 = vsel %vm440, %v5704, 0
        %v6052 = vsel %vm440, %v5705, 0
        %v6055 = vsel %vm440, %v5706, 0
        %v6058 = vsel %vm440, %v5707, 0
        %v6061 = vsel %vm440, %v5708, 0
        %v6064 = vsel %vm440, %v5709, 0
        %v6067 = vsel %vm440, %v5710, 0
        %v6070 = vsel %vm440, %v5711, 0
        %v6073 = vsel %vm440, %v5712, 0
        %v6076 = vsel %vm440, %v5713, 0
        %v6079 = vsel %vm440, %v5714, 0
        %v6082 = vsel %vm440, %v5715, 0
        %6084 = vmatprep.subr.mxu0 0.0
        %6085 = vmatpush1.msra.mxu0 %v5716
        %6086 = vmatprep.subr.mxu0 0.0
        %6087 = vmatpush1.msra.mxu0 %v5717
        %6088 = vmatprep.subr.mxu0 0.0
        %6089 = vmatpush1.msra.mxu0 %v5718
        %6090 = vmatprep.subr.mxu0 0.0
        %6091 = vmatpush1.msra.mxu0 %v5719
        %6092 = vmatprep.subr.mxu0 0.0
        %6093 = vmatpush1.msra.mxu0 %v5720
        %6094 = vmatprep.subr.mxu0 0.0
        %6095 = vmatpush1.msra.mxu0 %v5721
        %6096 = vmatprep.subr.mxu0 0.0
        %6097 = vmatpush1.msra.mxu0 %v5722
        %6098 = vmatprep.subr.mxu0 0.0
        %6099 = vmatpush1.msra.mxu0 0.0
        %6100 = vmatprep.subr.mxu0 0.0
        %6101 = vmatpush1.msra.mxu0 0.0
        %6102 = vmatprep.subr.mxu0 0.0
        %6103 = vmatpush1.msra.mxu0 0.0
        %6104 = vmatprep.subr.mxu0 0.0
        %6105 = vmatpush1.msra.mxu0 0.0
        %6106 = vmatprep.subr.mxu0 0.0
        %6107 = vmatpush1.msra.mxu0 0.0
        %6108 = vmatprep.subr.mxu0 0.0
        %6109 = vmatpush1.msra.mxu0 0.0
        %6110 = vmatprep.subr.mxu0 0.0
        %6111 = vmatpush1.msra.mxu0 0.0
        %6112 = vmatprep.subr.mxu0 0.0
        %6113 = vmatpush1.msra.mxu0 0.0
        %6114 = vmatprep.subr.mxu0 0.0
        %6115 = vmatpush1.msra.mxu0 0.0
        %6116 = vmatprep.subr.mxu0 0.0
        %6117 = vmatpush1.msra.mxu0 0.0
        %6118 = vmatprep.subr.mxu0 0.0
        %6119 = vmatpush1.msra.mxu0 0.0
        %6120 = vmatprep.subr.mxu0 0.0
        %6121 = vmatpush1.msra.mxu0 0.0
        %6122 = vmatprep.subr.mxu0 0.0
        %6123 = vmatpush1.msra.mxu0 0.0
        %6124 = vmatprep.subr.mxu0 0.0
        %6125 = vmatpush1.msra.mxu0 0.0
        %6126 = vmatprep.subr.mxu0 0.0
        %6127 = vmatpush1.msra.mxu0 0.0
        %6128 = vmatprep.subr.mxu0 0.0
        %6129 = vmatpush1.msra.mxu0 0.0
        %6130 = vmatprep.subr.mxu0 0.0
        %6131 = vmatpush1.msra.mxu0 0.0
        %6132 = vmatprep.subr.mxu0 0.0
        %6133 = vmatpush1.msra.mxu0 0.0
        %6134 = vmatprep.subr.mxu0 0.0
        %6135 = vmatpush1.msra.mxu0 0.0
        %6136 = vmatprep.subr.mxu0 0.0
        %6137 = vmatpush1.msra.mxu0 0.0
        %6138 = vmatprep.subr.mxu0 0.0
        %6139 = vmatpush1.msra.mxu0 0.0
        %6140 = vmatprep.subr.mxu0 0.0
        %6141 = vmatpush1.msra.mxu0 0.0
        %6142 = vmatprep.subr.mxu0 0.0
        %6143 = vmatpush1.msra.mxu0 0.0
        %6144 = vmatprep.subr.mxu0 0.0
        %6145 = vmatpush1.msra.mxu0 0.0
        %6146 = vmatprep.subr.mxu0 0.0
        %6147 = vmatpush1.msra.mxu0 0.0
        %6148 = vmatprep.mubr.f32.mxu0 0.0
        %6149 = vmatmul.mubr.f32.gmra.mrb[0].mxu0 %v6013
        %v6150 = vpop.f32.mrb[0].mxu0
        %v6151 = vadd.f32 %v5894, %v6150
        %v6152 = vpop.f32.mrb[0].mxu0
        %6153 = vmatprep.mubr.f32.mxu0 0.0
        %6154 = vmatmul.mubr.f32.gmra.mrb[0].mxu0 %v6016
        %v6155 = vpop.f32.mrb[0].mxu0
        %v6156 = vadd.f32 %v5899, %v6155
        %v6157 = vpop.f32.mrb[0].mxu0
        %6158 = vmatprep.mubr.f32.mxu0 0.0
        %6159 = vmatmul.mubr.f32.gmra.mrb[0].mxu0 %v6019
        %v6160 = vpop.f32.mrb[0].mxu0
        %v6161 = vadd.f32 %v5904, %v6160
        %v6162 = vpop.f32.mrb[0].mxu0
        %6163 = vmatprep.mubr.f32.mxu0 0.0
        %6164 = vmatmul.mubr.f32.gmra.mrb[0].mxu0 %v6022
        %v6165 = vpop.f32.mrb[0].mxu0
        %v6166 = vadd.f32 %v5909, %v6165
        %v6167 = vpop.f32.mrb[0].mxu0
        %6168 = vmatprep.mubr.f32.mxu0 0.0
        %6169 = vmatmul.mubr.f32.gmra.mrb[0].mxu0 %v6025
        %v6170 = vpop.f32.mrb[0].mxu0
        %v6171 = vadd.f32 %v5914, %v6170
        %v6172 = vpop.f32.mrb[0].mxu0
        %6173 = vmatprep.mubr.f32.mxu0 0.0
        %6174 = vmatmul.mubr.f32.gmra.mrb[0].mxu0 %v6028
        %v6175 = vpop.f32.mrb[0].mxu0
        %v6176 = vadd.f32 %v5919, %v6175
        %v6177 = vpop.f32.mrb[0].mxu0
        %6178 = vmatprep.mubr.f32.mxu0 0.0
        %6179 = vmatmul.mubr.f32.gmra.mrb[0].mxu0 %v6031
        %v6180 = vpop.f32.mrb[0].mxu0
        %v6181 = vadd.f32 %v5924, %v6180
        %v6182 = vpop.f32.mrb[0].mxu0
        %6183 = vmatprep.mubr.f32.mxu0 0.0
        %6184 = vmatmul.mubr.f32.gmra.mrb[0].mxu0 %v6034
        %v6185 = vpop.f32.mrb[0].mxu0
        %v6186 = vadd.f32 %v5929, %v6185
        %v6187 = vpop.f32.mrb[0].mxu0
        %6188 = vmatprep.mubr.f32.mxu0 0.0
        %6189 = vmatmul.mubr.f32.gmra.mrb[0].mxu0 %v6037
        %v6190 = vpop.f32.mrb[0].mxu0
        %v6191 = vadd.f32 %v5934, %v6190
        %v6192 = vpop.f32.mrb[0].mxu0
        %6193 = vmatprep.mubr.f32.mxu0 0.0
        %6194 = vmatmul.mubr.f32.gmra.mrb[0].mxu0 %v6040
        %v6195 = vpop.f32.mrb[0].mxu0
        %v6196 = vadd.f32 %v5939, %v6195
        %v6197 = vpop.f32.mrb[0].mxu0
        %6198 = vmatprep.mubr.f32.mxu0 0.0
        %6199 = vmatmul.mubr.f32.gmra.mrb[0].mxu0 %v6043
        %v6200 = vpop.f32.mrb[0].mxu0
        %v6201 = vadd.f32 %v5944, %v6200
        %v6202 = vpop.f32.mrb[0].mxu0
        %6203 = vmatprep.mubr.f32.mxu0 0.0
        %6204 = vmatmul.mubr.f32.gmra.mrb[0].mxu0 %v6046
        %v6205 = vpop.f32.mrb[0].mxu0
        %v6206 = vadd.f32 %v5949, %v6205
        %v6207 = vpop.f32.mrb[0].mxu0
        %6208 = vmatprep.mubr.f32.mxu0 0.0
        %6209 = vmatmul.mubr.f32.gmra.mrb[0].mxu0 %v6049
        %v6210 = vpop.f32.mrb[0].mxu0
        %v6211 = vadd.f32 %v5954, %v6210
        %v6212 = vpop.f32.mrb[0].mxu0
        %6213 = vmatprep.mubr.f32.mxu0 0.0
        %6214 = vmatmul.mubr.f32.gmra.mrb[0].mxu0 %v6052
        %v6215 = vpop.f32.mrb[0].mxu0
        %v6216 = vadd.f32 %v5959, %v6215
        %v6217 = vpop.f32.mrb[0].mxu0
        %6218 = vmatprep.mubr.f32.mxu0 0.0
        %6219 = vmatmul.mubr.f32.gmra.mrb[0].mxu0 %v6055
        %v6220 = vpop.f32.mrb[0].mxu0
        %v6221 = vadd.f32 %v5964, %v6220
        %v6222 = vpop.f32.mrb[0].mxu0
        %6223 = vmatprep.mubr.f32.mxu0 0.0
        %6224 = vmatmul.mubr.f32.gmra.mrb[0].mxu0 %v6058
        %v6225 = vpop.f32.mrb[0].mxu0
        %v6226 = vadd.f32 %v5969, %v6225
        %v6227 = vpop.f32.mrb[0].mxu0
        %6228 = vmatprep.mubr.f32.mxu0 0.0
        %6229 = vmatmul.mubr.f32.gmra.mrb[0].mxu0 %v6061
        %v6230 = vpop.f32.mrb[0].mxu0
        %v6231 = vadd.f32 %v5974, %v6230
        %v6232 = vpop.f32.mrb[0].mxu0
        %6233 = vmatprep.mubr.f32.mxu0 0.0
        %6234 = vmatmul.mubr.f32.gmra.mrb[0].mxu0 %v6064
        %v6235 = vpop.f32.mrb[0].mxu0
        %v6236 = vadd.f32 %v5979, %v6235
        %v6237 = vpop.f32.mrb[0].mxu0
        %6238 = vmatprep.mubr.f32.mxu0 0.0
        %6239 = vmatmul.mubr.f32.gmra.mrb[0].mxu0 %v6067
        %v6240 = vpop.f32.mrb[0].mxu0
        %v6241 = vadd.f32 %v5984, %v6240
        %v6242 = vpop.f32.mrb[0].mxu0
        %6243 = vmatprep.mubr.f32.mxu0 0.0
        %6244 = vmatmul.mubr.f32.gmra.mrb[0].mxu0 %v6070
        %v6245 = vpop.f32.mrb[0].mxu0
        %v6246 = vadd.f32 %v5989, %v6245
        %v6247 = vpop.f32.mrb[0].mxu0
        %6248 = vmatprep.mubr.f32.mxu0 0.0
        %6249 = vmatmul.mubr.f32.gmra.mrb[0].mxu0 %v6073
        %v6250 = vpop.f32.mrb[0].mxu0
        %v6251 = vadd.f32 %v5994, %v6250
        %v6252 = vpop.f32.mrb[0].mxu0
        %6253 = vmatprep.mubr.f32.mxu0 0.0
        %6254 = vmatmul.mubr.f32.gmra.mrb[0].mxu0 %v6076
        %v6255 = vpop.f32.mrb[0].mxu0
        %v6256 = vadd.f32 %v5999, %v6255
        %v6257 = vpop.f32.mrb[0].mxu0
        %6258 = vmatprep.mubr.f32.mxu0 0.0
        %6259 = vmatmul.mubr.f32.gmra.mrb[0].mxu0 %v6079
        %v6260 = vpop.f32.mrb[0].mxu0
        %v6261 = vadd.f32 %v6004, %v6260
        %v6262 = vpop.f32.mrb[0].mxu0
        %6263 = vmatprep.mubr.f32.mxu0 0.0
        %6264 = vmatmul.mubr.f32.gmra.mrb[0].mxu0 %v6082
        %v6265 = vpop.f32.mrb[0].mxu0
        %v6266 = vadd.f32 %v6009, %v6265
        %v6267 = vpop.f32.mrb[0].mxu0
        %6268 = vdwg.mxu0
        %v6269 = vld [vmem:[#allocation3 + $0x2] sm:$0xff]
        %v6270 = vld [vmem:[#allocation3 + $0xa] sm:$0xff]
        %v6271 = vld [vmem:[#allocation3 + $0x12] sm:$0xff]
        %v6272 = vld [vmem:[#allocation3 + $0x1a] sm:$0xff]
        %v6273 = vld [vmem:[#allocation3 + $0x22] sm:$0xff]
        %v6274 = vld [vmem:[#allocation3 + $0x2a] sm:$0xff]
        %v6275 = vld [vmem:[#allocation3 + $0x32] sm:$0xff]
        %v6276 = vld [vmem:[#allocation3 + $0x3a] sm:$0xff]
        %v6277 = vld [vmem:[#allocation3 + $0x42] sm:$0xff]
        %v6278 = vld [vmem:[#allocation3 + $0x4a] sm:$0xff]
        %v6279 = vld [vmem:[#allocation3 + $0x52] sm:$0xff]
        %v6280 = vld [vmem:[#allocation3 + $0x5a] sm:$0xff]
        %v6281 = vld [vmem:[#allocation3 + $0x62] sm:$0xff]
        %v6282 = vld [vmem:[#allocation3 + $0x6a] sm:$0xff]
        %v6283 = vld [vmem:[#allocation3 + $0x72] sm:$0xff]
        %v6284 = vld [vmem:[#allocation3 + $0x7a] sm:$0xff]
        %v6285 = vld [vmem:[#allocation3 + $0x82] sm:$0xff]
        %v6286 = vld [vmem:[#allocation3 + $0x8a] sm:$0xff]
        %v6287 = vld [vmem:[#allocation3 + $0x92] sm:$0xff]
        %v6288 = vld [vmem:[#allocation3 + $0x9a] sm:$0xff]
        %v6289 = vld [vmem:[#allocation3 + $0xa2] sm:$0xff]
        %v6290 = vld [vmem:[#allocation3 + $0xaa] sm:$0xff]
        %v6291 = vld [vmem:[#allocation3 + $0xb2] sm:$0xff]
        %v6292 = vld [vmem:[#allocation3 + $0xba] sm:$0x7]
        %s6293 = scalar_lea.vmem %s5, 112
        %v6294 = vld [vmem:[%s6293] sm:$0xff]
        %v6295 = vld [vmem:[%s6293 + $0x8] sm:$0xff]
        %v6296 = vld [vmem:[%s6293 + $0x10] sm:$0xff]
        %v6297 = vld [vmem:[%s6293 + $0x18] sm:$0xff]
        %v6298 = vld [vmem:[%s6293 + $0x20] sm:$0xff]
        %v6299 = vld [vmem:[%s6293 + $0x28] sm:$0xff]
        %v6300 = vld [vmem:[%s6293 + $0x30] sm:$0xff]
        %v6302 = vsel %vm440, %v6269, 0
        %v6305 = vsel %vm440, %v6270, 0
        %v6308 = vsel %vm440, %v6271, 0
        %v6311 = vsel %vm440, %v6272, 0
        %v6314 = vsel %vm440, %v6273, 0
        %v6317 = vsel %vm440, %v6274, 0
        %v6320 = vsel %vm440, %v6275, 0
        %v6323 = vsel %vm440, %v6276, 0
        %v6326 = vsel %vm440, %v6277, 0
        %v6329 = vsel %vm440, %v6278, 0
        %v6332 = vsel %vm440, %v6279, 0
        %v6335 = vsel %vm440, %v6280, 0
        %v6338 = vsel %vm440, %v6281, 0
        %v6341 = vsel %vm440, %v6282, 0
        %v6344 = vsel %vm440, %v6283, 0
        %v6347 = vsel %vm440, %v6284, 0
        %v6350 = vsel %vm440, %v6285, 0
        %v6353 = vsel %vm440, %v6286, 0
        %v6356 = vsel %vm440, %v6287, 0
        %v6359 = vsel %vm440, %v6288, 0
        %v6362 = vsel %vm440, %v6289, 0
        %v6365 = vsel %vm440, %v6290, 0
        %v6368 = vsel %vm440, %v6291, 0
        %v6371 = vsel %vm440, %v6292, 0
        %6373 = vmatprep.subr.mxu0 0.0
        %6374 = vmatpush1.msra.mxu0 %v6294
        %6375 = vmatprep.subr.mxu0 0.0
        %6376 = vmatpush1.msra.mxu0 %v6295
        %6377 = vmatprep.subr.mxu0 0.0
        %6378 = vmatpush1.msra.mxu0 %v6296
        %6379 = vmatprep.subr.mxu0 0.0
        %6380 = vmatpush1.msra.mxu0 %v6297
        %6381 = vmatprep.subr.mxu0 0.0
        %6382 = vmatpush1.msra.mxu0 %v6298
        %6383 = vmatprep.subr.mxu0 0.0
        %6384 = vmatpush1.msra.mxu0 %v6299
        %6385 = vmatprep.subr.mxu0 0.0
        %6386 = vmatpush1.msra.mxu0 %v6300
        %6387 = vmatprep.subr.mxu0 0.0
        %6388 = vmatpush1.msra.mxu0 0.0
        %6389 = vmatprep.subr.mxu0 0.0
        %6390 = vmatpush1.msra.mxu0 0.0
        %6391 = vmatprep.subr.mxu0 0.0
        %6392 = vmatpush1.msra.mxu0 0.0
        %6393 = vmatprep.subr.mxu0 0.0
        %6394 = vmatpush1.msra.mxu0 0.0
        %6395 = vmatprep.subr.mxu0 0.0
        %6396 = vmatpush1.msra.mxu0 0.0
        %6397 = vmatprep.subr.mxu0 0.0
        %6398 = vmatpush1.msra.mxu0 0.0
        %6399 = vmatprep.subr.mxu0 0.0
        %6400 = vmatpush1.msra.mxu0 0.0
        %6401 = vmatprep.subr.mxu0 0.0
        %6402 = vmatpush1.msra.mxu0 0.0
        %6403 = vmatprep.subr.mxu0 0.0
        %6404 = vmatpush1.msra.mxu0 0.0
        %6405 = vmatprep.subr.mxu0 0.0
        %6406 = vmatpush1.msra.mxu0 0.0
        %6407 = vmatprep.subr.mxu0 0.0
        %6408 = vmatpush1.msra.mxu0 0.0
        %6409 = vmatprep.subr.mxu0 0.0
        %6410 = vmatpush1.msra.mxu0 0.0
        %6411 = vmatprep.subr.mxu0 0.0
        %6412 = vmatpush1.msra.mxu0 0.0
        %6413 = vmatprep.subr.mxu0 0.0
        %6414 = vmatpush1.msra.mxu0 0.0
        %6415 = vmatprep.subr.mxu0 0.0
        %6416 = vmatpush1.msra.mxu0 0.0
        %6417 = vmatprep.subr.mxu0 0.0
        %6418 = vmatpush1.msra.mxu0 0.0
        %6419 = vmatprep.subr.mxu0 0.0
        %6420 = vmatpush1.msra.mxu0 0.0
        %6421 = vmatprep.subr.mxu0 0.0
        %6422 = vmatpush1.msra.mxu0 0.0
        %6423 = vmatprep.subr.mxu0 0.0
        %6424 = vmatpush1.msra.mxu0 0.0
        %6425 = vmatprep.subr.mxu0 0.0
        %6426 = vmatpush1.msra.mxu0 0.0
        %6427 = vmatprep.subr.mxu0 0.0
        %6428 = vmatpush1.msra.mxu0 0.0
        %6429 = vmatprep.subr.mxu0 0.0
        %6430 = vmatpush1.msra.mxu0 0.0
        %6431 = vmatprep.subr.mxu0 0.0
        %6432 = vmatpush1.msra.mxu0 0.0
        %6433 = vmatprep.subr.mxu0 0.0
        %6434 = vmatpush1.msra.mxu0 0.0
        %6435 = vmatprep.subr.mxu0 0.0
        %6436 = vmatpush1.msra.mxu0 0.0
        %6437 = vmatprep.mubr.f32.mxu0 0.0
        %6438 = vmatmul.mubr.f32.gmra.mrb[0].mxu0 %v6302
        %v6439 = vpop.f32.mrb[0].mxu0
        %v6440 = vadd.f32 0.0, %v6439
        %v6441 = vpop.f32.mrb[0].mxu0
        %6442 = vmatprep.mubr.f32.mxu0 0.0
        %6443 = vmatmul.mubr.f32.gmra.mrb[0].mxu0 %v6305
        %v6444 = vpop.f32.mrb[0].mxu0
        %v6445 = vadd.f32 0.0, %v6444
        %v6446 = vpop.f32.mrb[0].mxu0
        %6447 = vmatprep.mubr.f32.mxu0 0.0
        %6448 = vmatmul.mubr.f32.gmra.mrb[0].mxu0 %v6308
        %v6449 = vpop.f32.mrb[0].mxu0
        %v6450 = vadd.f32 0.0, %v6449
        %v6451 = vpop.f32.mrb[0].mxu0
        %6452 = vmatprep.mubr.f32.mxu0 0.0
        %6453 = vmatmul.mubr.f32.gmra.mrb[0].mxu0 %v6311
        %v6454 = vpop.f32.mrb[0].mxu0
        %v6455 = vadd.f32 0.0, %v6454
        %v6456 = vpop.f32.mrb[0].mxu0
        %6457 = vmatprep.mubr.f32.mxu0 0.0
        %6458 = vmatmul.mubr.f32.gmra.mrb[0].mxu0 %v6314
        %v6459 = vpop.f32.mrb[0].mxu0
        %v6460 = vadd.f32 0.0, %v6459
        %v6461 = vpop.f32.mrb[0].mxu0
        %6462 = vmatprep.mubr.f32.mxu0 0.0
        %6463 = vmatmul.mubr.f32.gmra.mrb[0].mxu0 %v6317
        %v6464 = vpop.f32.mrb[0].mxu0
        %v6465 = vadd.f32 0.0, %v6464
        %v6466 = vpop.f32.mrb[0].mxu0
        %6467 = vmatprep.mubr.f32.mxu0 0.0
        %6468 = vmatmul.mubr.f32.gmra.mrb[0].mxu0 %v6320
        %v6469 = vpop.f32.mrb[0].mxu0
        %v6470 = vadd.f32 0.0, %v6469
        %v6471 = vpop.f32.mrb[0].mxu0
        %6472 = vmatprep.mubr.f32.mxu0 0.0
        %6473 = vmatmul.mubr.f32.gmra.mrb[0].mxu0 %v6323
        %v6474 = vpop.f32.mrb[0].mxu0
        %v6475 = vadd.f32 0.0, %v6474
        %v6476 = vpop.f32.mrb[0].mxu0
        %6477 = vmatprep.mubr.f32.mxu0 0.0
        %6478 = vmatmul.mubr.f32.gmra.mrb[0].mxu0 %v6326
        %v6479 = vpop.f32.mrb[0].mxu0
        %v6480 = vadd.f32 0.0, %v6479
        %v6481 = vpop.f32.mrb[0].mxu0
        %6482 = vmatprep.mubr.f32.mxu0 0.0
        %6483 = vmatmul.mubr.f32.gmra.mrb[0].mxu0 %v6329
        %v6484 = vpop.f32.mrb[0].mxu0
        %v6485 = vadd.f32 0.0, %v6484
        %v6486 = vpop.f32.mrb[0].mxu0
        %6487 = vmatprep.mubr.f32.mxu0 0.0
        %6488 = vmatmul.mubr.f32.gmra.mrb[0].mxu0 %v6332
        %v6489 = vpop.f32.mrb[0].mxu0
        %v6490 = vadd.f32 0.0, %v6489
        %v6491 = vpop.f32.mrb[0].mxu0
        %6492 = vmatprep.mubr.f32.mxu0 0.0
        %6493 = vmatmul.mubr.f32.gmra.mrb[0].mxu0 %v6335
        %v6494 = vpop.f32.mrb[0].mxu0
        %v6495 = vadd.f32 0.0, %v6494
        %v6496 = vpop.f32.mrb[0].mxu0
        %6497 = vmatprep.mubr.f32.mxu0 0.0
        %6498 = vmatmul.mubr.f32.gmra.mrb[0].mxu0 %v6338
        %v6499 = vpop.f32.mrb[0].mxu0
        %v6500 = vadd.f32 0.0, %v6499
        %v6501 = vpop.f32.mrb[0].mxu0
        %6502 = vmatprep.mubr.f32.mxu0 0.0
        %6503 = vmatmul.mubr.f32.gmra.mrb[0].mxu0 %v6341
        %v6504 = vpop.f32.mrb[0].mxu0
        %v6505 = vadd.f32 0.0, %v6504
        %v6506 = vpop.f32.mrb[0].mxu0
        %6507 = vmatprep.mubr.f32.mxu0 0.0
        %6508 = vmatmul.mubr.f32.gmra.mrb[0].mxu0 %v6344
        %v6509 = vpop.f32.mrb[0].mxu0
        %v6510 = vadd.f32 0.0, %v6509
        %v6511 = vpop.f32.mrb[0].mxu0
        %6512 = vmatprep.mubr.f32.mxu0 0.0
        %6513 = vmatmul.mubr.f32.gmra.mrb[0].mxu0 %v6347
        %v6514 = vpop.f32.mrb[0].mxu0
        %v6515 = vadd.f32 0.0, %v6514
        %v6516 = vpop.f32.mrb[0].mxu0
        %6517 = vmatprep.mubr.f32.mxu0 0.0
        %6518 = vmatmul.mubr.f32.gmra.mrb[0].mxu0 %v6350
        %v6519 = vpop.f32.mrb[0].mxu0
        %v6520 = vadd.f32 0.0, %v6519
        %v6521 = vpop.f32.mrb[0].mxu0
        %6522 = vmatprep.mubr.f32.mxu0 0.0
        %6523 = vmatmul.mubr.f32.gmra.mrb[0].mxu0 %v6353
        %v6524 = vpop.f32.mrb[0].mxu0
        %v6525 = vadd.f32 0.0, %v6524
        %v6526 = vpop.f32.mrb[0].mxu0
        %6527 = vmatprep.mubr.f32.mxu0 0.0
        %6528 = vmatmul.mubr.f32.gmra.mrb[0].mxu0 %v6356
        %v6529 = vpop.f32.mrb[0].mxu0
        %v6530 = vadd.f32 0.0, %v6529
        %v6531 = vpop.f32.mrb[0].mxu0
        %6532 = vmatprep.mubr.f32.mxu0 0.0
        %6533 = vmatmul.mubr.f32.gmra.mrb[0].mxu0 %v6359
        %v6534 = vpop.f32.mrb[0].mxu0
        %v6535 = vadd.f32 0.0, %v6534
        %v6536 = vpop.f32.mrb[0].mxu0
        %6537 = vmatprep.mubr.f32.mxu0 0.0
        %6538 = vmatmul.mubr.f32.gmra.mrb[0].mxu0 %v6362
        %v6539 = vpop.f32.mrb[0].mxu0
        %v6540 = vadd.f32 0.0, %v6539
        %v6541 = vpop.f32.mrb[0].mxu0
        %6542 = vmatprep.mubr.f32.mxu0 0.0
        %6543 = vmatmul.mubr.f32.gmra.mrb[0].mxu0 %v6365
        %v6544 = vpop.f32.mrb[0].mxu0
        %v6545 = vadd.f32 0.0, %v6544
        %v6546 = vpop.f32.mrb[0].mxu0
        %6547 = vmatprep.mubr.f32.mxu0 0.0
        %6548 = vmatmul.mubr.f32.gmra.mrb[0].mxu0 %v6368
        %v6549 = vpop.f32.mrb[0].mxu0
        %v6550 = vadd.f32 0.0, %v6549
        %v6551 = vpop.f32.mrb[0].mxu0
        %6552 = vmatprep.mubr.f32.mxu0 0.0
        %6553 = vmatmul.mubr.f32.gmra.mrb[0].mxu0 %v6371
        %v6554 = vpop.f32.mrb[0].mxu0
        %v6555 = vadd.f32 0.0, %v6554
        %v6556 = vpop.f32.mrb[0].mxu0
        %6557 = vdwg.mxu0
        %v6558 = vadd.f32 %v6151, %v6440
        %v6559 = vadd.f32 %v6156, %v6445
        %v6560 = vadd.f32 %v6161, %v6450
        %v6561 = vadd.f32 %v6166, %v6455
        %v6562 = vadd.f32 %v6171, %v6460
        %v6563 = vadd.f32 %v6176, %v6465
        %v6564 = vadd.f32 %v6181, %v6470
        %v6565 = vadd.f32 %v6186, %v6475
        %v6566 = vadd.f32 %v6191, %v6480
        %v6567 = vadd.f32 %v6196, %v6485
        %v6568 = vadd.f32 %v6201, %v6490
        %v6569 = vadd.f32 %v6206, %v6495
        %v6570 = vadd.f32 %v6211, %v6500
        %v6571 = vadd.f32 %v6216, %v6505
        %v6572 = vadd.f32 %v6221, %v6510
        %v6573 = vadd.f32 %v6226, %v6515
        %v6574 = vadd.f32 %v6231, %v6520
        %v6575 = vadd.f32 %v6236, %v6525
        %v6576 = vadd.f32 %v6241, %v6530
        %v6577 = vadd.f32 %v6246, %v6535
        %v6578 = vadd.f32 %v6251, %v6540
        %v6579 = vadd.f32 %v6256, %v6545
        %v6580 = vadd.f32 %v6261, %v6550
        %v6581 = vadd.f32 %v6266, %v6555
        %v6582 = vld [vmem:[#allocation3 + $0x3] sm:$0xff]
        %v6583 = vld [vmem:[#allocation3 + $0xb] sm:$0xff]
        %v6584 = vld [vmem:[#allocation3 + $0x13] sm:$0xff]
        %v6585 = vld [vmem:[#allocation3 + $0x1b] sm:$0xff]
        %v6586 = vld [vmem:[#allocation3 + $0x23] sm:$0xff]
        %v6587 = vld [vmem:[#allocation3 + $0x2b] sm:$0xff]
        %v6588 = vld [vmem:[#allocation3 + $0x33] sm:$0xff]
        %v6589 = vld [vmem:[#allocation3 + $0x3b] sm:$0xff]
        %v6590 = vld [vmem:[#allocation3 + $0x43] sm:$0xff]
        %v6591 = vld [vmem:[#allocation3 + $0x4b] sm:$0xff]
        %v6592 = vld [vmem:[#allocation3 + $0x53] sm:$0xff]
        %v6593 = vld [vmem:[#allocation3 + $0x5b] sm:$0xff]
        %v6594 = vld [vmem:[#allocation3 + $0x63] sm:$0xff]
        %v6595 = vld [vmem:[#allocation3 + $0x6b] sm:$0xff]
        %v6596 = vld [vmem:[#allocation3 + $0x73] sm:$0xff]
        %v6597 = vld [vmem:[#allocation3 + $0x7b] sm:$0xff]
        %v6598 = vld [vmem:[#allocation3 + $0x83] sm:$0xff]
        %v6599 = vld [vmem:[#allocation3 + $0x8b] sm:$0xff]
        %v6600 = vld [vmem:[#allocation3 + $0x93] sm:$0xff]
        %v6601 = vld [vmem:[#allocation3 + $0x9b] sm:$0xff]
        %v6602 = vld [vmem:[#allocation3 + $0xa3] sm:$0xff]
        %v6603 = vld [vmem:[#allocation3 + $0xab] sm:$0xff]
        %v6604 = vld [vmem:[#allocation3 + $0xb3] sm:$0xff]
        %v6605 = vld [vmem:[#allocation3 + $0xbb] sm:$0x7]
        %s6606 = scalar_lea.vmem %s5, 168
        %v6607 = vld [vmem:[%s6606] sm:$0xff]
        %v6608 = vld [vmem:[%s6606 + $0x8] sm:$0xff]
        %v6609 = vld [vmem:[%s6606 + $0x10] sm:$0xff]
        %v6610 = vld [vmem:[%s6606 + $0x18] sm:$0xff]
        %v6611 = vld [vmem:[%s6606 + $0x20] sm:$0xff]
        %v6612 = vld [vmem:[%s6606 + $0x28] sm:$0xff]
        %v6613 = vld [vmem:[%s6606 + $0x30] sm:$0xff]
        %v6615 = vsel %vm440, %v6582, 0
        %v6618 = vsel %vm440, %v6583, 0
        %v6621 = vsel %vm440, %v6584, 0
        %v6624 = vsel %vm440, %v6585, 0
        %v6627 = vsel %vm440, %v6586, 0
        %v6630 = vsel %vm440, %v6587, 0
        %v6633 = vsel %vm440, %v6588, 0
        %v6636 = vsel %vm440, %v6589, 0
        %v6639 = vsel %vm440, %v6590, 0
        %v6642 = vsel %vm440, %v6591, 0
        %v6645 = vsel %vm440, %v6592, 0
        %v6648 = vsel %vm440, %v6593, 0
        %v6651 = vsel %vm440, %v6594, 0
        %v6654 = vsel %vm440, %v6595, 0
        %v6657 = vsel %vm440, %v6596, 0
        %v6660 = vsel %vm440, %v6597, 0
        %v6663 = vsel %vm440, %v6598, 0
        %v6666 = vsel %vm440, %v6599, 0
        %v6669 = vsel %vm440, %v6600, 0
        %v6672 = vsel %vm440, %v6601, 0
        %v6675 = vsel %vm440, %v6602, 0
        %v6678 = vsel %vm440, %v6603, 0
        %v6681 = vsel %vm440, %v6604, 0
        %v6684 = vsel %vm440, %v6605, 0
        %6686 = vmatprep.subr.mxu0 0.0
        %6687 = vmatpush1.msra.mxu0 %v6607
        %6688 = vmatprep.subr.mxu0 0.0
        %6689 = vmatpush1.msra.mxu0 %v6608
        %6690 = vmatprep.subr.mxu0 0.0
        %6691 = vmatpush1.msra.mxu0 %v6609
        %6692 = vmatprep.subr.mxu0 0.0
        %6693 = vmatpush1.msra.mxu0 %v6610
        %6694 = vmatprep.subr.mxu0 0.0
        %6695 = vmatpush1.msra.mxu0 %v6611
        %6696 = vmatprep.subr.mxu0 0.0
        %6697 = vmatpush1.msra.mxu0 %v6612
        %6698 = vmatprep.subr.mxu0 0.0
        %6699 = vmatpush1.msra.mxu0 %v6613
        %6700 = vmatprep.subr.mxu0 0.0
        %6701 = vmatpush1.msra.mxu0 0.0
        %6702 = vmatprep.subr.mxu0 0.0
        %6703 = vmatpush1.msra.mxu0 0.0
        %6704 = vmatprep.subr.mxu0 0.0
        %6705 = vmatpush1.msra.mxu0 0.0
        %6706 = vmatprep.subr.mxu0 0.0
        %6707 = vmatpush1.msra.mxu0 0.0
        %6708 = vmatprep.subr.mxu0 0.0
        %6709 = vmatpush1.msra.mxu0 0.0
        %6710 = vmatprep.subr.mxu0 0.0
        %6711 = vmatpush1.msra.mxu0 0.0
        %6712 = vmatprep.subr.mxu0 0.0
        %6713 = vmatpush1.msra.mxu0 0.0
        %6714 = vmatprep.subr.mxu0 0.0
        %6715 = vmatpush1.msra.mxu0 0.0
        %6716 = vmatprep.subr.mxu0 0.0
        %6717 = vmatpush1.msra.mxu0 0.0
        %6718 = vmatprep.subr.mxu0 0.0
        %6719 = vmatpush1.msra.mxu0 0.0
        %6720 = vmatprep.subr.mxu0 0.0
        %6721 = vmatpush1.msra.mxu0 0.0
        %6722 = vmatprep.subr.mxu0 0.0
        %6723 = vmatpush1.msra.mxu0 0.0
        %6724 = vmatprep.subr.mxu0 0.0
        %6725 = vmatpush1.msra.mxu0 0.0
        %6726 = vmatprep.subr.mxu0 0.0
        %6727 = vmatpush1.msra.mxu0 0.0
        %6728 = vmatprep.subr.mxu0 0.0
        %6729 = vmatpush1.msra.mxu0 0.0
        %6730 = vmatprep.subr.mxu0 0.0
        %6731 = vmatpush1.msra.mxu0 0.0
        %6732 = vmatprep.subr.mxu0 0.0
        %6733 = vmatpush1.msra.mxu0 0.0
        %6734 = vmatprep.subr.mxu0 0.0
        %6735 = vmatpush1.msra.mxu0 0.0
        %6736 = vmatprep.subr.mxu0 0.0
        %6737 = vmatpush1.msra.mxu0 0.0
        %6738 = vmatprep.subr.mxu0 0.0
        %6739 = vmatpush1.msra.mxu0 0.0
        %6740 = vmatprep.subr.mxu0 0.0
        %6741 = vmatpush1.msra.mxu0 0.0
        %6742 = vmatprep.subr.mxu0 0.0
        %6743 = vmatpush1.msra.mxu0 0.0
        %6744 = vmatprep.subr.mxu0 0.0
        %6745 = vmatpush1.msra.mxu0 0.0
        %6746 = vmatprep.subr.mxu0 0.0
        %6747 = vmatpush1.msra.mxu0 0.0
        %6748 = vmatprep.subr.mxu0 0.0
        %6749 = vmatpush1.msra.mxu0 0.0
        %6750 = vmatprep.mubr.f32.mxu0 0.0
        %6751 = vmatmul.mubr.f32.gmra.mrb[0].mxu0 %v6615
        %v6752 = vpop.f32.mrb[0].mxu0
        %v6753 = vadd.f32 0.0, %v6752
        %v6754 = vpop.f32.mrb[0].mxu0
        %6755 = vmatprep.mubr.f32.mxu0 0.0
        %6756 = vmatmul.mubr.f32.gmra.mrb[0].mxu0 %v6618
        %v6757 = vpop.f32.mrb[0].mxu0
        %v6758 = vadd.f32 0.0, %v6757
        %v6759 = vpop.f32.mrb[0].mxu0
        %6760 = vmatprep.mubr.f32.mxu0 0.0
        %6761 = vmatmul.mubr.f32.gmra.mrb[0].mxu0 %v6621
        %v6762 = vpop.f32.mrb[0].mxu0
        %v6763 = vadd.f32 0.0, %v6762
        %v6764 = vpop.f32.mrb[0].mxu0
        %6765 = vmatprep.mubr.f32.mxu0 0.0
        %6766 = vmatmul.mubr.f32.gmra.mrb[0].mxu0 %v6624
        %v6767 = vpop.f32.mrb[0].mxu0
        %v6768 = vadd.f32 0.0, %v6767
        %v6769 = vpop.f32.mrb[0].mxu0
        %6770 = vmatprep.mubr.f32.mxu0 0.0
        %6771 = vmatmul.mubr.f32.gmra.mrb[0].mxu0 %v6627
        %v6772 = vpop.f32.mrb[0].mxu0
        %v6773 = vadd.f32 0.0, %v6772
        %v6774 = vpop.f32.mrb[0].mxu0
        %6775 = vmatprep.mubr.f32.mxu0 0.0
        %6776 = vmatmul.mubr.f32.gmra.mrb[0].mxu0 %v6630
        %v6777 = vpop.f32.mrb[0].mxu0
        %v6778 = vadd.f32 0.0, %v6777
        %v6779 = vpop.f32.mrb[0].mxu0
        %6780 = vmatprep.mubr.f32.mxu0 0.0
        %6781 = vmatmul.mubr.f32.gmra.mrb[0].mxu0 %v6633
        %v6782 = vpop.f32.mrb[0].mxu0
        %v6783 = vadd.f32 0.0, %v6782
        %v6784 = vpop.f32.mrb[0].mxu0
        %6785 = vmatprep.mubr.f32.mxu0 0.0
        %6786 = vmatmul.mubr.f32.gmra.mrb[0].mxu0 %v6636
        %v6787 = vpop.f32.mrb[0].mxu0
        %v6788 = vadd.f32 0.0, %v6787
        %v6789 = vpop.f32.mrb[0].mxu0
        %6790 = vmatprep.mubr.f32.mxu0 0.0
        %6791 = vmatmul.mubr.f32.gmra.mrb[0].mxu0 %v6639
        %v6792 = vpop.f32.mrb[0].mxu0
        %v6793 = vadd.f32 0.0, %v6792
        %v6794 = vpop.f32.mrb[0].mxu0
        %6795 = vmatprep.mubr.f32.mxu0 0.0
        %6796 = vmatmul.mubr.f32.gmra.mrb[0].mxu0 %v6642
        %v6797 = vpop.f32.mrb[0].mxu0
        %v6798 = vadd.f32 0.0, %v6797
        %v6799 = vpop.f32.mrb[0].mxu0
        %6800 = vmatprep.mubr.f32.mxu0 0.0
        %6801 = vmatmul.mubr.f32.gmra.mrb[0].mxu0 %v6645
        %v6802 = vpop.f32.mrb[0].mxu0
        %v6803 = vadd.f32 0.0, %v6802
        %v6804 = vpop.f32.mrb[0].mxu0
        %6805 = vmatprep.mubr.f32.mxu0 0.0
        %6806 = vmatmul.mubr.f32.gmra.mrb[0].mxu0 %v6648
        %v6807 = vpop.f32.mrb[0].mxu0
        %v6808 = vadd.f32 0.0, %v6807
        %v6809 = vpop.f32.mrb[0].mxu0
        %6810 = vmatprep.mubr.f32.mxu0 0.0
        %6811 = vmatmul.mubr.f32.gmra.mrb[0].mxu0 %v6651
        %v6812 = vpop.f32.mrb[0].mxu0
        %v6813 = vadd.f32 0.0, %v6812
        %v6814 = vpop.f32.mrb[0].mxu0
        %6815 = vmatprep.mubr.f32.mxu0 0.0
        %6816 = vmatmul.mubr.f32.gmra.mrb[0].mxu0 %v6654
        %v6817 = vpop.f32.mrb[0].mxu0
        %v6818 = vadd.f32 0.0, %v6817
        %v6819 = vpop.f32.mrb[0].mxu0
        %6820 = vmatprep.mubr.f32.mxu0 0.0
        %6821 = vmatmul.mubr.f32.gmra.mrb[0].mxu0 %v6657
        %v6822 = vpop.f32.mrb[0].mxu0
        %v6823 = vadd.f32 0.0, %v6822
        %v6824 = vpop.f32.mrb[0].mxu0
        %6825 = vmatprep.mubr.f32.mxu0 0.0
        %6826 = vmatmul.mubr.f32.gmra.mrb[0].mxu0 %v6660
        %v6827 = vpop.f32.mrb[0].mxu0
        %v6828 = vadd.f32 0.0, %v6827
        %v6829 = vpop.f32.mrb[0].mxu0
        %6830 = vmatprep.mubr.f32.mxu0 0.0
        %6831 = vmatmul.mubr.f32.gmra.mrb[0].mxu0 %v6663
        %v6832 = vpop.f32.mrb[0].mxu0
        %v6833 = vadd.f32 0.0, %v6832
        %v6834 = vpop.f32.mrb[0].mxu0
        %6835 = vmatprep.mubr.f32.mxu0 0.0
        %6836 = vmatmul.mubr.f32.gmra.mrb[0].mxu0 %v6666
        %v6837 = vpop.f32.mrb[0].mxu0
        %v6838 = vadd.f32 0.0, %v6837
        %v6839 = vpop.f32.mrb[0].mxu0
        %6840 = vmatprep.mubr.f32.mxu0 0.0
        %6841 = vmatmul.mubr.f32.gmra.mrb[0].mxu0 %v6669
        %v6842 = vpop.f32.mrb[0].mxu0
        %v6843 = vadd.f32 0.0, %v6842
        %v6844 = vpop.f32.mrb[0].mxu0
        %6845 = vmatprep.mubr.f32.mxu0 0.0
        %6846 = vmatmul.mubr.f32.gmra.mrb[0].mxu0 %v6672
        %v6847 = vpop.f32.mrb[0].mxu0
        %v6848 = vadd.f32 0.0, %v6847
        %v6849 = vpop.f32.mrb[0].mxu0
        %6850 = vmatprep.mubr.f32.mxu0 0.0
        %6851 = vmatmul.mubr.f32.gmra.mrb[0].mxu0 %v6675
        %v6852 = vpop.f32.mrb[0].mxu0
        %v6853 = vadd.f32 0.0, %v6852
        %v6854 = vpop.f32.mrb[0].mxu0
        %6855 = vmatprep.mubr.f32.mxu0 0.0
        %6856 = vmatmul.mubr.f32.gmra.mrb[0].mxu0 %v6678
        %v6857 = vpop.f32.mrb[0].mxu0
        %v6858 = vadd.f32 0.0, %v6857
        %v6859 = vpop.f32.mrb[0].mxu0
        %6860 = vmatprep.mubr.f32.mxu0 0.0
        %6861 = vmatmul.mubr.f32.gmra.mrb[0].mxu0 %v6681
        %v6862 = vpop.f32.mrb[0].mxu0
        %v6863 = vadd.f32 0.0, %v6862
        %v6864 = vpop.f32.mrb[0].mxu0
        %6865 = vmatprep.mubr.f32.mxu0 0.0
        %6866 = vmatmul.mubr.f32.gmra.mrb[0].mxu0 %v6684
        %v6867 = vpop.f32.mrb[0].mxu0
        %v6868 = vadd.f32 0.0, %v6867
        %v6869 = vpop.f32.mrb[0].mxu0
        %6870 = vdwg.mxu0
        %v6871 = vadd.f32 %v6558, %v6753
        %v6872 = vadd.f32 %v6559, %v6758
        %v6873 = vadd.f32 %v6560, %v6763
        %v6874 = vadd.f32 %v6561, %v6768
        %v6875 = vadd.f32 %v6562, %v6773
        %v6876 = vadd.f32 %v6563, %v6778
        %v6877 = vadd.f32 %v6564, %v6783
        %v6878 = vadd.f32 %v6565, %v6788
        %v6879 = vadd.f32 %v6566, %v6793
        %v6880 = vadd.f32 %v6567, %v6798
        %v6881 = vadd.f32 %v6568, %v6803
        %v6882 = vadd.f32 %v6569, %v6808
        %v6883 = vadd.f32 %v6570, %v6813
        %v6884 = vadd.f32 %v6571, %v6818
        %v6885 = vadd.f32 %v6572, %v6823
        %v6886 = vadd.f32 %v6573, %v6828
        %v6887 = vadd.f32 %v6574, %v6833
        %v6888 = vadd.f32 %v6575, %v6838
        %v6889 = vadd.f32 %v6576, %v6843
        %v6890 = vadd.f32 %v6577, %v6848
        %v6891 = vadd.f32 %v6578, %v6853
        %v6892 = vadd.f32 %v6579, %v6858
        %v6893 = vadd.f32 %v6580, %v6863
        %v6894 = vadd.f32 %v6581, %v6868
        %v6895 = vld [vmem:[#allocation3 + $0x4] sm:$0xff]
        %v6896 = vld [vmem:[#allocation3 + $0xc] sm:$0xff]
        %v6897 = vld [vmem:[#allocation3 + $0x14] sm:$0xff]
        %v6898 = vld [vmem:[#allocation3 + $0x1c] sm:$0xff]
        %v6899 = vld [vmem:[#allocation3 + $0x24] sm:$0xff]
        %v6900 = vld [vmem:[#allocation3 + $0x2c] sm:$0xff]
        %v6901 = vld [vmem:[#allocation3 + $0x34] sm:$0xff]
        %v6902 = vld [vmem:[#allocation3 + $0x3c] sm:$0xff]
        %v6903 = vld [vmem:[#allocation3 + $0x44] sm:$0xff]
        %v6904 = vld [vmem:[#allocation3 + $0x4c] sm:$0xff]
        %v6905 = vld [vmem:[#allocation3 + $0x54] sm:$0xff]
        %v6906 = vld [vmem:[#allocation3 + $0x5c] sm:$0xff]
        %v6907 = vld [vmem:[#allocation3 + $0x64] sm:$0xff]
        %v6908 = vld [vmem:[#allocation3 + $0x6c] sm:$0xff]
        %v6909 = vld [vmem:[#allocation3 + $0x74] sm:$0xff]
        %v6910 = vld [vmem:[#allocation3 + $0x7c] sm:$0xff]
        %v6911 = vld [vmem:[#allocation3 + $0x84] sm:$0xff]
        %v6912 = vld [vmem:[#allocation3 + $0x8c] sm:$0xff]
        %v6913 = vld [vmem:[#allocation3 + $0x94] sm:$0xff]
        %v6914 = vld [vmem:[#allocation3 + $0x9c] sm:$0xff]
        %v6915 = vld [vmem:[#allocation3 + $0xa4] sm:$0xff]
        %v6916 = vld [vmem:[#allocation3 + $0xac] sm:$0xff]
        %v6917 = vld [vmem:[#allocation3 + $0xb4] sm:$0xff]
        %v6918 = vld [vmem:[#allocation3 + $0xbc] sm:$0x7]
        %s6919 = scalar_lea.vmem %s5, 224
        %v6920 = vld [vmem:[%s6919] sm:$0xff]
        %v6921 = vld [vmem:[%s6919 + $0x8] sm:$0xff]
        %v6922 = vld [vmem:[%s6919 + $0x10] sm:$0xff]
        %v6923 = vld [vmem:[%s6919 + $0x18] sm:$0xff]
        %v6924 = vld [vmem:[%s6919 + $0x20] sm:$0xff]
        %v6925 = vld [vmem:[%s6919 + $0x28] sm:$0xff]
        %v6926 = vld [vmem:[%s6919 + $0x30] sm:$0xff]
        %v6928 = vsel %vm440, %v6895, 0
        %v6931 = vsel %vm440, %v6896, 0
        %v6934 = vsel %vm440, %v6897, 0
        %v6937 = vsel %vm440, %v6898, 0
        %v6940 = vsel %vm440, %v6899, 0
        %v6943 = vsel %vm440, %v6900, 0
        %v6946 = vsel %vm440, %v6901, 0
        %v6949 = vsel %vm440, %v6902, 0
        %v6952 = vsel %vm440, %v6903, 0
        %v6955 = vsel %vm440, %v6904, 0
        %v6958 = vsel %vm440, %v6905, 0
        %v6961 = vsel %vm440, %v6906, 0
        %v6964 = vsel %vm440, %v6907, 0
        %v6967 = vsel %vm440, %v6908, 0
        %v6970 = vsel %vm440, %v6909, 0
        %v6973 = vsel %vm440, %v6910, 0
        %v6976 = vsel %vm440, %v6911, 0
        %v6979 = vsel %vm440, %v6912, 0
        %v6982 = vsel %vm440, %v6913, 0
        %v6985 = vsel %vm440, %v6914, 0
        %v6988 = vsel %vm440, %v6915, 0
        %v6991 = vsel %vm440, %v6916, 0
        %v6994 = vsel %vm440, %v6917, 0
        %v6997 = vsel %vm440, %v6918, 0
        %6999 = vmatprep.subr.mxu0 0.0
        %7000 = vmatpush1.msra.mxu0 %v6920
        %7001 = vmatprep.subr.mxu0 0.0
        %7002 = vmatpush1.msra.mxu0 %v6921
        %7003 = vmatprep.subr.mxu0 0.0
        %7004 = vmatpush1.msra.mxu0 %v6922
        %7005 = vmatprep.subr.mxu0 0.0
        %7006 = vmatpush1.msra.mxu0 %v6923
        %7007 = vmatprep.subr.mxu0 0.0
        %7008 = vmatpush1.msra.mxu0 %v6924
        %7009 = vmatprep.subr.mxu0 0.0
        %7010 = vmatpush1.msra.mxu0 %v6925
        %7011 = vmatprep.subr.mxu0 0.0
        %7012 = vmatpush1.msra.mxu0 %v6926
        %7013 = vmatprep.subr.mxu0 0.0
        %7014 = vmatpush1.msra.mxu0 0.0
        %7015 = vmatprep.subr.mxu0 0.0
        %7016 = vmatpush1.msra.mxu0 0.0
        %7017 = vmatprep.subr.mxu0 0.0
        %7018 = vmatpush1.msra.mxu0 0.0
        %7019 = vmatprep.subr.mxu0 0.0
        %7020 = vmatpush1.msra.mxu0 0.0
        %7021 = vmatprep.subr.mxu0 0.0
        %7022 = vmatpush1.msra.mxu0 0.0
        %7023 = vmatprep.subr.mxu0 0.0
        %7024 = vmatpush1.msra.mxu0 0.0
        %7025 = vmatprep.subr.mxu0 0.0
        %7026 = vmatpush1.msra.mxu0 0.0
        %7027 = vmatprep.subr.mxu0 0.0
        %7028 = vmatpush1.msra.mxu0 0.0
        %7029 = vmatprep.subr.mxu0 0.0
        %7030 = vmatpush1.msra.mxu0 0.0
        %7031 = vmatprep.subr.mxu0 0.0
        %7032 = vmatpush1.msra.mxu0 0.0
        %7033 = vmatprep.subr.mxu0 0.0
        %7034 = vmatpush1.msra.mxu0 0.0
        %7035 = vmatprep.subr.mxu0 0.0
        %7036 = vmatpush1.msra.mxu0 0.0
        %7037 = vmatprep.subr.mxu0 0.0
        %7038 = vmatpush1.msra.mxu0 0.0
        %7039 = vmatprep.subr.mxu0 0.0
        %7040 = vmatpush1.msra.mxu0 0.0
        %7041 = vmatprep.subr.mxu0 0.0
        %7042 = vmatpush1.msra.mxu0 0.0
        %7043 = vmatprep.subr.mxu0 0.0
        %7044 = vmatpush1.msra.mxu0 0.0
        %7045 = vmatprep.subr.mxu0 0.0
        %7046 = vmatpush1.msra.mxu0 0.0
        %7047 = vmatprep.subr.mxu0 0.0
        %7048 = vmatpush1.msra.mxu0 0.0
        %7049 = vmatprep.subr.mxu0 0.0
        %7050 = vmatpush1.msra.mxu0 0.0
        %7051 = vmatprep.subr.mxu0 0.0
        %7052 = vmatpush1.msra.mxu0 0.0
        %7053 = vmatprep.subr.mxu0 0.0
        %7054 = vmatpush1.msra.mxu0 0.0
        %7055 = vmatprep.subr.mxu0 0.0
        %7056 = vmatpush1.msra.mxu0 0.0
        %7057 = vmatprep.subr.mxu0 0.0
        %7058 = vmatpush1.msra.mxu0 0.0
        %7059 = vmatprep.subr.mxu0 0.0
        %7060 = vmatpush1.msra.mxu0 0.0
        %7061 = vmatprep.subr.mxu0 0.0
        %7062 = vmatpush1.msra.mxu0 0.0
        %7063 = vmatprep.mubr.f32.mxu0 0.0
        %7064 = vmatmul.mubr.f32.gmra.mrb[0].mxu0 %v6928
        %v7065 = vpop.f32.mrb[0].mxu0
        %v7066 = vadd.f32 0.0, %v7065
        %v7067 = vpop.f32.mrb[0].mxu0
        %7068 = vmatprep.mubr.f32.mxu0 0.0
        %7069 = vmatmul.mubr.f32.gmra.mrb[0].mxu0 %v6931
        %v7070 = vpop.f32.mrb[0].mxu0
        %v7071 = vadd.f32 0.0, %v7070
        %v7072 = vpop.f32.mrb[0].mxu0
        %7073 = vmatprep.mubr.f32.mxu0 0.0
        %7074 = vmatmul.mubr.f32.gmra.mrb[0].mxu0 %v6934
        %v7075 = vpop.f32.mrb[0].mxu0
        %v7076 = vadd.f32 0.0, %v7075
        %v7077 = vpop.f32.mrb[0].mxu0
        %7078 = vmatprep.mubr.f32.mxu0 0.0
        %7079 = vmatmul.mubr.f32.gmra.mrb[0].mxu0 %v6937
        %v7080 = vpop.f32.mrb[0].mxu0
        %v7081 = vadd.f32 0.0, %v7080
        %v7082 = vpop.f32.mrb[0].mxu0
        %7083 = vmatprep.mubr.f32.mxu0 0.0
        %7084 = vmatmul.mubr.f32.gmra.mrb[0].mxu0 %v6940
        %v7085 = vpop.f32.mrb[0].mxu0
        %v7086 = vadd.f32 0.0, %v7085
        %v7087 = vpop.f32.mrb[0].mxu0
        %7088 = vmatprep.mubr.f32.mxu0 0.0
        %7089 = vmatmul.mubr.f32.gmra.mrb[0].mxu0 %v6943
        %v7090 = vpop.f32.mrb[0].mxu0
        %v7091 = vadd.f32 0.0, %v7090
        %v7092 = vpop.f32.mrb[0].mxu0
        %7093 = vmatprep.mubr.f32.mxu0 0.0
        %7094 = vmatmul.mubr.f32.gmra.mrb[0].mxu0 %v6946
        %v7095 = vpop.f32.mrb[0].mxu0
        %v7096 = vadd.f32 0.0, %v7095
        %v7097 = vpop.f32.mrb[0].mxu0
        %7098 = vmatprep.mubr.f32.mxu0 0.0
        %7099 = vmatmul.mubr.f32.gmra.mrb[0].mxu0 %v6949
        %v7100 = vpop.f32.mrb[0].mxu0
        %v7101 = vadd.f32 0.0, %v7100
        %v7102 = vpop.f32.mrb[0].mxu0
        %7103 = vmatprep.mubr.f32.mxu0 0.0
        %7104 = vmatmul.mubr.f32.gmra.mrb[0].mxu0 %v6952
        %v7105 = vpop.f32.mrb[0].mxu0
        %v7106 = vadd.f32 0.0, %v7105
        %v7107 = vpop.f32.mrb[0].mxu0
        %7108 = vmatprep.mubr.f32.mxu0 0.0
        %7109 = vmatmul.mubr.f32.gmra.mrb[0].mxu0 %v6955
        %v7110 = vpop.f32.mrb[0].mxu0
        %v7111 = vadd.f32 0.0, %v7110
        %v7112 = vpop.f32.mrb[0].mxu0
        %7113 = vmatprep.mubr.f32.mxu0 0.0
        %7114 = vmatmul.mubr.f32.gmra.mrb[0].mxu0 %v6958
        %v7115 = vpop.f32.mrb[0].mxu0
        %v7116 = vadd.f32 0.0, %v7115
        %v7117 = vpop.f32.mrb[0].mxu0
        %7118 = vmatprep.mubr.f32.mxu0 0.0
        %7119 = vmatmul.mubr.f32.gmra.mrb[0].mxu0 %v6961
        %v7120 = vpop.f32.mrb[0].mxu0
        %v7121 = vadd.f32 0.0, %v7120
        %v7122 = vpop.f32.mrb[0].mxu0
        %7123 = vmatprep.mubr.f32.mxu0 0.0
        %7124 = vmatmul.mubr.f32.gmra.mrb[0].mxu0 %v6964
        %v7125 = vpop.f32.mrb[0].mxu0
        %v7126 = vadd.f32 0.0, %v7125
        %v7127 = vpop.f32.mrb[0].mxu0
        %7128 = vmatprep.mubr.f32.mxu0 0.0
        %7129 = vmatmul.mubr.f32.gmra.mrb[0].mxu0 %v6967
        %v7130 = vpop.f32.mrb[0].mxu0
        %v7131 = vadd.f32 0.0, %v7130
        %v7132 = vpop.f32.mrb[0].mxu0
        %7133 = vmatprep.mubr.f32.mxu0 0.0
        %7134 = vmatmul.mubr.f32.gmra.mrb[0].mxu0 %v6970
        %v7135 = vpop.f32.mrb[0].mxu0
        %v7136 = vadd.f32 0.0, %v7135
        %v7137 = vpop.f32.mrb[0].mxu0
        %7138 = vmatprep.mubr.f32.mxu0 0.0
        %7139 = vmatmul.mubr.f32.gmra.mrb[0].mxu0 %v6973
        %v7140 = vpop.f32.mrb[0].mxu0
        %v7141 = vadd.f32 0.0, %v7140
        %v7142 = vpop.f32.mrb[0].mxu0
        %7143 = vmatprep.mubr.f32.mxu0 0.0
        %7144 = vmatmul.mubr.f32.gmra.mrb[0].mxu0 %v6976
        %v7145 = vpop.f32.mrb[0].mxu0
        %v7146 = vadd.f32 0.0, %v7145
        %v7147 = vpop.f32.mrb[0].mxu0
        %7148 = vmatprep.mubr.f32.mxu0 0.0
        %7149 = vmatmul.mubr.f32.gmra.mrb[0].mxu0 %v6979
        %v7150 = vpop.f32.mrb[0].mxu0
        %v7151 = vadd.f32 0.0, %v7150
        %v7152 = vpop.f32.mrb[0].mxu0
        %7153 = vmatprep.mubr.f32.mxu0 0.0
        %7154 = vmatmul.mubr.f32.gmra.mrb[0].mxu0 %v6982
        %v7155 = vpop.f32.mrb[0].mxu0
        %v7156 = vadd.f32 0.0, %v7155
        %v7157 = vpop.f32.mrb[0].mxu0
        %7158 = vmatprep.mubr.f32.mxu0 0.0
        %7159 = vmatmul.mubr.f32.gmra.mrb[0].mxu0 %v6985
        %v7160 = vpop.f32.mrb[0].mxu0
        %v7161 = vadd.f32 0.0, %v7160
        %v7162 = vpop.f32.mrb[0].mxu0
        %7163 = vmatprep.mubr.f32.mxu0 0.0
        %7164 = vmatmul.mubr.f32.gmra.mrb[0].mxu0 %v6988
        %v7165 = vpop.f32.mrb[0].mxu0
        %v7166 = vadd.f32 0.0, %v7165
        %v7167 = vpop.f32.mrb[0].mxu0
        %7168 = vmatprep.mubr.f32.mxu0 0.0
        %7169 = vmatmul.mubr.f32.gmra.mrb[0].mxu0 %v6991
        %v7170 = vpop.f32.mrb[0].mxu0
        %v7171 = vadd.f32 0.0, %v7170
        %v7172 = vpop.f32.mrb[0].mxu0
        %7173 = vmatprep.mubr.f32.mxu0 0.0
        %7174 = vmatmul.mubr.f32.gmra.mrb[0].mxu0 %v6994
        %v7175 = vpop.f32.mrb[0].mxu0
        %v7176 = vadd.f32 0.0, %v7175
        %v7177 = vpop.f32.mrb[0].mxu0
        %7178 = vmatprep.mubr.f32.mxu0 0.0
        %7179 = vmatmul.mubr.f32.gmra.mrb[0].mxu0 %v6997
        %v7180 = vpop.f32.mrb[0].mxu0
        %v7181 = vadd.f32 0.0, %v7180
        %v7182 = vpop.f32.mrb[0].mxu0
        %7183 = vdwg.mxu0
        %v7184 = vadd.f32 %v6871, %v7066
        %v7185 = vadd.f32 %v6872, %v7071
        %v7186 = vadd.f32 %v6873, %v7076
        %v7187 = vadd.f32 %v6874, %v7081
        %v7188 = vadd.f32 %v6875, %v7086
        %v7189 = vadd.f32 %v6876, %v7091
        %v7190 = vadd.f32 %v6877, %v7096
        %v7191 = vadd.f32 %v6878, %v7101
        %v7192 = vadd.f32 %v6879, %v7106
        %v7193 = vadd.f32 %v6880, %v7111
        %v7194 = vadd.f32 %v6881, %v7116
        %v7195 = vadd.f32 %v6882, %v7121
        %v7196 = vadd.f32 %v6883, %v7126
        %v7197 = vadd.f32 %v6884, %v7131
        %v7198 = vadd.f32 %v6885, %v7136
        %v7199 = vadd.f32 %v6886, %v7141
        %v7200 = vadd.f32 %v6887, %v7146
        %v7201 = vadd.f32 %v6888, %v7151
        %v7202 = vadd.f32 %v6889, %v7156
        %v7203 = vadd.f32 %v6890, %v7161
        %v7204 = vadd.f32 %v6891, %v7166
        %v7205 = vadd.f32 %v6892, %v7171
        %v7206 = vadd.f32 %v6893, %v7176
        %v7207 = vadd.f32 %v6894, %v7181
        %v7208 = vld [vmem:[%s6] sm:$0x1]
        %v7210 = vlaneseq
        %v7211 = vshrl.u32 %v7210, 7
        %v7212 = vsub.s32 0, %v7211
        %v7213 = vrot.slane %v7208, %v7212
        %v7215 = vadd.f32 %v7184, %v7213
        %v7216 = vadd.f32 %v7185, %v7213
        %v7217 = vadd.f32 %v7186, %v7213
        %v7218 = vadd.f32 %v7187, %v7213
        %v7219 = vadd.f32 %v7188, %v7213
        %v7220 = vadd.f32 %v7189, %v7213
        %v7221 = vadd.f32 %v7190, %v7213
        %v7222 = vadd.f32 %v7191, %v7213
        %v7223 = vadd.f32 %v7192, %v7213
        %v7224 = vadd.f32 %v7193, %v7213
        %v7225 = vadd.f32 %v7194, %v7213
        %v7226 = vadd.f32 %v7195, %v7213
        %v7227 = vadd.f32 %v7196, %v7213
        %v7228 = vadd.f32 %v7197, %v7213
        %v7229 = vadd.f32 %v7198, %v7213
        %v7230 = vadd.f32 %v7199, %v7213
        %v7231 = vadd.f32 %v7200, %v7213
        %v7232 = vadd.f32 %v7201, %v7213
        %v7233 = vadd.f32 %v7202, %v7213
        %v7234 = vadd.f32 %v7203, %v7213
        %v7235 = vadd.f32 %v7204, %v7213
        %v7236 = vadd.f32 %v7205, %v7213
        %v7237 = vadd.f32 %v7206, %v7213
        %v7238 = vadd.f32 %v7207, %v7213
        %vm7239 = vcmp.gt.f32.partialorder %v7215, 0.0
        %vm7240 = vcmp.gt.f32.partialorder %v7216, 0.0
        %vm7241 = vcmp.gt.f32.partialorder %v7217, 0.0
        %vm7242 = vcmp.gt.f32.partialorder %v7218, 0.0
        %vm7243 = vcmp.gt.f32.partialorder %v7219, 0.0
        %vm7244 = vcmp.gt.f32.partialorder %v7220, 0.0
        %vm7245 = vcmp.gt.f32.partialorder %v7221, 0.0
        %vm7246 = vcmp.gt.f32.partialorder %v7222, 0.0
        %vm7247 = vcmp.gt.f32.partialorder %v7223, 0.0
        %vm7248 = vcmp.gt.f32.partialorder %v7224, 0.0
        %vm7249 = vcmp.gt.f32.partialorder %v7225, 0.0
        %vm7250 = vcmp.gt.f32.partialorder %v7226, 0.0
        %vm7251 = vcmp.gt.f32.partialorder %v7227, 0.0
        %vm7252 = vcmp.gt.f32.partialorder %v7228, 0.0
        %vm7253 = vcmp.gt.f32.partialorder %v7229, 0.0
        %vm7254 = vcmp.gt.f32.partialorder %v7230, 0.0
        %vm7255 = vcmp.gt.f32.partialorder %v7231, 0.0
        %vm7256 = vcmp.gt.f32.partialorder %v7232, 0.0
        %vm7257 = vcmp.gt.f32.partialorder %v7233, 0.0
        %vm7258 = vcmp.gt.f32.partialorder %v7234, 0.0
        %vm7259 = vcmp.gt.f32.partialorder %v7235, 0.0
        %vm7260 = vcmp.gt.f32.partialorder %v7236, 0.0
        %vm7261 = vcmp.gt.f32.partialorder %v7237, 0.0
        %vm7262 = vcmp.gt.f32.partialorder %v7238, 0.0
        %v7263 = vmul.f32 %v7215, 1.442695
        %v7264 = vpow.pop %v7263
        %v7265 = vmul.f32 %v7216, 1.442695
        %v7266 = vpow.pop %v7265
        %v7267 = vmul.f32 %v7217, 1.442695
        %v7268 = vpow.pop %v7267
        %v7269 = vmul.f32 %v7218, 1.442695
        %v7270 = vpow.pop %v7269
        %v7271 = vmul.f32 %v7219, 1.442695
        %v7272 = vpow.pop %v7271
        %v7273 = vmul.f32 %v7220, 1.442695
        %v7274 = vpow.pop %v7273
        %v7275 = vmul.f32 %v7221, 1.442695
        %v7276 = vpow.pop %v7275
        %v7277 = vmul.f32 %v7222, 1.442695
        %v7278 = vpow.pop %v7277
        %v7279 = vmul.f32 %v7223, 1.442695
        %v7280 = vpow.pop %v7279
        %v7281 = vmul.f32 %v7224, 1.442695
        %v7282 = vpow.pop %v7281
        %v7283 = vmul.f32 %v7225, 1.442695
        %v7284 = vpow.pop %v7283
        %v7285 = vmul.f32 %v7226, 1.442695
        %v7286 = vpow.pop %v7285
        %v7287 = vmul.f32 %v7227, 1.442695
        %v7288 = vpow.pop %v7287
        %v7289 = vmul.f32 %v7228, 1.442695
        %v7290 = vpow.pop %v7289
        %v7291 = vmul.f32 %v7229, 1.442695
        %v7292 = vpow.pop %v7291
        %v7293 = vmul.f32 %v7230, 1.442695
        %v7294 = vpow.pop %v7293
        %v7295 = vmul.f32 %v7231, 1.442695
        %v7296 = vpow.pop %v7295
        %v7297 = vmul.f32 %v7232, 1.442695
        %v7298 = vpow.pop %v7297
        %v7299 = vmul.f32 %v7233, 1.442695
        %v7300 = vpow.pop %v7299
        %v7301 = vmul.f32 %v7234, 1.442695
        %v7302 = vpow.pop %v7301
        %v7303 = vmul.f32 %v7235, 1.442695
        %v7304 = vpow.pop %v7303
        %v7305 = vmul.f32 %v7236, 1.442695
        %v7306 = vpow.pop %v7305
        %v7307 = vmul.f32 %v7237, 1.442695
        %v7308 = vpow.pop %v7307
        %v7309 = vmul.f32 %v7238, 1.442695
        %v7310 = vpow.pop %v7309
        %v7311 = vsub.f32 %v7264, 1.0
        %v7312 = vsub.f32 %v7266, 1.0
        %v7313 = vsub.f32 %v7268, 1.0
        %v7314 = vsub.f32 %v7270, 1.0
        %v7315 = vsub.f32 %v7272, 1.0
        %v7316 = vsub.f32 %v7274, 1.0
        %v7317 = vsub.f32 %v7276, 1.0
        %v7318 = vsub.f32 %v7278, 1.0
        %v7319 = vsub.f32 %v7280, 1.0
        %v7320 = vsub.f32 %v7282, 1.0
        %v7321 = vsub.f32 %v7284, 1.0
        %v7322 = vsub.f32 %v7286, 1.0
        %v7323 = vsub.f32 %v7288, 1.0
        %v7324 = vsub.f32 %v7290, 1.0
        %v7325 = vsub.f32 %v7292, 1.0
        %v7326 = vsub.f32 %v7294, 1.0
        %v7327 = vsub.f32 %v7296, 1.0
        %v7328 = vsub.f32 %v7298, 1.0
        %v7329 = vsub.f32 %v7300, 1.0
        %v7330 = vsub.f32 %v7302, 1.0
        %v7331 = vsub.f32 %v7304, 1.0
        %v7332 = vsub.f32 %v7306, 1.0
        %v7333 = vsub.f32 %v7308, 1.0
        %v7334 = vsub.f32 %v7310, 1.0
        %v7335 = vsel %vm7239, %v7215, %v7311
        %v7336 = vsel %vm7240, %v7216, %v7312
        %v7337 = vsel %vm7241, %v7217, %v7313
        %v7338 = vsel %vm7242, %v7218, %v7314
        %v7339 = vsel %vm7243, %v7219, %v7315
        %v7340 = vsel %vm7244, %v7220, %v7316
        %v7341 = vsel %vm7245, %v7221, %v7317
        %v7342 = vsel %vm7246, %v7222, %v7318
        %v7343 = vsel %vm7247, %v7223, %v7319
        %v7344 = vsel %vm7248, %v7224, %v7320
        %v7345 = vsel %vm7249, %v7225, %v7321
        %v7346 = vsel %vm7250, %v7226, %v7322
        %v7347 = vsel %vm7251, %v7227, %v7323
        %v7348 = vsel %vm7252, %v7228, %v7324
        %v7349 = vsel %vm7253, %v7229, %v7325
        %v7350 = vsel %vm7254, %v7230, %v7326
        %v7351 = vsel %vm7255, %v7231, %v7327
        %v7352 = vsel %vm7256, %v7232, %v7328
        %v7353 = vsel %vm7257, %v7233, %v7329
        %v7354 = vsel %vm7258, %v7234, %v7330
        %v7355 = vsel %vm7259, %v7235, %v7331
        %v7356 = vsel %vm7260, %v7236, %v7332
        %v7357 = vsel %vm7261, %v7237, %v7333
        %v7358 = vsel %vm7262, %v7238, %v7334
        %vm7359 = vcmask 818176
        %7360 = vst.msk [vmem:[#allocation5] sm:$0xff] %vm7359, %v7335
        %7361 = vst.msk [vmem:[#allocation5 + $0x8] sm:$0xff] %vm7359, %v7336
        %7362 = vst.msk [vmem:[#allocation5 + $0x10] sm:$0xff] %vm7359, %v7337
        %7363 = vst.msk [vmem:[#allocation5 + $0x18] sm:$0xff] %vm7359, %v7338
        %7364 = vst.msk [vmem:[#allocation5 + $0x20] sm:$0xff] %vm7359, %v7339
        %7365 = vst.msk [vmem:[#allocation5 + $0x28] sm:$0xff] %vm7359, %v7340
        %7366 = vst.msk [vmem:[#allocation5 + $0x30] sm:$0xff] %vm7359, %v7341
        %7367 = vst.msk [vmem:[#allocation5 + $0x38] sm:$0xff] %vm7359, %v7342
        %7368 = vst.msk [vmem:[#allocation5 + $0x40] sm:$0xff] %vm7359, %v7343
        %7369 = vst.msk [vmem:[#allocation5 + $0x48] sm:$0xff] %vm7359, %v7344
        %7370 = vst.msk [vmem:[#allocation5 + $0x50] sm:$0xff] %vm7359, %v7345
        %7371 = vst.msk [vmem:[#allocation5 + $0x58] sm:$0xff] %vm7359, %v7346
        %7372 = vst.msk [vmem:[#allocation5 + $0x60] sm:$0xff] %vm7359, %v7347
        %7373 = vst.msk [vmem:[#allocation5 + $0x68] sm:$0xff] %vm7359, %v7348
        %7374 = vst.msk [vmem:[#allocation5 + $0x70] sm:$0xff] %vm7359, %v7349
        %7375 = vst.msk [vmem:[#allocation5 + $0x78] sm:$0xff] %vm7359, %v7350
        %7376 = vst.msk [vmem:[#allocation5 + $0x80] sm:$0xff] %vm7359, %v7351
        %7377 = vst.msk [vmem:[#allocation5 + $0x88] sm:$0xff] %vm7359, %v7352
        %7378 = vst.msk [vmem:[#allocation5 + $0x90] sm:$0xff] %vm7359, %v7353
        %7379 = vst.msk [vmem:[#allocation5 + $0x98] sm:$0xff] %vm7359, %v7354
        %7380 = vst.msk [vmem:[#allocation5 + $0xa0] sm:$0xff] %vm7359, %v7355
        %7381 = vst.msk [vmem:[#allocation5 + $0xa8] sm:$0xff] %vm7359, %v7356
        %7382 = vst.msk [vmem:[#allocation5 + $0xb0] sm:$0xff] %vm7359, %v7357
        %vm7383 = vcmask 813056
        %7384 = vst.msk [vmem:[#allocation5 + $0xb8] sm:$0x7] %vm7383, %v7358
        %v7385 = vld [vmem:[#allocation5] ss:$2 sm:$0xff]
        %v7386 = vld [vmem:[%s5525] ss:$2 sm:$0xff]
        %v7387 = vld [vmem:[%s5527] ss:$2 sm:$0xff]
        %v7388 = vld [vmem:[%s5529] ss:$2 sm:$0xff]
        %v7389 = vld [vmem:[%s5531] ss:$2 sm:$0xff]
        %v7390 = vld [vmem:[%s5533] ss:$2 sm:$0xff]
        %v7391 = vld [vmem:[%s5535] ss:$2 sm:$0xff]
        %v7392 = vld [vmem:[%s5537] ss:$2 sm:$0xff]
        %v7393 = vld [vmem:[%s5539] ss:$2 sm:$0xff]
        %v7394 = vld [vmem:[%s5541] ss:$2 sm:$0xff]
        %v7395 = vld [vmem:[%s5543] ss:$2 sm:$0xff]
        %v7396 = vld [vmem:[%s5545] ss:$2 sm:$0x1f]
        %v7397 = vld [vmem:[%s5571] ss:$2 sm:$0xff]
        %v7398 = vld [vmem:[%s5573] ss:$2 sm:$0xff]
        %v7399 = vld [vmem:[%s5575] ss:$2 sm:$0xff]
        %v7400 = vld [vmem:[%s5577] ss:$2 sm:$0xff]
        %v7401 = vld [vmem:[%s5579] ss:$2 sm:$0xff]
        %v7402 = vld [vmem:[%s5581] ss:$2 sm:$0xff]
        %v7403 = vld [vmem:[%s5583] ss:$2 sm:$0xff]
        %v7404 = vld [vmem:[%s5585] ss:$2 sm:$0xff]
        %v7405 = vld [vmem:[%s5587] ss:$2 sm:$0xff]
        %v7406 = vld [vmem:[%s5589] ss:$2 sm:$0xff]
        %v7407 = vld [vmem:[%s5591] ss:$2 sm:$0xff]
        %v7408 = vld [vmem:[%s5593] ss:$2 sm:$0x1f]
        %v7409 = vadd.f32 %v7385, %v7397
        %v7410 = vadd.f32 %v7386, %v7398
        %v7411 = vadd.f32 %v7387, %v7399
        %v7412 = vadd.f32 %v7388, %v7400
        %v7413 = vadd.f32 %v7389, %v7401
        %v7414 = vadd.f32 %v7390, %v7402
        %v7415 = vadd.f32 %v7391, %v7403
        %v7416 = vadd.f32 %v7392, %v7404
        %v7417 = vadd.f32 %v7393, %v7405
        %v7418 = vadd.f32 %v7394, %v7406
        %v7419 = vadd.f32 %v7395, %v7407
        %v7420 = vadd.f32 %v7396, %v7408
        %v7421 = vmul.f32 %v7409, 0.5
        %v7422 = vmul.f32 %v7410, 0.5
        %v7423 = vmul.f32 %v7411, 0.5
        %v7424 = vmul.f32 %v7412, 0.5
        %v7425 = vmul.f32 %v7413, 0.5
        %v7426 = vmul.f32 %v7414, 0.5
        %v7427 = vmul.f32 %v7415, 0.5
        %v7428 = vmul.f32 %v7416, 0.5
        %v7429 = vmul.f32 %v7417, 0.5
        %v7430 = vmul.f32 %v7418, 0.5
        %v7431 = vmul.f32 %v7419, 0.5
        %v7432 = vmul.f32 %v7420, 0.5
        %7433 = vst.msk [vmem:[#allocation4 + $0x2] sm:$0xff] %vm7359, %v7421
        %7434 = vst.msk [vmem:[#allocation4 + $0xa] sm:$0xff] %vm7359, %v7422
        %7435 = vst.msk [vmem:[#allocation4 + $0x12] sm:$0xff] %vm7359, %v7423
        %7436 = vst.msk [vmem:[#allocation4 + $0x1a] sm:$0xff] %vm7359, %v7424
        %7437 = vst.msk [vmem:[#allocation4 + $0x22] sm:$0xff] %vm7359, %v7425
        %7438 = vst.msk [vmem:[#allocation4 + $0x2a] sm:$0xff] %vm7359, %v7426
        %7439 = vst.msk [vmem:[#allocation4 + $0x32] sm:$0xff] %vm7359, %v7427
        %7440 = vst.msk [vmem:[#allocation4 + $0x3a] sm:$0xff] %vm7359, %v7428
        %7441 = vst.msk [vmem:[#allocation4 + $0x42] sm:$0xff] %vm7359, %v7429
        %7442 = vst.msk [vmem:[#allocation4 + $0x4a] sm:$0xff] %vm7359, %v7430
        %7443 = vst.msk [vmem:[#allocation4 + $0x52] sm:$0xff] %vm7359, %v7431
        %vm7444 = vcmask 815104
        %7445 = vst.msk [vmem:[#allocation4 + $0x5a] sm:$0x1f] %vm7444, %v7432
        %v7446 = vld [vmem:[#allocation4] sm:$0xff]
        %v7447 = vld [vmem:[#allocation4 + $0x8] sm:$0xff]
        %v7448 = vld [vmem:[#allocation4 + $0x10] sm:$0xff]
        %v7449 = vld [vmem:[#allocation4 + $0x18] sm:$0xff]
        %v7450 = vld [vmem:[#allocation4 + $0x20] sm:$0xff]
        %v7451 = vld [vmem:[#allocation4 + $0x28] sm:$0xff]
        %v7452 = vld [vmem:[#allocation4 + $0x30] sm:$0xff]
        %v7453 = vld [vmem:[#allocation4 + $0x38] sm:$0xff]
        %v7454 = vld [vmem:[#allocation4 + $0x40] sm:$0xff]
        %v7455 = vld [vmem:[#allocation4 + $0x48] sm:$0xff]
        %v7456 = vld [vmem:[#allocation4 + $0x50] sm:$0xff]
        %v7457 = vld [vmem:[#allocation4 + $0x58] sm:$0x1f]
        %v7458 = vld [vmem:[%s7] sm:$0xff]
        %v7459 = vld [vmem:[%s7 + $0x8] sm:$0xff]
        %v7460 = vld [vmem:[%s7 + $0x10] sm:$0xff]
        %v7461 = vld [vmem:[%s7 + $0x18] sm:$0xff]
        %v7462 = vld [vmem:[%s7 + $0x20] sm:$0xff]
        %v7463 = vld [vmem:[%s7 + $0x28] sm:$0xff]
        %v7464 = vld [vmem:[%s7 + $0x30] sm:$0xff]
        %v7465 = vld [vmem:[%s7 + $0x38] sm:$0xff]
        %v7466 = vld [vmem:[%s7 + $0x40] sm:$0xff]
        %v7467 = vld [vmem:[%s7 + $0x48] sm:$0xff]
        %v7468 = vld [vmem:[%s7 + $0x50] sm:$0xff]
        %v7469 = vld [vmem:[%s7 + $0x58] sm:$0xff]
        %v7470 = vld [vmem:[%s7 + $0x60] sm:$0xff]
        %v7471 = vld [vmem:[%s7 + $0x68] sm:$0xff]
        %v7472 = vld [vmem:[%s7 + $0x70] sm:$0xff]
        %v7473 = vld [vmem:[%s7 + $0x78] sm:$0xff]
        %v7474 = vld [vmem:[%s7 + $0x80] sm:$0xff]
        %v7475 = vld [vmem:[%s7 + $0x88] sm:$0xff]
        %v7476 = vld [vmem:[%s7 + $0x90] sm:$0xff]
        %v7477 = vld [vmem:[%s7 + $0x98] sm:$0xff]
        %v7478 = vld [vmem:[%s7 + $0xa0] sm:$0xff]
        %v7479 = vld [vmem:[%s7 + $0xa8] sm:$0xff]
        %v7480 = vld [vmem:[%s7 + $0xb0] sm:$0xff]
        %v7481 = vld [vmem:[%s7 + $0xb8] sm:$0xff]
        %v7482 = vld [vmem:[%s7 + $0xc0] sm:$0xff]
        %v7483 = vld [vmem:[%s7 + $0xc8] sm:$0xff]
        %v7484 = vld [vmem:[#allocation4 + $0x1] sm:$0xff]
        %v7485 = vld [vmem:[#allocation4 + $0x9] sm:$0xff]
        %v7486 = vld [vmem:[#allocation4 + $0x11] sm:$0xff]
        %v7487 = vld [vmem:[#allocation4 + $0x19] sm:$0xff]
        %v7488 = vld [vmem:[#allocation4 + $0x21] sm:$0xff]
        %v7489 = vld [vmem:[#allocation4 + $0x29] sm:$0xff]
        %v7490 = vld [vmem:[#allocation4 + $0x31] sm:$0xff]
        %v7491 = vld [vmem:[#allocation4 + $0x39] sm:$0xff]
        %v7492 = vld [vmem:[#allocation4 + $0x41] sm:$0xff]
        %v7493 = vld [vmem:[#allocation4 + $0x49] sm:$0xff]
        %v7494 = vld [vmem:[#allocation4 + $0x51] sm:$0xff]
        %v7495 = vld [vmem:[#allocation4 + $0x59] sm:$0x1f]
        %s7496 = scalar_lea.vmem %s7, 208
        %v7497 = vld [vmem:[%s7496] sm:$0xff]
        %v7498 = vld [vmem:[%s7496 + $0x8] sm:$0xff]
        %v7499 = vld [vmem:[%s7496 + $0x10] sm:$0xff]
        %v7500 = vld [vmem:[%s7496 + $0x18] sm:$0xff]
        %v7501 = vld [vmem:[%s7496 + $0x20] sm:$0xff]
        %v7502 = vld [vmem:[%s7496 + $0x28] sm:$0xff]
        %v7503 = vld [vmem:[%s7496 + $0x30] sm:$0xff]
        %v7504 = vld [vmem:[%s7496 + $0x38] sm:$0xff]
        %v7505 = vld [vmem:[%s7496 + $0x40] sm:$0xff]
        %v7506 = vld [vmem:[%s7496 + $0x48] sm:$0xff]
        %v7507 = vld [vmem:[%s7496 + $0x50] sm:$0xff]
        %v7508 = vld [vmem:[%s7496 + $0x58] sm:$0xff]
        %v7509 = vld [vmem:[%s7496 + $0x60] sm:$0xff]
        %v7510 = vld [vmem:[%s7496 + $0x68] sm:$0xff]
        %v7511 = vld [vmem:[%s7496 + $0x70] sm:$0xff]
        %v7512 = vld [vmem:[%s7496 + $0x78] sm:$0xff]
        %v7513 = vld [vmem:[%s7496 + $0x80] sm:$0xff]
        %v7514 = vld [vmem:[%s7496 + $0x88] sm:$0xff]
        %v7515 = vld [vmem:[%s7496 + $0x90] sm:$0xff]
        %v7516 = vld [vmem:[%s7496 + $0x98] sm:$0xff]
        %v7517 = vld [vmem:[%s7496 + $0xa0] sm:$0xff]
        %v7518 = vld [vmem:[%s7496 + $0xa8] sm:$0xff]
        %v7519 = vld [vmem:[%s7496 + $0xb0] sm:$0xff]
        %v7520 = vld [vmem:[%s7496 + $0xb8] sm:$0xff]
        %v7521 = vld [vmem:[%s7496 + $0xc0] sm:$0xff]
        %v7522 = vld [vmem:[%s7496 + $0xc8] sm:$0xff]
        %v7524 = vsel %vm466, %v7484, 0
        %v7527 = vsel %vm466, %v7485, 0
        %v7530 = vsel %vm466, %v7486, 0
        %v7533 = vsel %vm466, %v7487, 0
        %v7536 = vsel %vm466, %v7488, 0
        %v7539 = vsel %vm466, %v7489, 0
        %v7542 = vsel %vm466, %v7490, 0
        %v7545 = vsel %vm466, %v7491, 0
        %v7548 = vsel %vm466, %v7492, 0
        %v7551 = vsel %vm466, %v7493, 0
        %v7554 = vsel %vm466, %v7494, 0
        %v7557 = vsel %vm466, %v7495, 0
        %7559 = vmatprep.subr.mxu0 %v7498
        %7560 = vmatpush1.msra.mxu0 %v7497
        %7561 = vmatprep.subr.mxu0 %v7500
        %7562 = vmatpush1.msra.mxu0 %v7499
        %7563 = vmatprep.subr.mxu0 %v7502
        %7564 = vmatpush1.msra.mxu0 %v7501
        %7565 = vmatprep.subr.mxu0 %v7504
        %7566 = vmatpush1.msra.mxu0 %v7503
        %7567 = vmatprep.subr.mxu0 %v7506
        %7568 = vmatpush1.msra.mxu0 %v7505
        %7569 = vmatprep.subr.mxu0 %v7508
        %7570 = vmatpush1.msra.mxu0 %v7507
        %7571 = vmatprep.subr.mxu0 %v7510
        %7572 = vmatpush1.msra.mxu0 %v7509
        %7573 = vmatprep.subr.mxu0 %v7512
        %7574 = vmatpush1.msra.mxu0 %v7511
        %7575 = vmatprep.subr.mxu0 %v7514
        %7576 = vmatpush1.msra.mxu0 %v7513
        %7577 = vmatprep.subr.mxu0 %v7516
        %7578 = vmatpush1.msra.mxu0 %v7515
        %7579 = vmatprep.subr.mxu0 %v7518
        %7580 = vmatpush1.msra.mxu0 %v7517
        %7581 = vmatprep.subr.mxu0 %v7520
        %7582 = vmatpush1.msra.mxu0 %v7519
        %7583 = vmatprep.subr.mxu0 %v7522
        %7584 = vmatpush1.msra.mxu0 %v7521
        %7585 = vmatprep.subr.mxu0 0.0
        %7586 = vmatpush1.msra.mxu0 0.0
        %7587 = vmatprep.subr.mxu0 0.0
        %7588 = vmatpush1.msra.mxu0 0.0
        %7589 = vmatprep.subr.mxu0 0.0
        %7590 = vmatpush1.msra.mxu0 0.0
        %7591 = vmatprep.subr.mxu0 0.0
        %7592 = vmatpush1.msra.mxu0 0.0
        %7593 = vmatprep.subr.mxu0 0.0
        %7594 = vmatpush1.msra.mxu0 0.0
        %7595 = vmatprep.subr.mxu0 0.0
        %7596 = vmatpush1.msra.mxu0 0.0
        %7597 = vmatprep.subr.mxu0 0.0
        %7598 = vmatpush1.msra.mxu0 0.0
        %7599 = vmatprep.subr.mxu0 0.0
        %7600 = vmatpush1.msra.mxu0 0.0
        %7601 = vmatprep.subr.mxu0 0.0
        %7602 = vmatpush1.msra.mxu0 0.0
        %7603 = vmatprep.subr.mxu0 0.0
        %7604 = vmatpush1.msra.mxu0 0.0
        %7605 = vmatprep.subr.mxu0 0.0
        %7606 = vmatpush1.msra.mxu0 0.0
        %7607 = vmatprep.subr.mxu0 0.0
        %7608 = vmatpush1.msra.mxu0 0.0
        %7609 = vmatprep.subr.mxu0 0.0
        %7610 = vmatpush1.msra.mxu0 0.0
        %7611 = vmatprep.subr.mxu0 0.0
        %7612 = vmatpush1.msra.mxu0 0.0
        %7613 = vmatprep.subr.mxu0 0.0
        %7614 = vmatpush1.msra.mxu0 0.0
        %7615 = vmatprep.subr.mxu0 0.0
        %7616 = vmatpush1.msra.mxu0 0.0
        %7617 = vmatprep.subr.mxu0 0.0
        %7618 = vmatpush1.msra.mxu0 0.0
        %7619 = vmatprep.subr.mxu0 0.0
        %7620 = vmatpush1.msra.mxu0 0.0
        %7621 = vmatprep.subr.mxu0 0.0
        %7622 = vmatpush1.msra.mxu0 0.0
        %7623 = vmatprep.mubr.f32.mxu0 0.0
        %7624 = vmatmul.mubr.f32.gmra.mrb[0].mxu0 %v7524
        %v7625 = vpop.f32.mrb[0].mxu0
        %v7626 = vadd.f32 0.0, %v7625
        %v7627 = vpop.f32.mrb[0].mxu0
        %v7628 = vadd.f32 0.0, %v7627
        %7629 = vmatprep.mubr.f32.mxu0 0.0
        %7630 = vmatmul.mubr.f32.gmra.mrb[0].mxu0 %v7527
        %v7631 = vpop.f32.mrb[0].mxu0
        %v7632 = vadd.f32 0.0, %v7631
        %v7633 = vpop.f32.mrb[0].mxu0
        %v7634 = vadd.f32 0.0, %v7633
        %7635 = vmatprep.mubr.f32.mxu0 0.0
        %7636 = vmatmul.mubr.f32.gmra.mrb[0].mxu0 %v7530
        %v7637 = vpop.f32.mrb[0].mxu0
        %v7638 = vadd.f32 0.0, %v7637
        %v7639 = vpop.f32.mrb[0].mxu0
        %v7640 = vadd.f32 0.0, %v7639
        %7641 = vmatprep.mubr.f32.mxu0 0.0
        %7642 = vmatmul.mubr.f32.gmra.mrb[0].mxu0 %v7533
        %v7643 = vpop.f32.mrb[0].mxu0
        %v7644 = vadd.f32 0.0, %v7643
        %v7645 = vpop.f32.mrb[0].mxu0
        %v7646 = vadd.f32 0.0, %v7645
        %7647 = vmatprep.mubr.f32.mxu0 0.0
        %7648 = vmatmul.mubr.f32.gmra.mrb[0].mxu0 %v7536
        %v7649 = vpop.f32.mrb[0].mxu0
        %v7650 = vadd.f32 0.0, %v7649
        %v7651 = vpop.f32.mrb[0].mxu0
        %v7652 = vadd.f32 0.0, %v7651
        %7653 = vmatprep.mubr.f32.mxu0 0.0
        %7654 = vmatmul.mubr.f32.gmra.mrb[0].mxu0 %v7539
        %v7655 = vpop.f32.mrb[0].mxu0
        %v7656 = vadd.f32 0.0, %v7655
        %v7657 = vpop.f32.mrb[0].mxu0
        %v7658 = vadd.f32 0.0, %v7657
        %7659 = vmatprep.mubr.f32.mxu0 0.0
        %7660 = vmatmul.mubr.f32.gmra.mrb[0].mxu0 %v7542
        %v7661 = vpop.f32.mrb[0].mxu0
        %v7662 = vadd.f32 0.0, %v7661
        %v7663 = vpop.f32.mrb[0].mxu0
        %v7664 = vadd.f32 0.0, %v7663
        %7665 = vmatprep.mubr.f32.mxu0 0.0
        %7666 = vmatmul.mubr.f32.gmra.mrb[0].mxu0 %v7545
        %v7667 = vpop.f32.mrb[0].mxu0
        %v7668 = vadd.f32 0.0, %v7667
        %v7669 = vpop.f32.mrb[0].mxu0
        %v7670 = vadd.f32 0.0, %v7669
        %7671 = vmatprep.mubr.f32.mxu0 0.0
        %7672 = vmatmul.mubr.f32.gmra.mrb[0].mxu0 %v7548
        %v7673 = vpop.f32.mrb[0].mxu0
        %v7674 = vadd.f32 0.0, %v7673
        %v7675 = vpop.f32.mrb[0].mxu0
        %v7676 = vadd.f32 0.0, %v7675
        %7677 = vmatprep.mubr.f32.mxu0 0.0
        %7678 = vmatmul.mubr.f32.gmra.mrb[0].mxu0 %v7551
        %v7679 = vpop.f32.mrb[0].mxu0
        %v7680 = vadd.f32 0.0, %v7679
        %v7681 = vpop.f32.mrb[0].mxu0
        %v7682 = vadd.f32 0.0, %v7681
        %7683 = vmatprep.mubr.f32.mxu0 0.0
        %7684 = vmatmul.mubr.f32.gmra.mrb[0].mxu0 %v7554
        %v7685 = vpop.f32.mrb[0].mxu0
        %v7686 = vadd.f32 0.0, %v7685
        %v7687 = vpop.f32.mrb[0].mxu0
        %v7688 = vadd.f32 0.0, %v7687
        %7689 = vmatprep.mubr.f32.mxu0 0.0
        %7690 = vmatmul.mubr.f32.gmra.mrb[0].mxu0 %v7557
        %v7691 = vpop.f32.mrb[0].mxu0
        %v7692 = vadd.f32 0.0, %v7691
        %v7693 = vpop.f32.mrb[0].mxu0
        %v7694 = vadd.f32 0.0, %v7693
        %7695 = vdwg.mxu0
        %v7697 = vsel %vm466, %v7446, 0
        %v7700 = vsel %vm466, %v7447, 0
        %v7703 = vsel %vm466, %v7448, 0
        %v7706 = vsel %vm466, %v7449, 0
        %v7709 = vsel %vm466, %v7450, 0
        %v7712 = vsel %vm466, %v7451, 0
        %v7715 = vsel %vm466, %v7452, 0
        %v7718 = vsel %vm466, %v7453, 0
        %v7721 = vsel %vm466, %v7454, 0
        %v7724 = vsel %vm466, %v7455, 0
        %v7727 = vsel %vm466, %v7456, 0
        %v7730 = vsel %vm466, %v7457, 0
        %7732 = vmatprep.subr.mxu0 %v7459
        %7733 = vmatpush1.msra.mxu0 %v7458
        %7734 = vmatprep.subr.mxu0 %v7461
        %7735 = vmatpush1.msra.mxu0 %v7460
        %7736 = vmatprep.subr.mxu0 %v7463
        %7737 = vmatpush1.msra.mxu0 %v7462
        %7738 = vmatprep.subr.mxu0 %v7465
        %7739 = vmatpush1.msra.mxu0 %v7464
        %7740 = vmatprep.subr.mxu0 %v7467
        %7741 = vmatpush1.msra.mxu0 %v7466
        %7742 = vmatprep.subr.mxu0 %v7469
        %7743 = vmatpush1.msra.mxu0 %v7468
        %7744 = vmatprep.subr.mxu0 %v7471
        %7745 = vmatpush1.msra.mxu0 %v7470
        %7746 = vmatprep.subr.mxu0 %v7473
        %7747 = vmatpush1.msra.mxu0 %v7472
        %7748 = vmatprep.subr.mxu0 %v7475
        %7749 = vmatpush1.msra.mxu0 %v7474
        %7750 = vmatprep.subr.mxu0 %v7477
        %7751 = vmatpush1.msra.mxu0 %v7476
        %7752 = vmatprep.subr.mxu0 %v7479
        %7753 = vmatpush1.msra.mxu0 %v7478
        %7754 = vmatprep.subr.mxu0 %v7481
        %7755 = vmatpush1.msra.mxu0 %v7480
        %7756 = vmatprep.subr.mxu0 %v7483
        %7757 = vmatpush1.msra.mxu0 %v7482
        %7758 = vmatprep.subr.mxu0 0.0
        %7759 = vmatpush1.msra.mxu0 0.0
        %7760 = vmatprep.subr.mxu0 0.0
        %7761 = vmatpush1.msra.mxu0 0.0
        %7762 = vmatprep.subr.mxu0 0.0
        %7763 = vmatpush1.msra.mxu0 0.0
        %7764 = vmatprep.subr.mxu0 0.0
        %7765 = vmatpush1.msra.mxu0 0.0
        %7766 = vmatprep.subr.mxu0 0.0
        %7767 = vmatpush1.msra.mxu0 0.0
        %7768 = vmatprep.subr.mxu0 0.0
        %7769 = vmatpush1.msra.mxu0 0.0
        %7770 = vmatprep.subr.mxu0 0.0
        %7771 = vmatpush1.msra.mxu0 0.0
        %7772 = vmatprep.subr.mxu0 0.0
        %7773 = vmatpush1.msra.mxu0 0.0
        %7774 = vmatprep.subr.mxu0 0.0
        %7775 = vmatpush1.msra.mxu0 0.0
        %7776 = vmatprep.subr.mxu0 0.0
        %7777 = vmatpush1.msra.mxu0 0.0
        %7778 = vmatprep.subr.mxu0 0.0
        %7779 = vmatpush1.msra.mxu0 0.0
        %7780 = vmatprep.subr.mxu0 0.0
        %7781 = vmatpush1.msra.mxu0 0.0
        %7782 = vmatprep.subr.mxu0 0.0
        %7783 = vmatpush1.msra.mxu0 0.0
        %7784 = vmatprep.subr.mxu0 0.0
        %7785 = vmatpush1.msra.mxu0 0.0
        %7786 = vmatprep.subr.mxu0 0.0
        %7787 = vmatpush1.msra.mxu0 0.0
        %7788 = vmatprep.subr.mxu0 0.0
        %7789 = vmatpush1.msra.mxu0 0.0
        %7790 = vmatprep.subr.mxu0 0.0
        %7791 = vmatpush1.msra.mxu0 0.0
        %7792 = vmatprep.subr.mxu0 0.0
        %7793 = vmatpush1.msra.mxu0 0.0
        %7794 = vmatprep.subr.mxu0 0.0
        %7795 = vmatpush1.msra.mxu0 0.0
        %7796 = vmatprep.mubr.f32.mxu0 0.0
        %7797 = vmatmul.mubr.f32.gmra.mrb[0].mxu0 %v7697
        %v7798 = vpop.f32.mrb[0].mxu0
        %v7799 = vadd.f32 %v7626, %v7798
        %v7800 = vpop.f32.mrb[0].mxu0
        %v7801 = vadd.f32 %v7628, %v7800
        %7802 = vmatprep.mubr.f32.mxu0 0.0
        %7803 = vmatmul.mubr.f32.gmra.mrb[0].mxu0 %v7700
        %v7804 = vpop.f32.mrb[0].mxu0
        %v7805 = vadd.f32 %v7632, %v7804
        %v7806 = vpop.f32.mrb[0].mxu0
        %v7807 = vadd.f32 %v7634, %v7806
        %7808 = vmatprep.mubr.f32.mxu0 0.0
        %7809 = vmatmul.mubr.f32.gmra.mrb[0].mxu0 %v7703
        %v7810 = vpop.f32.mrb[0].mxu0
        %v7811 = vadd.f32 %v7638, %v7810
        %v7812 = vpop.f32.mrb[0].mxu0
        %v7813 = vadd.f32 %v7640, %v7812
        %7814 = vmatprep.mubr.f32.mxu0 0.0
        %7815 = vmatmul.mubr.f32.gmra.mrb[0].mxu0 %v7706
        %v7816 = vpop.f32.mrb[0].mxu0
        %v7817 = vadd.f32 %v7644, %v7816
        %v7818 = vpop.f32.mrb[0].mxu0
        %v7819 = vadd.f32 %v7646, %v7818
        %7820 = vmatprep.mubr.f32.mxu0 0.0
        %7821 = vmatmul.mubr.f32.gmra.mrb[0].mxu0 %v7709
        %v7822 = vpop.f32.mrb[0].mxu0
        %v7823 = vadd.f32 %v7650, %v7822
        %v7824 = vpop.f32.mrb[0].mxu0
        %v7825 = vadd.f32 %v7652, %v7824
        %7826 = vmatprep.mubr.f32.mxu0 0.0
        %7827 = vmatmul.mubr.f32.gmra.mrb[0].mxu0 %v7712
        %v7828 = vpop.f32.mrb[0].mxu0
        %v7829 = vadd.f32 %v7656, %v7828
        %v7830 = vpop.f32.mrb[0].mxu0
        %v7831 = vadd.f32 %v7658, %v7830
        %7832 = vmatprep.mubr.f32.mxu0 0.0
        %7833 = vmatmul.mubr.f32.gmra.mrb[0].mxu0 %v7715
        %v7834 = vpop.f32.mrb[0].mxu0
        %v7835 = vadd.f32 %v7662, %v7834
        %v7836 = vpop.f32.mrb[0].mxu0
        %v7837 = vadd.f32 %v7664, %v7836
        %7838 = vmatprep.mubr.f32.mxu0 0.0
        %7839 = vmatmul.mubr.f32.gmra.mrb[0].mxu0 %v7718
        %v7840 = vpop.f32.mrb[0].mxu0
        %v7841 = vadd.f32 %v7668, %v7840
        %v7842 = vpop.f32.mrb[0].mxu0
        %v7843 = vadd.f32 %v7670, %v7842
        %7844 = vmatprep.mubr.f32.mxu0 0.0
        %7845 = vmatmul.mubr.f32.gmra.mrb[0].mxu0 %v7721
        %v7846 = vpop.f32.mrb[0].mxu0
        %v7847 = vadd.f32 %v7674, %v7846
        %v7848 = vpop.f32.mrb[0].mxu0
        %v7849 = vadd.f32 %v7676, %v7848
        %7850 = vmatprep.mubr.f32.mxu0 0.0
        %7851 = vmatmul.mubr.f32.gmra.mrb[0].mxu0 %v7724
        %v7852 = vpop.f32.mrb[0].mxu0
        %v7853 = vadd.f32 %v7680, %v7852
        %v7854 = vpop.f32.mrb[0].mxu0
        %v7855 = vadd.f32 %v7682, %v7854
        %7856 = vmatprep.mubr.f32.mxu0 0.0
        %7857 = vmatmul.mubr.f32.gmra.mrb[0].mxu0 %v7727
        %v7858 = vpop.f32.mrb[0].mxu0
        %v7859 = vadd.f32 %v7686, %v7858
        %v7860 = vpop.f32.mrb[0].mxu0
        %v7861 = vadd.f32 %v7688, %v7860
        %7862 = vmatprep.mubr.f32.mxu0 0.0
        %7863 = vmatmul.mubr.f32.gmra.mrb[0].mxu0 %v7730
        %v7864 = vpop.f32.mrb[0].mxu0
        %v7865 = vadd.f32 %v7692, %v7864
        %v7866 = vpop.f32.mrb[0].mxu0
        %v7867 = vadd.f32 %v7694, %v7866
        %7868 = vdwg.mxu0
        %v7869 = vld [vmem:[#allocation4 + $0x2] sm:$0xff]
        %v7870 = vld [vmem:[#allocation4 + $0xa] sm:$0xff]
        %v7871 = vld [vmem:[#allocation4 + $0x12] sm:$0xff]
        %v7872 = vld [vmem:[#allocation4 + $0x1a] sm:$0xff]
        %v7873 = vld [vmem:[#allocation4 + $0x22] sm:$0xff]
        %v7874 = vld [vmem:[#allocation4 + $0x2a] sm:$0xff]
        %v7875 = vld [vmem:[#allocation4 + $0x32] sm:$0xff]
        %v7876 = vld [vmem:[#allocation4 + $0x3a] sm:$0xff]
        %v7877 = vld [vmem:[#allocation4 + $0x42] sm:$0xff]
        %v7878 = vld [vmem:[#allocation4 + $0x4a] sm:$0xff]
        %v7879 = vld [vmem:[#allocation4 + $0x52] sm:$0xff]
        %v7880 = vld [vmem:[#allocation4 + $0x5a] sm:$0x1f]
        %s7881 = scalar_lea.vmem %s7, 416
        %v7882 = vld [vmem:[%s7881] sm:$0xff]
        %v7883 = vld [vmem:[%s7881 + $0x8] sm:$0xff]
        %v7884 = vld [vmem:[%s7881 + $0x10] sm:$0xff]
        %v7885 = vld [vmem:[%s7881 + $0x18] sm:$0xff]
        %v7886 = vld [vmem:[%s7881 + $0x20] sm:$0xff]
        %v7887 = vld [vmem:[%s7881 + $0x28] sm:$0xff]
        %v7888 = vld [vmem:[%s7881 + $0x30] sm:$0xff]
        %v7889 = vld [vmem:[%s7881 + $0x38] sm:$0xff]
        %v7890 = vld [vmem:[%s7881 + $0x40] sm:$0xff]
        %v7891 = vld [vmem:[%s7881 + $0x48] sm:$0xff]
        %v7892 = vld [vmem:[%s7881 + $0x50] sm:$0xff]
        %v7893 = vld [vmem:[%s7881 + $0x58] sm:$0xff]
        %v7894 = vld [vmem:[%s7881 + $0x60] sm:$0xff]
        %v7895 = vld [vmem:[%s7881 + $0x68] sm:$0xff]
        %v7896 = vld [vmem:[%s7881 + $0x70] sm:$0xff]
        %v7897 = vld [vmem:[%s7881 + $0x78] sm:$0xff]
        %v7898 = vld [vmem:[%s7881 + $0x80] sm:$0xff]
        %v7899 = vld [vmem:[%s7881 + $0x88] sm:$0xff]
        %v7900 = vld [vmem:[%s7881 + $0x90] sm:$0xff]
        %v7901 = vld [vmem:[%s7881 + $0x98] sm:$0xff]
        %v7902 = vld [vmem:[%s7881 + $0xa0] sm:$0xff]
        %v7903 = vld [vmem:[%s7881 + $0xa8] sm:$0xff]
        %v7904 = vld [vmem:[%s7881 + $0xb0] sm:$0xff]
        %v7905 = vld [vmem:[%s7881 + $0xb8] sm:$0xff]
        %v7906 = vld [vmem:[%s7881 + $0xc0] sm:$0xff]
        %v7907 = vld [vmem:[%s7881 + $0xc8] sm:$0xff]
        %v7909 = vsel %vm466, %v7869, 0
        %v7912 = vsel %vm466, %v7870, 0
        %v7915 = vsel %vm466, %v7871, 0
        %v7918 = vsel %vm466, %v7872, 0
        %v7921 = vsel %vm466, %v7873, 0
        %v7924 = vsel %vm466, %v7874, 0
        %v7927 = vsel %vm466, %v7875, 0
        %v7930 = vsel %vm466, %v7876, 0
        %v7933 = vsel %vm466, %v7877, 0
        %v7936 = vsel %vm466, %v7878, 0
        %v7939 = vsel %vm466, %v7879, 0
        %v7942 = vsel %vm466, %v7880, 0
        %7944 = vmatprep.subr.mxu0 %v7883
        %7945 = vmatpush1.msra.mxu0 %v7882
        %7946 = vmatprep.subr.mxu0 %v7885
        %7947 = vmatpush1.msra.mxu0 %v7884
        %7948 = vmatprep.subr.mxu0 %v7887
        %7949 = vmatpush1.msra.mxu0 %v7886
        %7950 = vmatprep.subr.mxu0 %v7889
        %7951 = vmatpush1.msra.mxu0 %v7888
        %7952 = vmatprep.subr.mxu0 %v7891
        %7953 = vmatpush1.msra.mxu0 %v7890
        %7954 = vmatprep.subr.mxu0 %v7893
        %7955 = vmatpush1.msra.mxu0 %v7892
        %7956 = vmatprep.subr.mxu0 %v7895
        %7957 = vmatpush1.msra.mxu0 %v7894
        %7958 = vmatprep.subr.mxu0 %v7897
        %7959 = vmatpush1.msra.mxu0 %v7896
        %7960 = vmatprep.subr.mxu0 %v7899
        %7961 = vmatpush1.msra.mxu0 %v7898
        %7962 = vmatprep.subr.mxu0 %v7901
        %7963 = vmatpush1.msra.mxu0 %v7900
        %7964 = vmatprep.subr.mxu0 %v7903
        %7965 = vmatpush1.msra.mxu0 %v7902
        %7966 = vmatprep.subr.mxu0 %v7905
        %7967 = vmatpush1.msra.mxu0 %v7904
        %7968 = vmatprep.subr.mxu0 %v7907
        %7969 = vmatpush1.msra.mxu0 %v7906
        %7970 = vmatprep.subr.mxu0 0.0
        %7971 = vmatpush1.msra.mxu0 0.0
        %7972 = vmatprep.subr.mxu0 0.0
        %7973 = vmatpush1.msra.mxu0 0.0
        %7974 = vmatprep.subr.mxu0 0.0
        %7975 = vmatpush1.msra.mxu0 0.0
        %7976 = vmatprep.subr.mxu0 0.0
        %7977 = vmatpush1.msra.mxu0 0.0
        %7978 = vmatprep.subr.mxu0 0.0
        %7979 = vmatpush1.msra.mxu0 0.0
        %7980 = vmatprep.subr.mxu0 0.0
        %7981 = vmatpush1.msra.mxu0 0.0
        %7982 = vmatprep.subr.mxu0 0.0
        %7983 = vmatpush1.msra.mxu0 0.0
        %7984 = vmatprep.subr.mxu0 0.0
        %7985 = vmatpush1.msra.mxu0 0.0
        %7986 = vmatprep.subr.mxu0 0.0
        %7987 = vmatpush1.msra.mxu0 0.0
        %7988 = vmatprep.subr.mxu0 0.0
        %7989 = vmatpush1.msra.mxu0 0.0
        %7990 = vmatprep.subr.mxu0 0.0
        %7991 = vmatpush1.msra.mxu0 0.0
        %7992 = vmatprep.subr.mxu0 0.0
        %7993 = vmatpush1.msra.mxu0 0.0
        %7994 = vmatprep.subr.mxu0 0.0
        %7995 = vmatpush1.msra.mxu0 0.0
        %7996 = vmatprep.subr.mxu0 0.0
        %7997 = vmatpush1.msra.mxu0 0.0
        %7998 = vmatprep.subr.mxu0 0.0
        %7999 = vmatpush1.msra.mxu0 0.0
        %8000 = vmatprep.subr.mxu0 0.0
        %8001 = vmatpush1.msra.mxu0 0.0
        %8002 = vmatprep.subr.mxu0 0.0
        %8003 = vmatpush1.msra.mxu0 0.0
        %8004 = vmatprep.subr.mxu0 0.0
        %8005 = vmatpush1.msra.mxu0 0.0
        %8006 = vmatprep.subr.mxu0 0.0
        %8007 = vmatpush1.msra.mxu0 0.0
        %8008 = vmatprep.mubr.f32.mxu0 0.0
        %8009 = vmatmul.mubr.f32.gmra.mrb[0].mxu0 %v7909
        %v8010 = vpop.f32.mrb[0].mxu0
        %v8011 = vadd.f32 0.0, %v8010
        %v8012 = vpop.f32.mrb[0].mxu0
        %v8013 = vadd.f32 0.0, %v8012
        %8014 = vmatprep.mubr.f32.mxu0 0.0
        %8015 = vmatmul.mubr.f32.gmra.mrb[0].mxu0 %v7912
        %v8016 = vpop.f32.mrb[0].mxu0
        %v8017 = vadd.f32 0.0, %v8016
        %v8018 = vpop.f32.mrb[0].mxu0
        %v8019 = vadd.f32 0.0, %v8018
        %8020 = vmatprep.mubr.f32.mxu0 0.0
        %8021 = vmatmul.mubr.f32.gmra.mrb[0].mxu0 %v7915
        %v8022 = vpop.f32.mrb[0].mxu0
        %v8023 = vadd.f32 0.0, %v8022
        %v8024 = vpop.f32.mrb[0].mxu0
        %v8025 = vadd.f32 0.0, %v8024
        %8026 = vmatprep.mubr.f32.mxu0 0.0
        %8027 = vmatmul.mubr.f32.gmra.mrb[0].mxu0 %v7918
        %v8028 = vpop.f32.mrb[0].mxu0
        %v8029 = vadd.f32 0.0, %v8028
        %v8030 = vpop.f32.mrb[0].mxu0
        %v8031 = vadd.f32 0.0, %v8030
        %8032 = vmatprep.mubr.f32.mxu0 0.0
        %8033 = vmatmul.mubr.f32.gmra.mrb[0].mxu0 %v7921
        %v8034 = vpop.f32.mrb[0].mxu0
        %v8035 = vadd.f32 0.0, %v8034
        %v8036 = vpop.f32.mrb[0].mxu0
        %v8037 = vadd.f32 0.0, %v8036
        %8038 = vmatprep.mubr.f32.mxu0 0.0
        %8039 = vmatmul.mubr.f32.gmra.mrb[0].mxu0 %v7924
        %v8040 = vpop.f32.mrb[0].mxu0
        %v8041 = vadd.f32 0.0, %v8040
        %v8042 = vpop.f32.mrb[0].mxu0
        %v8043 = vadd.f32 0.0, %v8042
        %8044 = vmatprep.mubr.f32.mxu0 0.0
        %8045 = vmatmul.mubr.f32.gmra.mrb[0].mxu0 %v7927
        %v8046 = vpop.f32.mrb[0].mxu0
        %v8047 = vadd.f32 0.0, %v8046
        %v8048 = vpop.f32.mrb[0].mxu0
        %v8049 = vadd.f32 0.0, %v8048
        %8050 = vmatprep.mubr.f32.mxu0 0.0
        %8051 = vmatmul.mubr.f32.gmra.mrb[0].mxu0 %v7930
        %v8052 = vpop.f32.mrb[0].mxu0
        %v8053 = vadd.f32 0.0, %v8052
        %v8054 = vpop.f32.mrb[0].mxu0
        %v8055 = vadd.f32 0.0, %v8054
        %8056 = vmatprep.mubr.f32.mxu0 0.0
        %8057 = vmatmul.mubr.f32.gmra.mrb[0].mxu0 %v7933
        %v8058 = vpop.f32.mrb[0].mxu0
        %v8059 = vadd.f32 0.0, %v8058
        %v8060 = vpop.f32.mrb[0].mxu0
        %v8061 = vadd.f32 0.0, %v8060
        %8062 = vmatprep.mubr.f32.mxu0 0.0
        %8063 = vmatmul.mubr.f32.gmra.mrb[0].mxu0 %v7936
        %v8064 = vpop.f32.mrb[0].mxu0
        %v8065 = vadd.f32 0.0, %v8064
        %v8066 = vpop.f32.mrb[0].mxu0
        %v8067 = vadd.f32 0.0, %v8066
        %8068 = vmatprep.mubr.f32.mxu0 0.0
        %8069 = vmatmul.mubr.f32.gmra.mrb[0].mxu0 %v7939
        %v8070 = vpop.f32.mrb[0].mxu0
        %v8071 = vadd.f32 0.0, %v8070
        %v8072 = vpop.f32.mrb[0].mxu0
        %v8073 = vadd.f32 0.0, %v8072
        %8074 = vmatprep.mubr.f32.mxu0 0.0
        %8075 = vmatmul.mubr.f32.gmra.mrb[0].mxu0 %v7942
        %v8076 = vpop.f32.mrb[0].mxu0
        %v8077 = vadd.f32 0.0, %v8076
        %v8078 = vpop.f32.mrb[0].mxu0
        %v8079 = vadd.f32 0.0, %v8078
        %8080 = vdwg.mxu0
        %v8081 = vadd.f32 %v7799, %v8011
        %v8082 = vadd.f32 %v7801, %v8013
        %v8083 = vadd.f32 %v7805, %v8017
        %v8084 = vadd.f32 %v7807, %v8019
        %v8085 = vadd.f32 %v7811, %v8023
        %v8086 = vadd.f32 %v7813, %v8025
        %v8087 = vadd.f32 %v7817, %v8029
        %v8088 = vadd.f32 %v7819, %v8031
        %v8089 = vadd.f32 %v7823, %v8035
        %v8090 = vadd.f32 %v7825, %v8037
        %v8091 = vadd.f32 %v7829, %v8041
        %v8092 = vadd.f32 %v7831, %v8043
        %v8093 = vadd.f32 %v7835, %v8047
        %v8094 = vadd.f32 %v7837, %v8049
        %v8095 = vadd.f32 %v7841, %v8053
        %v8096 = vadd.f32 %v7843, %v8055
        %v8097 = vadd.f32 %v7847, %v8059
        %v8098 = vadd.f32 %v7849, %v8061
        %v8099 = vadd.f32 %v7853, %v8065
        %v8100 = vadd.f32 %v7855, %v8067
        %v8101 = vadd.f32 %v7859, %v8071
        %v8102 = vadd.f32 %v7861, %v8073
        %v8103 = vadd.f32 %v7865, %v8077
        %v8104 = vadd.f32 %v7867, %v8079
        %v8105 = vld [vmem:[#allocation4 + $0x3] sm:$0xff]
        %v8106 = vld [vmem:[#allocation4 + $0xb] sm:$0xff]
        %v8107 = vld [vmem:[#allocation4 + $0x13] sm:$0xff]
        %v8108 = vld [vmem:[#allocation4 + $0x1b] sm:$0xff]
        %v8109 = vld [vmem:[#allocation4 + $0x23] sm:$0xff]
        %v8110 = vld [vmem:[#allocation4 + $0x2b] sm:$0xff]
        %v8111 = vld [vmem:[#allocation4 + $0x33] sm:$0xff]
        %v8112 = vld [vmem:[#allocation4 + $0x3b] sm:$0xff]
        %v8113 = vld [vmem:[#allocation4 + $0x43] sm:$0xff]
        %v8114 = vld [vmem:[#allocation4 + $0x4b] sm:$0xff]
        %v8115 = vld [vmem:[#allocation4 + $0x53] sm:$0xff]
        %v8116 = vld [vmem:[#allocation4 + $0x5b] sm:$0x1f]
        %s8117 = scalar_lea.vmem %s7, 624
        %v8118 = vld [vmem:[%s8117] sm:$0xff]
        %v8119 = vld [vmem:[%s8117 + $0x8] sm:$0xff]
        %v8120 = vld [vmem:[%s8117 + $0x10] sm:$0xff]
        %v8121 = vld [vmem:[%s8117 + $0x18] sm:$0xff]
        %v8122 = vld [vmem:[%s8117 + $0x20] sm:$0xff]
        %v8123 = vld [vmem:[%s8117 + $0x28] sm:$0xff]
        %v8124 = vld [vmem:[%s8117 + $0x30] sm:$0xff]
        %v8125 = vld [vmem:[%s8117 + $0x38] sm:$0xff]
        %v8126 = vld [vmem:[%s8117 + $0x40] sm:$0xff]
        %v8127 = vld [vmem:[%s8117 + $0x48] sm:$0xff]
        %v8128 = vld [vmem:[%s8117 + $0x50] sm:$0xff]
        %v8129 = vld [vmem:[%s8117 + $0x58] sm:$0xff]
        %v8130 = vld [vmem:[%s8117 + $0x60] sm:$0xff]
        %v8131 = vld [vmem:[%s8117 + $0x68] sm:$0xff]
        %v8132 = vld [vmem:[%s8117 + $0x70] sm:$0xff]
        %v8133 = vld [vmem:[%s8117 + $0x78] sm:$0xff]
        %v8134 = vld [vmem:[%s8117 + $0x80] sm:$0xff]
        %v8135 = vld [vmem:[%s8117 + $0x88] sm:$0xff]
        %v8136 = vld [vmem:[%s8117 + $0x90] sm:$0xff]
        %v8137 = vld [vmem:[%s8117 + $0x98] sm:$0xff]
        %v8138 = vld [vmem:[%s8117 + $0xa0] sm:$0xff]
        %v8139 = vld [vmem:[%s8117 + $0xa8] sm:$0xff]
        %v8140 = vld [vmem:[%s8117 + $0xb0] sm:$0xff]
        %v8141 = vld [vmem:[%s8117 + $0xb8] sm:$0xff]
        %v8142 = vld [vmem:[%s8117 + $0xc0] sm:$0xff]
        %v8143 = vld [vmem:[%s8117 + $0xc8] sm:$0xff]
        %v8145 = vsel %vm466, %v8105, 0
        %v8148 = vsel %vm466, %v8106, 0
        %v8151 = vsel %vm466, %v8107, 0
        %v8154 = vsel %vm466, %v8108, 0
        %v8157 = vsel %vm466, %v8109, 0
        %v8160 = vsel %vm466, %v8110, 0
        %v8163 = vsel %vm466, %v8111, 0
        %v8166 = vsel %vm466, %v8112, 0
        %v8169 = vsel %vm466, %v8113, 0
        %v8172 = vsel %vm466, %v8114, 0
        %v8175 = vsel %vm466, %v8115, 0
        %v8178 = vsel %vm466, %v8116, 0
        %8180 = vmatprep.subr.mxu0 %v8119
        %8181 = vmatpush1.msra.mxu0 %v8118
        %8182 = vmatprep.subr.mxu0 %v8121
        %8183 = vmatpush1.msra.mxu0 %v8120
        %8184 = vmatprep.subr.mxu0 %v8123
        %8185 = vmatpush1.msra.mxu0 %v8122
        %8186 = vmatprep.subr.mxu0 %v8125
        %8187 = vmatpush1.msra.mxu0 %v8124
        %8188 = vmatprep.subr.mxu0 %v8127
        %8189 = vmatpush1.msra.mxu0 %v8126
        %8190 = vmatprep.subr.mxu0 %v8129
        %8191 = vmatpush1.msra.mxu0 %v8128
        %8192 = vmatprep.subr.mxu0 %v8131
        %8193 = vmatpush1.msra.mxu0 %v8130
        %8194 = vmatprep.subr.mxu0 %v8133
        %8195 = vmatpush1.msra.mxu0 %v8132
        %8196 = vmatprep.subr.mxu0 %v8135
        %8197 = vmatpush1.msra.mxu0 %v8134
        %8198 = vmatprep.subr.mxu0 %v8137
        %8199 = vmatpush1.msra.mxu0 %v8136
        %8200 = vmatprep.subr.mxu0 %v8139
        %8201 = vmatpush1.msra.mxu0 %v8138
        %8202 = vmatprep.subr.mxu0 %v8141
        %8203 = vmatpush1.msra.mxu0 %v8140
        %8204 = vmatprep.subr.mxu0 %v8143
        %8205 = vmatpush1.msra.mxu0 %v8142
        %8206 = vmatprep.subr.mxu0 0.0
        %8207 = vmatpush1.msra.mxu0 0.0
        %8208 = vmatprep.subr.mxu0 0.0
        %8209 = vmatpush1.msra.mxu0 0.0
        %8210 = vmatprep.subr.mxu0 0.0
        %8211 = vmatpush1.msra.mxu0 0.0
        %8212 = vmatprep.subr.mxu0 0.0
        %8213 = vmatpush1.msra.mxu0 0.0
        %8214 = vmatprep.subr.mxu0 0.0
        %8215 = vmatpush1.msra.mxu0 0.0
        %8216 = vmatprep.subr.mxu0 0.0
        %8217 = vmatpush1.msra.mxu0 0.0
        %8218 = vmatprep.subr.mxu0 0.0
        %8219 = vmatpush1.msra.mxu0 0.0
        %8220 = vmatprep.subr.mxu0 0.0
        %8221 = vmatpush1.msra.mxu0 0.0
        %8222 = vmatprep.subr.mxu0 0.0
        %8223 = vmatpush1.msra.mxu0 0.0
        %8224 = vmatprep.subr.mxu0 0.0
        %8225 = vmatpush1.msra.mxu0 0.0
        %8226 = vmatprep.subr.mxu0 0.0
        %8227 = vmatpush1.msra.mxu0 0.0
        %8228 = vmatprep.subr.mxu0 0.0
        %8229 = vmatpush1.msra.mxu0 0.0
        %8230 = vmatprep.subr.mxu0 0.0
        %8231 = vmatpush1.msra.mxu0 0.0
        %8232 = vmatprep.subr.mxu0 0.0
        %8233 = vmatpush1.msra.mxu0 0.0
        %8234 = vmatprep.subr.mxu0 0.0
        %8235 = vmatpush1.msra.mxu0 0.0
        %8236 = vmatprep.subr.mxu0 0.0
        %8237 = vmatpush1.msra.mxu0 0.0
        %8238 = vmatprep.subr.mxu0 0.0
        %8239 = vmatpush1.msra.mxu0 0.0
        %8240 = vmatprep.subr.mxu0 0.0
        %8241 = vmatpush1.msra.mxu0 0.0
        %8242 = vmatprep.subr.mxu0 0.0
        %8243 = vmatpush1.msra.mxu0 0.0
        %8244 = vmatprep.mubr.f32.mxu0 0.0
        %8245 = vmatmul.mubr.f32.gmra.mrb[0].mxu0 %v8145
        %v8246 = vpop.f32.mrb[0].mxu0
        %v8247 = vadd.f32 0.0, %v8246
        %v8248 = vpop.f32.mrb[0].mxu0
        %v8249 = vadd.f32 0.0, %v8248
        %8250 = vmatprep.mubr.f32.mxu0 0.0
        %8251 = vmatmul.mubr.f32.gmra.mrb[0].mxu0 %v8148
        %v8252 = vpop.f32.mrb[0].mxu0
        %v8253 = vadd.f32 0.0, %v8252
        %v8254 = vpop.f32.mrb[0].mxu0
        %v8255 = vadd.f32 0.0, %v8254
        %8256 = vmatprep.mubr.f32.mxu0 0.0
        %8257 = vmatmul.mubr.f32.gmra.mrb[0].mxu0 %v8151
        %v8258 = vpop.f32.mrb[0].mxu0
        %v8259 = vadd.f32 0.0, %v8258
        %v8260 = vpop.f32.mrb[0].mxu0
        %v8261 = vadd.f32 0.0, %v8260
        %8262 = vmatprep.mubr.f32.mxu0 0.0
        %8263 = vmatmul.mubr.f32.gmra.mrb[0].mxu0 %v8154
        %v8264 = vpop.f32.mrb[0].mxu0
        %v8265 = vadd.f32 0.0, %v8264
        %v8266 = vpop.f32.mrb[0].mxu0
        %v8267 = vadd.f32 0.0, %v8266
        %8268 = vmatprep.mubr.f32.mxu0 0.0
        %8269 = vmatmul.mubr.f32.gmra.mrb[0].mxu0 %v8157
        %v8270 = vpop.f32.mrb[0].mxu0
        %v8271 = vadd.f32 0.0, %v8270
        %v8272 = vpop.f32.mrb[0].mxu0
        %v8273 = vadd.f32 0.0, %v8272
        %8274 = vmatprep.mubr.f32.mxu0 0.0
        %8275 = vmatmul.mubr.f32.gmra.mrb[0].mxu0 %v8160
        %v8276 = vpop.f32.mrb[0].mxu0
        %v8277 = vadd.f32 0.0, %v8276
        %v8278 = vpop.f32.mrb[0].mxu0
        %v8279 = vadd.f32 0.0, %v8278
        %8280 = vmatprep.mubr.f32.mxu0 0.0
        %8281 = vmatmul.mubr.f32.gmra.mrb[0].mxu0 %v8163
        %v8282 = vpop.f32.mrb[0].mxu0
        %v8283 = vadd.f32 0.0, %v8282
        %v8284 = vpop.f32.mrb[0].mxu0
        %v8285 = vadd.f32 0.0, %v8284
        %8286 = vmatprep.mubr.f32.mxu0 0.0
        %8287 = vmatmul.mubr.f32.gmra.mrb[0].mxu0 %v8166
        %v8288 = vpop.f32.mrb[0].mxu0
        %v8289 = vadd.f32 0.0, %v8288
        %v8290 = vpop.f32.mrb[0].mxu0
        %v8291 = vadd.f32 0.0, %v8290
        %8292 = vmatprep.mubr.f32.mxu0 0.0
        %8293 = vmatmul.mubr.f32.gmra.mrb[0].mxu0 %v8169
        %v8294 = vpop.f32.mrb[0].mxu0
        %v8295 = vadd.f32 0.0, %v8294
        %v8296 = vpop.f32.mrb[0].mxu0
        %v8297 = vadd.f32 0.0, %v8296
        %8298 = vmatprep.mubr.f32.mxu0 0.0
        %8299 = vmatmul.mubr.f32.gmra.mrb[0].mxu0 %v8172
        %v8300 = vpop.f32.mrb[0].mxu0
        %v8301 = vadd.f32 0.0, %v8300
        %v8302 = vpop.f32.mrb[0].mxu0
        %v8303 = vadd.f32 0.0, %v8302
        %8304 = vmatprep.mubr.f32.mxu0 0.0
        %8305 = vmatmul.mubr.f32.gmra.mrb[0].mxu0 %v8175
        %v8306 = vpop.f32.mrb[0].mxu0
        %v8307 = vadd.f32 0.0, %v8306
        %v8308 = vpop.f32.mrb[0].mxu0
        %v8309 = vadd.f32 0.0, %v8308
        %8310 = vmatprep.mubr.f32.mxu0 0.0
        %8311 = vmatmul.mubr.f32.gmra.mrb[0].mxu0 %v8178
        %v8312 = vpop.f32.mrb[0].mxu0
        %v8313 = vadd.f32 0.0, %v8312
        %v8314 = vpop.f32.mrb[0].mxu0
        %v8315 = vadd.f32 0.0, %v8314
        %8316 = vdwg.mxu0
        %v8317 = vadd.f32 %v8081, %v8247
        %v8318 = vadd.f32 %v8082, %v8249
        %v8319 = vadd.f32 %v8083, %v8253
        %v8320 = vadd.f32 %v8084, %v8255
        %v8321 = vadd.f32 %v8085, %v8259
        %v8322 = vadd.f32 %v8086, %v8261
        %v8323 = vadd.f32 %v8087, %v8265
        %v8324 = vadd.f32 %v8088, %v8267
        %v8325 = vadd.f32 %v8089, %v8271
        %v8326 = vadd.f32 %v8090, %v8273
        %v8327 = vadd.f32 %v8091, %v8277
        %v8328 = vadd.f32 %v8092, %v8279
        %v8329 = vadd.f32 %v8093, %v8283
        %v8330 = vadd.f32 %v8094, %v8285
        %v8331 = vadd.f32 %v8095, %v8289
        %v8332 = vadd.f32 %v8096, %v8291
        %v8333 = vadd.f32 %v8097, %v8295
        %v8334 = vadd.f32 %v8098, %v8297
        %v8335 = vadd.f32 %v8099, %v8301
        %v8336 = vadd.f32 %v8100, %v8303
        %v8337 = vadd.f32 %v8101, %v8307
        %v8338 = vadd.f32 %v8102, %v8309
        %v8339 = vadd.f32 %v8103, %v8313
        %v8340 = vadd.f32 %v8104, %v8315
        %v8341 = vld [vmem:[#allocation4 + $0x4] sm:$0xff]
        %v8342 = vld [vmem:[#allocation4 + $0xc] sm:$0xff]
        %v8343 = vld [vmem:[#allocation4 + $0x14] sm:$0xff]
        %v8344 = vld [vmem:[#allocation4 + $0x1c] sm:$0xff]
        %v8345 = vld [vmem:[#allocation4 + $0x24] sm:$0xff]
        %v8346 = vld [vmem:[#allocation4 + $0x2c] sm:$0xff]
        %v8347 = vld [vmem:[#allocation4 + $0x34] sm:$0xff]
        %v8348 = vld [vmem:[#allocation4 + $0x3c] sm:$0xff]
        %v8349 = vld [vmem:[#allocation4 + $0x44] sm:$0xff]
        %v8350 = vld [vmem:[#allocation4 + $0x4c] sm:$0xff]
        %v8351 = vld [vmem:[#allocation4 + $0x54] sm:$0xff]
        %v8352 = vld [vmem:[#allocation4 + $0x5c] sm:$0x1f]
        %s8353 = scalar_lea.vmem %s7, 832
        %v8354 = vld [vmem:[%s8353] sm:$0xff]
        %v8355 = vld [vmem:[%s8353 + $0x8] sm:$0xff]
        %v8356 = vld [vmem:[%s8353 + $0x10] sm:$0xff]
        %v8357 = vld [vmem:[%s8353 + $0x18] sm:$0xff]
        %v8358 = vld [vmem:[%s8353 + $0x20] sm:$0xff]
        %v8359 = vld [vmem:[%s8353 + $0x28] sm:$0xff]
        %v8360 = vld [vmem:[%s8353 + $0x30] sm:$0xff]
        %v8361 = vld [vmem:[%s8353 + $0x38] sm:$0xff]
        %v8362 = vld [vmem:[%s8353 + $0x40] sm:$0xff]
        %v8363 = vld [vmem:[%s8353 + $0x48] sm:$0xff]
        %v8364 = vld [vmem:[%s8353 + $0x50] sm:$0xff]
        %v8365 = vld [vmem:[%s8353 + $0x58] sm:$0xff]
        %v8366 = vld [vmem:[%s8353 + $0x60] sm:$0xff]
        %v8367 = vld [vmem:[%s8353 + $0x68] sm:$0xff]
        %v8368 = vld [vmem:[%s8353 + $0x70] sm:$0xff]
        %v8369 = vld [vmem:[%s8353 + $0x78] sm:$0xff]
        %v8370 = vld [vmem:[%s8353 + $0x80] sm:$0xff]
        %v8371 = vld [vmem:[%s8353 + $0x88] sm:$0xff]
        %v8372 = vld [vmem:[%s8353 + $0x90] sm:$0xff]
        %v8373 = vld [vmem:[%s8353 + $0x98] sm:$0xff]
        %v8374 = vld [vmem:[%s8353 + $0xa0] sm:$0xff]
        %v8375 = vld [vmem:[%s8353 + $0xa8] sm:$0xff]
        %v8376 = vld [vmem:[%s8353 + $0xb0] sm:$0xff]
        %v8377 = vld [vmem:[%s8353 + $0xb8] sm:$0xff]
        %v8378 = vld [vmem:[%s8353 + $0xc0] sm:$0xff]
        %v8379 = vld [vmem:[%s8353 + $0xc8] sm:$0xff]
        %v8381 = vsel %vm466, %v8341, 0
        %v8384 = vsel %vm466, %v8342, 0
        %v8387 = vsel %vm466, %v8343, 0
        %v8390 = vsel %vm466, %v8344, 0
        %v8393 = vsel %vm466, %v8345, 0
        %v8396 = vsel %vm466, %v8346, 0
        %v8399 = vsel %vm466, %v8347, 0
        %v8402 = vsel %vm466, %v8348, 0
        %v8405 = vsel %vm466, %v8349, 0
        %v8408 = vsel %vm466, %v8350, 0
        %v8411 = vsel %vm466, %v8351, 0
        %v8414 = vsel %vm466, %v8352, 0
        %8416 = vmatprep.subr.mxu0 %v8355
        %8417 = vmatpush1.msra.mxu0 %v8354
        %8418 = vmatprep.subr.mxu0 %v8357
        %8419 = vmatpush1.msra.mxu0 %v8356
        %8420 = vmatprep.subr.mxu0 %v8359
        %8421 = vmatpush1.msra.mxu0 %v8358
        %8422 = vmatprep.subr.mxu0 %v8361
        %8423 = vmatpush1.msra.mxu0 %v8360
        %8424 = vmatprep.subr.mxu0 %v8363
        %8425 = vmatpush1.msra.mxu0 %v8362
        %8426 = vmatprep.subr.mxu0 %v8365
        %8427 = vmatpush1.msra.mxu0 %v8364
        %8428 = vmatprep.subr.mxu0 %v8367
        %8429 = vmatpush1.msra.mxu0 %v8366
        %8430 = vmatprep.subr.mxu0 %v8369
        %8431 = vmatpush1.msra.mxu0 %v8368
        %8432 = vmatprep.subr.mxu0 %v8371
        %8433 = vmatpush1.msra.mxu0 %v8370
        %8434 = vmatprep.subr.mxu0 %v8373
        %8435 = vmatpush1.msra.mxu0 %v8372
        %8436 = vmatprep.subr.mxu0 %v8375
        %8437 = vmatpush1.msra.mxu0 %v8374
        %8438 = vmatprep.subr.mxu0 %v8377
        %8439 = vmatpush1.msra.mxu0 %v8376
        %8440 = vmatprep.subr.mxu0 %v8379
        %8441 = vmatpush1.msra.mxu0 %v8378
        %8442 = vmatprep.subr.mxu0 0.0
        %8443 = vmatpush1.msra.mxu0 0.0
        %8444 = vmatprep.subr.mxu0 0.0
        %8445 = vmatpush1.msra.mxu0 0.0
        %8446 = vmatprep.subr.mxu0 0.0
        %8447 = vmatpush1.msra.mxu0 0.0
        %8448 = vmatprep.subr.mxu0 0.0
        %8449 = vmatpush1.msra.mxu0 0.0
        %8450 = vmatprep.subr.mxu0 0.0
        %8451 = vmatpush1.msra.mxu0 0.0
        %8452 = vmatprep.subr.mxu0 0.0
        %8453 = vmatpush1.msra.mxu0 0.0
        %8454 = vmatprep.subr.mxu0 0.0
        %8455 = vmatpush1.msra.mxu0 0.0
        %8456 = vmatprep.subr.mxu0 0.0
        %8457 = vmatpush1.msra.mxu0 0.0
        %8458 = vmatprep.subr.mxu0 0.0
        %8459 = vmatpush1.msra.mxu0 0.0
        %8460 = vmatprep.subr.mxu0 0.0
        %8461 = vmatpush1.msra.mxu0 0.0
        %8462 = vmatprep.subr.mxu0 0.0
        %8463 = vmatpush1.msra.mxu0 0.0
        %8464 = vmatprep.subr.mxu0 0.0
        %8465 = vmatpush1.msra.mxu0 0.0
        %8466 = vmatprep.subr.mxu0 0.0
        %8467 = vmatpush1.msra.mxu0 0.0
        %8468 = vmatprep.subr.mxu0 0.0
        %8469 = vmatpush1.msra.mxu0 0.0
        %8470 = vmatprep.subr.mxu0 0.0
        %8471 = vmatpush1.msra.mxu0 0.0
        %8472 = vmatprep.subr.mxu0 0.0
        %8473 = vmatpush1.msra.mxu0 0.0
        %8474 = vmatprep.subr.mxu0 0.0
        %8475 = vmatpush1.msra.mxu0 0.0
        %8476 = vmatprep.subr.mxu0 0.0
        %8477 = vmatpush1.msra.mxu0 0.0
        %8478 = vmatprep.subr.mxu0 0.0
        %8479 = vmatpush1.msra.mxu0 0.0
        %8480 = vmatprep.mubr.f32.mxu0 0.0
        %8481 = vmatmul.mubr.f32.gmra.mrb[0].mxu0 %v8381
        %v8482 = vpop.f32.mrb[0].mxu0
        %v8483 = vadd.f32 0.0, %v8482
        %v8484 = vpop.f32.mrb[0].mxu0
        %v8485 = vadd.f32 0.0, %v8484
        %8486 = vmatprep.mubr.f32.mxu0 0.0
        %8487 = vmatmul.mubr.f32.gmra.mrb[0].mxu0 %v8384
        %v8488 = vpop.f32.mrb[0].mxu0
        %v8489 = vadd.f32 0.0, %v8488
        %v8490 = vpop.f32.mrb[0].mxu0
        %v8491 = vadd.f32 0.0, %v8490
        %8492 = vmatprep.mubr.f32.mxu0 0.0
        %8493 = vmatmul.mubr.f32.gmra.mrb[0].mxu0 %v8387
        %v8494 = vpop.f32.mrb[0].mxu0
        %v8495 = vadd.f32 0.0, %v8494
        %v8496 = vpop.f32.mrb[0].mxu0
        %v8497 = vadd.f32 0.0, %v8496
        %8498 = vmatprep.mubr.f32.mxu0 0.0
        %8499 = vmatmul.mubr.f32.gmra.mrb[0].mxu0 %v8390
        %v8500 = vpop.f32.mrb[0].mxu0
        %v8501 = vadd.f32 0.0, %v8500
        %v8502 = vpop.f32.mrb[0].mxu0
        %v8503 = vadd.f32 0.0, %v8502
        %8504 = vmatprep.mubr.f32.mxu0 0.0
        %8505 = vmatmul.mubr.f32.gmra.mrb[0].mxu0 %v8393
        %v8506 = vpop.f32.mrb[0].mxu0
        %v8507 = vadd.f32 0.0, %v8506
        %v8508 = vpop.f32.mrb[0].mxu0
        %v8509 = vadd.f32 0.0, %v8508
        %8510 = vmatprep.mubr.f32.mxu0 0.0
        %8511 = vmatmul.mubr.f32.gmra.mrb[0].mxu0 %v8396
        %v8512 = vpop.f32.mrb[0].mxu0
        %v8513 = vadd.f32 0.0, %v8512
        %v8514 = vpop.f32.mrb[0].mxu0
        %v8515 = vadd.f32 0.0, %v8514
        %8516 = vmatprep.mubr.f32.mxu0 0.0
        %8517 = vmatmul.mubr.f32.gmra.mrb[0].mxu0 %v8399
        %v8518 = vpop.f32.mrb[0].mxu0
        %v8519 = vadd.f32 0.0, %v8518
        %v8520 = vpop.f32.mrb[0].mxu0
        %v8521 = vadd.f32 0.0, %v8520
        %8522 = vmatprep.mubr.f32.mxu0 0.0
        %8523 = vmatmul.mubr.f32.gmra.mrb[0].mxu0 %v8402
        %v8524 = vpop.f32.mrb[0].mxu0
        %v8525 = vadd.f32 0.0, %v8524
        %v8526 = vpop.f32.mrb[0].mxu0
        %v8527 = vadd.f32 0.0, %v8526
        %8528 = vmatprep.mubr.f32.mxu0 0.0
        %8529 = vmatmul.mubr.f32.gmra.mrb[0].mxu0 %v8405
        %v8530 = vpop.f32.mrb[0].mxu0
        %v8531 = vadd.f32 0.0, %v8530
        %v8532 = vpop.f32.mrb[0].mxu0
        %v8533 = vadd.f32 0.0, %v8532
        %8534 = vmatprep.mubr.f32.mxu0 0.0
        %8535 = vmatmul.mubr.f32.gmra.mrb[0].mxu0 %v8408
        %v8536 = vpop.f32.mrb[0].mxu0
        %v8537 = vadd.f32 0.0, %v8536
        %v8538 = vpop.f32.mrb[0].mxu0
        %v8539 = vadd.f32 0.0, %v8538
        %8540 = vmatprep.mubr.f32.mxu0 0.0
        %8541 = vmatmul.mubr.f32.gmra.mrb[0].mxu0 %v8411
        %v8542 = vpop.f32.mrb[0].mxu0
        %v8543 = vadd.f32 0.0, %v8542
        %v8544 = vpop.f32.mrb[0].mxu0
        %v8545 = vadd.f32 0.0, %v8544
        %8546 = vmatprep.mubr.f32.mxu0 0.0
        %8547 = vmatmul.mubr.f32.gmra.mrb[0].mxu0 %v8414
        %v8548 = vpop.f32.mrb[0].mxu0
        %v8549 = vadd.f32 0.0, %v8548
        %v8550 = vpop.f32.mrb[0].mxu0
        %v8551 = vadd.f32 0.0, %v8550
        %8552 = vdwg.mxu0
        %v8553 = vadd.f32 %v8317, %v8483
        %v8554 = vadd.f32 %v8318, %v8485
        %v8555 = vadd.f32 %v8319, %v8489
        %v8556 = vadd.f32 %v8320, %v8491
        %v8557 = vadd.f32 %v8321, %v8495
        %v8558 = vadd.f32 %v8322, %v8497
        %v8559 = vadd.f32 %v8323, %v8501
        %v8560 = vadd.f32 %v8324, %v8503
        %v8561 = vadd.f32 %v8325, %v8507
        %v8562 = vadd.f32 %v8326, %v8509
        %v8563 = vadd.f32 %v8327, %v8513
        %v8564 = vadd.f32 %v8328, %v8515
        %v8565 = vadd.f32 %v8329, %v8519
        %v8566 = vadd.f32 %v8330, %v8521
        %v8567 = vadd.f32 %v8331, %v8525
        %v8568 = vadd.f32 %v8332, %v8527
        %v8569 = vadd.f32 %v8333, %v8531
        %v8570 = vadd.f32 %v8334, %v8533
        %v8571 = vadd.f32 %v8335, %v8537
        %v8572 = vadd.f32 %v8336, %v8539
        %v8573 = vadd.f32 %v8337, %v8543
        %v8574 = vadd.f32 %v8338, %v8545
        %v8575 = vadd.f32 %v8339, %v8549
        %v8576 = vadd.f32 %v8340, %v8551
        %v8577 = vld [vmem:[%s8] sm:$0x3]
        %v8579 = vlaneseq
        %v8580 = vshrl.u32 %v8579, 7
        %v8581 = vsub.s32 0, %v8580
        %v8582 = vrot.slane %v8577, %v8581
        %v8583 = vlaneseq
        %v8584 = vshrl.u32 %v8583, 7
        %v8585 = vsub.s32 1, %v8584
        %v8586 = vrot.slane %v8577, %v8585
        %v8589 = vadd.f32 %v8553, %v8582
        %v8590 = vadd.f32 %v8554, %v8586
        %v8591 = vadd.f32 %v8555, %v8582
        %v8592 = vadd.f32 %v8556, %v8586
        %v8593 = vadd.f32 %v8557, %v8582
        %v8594 = vadd.f32 %v8558, %v8586
        %v8595 = vadd.f32 %v8559, %v8582
        %v8596 = vadd.f32 %v8560, %v8586
        %v8597 = vadd.f32 %v8561, %v8582
        %v8598 = vadd.f32 %v8562, %v8586
        %v8599 = vadd.f32 %v8563, %v8582
        %v8600 = vadd.f32 %v8564, %v8586
        %v8601 = vadd.f32 %v8565, %v8582
        %v8602 = vadd.f32 %v8566, %v8586
        %v8603 = vadd.f32 %v8567, %v8582
        %v8604 = vadd.f32 %v8568, %v8586
        %v8605 = vadd.f32 %v8569, %v8582
        %v8606 = vadd.f32 %v8570, %v8586
        %v8607 = vadd.f32 %v8571, %v8582
        %v8608 = vadd.f32 %v8572, %v8586
        %v8609 = vadd.f32 %v8573, %v8582
        %v8610 = vadd.f32 %v8574, %v8586
        %v8611 = vadd.f32 %v8575, %v8582
        %v8612 = vadd.f32 %v8576, %v8586
        %vm8613 = vcmp.gt.f32.partialorder %v8589, 0.0
        %vm8614 = vcmp.gt.f32.partialorder %v8590, 0.0
        %vm8615 = vcmp.gt.f32.partialorder %v8591, 0.0
        %vm8616 = vcmp.gt.f32.partialorder %v8592, 0.0
        %vm8617 = vcmp.gt.f32.partialorder %v8593, 0.0
        %vm8618 = vcmp.gt.f32.partialorder %v8594, 0.0
        %vm8619 = vcmp.gt.f32.partialorder %v8595, 0.0
        %vm8620 = vcmp.gt.f32.partialorder %v8596, 0.0
        %vm8621 = vcmp.gt.f32.partialorder %v8597, 0.0
        %vm8622 = vcmp.gt.f32.partialorder %v8598, 0.0
        %vm8623 = vcmp.gt.f32.partialorder %v8599, 0.0
        %vm8624 = vcmp.gt.f32.partialorder %v8600, 0.0
        %vm8625 = vcmp.gt.f32.partialorder %v8601, 0.0
        %vm8626 = vcmp.gt.f32.partialorder %v8602, 0.0
        %vm8627 = vcmp.gt.f32.partialorder %v8603, 0.0
        %vm8628 = vcmp.gt.f32.partialorder %v8604, 0.0
        %vm8629 = vcmp.gt.f32.partialorder %v8605, 0.0
        %vm8630 = vcmp.gt.f32.partialorder %v8606, 0.0
        %vm8631 = vcmp.gt.f32.partialorder %v8607, 0.0
        %vm8632 = vcmp.gt.f32.partialorder %v8608, 0.0
        %vm8633 = vcmp.gt.f32.partialorder %v8609, 0.0
        %vm8634 = vcmp.gt.f32.partialorder %v8610, 0.0
        %vm8635 = vcmp.gt.f32.partialorder %v8611, 0.0
        %vm8636 = vcmp.gt.f32.partialorder %v8612, 0.0
        %v8637 = vmul.f32 %v8589, 1.442695
        %v8638 = vpow.pop %v8637
        %v8639 = vmul.f32 %v8590, 1.442695
        %v8640 = vpow.pop %v8639
        %v8641 = vmul.f32 %v8591, 1.442695
        %v8642 = vpow.pop %v8641
        %v8643 = vmul.f32 %v8592, 1.442695
        %v8644 = vpow.pop %v8643
        %v8645 = vmul.f32 %v8593, 1.442695
        %v8646 = vpow.pop %v8645
        %v8647 = vmul.f32 %v8594, 1.442695
        %v8648 = vpow.pop %v8647
        %v8649 = vmul.f32 %v8595, 1.442695
        %v8650 = vpow.pop %v8649
        %v8651 = vmul.f32 %v8596, 1.442695
        %v8652 = vpow.pop %v8651
        %v8653 = vmul.f32 %v8597, 1.442695
        %v8654 = vpow.pop %v8653
        %v8655 = vmul.f32 %v8598, 1.442695
        %v8656 = vpow.pop %v8655
        %v8657 = vmul.f32 %v8599, 1.442695
        %v8658 = vpow.pop %v8657
        %v8659 = vmul.f32 %v8600, 1.442695
        %v8660 = vpow.pop %v8659
        %v8661 = vmul.f32 %v8601, 1.442695
        %v8662 = vpow.pop %v8661
        %v8663 = vmul.f32 %v8602, 1.442695
        %v8664 = vpow.pop %v8663
        %v8665 = vmul.f32 %v8603, 1.442695
        %v8666 = vpow.pop %v8665
        %v8667 = vmul.f32 %v8604, 1.442695
        %v8668 = vpow.pop %v8667
        %v8669 = vmul.f32 %v8605, 1.442695
        %v8670 = vpow.pop %v8669
        %v8671 = vmul.f32 %v8606, 1.442695
        %v8672 = vpow.pop %v8671
        %v8673 = vmul.f32 %v8607, 1.442695
        %v8674 = vpow.pop %v8673
        %v8675 = vmul.f32 %v8608, 1.442695
        %v8676 = vpow.pop %v8675
        %v8677 = vmul.f32 %v8609, 1.442695
        %v8678 = vpow.pop %v8677
        %v8679 = vmul.f32 %v8610, 1.442695
        %v8680 = vpow.pop %v8679
        %v8681 = vmul.f32 %v8611, 1.442695
        %v8682 = vpow.pop %v8681
        %v8683 = vmul.f32 %v8612, 1.442695
        %v8684 = vpow.pop %v8683
        %v8685 = vsub.f32 %v8638, 1.0
        %v8686 = vsub.f32 %v8640, 1.0
        %v8687 = vsub.f32 %v8642, 1.0
        %v8688 = vsub.f32 %v8644, 1.0
        %v8689 = vsub.f32 %v8646, 1.0
        %v8690 = vsub.f32 %v8648, 1.0
        %v8691 = vsub.f32 %v8650, 1.0
        %v8692 = vsub.f32 %v8652, 1.0
        %v8693 = vsub.f32 %v8654, 1.0
        %v8694 = vsub.f32 %v8656, 1.0
        %v8695 = vsub.f32 %v8658, 1.0
        %v8696 = vsub.f32 %v8660, 1.0
        %v8697 = vsub.f32 %v8662, 1.0
        %v8698 = vsub.f32 %v8664, 1.0
        %v8699 = vsub.f32 %v8666, 1.0
        %v8700 = vsub.f32 %v8668, 1.0
        %v8701 = vsub.f32 %v8670, 1.0
        %v8702 = vsub.f32 %v8672, 1.0
        %v8703 = vsub.f32 %v8674, 1.0
        %v8704 = vsub.f32 %v8676, 1.0
        %v8705 = vsub.f32 %v8678, 1.0
        %v8706 = vsub.f32 %v8680, 1.0
        %v8707 = vsub.f32 %v8682, 1.0
        %v8708 = vsub.f32 %v8684, 1.0
        %v8709 = vsel %vm8613, %v8589, %v8685
        %v8710 = vsel %vm8614, %v8590, %v8686
        %v8711 = vsel %vm8615, %v8591, %v8687
        %v8712 = vsel %vm8616, %v8592, %v8688
        %v8713 = vsel %vm8617, %v8593, %v8689
        %v8714 = vsel %vm8618, %v8594, %v8690
        %v8715 = vsel %vm8619, %v8595, %v8691
        %v8716 = vsel %vm8620, %v8596, %v8692
        %v8717 = vsel %vm8621, %v8597, %v8693
        %v8718 = vsel %vm8622, %v8598, %v8694
        %v8719 = vsel %vm8623, %v8599, %v8695
        %v8720 = vsel %vm8624, %v8600, %v8696
        %v8721 = vsel %vm8625, %v8601, %v8697
        %v8722 = vsel %vm8626, %v8602, %v8698
        %v8723 = vsel %vm8627, %v8603, %v8699
        %v8724 = vsel %vm8628, %v8604, %v8700
        %v8725 = vsel %vm8629, %v8605, %v8701
        %v8726 = vsel %vm8630, %v8606, %v8702
        %v8727 = vsel %vm8631, %v8607, %v8703
        %v8728 = vsel %vm8632, %v8608, %v8704
        %v8729 = vsel %vm8633, %v8609, %v8705
        %v8730 = vsel %vm8634, %v8610, %v8706
        %v8731 = vsel %vm8635, %v8611, %v8707
        %v8732 = vsel %vm8636, %v8612, %v8708
        %v8733 = vld [vmem:[%s9] sm:$0xff]
        %v8734 = vld [vmem:[%s9 + $0x8] sm:$0xff]
        %v8735 = vld [vmem:[%s9 + $0x10] sm:$0xff]
        %v8736 = vld [vmem:[%s9 + $0x18] sm:$0xff]
        %v8737 = vld [vmem:[%s9 + $0x20] sm:$0xff]
        %v8738 = vld [vmem:[%s9 + $0x28] sm:$0xff]
        %v8739 = vld [vmem:[%s9 + $0x30] sm:$0xff]
        %v8740 = vld [vmem:[%s9 + $0x38] sm:$0xff]
        %v8741 = vld [vmem:[%s9 + $0x40] sm:$0xff]
        %v8742 = vld [vmem:[%s9 + $0x48] sm:$0xff]
        %v8743 = vld [vmem:[%s9 + $0x50] sm:$0xff]
        %v8744 = vld [vmem:[%s9 + $0x58] sm:$0xff]
        %v8745 = vld [vmem:[%s9 + $0x60] sm:$0xff]
        %v8746 = vld [vmem:[%s9 + $0x68] sm:$0xff]
        %v8747 = vld [vmem:[%s9 + $0x70] sm:$0xff]
        %v8748 = vld [vmem:[%s9 + $0x78] sm:$0xff]
        %v8749 = vld [vmem:[%s9 + $0x80] sm:$0xff]
        %v8750 = vld [vmem:[%s9 + $0x88] sm:$0xff]
        %v8751 = vld [vmem:[%s9 + $0x90] sm:$0xff]
        %v8752 = vld [vmem:[%s9 + $0x98] sm:$0xff]
        %v8753 = vld [vmem:[%s9 + $0xa0] sm:$0xff]
        %v8754 = vld [vmem:[%s9 + $0xa8] sm:$0xff]
        %v8755 = vld [vmem:[%s9 + $0xb0] sm:$0xf]
        %v8756 = vld [vmem:[%s9 + $0xb8] sm:$0xf]
        %v8757 = vmul.f32 %v8709, %v8733
        %v8758 = vmul.f32 %v8710, %v8734
        %v8759 = vmul.f32 %v8711, %v8735
        %v8760 = vmul.f32 %v8712, %v8736
        %v8761 = vmul.f32 %v8713, %v8737
        %v8762 = vmul.f32 %v8714, %v8738
        %v8763 = vmul.f32 %v8715, %v8739
        %v8764 = vmul.f32 %v8716, %v8740
        %v8765 = vmul.f32 %v8717, %v8741
        %v8766 = vmul.f32 %v8718, %v8742
        %v8767 = vmul.f32 %v8719, %v8743
        %v8768 = vmul.f32 %v8720, %v8744
        %v8769 = vmul.f32 %v8721, %v8745
        %v8770 = vmul.f32 %v8722, %v8746
        %v8771 = vmul.f32 %v8723, %v8747
        %v8772 = vmul.f32 %v8724, %v8748
        %v8773 = vmul.f32 %v8725, %v8749
        %v8774 = vmul.f32 %v8726, %v8750
        %v8775 = vmul.f32 %v8727, %v8751
        %v8776 = vmul.f32 %v8728, %v8752
        %v8777 = vmul.f32 %v8729, %v8753
        %v8778 = vmul.f32 %v8730, %v8754
        %v8779 = vmul.f32 %v8731, %v8755
        %v8780 = vmul.f32 %v8732, %v8756
        %vm8781 = vcmask 588800
        %v8782 = vsel %vm8781, %v8758, 0.0
        %v8783 = vadd.f32 %v8757, %v8782
        %8784 = vadd.xlane.f32.xlu0 %v8783
        %v8785 = vpop.xlane.xlu0 %8784
        %v8786 = vsel %vm8781, %v8760, 0.0
        %v8787 = vadd.f32 %v8759, %v8786
        %8788 = vadd.xlane.f32.xlu0 %v8787
        %v8789 = vpop.xlane.xlu0 %8788
        %v8790 = vsel %vm8781, %v8762, 0.0
        %v8791 = vadd.f32 %v8761, %v8790
        %8792 = vadd.xlane.f32.xlu0 %v8791
        %v8793 = vpop.xlane.xlu0 %8792
        %v8794 = vsel %vm8781, %v8764, 0.0
        %v8795 = vadd.f32 %v8763, %v8794
        %8796 = vadd.xlane.f32.xlu0 %v8795
        %v8797 = vpop.xlane.xlu0 %8796
        %v8798 = vsel %vm8781, %v8766, 0.0
        %v8799 = vadd.f32 %v8765, %v8798
        %8800 = vadd.xlane.f32.xlu0 %v8799
        %v8801 = vpop.xlane.xlu0 %8800
        %v8802 = vsel %vm8781, %v8768, 0.0
        %v8803 = vadd.f32 %v8767, %v8802
        %8804 = vadd.xlane.f32.xlu0 %v8803
        %v8805 = vpop.xlane.xlu0 %8804
        %v8806 = vsel %vm8781, %v8770, 0.0
        %v8807 = vadd.f32 %v8769, %v8806
        %8808 = vadd.xlane.f32.xlu0 %v8807
        %v8809 = vpop.xlane.xlu0 %8808
        %v8810 = vsel %vm8781, %v8772, 0.0
        %v8811 = vadd.f32 %v8771, %v8810
        %8812 = vadd.xlane.f32.xlu0 %v8811
        %v8813 = vpop.xlane.xlu0 %8812
        %v8814 = vsel %vm8781, %v8774, 0.0
        %v8815 = vadd.f32 %v8773, %v8814
        %8816 = vadd.xlane.f32.xlu0 %v8815
        %v8817 = vpop.xlane.xlu0 %8816
        %v8818 = vsel %vm8781, %v8776, 0.0
        %v8819 = vadd.f32 %v8775, %v8818
        %8820 = vadd.xlane.f32.xlu0 %v8819
        %v8821 = vpop.xlane.xlu0 %8820
        %v8822 = vsel %vm8781, %v8778, 0.0
        %v8823 = vadd.f32 %v8777, %v8822
        %8824 = vadd.xlane.f32.xlu0 %v8823
        %v8825 = vpop.xlane.xlu0 %8824
        %vm8826 = vcmask 1043456
        %v8827 = vsel %vm8826, %v8779, 0.0
        %vm8828 = vcmask 584704
        %v8829 = vsel %vm8828, %v8780, 0.0
        %v8830 = vadd.f32 %v8827, %v8829
        %8831 = vadd.xlane.f32.xlu0 %v8830
        %v8832 = vpop.xlane.xlu0 %8831
        %v8833 = vadd.f32 %v8785, %v8789
        %v8834 = vadd.f32 %v8833, %v8793
        %v8835 = vadd.f32 %v8834, %v8797
        %v8836 = vadd.f32 %v8835, %v8801
        %v8837 = vadd.f32 %v8836, %v8805
        %v8838 = vadd.f32 %v8837, %v8809
        %v8839 = vadd.f32 %v8838, %v8813
        %v8840 = vadd.f32 %v8839, %v8817
        %v8841 = vadd.f32 %v8840, %v8821
        %v8842 = vadd.f32 %v8841, %v8825
        %v8843 = vsel %vm8826, %v8832, 0.0
        %v8844 = vadd.f32 %v8842, %v8843
        %v8845 = vrot.slane %v8844, 4
        %v8846 = vadd.f32 %v8844, %v8845
        %v8847 = vrot.slane %v8846, 2
        %v8848 = vadd.f32 %v8846, %v8847
        %v8849 = vrot.slane %v8848, 1
        %v8850 = vadd.f32 %v8848, %v8849
        %s8851 = scalar_lea.vmem %s9, 192
        %v8852 = vld [vmem:[%s8851] sm:$0xff]
        %v8853 = vld [vmem:[%s8851 + $0x8] sm:$0xff]
        %v8854 = vld [vmem:[%s8851 + $0x10] sm:$0xff]
        %v8855 = vld [vmem:[%s8851 + $0x18] sm:$0xff]
        %v8856 = vld [vmem:[%s8851 + $0x20] sm:$0xff]
        %v8857 = vld [vmem:[%s8851 + $0x28] sm:$0xff]
        %v8858 = vld [vmem:[%s8851 + $0x30] sm:$0xff]
        %v8859 = vld [vmem:[%s8851 + $0x38] sm:$0xff]
        %v8860 = vld [vmem:[%s8851 + $0x40] sm:$0xff]
        %v8861 = vld [vmem:[%s8851 + $0x48] sm:$0xff]
        %v8862 = vld [vmem:[%s8851 + $0x50] sm:$0xff]
        %v8863 = vld [vmem:[%s8851 + $0x58] sm:$0xff]
        %v8864 = vld [vmem:[%s8851 + $0x60] sm:$0xff]
        %v8865 = vld [vmem:[%s8851 + $0x68] sm:$0xff]
        %v8866 = vld [vmem:[%s8851 + $0x70] sm:$0xff]
        %v8867 = vld [vmem:[%s8851 + $0x78] sm:$0xff]
        %v8868 = vld [vmem:[%s8851 + $0x80] sm:$0xff]
        %v8869 = vld [vmem:[%s8851 + $0x88] sm:$0xff]
        %v8870 = vld [vmem:[%s8851 + $0x90] sm:$0xff]
        %v8871 = vld [vmem:[%s8851 + $0x98] sm:$0xff]
        %v8872 = vld [vmem:[%s8851 + $0xa0] sm:$0xff]
        %v8873 = vld [vmem:[%s8851 + $0xa8] sm:$0xff]
        %v8874 = vld [vmem:[%s8851 + $0xb0] sm:$0xf]
        %v8875 = vld [vmem:[%s8851 + $0xb8] sm:$0xf]
        %v8876 = vmul.f32 %v8709, %v8852
        %v8877 = vmul.f32 %v8710, %v8853
        %v8878 = vmul.f32 %v8711, %v8854
        %v8879 = vmul.f32 %v8712, %v8855
        %v8880 = vmul.f32 %v8713, %v8856
        %v8881 = vmul.f32 %v8714, %v8857
        %v8882 = vmul.f32 %v8715, %v8858
        %v8883 = vmul.f32 %v8716, %v8859
        %v8884 = vmul.f32 %v8717, %v8860
        %v8885 = vmul.f32 %v8718, %v8861
        %v8886 = vmul.f32 %v8719, %v8862
        %v8887 = vmul.f32 %v8720, %v8863
        %v8888 = vmul.f32 %v8721, %v8864
        %v8889 = vmul.f32 %v8722, %v8865
        %v8890 = vmul.f32 %v8723, %v8866
        %v8891 = vmul.f32 %v8724, %v8867
        %v8892 = vmul.f32 %v8725, %v8868
        %v8893 = vmul.f32 %v8726, %v8869
        %v8894 = vmul.f32 %v8727, %v8870
        %v8895 = vmul.f32 %v8728, %v8871
        %v8896 = vmul.f32 %v8729, %v8872
        %v8897 = vmul.f32 %v8730, %v8873
        %v8898 = vmul.f32 %v8731, %v8874
        %v8899 = vmul.f32 %v8732, %v8875
        %v8900 = vsel %vm8781, %v8877, 0.0
        %v8901 = vadd.f32 %v8876, %v8900
        %8902 = vadd.xlane.f32.xlu0 %v8901
        %v8903 = vpop.xlane.xlu0 %8902
        %v8904 = vsel %vm8781, %v8879, 0.0
        %v8905 = vadd.f32 %v8878, %v8904
        %8906 = vadd.xlane.f32.xlu0 %v8905
        %v8907 = vpop.xlane.xlu0 %8906
        %v8908 = vsel %vm8781, %v8881, 0.0
        %v8909 = vadd.f32 %v8880, %v8908
        %8910 = vadd.xlane.f32.xlu0 %v8909
        %v8911 = vpop.xlane.xlu0 %8910
        %v8912 = vsel %vm8781, %v8883, 0.0
        %v8913 = vadd.f32 %v8882, %v8912
        %8914 = vadd.xlane.f32.xlu0 %v8913
        %v8915 = vpop.xlane.xlu0 %8914
        %v8916 = vsel %vm8781, %v8885, 0.0
        %v8917 = vadd.f32 %v8884, %v8916
        %8918 = vadd.xlane.f32.xlu0 %v8917
        %v8919 = vpop.xlane.xlu0 %8918
        %v8920 = vsel %vm8781, %v8887, 0.0
        %v8921 = vadd.f32 %v8886, %v8920
        %8922 = vadd.xlane.f32.xlu0 %v8921
        %v8923 = vpop.xlane.xlu0 %8922
        %v8924 = vsel %vm8781, %v8889, 0.0
        %v8925 = vadd.f32 %v8888, %v8924
        %8926 = vadd.xlane.f32.xlu0 %v8925
        %v8927 = vpop.xlane.xlu0 %8926
        %v8928 = vsel %vm8781, %v8891, 0.0
        %v8929 = vadd.f32 %v8890, %v8928
        %8930 = vadd.xlane.f32.xlu0 %v8929
        %v8931 = vpop.xlane.xlu0 %8930
        %v8932 = vsel %vm8781, %v8893, 0.0
        %v8933 = vadd.f32 %v8892, %v8932
        %8934 = vadd.xlane.f32.xlu0 %v8933
        %v8935 = vpop.xlane.xlu0 %8934
        %v8936 = vsel %vm8781, %v8895, 0.0
        %v8937 = vadd.f32 %v8894, %v8936
        %8938 = vadd.xlane.f32.xlu0 %v8937
        %v8939 = vpop.xlane.xlu0 %8938
        %v8940 = vsel %vm8781, %v8897, 0.0
        %v8941 = vadd.f32 %v8896, %v8940
        %8942 = vadd.xlane.f32.xlu0 %v8941
        %v8943 = vpop.xlane.xlu0 %8942
        %v8944 = vsel %vm8826, %v8898, 0.0
        %v8945 = vsel %vm8828, %v8899, 0.0
        %v8946 = vadd.f32 %v8944, %v8945
        %8947 = vadd.xlane.f32.xlu0 %v8946
        %v8948 = vpop.xlane.xlu0 %8947
        %v8949 = vadd.f32 %v8903, %v8907
        %v8950 = vadd.f32 %v8949, %v8911
        %v8951 = vadd.f32 %v8950, %v8915
        %v8952 = vadd.f32 %v8951, %v8919
        %v8953 = vadd.f32 %v8952, %v8923
        %v8954 = vadd.f32 %v8953, %v8927
        %v8955 = vadd.f32 %v8954, %v8931
        %v8956 = vadd.f32 %v8955, %v8935
        %v8957 = vadd.f32 %v8956, %v8939
        %v8958 = vadd.f32 %v8957, %v8943
        %v8959 = vsel %vm8826, %v8948, 0.0
        %v8960 = vadd.f32 %v8958, %v8959
        %v8961 = vrot.slane %v8960, 4
        %v8962 = vadd.f32 %v8960, %v8961
        %v8963 = vrot.slane %v8962, 2
        %v8964 = vadd.f32 %v8962, %v8963
        %v8965 = vrot.slane %v8964, 1
        %v8966 = vadd.f32 %v8964, %v8965
        %vm8967 = vcmask 7168
        %v8968 = vsel %vm8967, %v8850, %v8966
        %v8969 = vld [vmem:[%s10] sm:$0x1]
        %v8970 = vadd.f32 %v8968, %v8969
        %s8971 = scalar_lea.vmem %s389, %s482
        %vm8972 = vcmask 8192
        %8973 = vst.msk [vmem:[%s8971] sm:$0x1] %vm8972, %v8970
      $region69: #{deepconvnet_forward.1} parent=63 // loop_footer
        %s486 = sadd.s32 1, %s482
      $region70: #{deepconvnet_forward.1} parent=63 // loop_footer_branch
        %481 = sbr.rel target = $region66
      $region71: #{deepconvnet_forward.1} parent=63 // loop_exit
        _
      %p8974 = scmp.lt.s32.totalorder %s22, 1
      %s8975 = scalar_select %p8974, %s22, 1
      %s8976 = smul.addr %s8975, 8
      %s8977 = scalar_lea.vmem %s11, %s8976
      // Predicated region
      $region72: #{deepconvnet_forward.1} parent=63 // pred_check
        %p8978 = pneg %p276
      $region73: #{deepconvnet_forward.1} parent=63 // pred_check_branch
        %8980 = sbr.rel (%p8978) target = $region75
      $region74: #{deepconvnet_forward.1} parent=63 // pred_region
        _
      $region75: #{deepconvnet_forward.1} parent=63 // pred_fallthru
        _
    $region64: #{deepconvnet_forward.1} parent=5 // pred_fallthru
      _
    %p8981 = scmp.le.s32.totalorder 2, %s17
    // Predicated region
    $region76: #{deepconvnet_forward.1} parent=5 // pred_check
      %p8982 = pneg %p8981
    $region77: #{deepconvnet_forward.1} parent=5 // pred_check_branch
      %8984 = sbr.rel (%p8982) target = $region79
    $region78: #{deepconvnet_forward.1} parent=5 // pred_region
      %s8985 = ssub.s32 %s17, 2
      // Predicated region
      $region80: #{deepconvnet_forward.1} parent=78 // pred_check
        %p8986 = pneg %p282
      $region81: #{deepconvnet_forward.1} parent=78 // pred_check_branch
        %8988 = sbr.rel (%p8986) target = $region83
      $region82: #{deepconvnet_forward.1} parent=78 // pred_region
        %p8989 = scmp.lt.s32.totalorder %s23, 1
        %s8990 = scalar_select %p8989, %s23, 1
        %s8991 = smul.addr %s8990, 8
        %s8992 = scalar_lea.vmem %s11, %s8991
      $region83: #{deepconvnet_forward.1} parent=78 // pred_fallthru
        _
    $region79: #{deepconvnet_forward.1} parent=5 // pred_fallthru
      _
  $region6: #{deepconvnet_forward.1} parent=0 // loop_footer
    %s21 = sadd.s32 1, %s17
  $region7: #{deepconvnet_forward.1} parent=0 // loop_footer_branch
    %16 = sbr.rel target = $region3
  $region8: #{deepconvnet_forward.1} parent=0 // loop_exit
    _

</llo_original>
